<compile_context>
chip_gen: v5e
topology: v5e:2x2
jax: 0.10.0
libtpu: 0.0.40
codegen_flags: <defaults>
</compile_context>

<pallas_src>
import functools

import jax
import jax.numpy as jnp
from jax.experimental import pallas as pl
from jax.experimental.pallas import tpu as pltpu


def res_conv_block_kernel(*refs, has_downsample, compute_dtype):
    if has_downsample:
        (x_ref, g1_ref, b1_ref, g2_ref, b2_ref, g3_ref, b3_ref,
         g4_ref, b4_ref, gm_in_ref, gm_1_ref, gm_2_ref,
         w1_ref, w2_ref, w3_ref, wd_ref,
         out_ref, pad_ref, col_ref) = refs
    else:
        (x_ref, g1_ref, b1_ref, g2_ref, b2_ref, g3_ref, b3_ref,
         gm_in_ref, gm_1_ref, gm_2_ref,
         w1_ref, w2_ref, w3_ref,
         out_ref, pad_ref, col_ref) = refs
        g4_ref = b4_ref = wd_ref = None

    _, H, W, Cin = x_ref.shape
    Cout = out_ref.shape[-1]
    C1 = w1_ref.shape[-1]
    C2 = w2_ref.shape[-1]
    HW = H * W
    Wp = pad_ref.shape[1]          # sublane-aligned padded width (>= W + 2)
    Cpad = pad_ref.shape[2]
    eps = 1e-5

    def relu(v):
        return jnp.maximum(v, 0.0)

    def group_norm(y2, gm_ref, gamma_ref, beta_ref):
        # y2: (HW, C) f32. gm_ref is a (C, C) 0/1 group-membership matrix
        # pre-scaled by 1/(group_size*H*W), so `sums @ gm` yields the
        # per-group mean broadcast back to every channel (tiny MXU matmul,
        # no lane reshapes).  One-pass E[x^2]-mean^2 variance, all in f32.
        s = jnp.concatenate(
            [jnp.sum(y2, axis=0, keepdims=True),
             jnp.sum(y2 * y2, axis=0, keepdims=True)], axis=0)       # (2, C)
        g = jnp.dot(s, gm_ref[...], preferred_element_type=jnp.float32)
        mean, ex2 = g[0:1, :], g[1:2, :]
        var = ex2 - mean * mean
        inv = jax.lax.rsqrt(var + eps)                                # EUP
        return (y2 - mean) * (inv * gamma_ref[...]) + beta_ref[...]

    def conv3x3(y2, c_in, w_ref):
        # Write GN/ReLU result into the zero-bordered padded image (f32).
        pad_ref[1:H + 1, 1:W + 1, :c_in] = y2.reshape(H, W, c_in)

        # Build the im2col buffer with 128-lane-wide packed stores:
        # 2 taps per store for c_in=64, 4 taps for c_in=32; group offsets
        # (t0*c_in) are multiples of 128 lanes.  Cast to compute_dtype once
        # at the store (no cast inside the matmul).
        tps = 128 // c_in if (c_in < 128 and 128 % c_in == 0) else 1

        def window(t):
            dy, dx = divmod(t, 3)
            return pad_ref[dy:dy + H, dx:dx + W, :c_in].reshape(HW, c_in)

        for t0 in range(0, 9, tps):
            nt = min(tps, 9 - t0)
            pieces = [window(t) for t in range(t0, t0 + nt)]
            val = pieces[0] if nt == 1 else jnp.concatenate(pieces, axis=-1)
            col_ref[:, t0 * c_in:(t0 + nt) * c_in] = val.astype(compute_dtype)

        # Single fused im2col matmul: K = 9*c_in, f32 accumulation.
        return jnp.dot(col_ref[:, :9 * c_in], w_ref[...],
                       preferred_element_type=jnp.float32)            # (HW, c_out)

    # Zero ONLY the 1-element border of the padded scratch (top/bottom rows
    # and left/right columns); the interior is fully overwritten (up to the
    # :c_in channel slice actually read) before every windowed read.  Done
    # every grid step because scratch is uninitialized per-core under
    # "parallel" semantics.
    zrow = jnp.zeros((1, Wp, Cpad), pad_ref.dtype)
    zcol = jnp.zeros((H + 2, 1, Cpad), pad_ref.dtype)
    pad_ref[0:1, :, :] = zrow
    pad_ref[H + 1:H + 2, :, :] = zrow
    pad_ref[:, 0:1, :] = zcol
    pad_ref[:, W + 1:W + 2, :] = zcol

    x2 = x_ref[0].reshape(HW, Cin)

    # out1 = conv1(relu(gn1(x)))
    out1 = conv3x3(relu(group_norm(x2, gm_in_ref, g1_ref, b1_ref)), Cin, w1_ref)
    # out2 = conv2(relu(gn2(out1)))
    out2 = conv3x3(relu(group_norm(out1, gm_1_ref, g2_ref, b2_ref)), C1, w2_ref)
    # out3 = conv3(relu(gn3(out2)))
    out3 = conv3x3(relu(group_norm(out2, gm_2_ref, g3_ref, b3_ref)), C2, w3_ref)

    cat = jnp.concatenate([out1, out2, out3], axis=-1)                # (HW, Cout)

    if has_downsample:
        # residual = 1x1 conv(relu(gn4(x))) — kept fully in f32 (residual
        # error adds directly to the output).
        res = jnp.dot(relu(group_norm(x2, gm_in_ref, g4_ref, b4_ref)),
                      wd_ref[...], preferred_element_type=jnp.float32)
    else:
        res = x2                                                      # Cin == Cout

    out_ref[0] = (cat + res).reshape(H, W, Cout)


def res_conv_block_pallas(x, p, *, groups=32, compute_dtype=jnp.bfloat16):
    """x: (N, H, W, Cin) float32; p: dict of params (see init_params)."""
    N, H, W, Cin = x.shape
    HW = H * W
    C1 = p["w1"].shape[-1]
    C2 = p["w2"].shape[-1]
    Cout = C1 + 2 * C2
    has_ds = "wd" in p
    Cmax = max(Cin, C1, C2)
    Wp = ((W + 2 + 7) // 8) * 8          # padded width rounded to 8 sublanes
    assert Cin % groups == 0 and C1 % groups == 0 and C2 % groups == 0

    # Pre-scaled group-membership matrices (wrapper-side precompute, f32).
    def group_mean_matrix(C):
        gsz = C // groups
        gid = jnp.arange(C) // gsz
        return ((gid[:, None] == gid[None, :]).astype(jnp.float32)
                / float(gsz * HW))

    gm_in, gm_1, gm_2 = (group_mean_matrix(Cin), group_mean_matrix(C1),
                         group_mean_matrix(C2))

    # Conv weights reshaped wrapper-side for the fused im2col matmul:
    # (3, 3, C_in, C_out) -> (9*C_in, C_out); row order (kh, kw, cin) matches
    # the tap order used to build the im2col buffer in-kernel.  Weights are
    # stored in compute_dtype (bf16 by default); the 1x1 residual conv wd
    # stays f32.
    w1 = p["w1"].reshape(9 * Cin, C1).astype(compute_dtype)
    w2 = p["w2"].reshape(9 * C1, C2).astype(compute_dtype)
    w3 = p["w3"].reshape(9 * C2, C2).astype(compute_dtype)

    args = [x, p["g1"], p["b1"], p["g2"], p["b2"], p["g3"], p["b3"]]
    if has_ds:
        args += [p["g4"], p["b4"]]
    args += [gm_in, gm_1, gm_2, w1, w2, w3]
    if has_ds:
        args.append(p["wd"])             # residual 1x1 conv weight kept f32

    def full_spec(arr):
        nd = arr.ndim
        return pl.BlockSpec(arr.shape, lambda n, _nd=nd: (0,) * _nd)

    in_specs = ([pl.BlockSpec((1, H, W, Cin), lambda n: (n, 0, 0, 0))]
                + [full_spec(a) for a in args[1:]])
    out_specs = pl.BlockSpec((1, H, W, Cout), lambda n: (n, 0, 0, 0))

    kernel = functools.partial(res_conv_block_kernel,
                               has_downsample=has_ds,
                               compute_dtype=compute_dtype)

    # Explicit scoped-VMEM budget: scratch + double-buffered I/O blocks +
    # headroom, capped at v7x's 64 MiB per-TC VMEM.
    itemsize = jnp.dtype(compute_dtype).itemsize
    scratch_bytes = ((H + 2) * Wp * Cmax * 4          # f32 padded image
                     + HW * 9 * Cmax * itemsize)      # shared im2col buffer
    block_bytes = (H * W * (Cin + Cout) * 4
                   + sum(int(a.size) * a.dtype.itemsize for a in args[1:]))
    vmem_limit = int(min(64 << 20,
                         max(32 << 20,
                             scratch_bytes + 2 * block_bytes + (4 << 20))))

    return pl.pallas_call(
        kernel,
        out_shape=jax.ShapeDtypeStruct((N, H, W, Cout), jnp.float32),
        grid_spec=pltpu.PrefetchScalarGridSpec(
            num_scalar_prefetch=0,
            grid=(N,),
            in_specs=in_specs,
            out_specs=out_specs,
            scratch_shapes=[
                pltpu.VMEM((H + 2, Wp, Cmax), jnp.float32),   # padded image
                pltpu.VMEM((HW, 9 * Cmax), compute_dtype),    # shared im2col
            ]),
        compiler_params=pltpu.CompilerParams(
            dimension_semantics=("parallel",),
            vmem_limit_bytes=vmem_limit),
    )(*args)


def res_conv_block_reference(x, p, *, groups=32):
    """Pure-JAX NHWC reference matching the PyTorch forward (GROUP_NORM)."""
    HI = jax.lax.Precision.HIGHEST
    eps = 1e-5

    def gn(y, gamma, beta):
        N, H, W, C = y.shape
        yg = y.reshape(N, H, W, groups, C // groups)
        mean = jnp.mean(yg, axis=(1, 2, 4), keepdims=True)
        var = jnp.mean((yg - mean) ** 2, axis=(1, 2, 4), keepdims=True)
        yn = ((yg - mean) * jax.lax.rsqrt(var + eps)).reshape(N, H, W, C)
        return yn * gamma.reshape(1, 1, 1, C) + beta.reshape(1, 1, 1, C)

    def conv3x3(y, w):
        return jax.lax.conv_general_dilated(
            y, w, window_strides=(1, 1), padding="SAME",
            dimension_numbers=("NHWC", "HWIO", "NHWC"), precision=HI)

    relu = lambda v: jnp.maximum(v, 0.0)

    out1 = conv3x3(relu(gn(x, p["g1"], p["b1"])), p["w1"])
    out2 = conv3x3(relu(gn(out1, p["g2"], p["b2"])), p["w2"])
    out3 = conv3x3(relu(gn(out2, p["g3"], p["b3"])), p["w3"])
    cat = jnp.concatenate([out1, out2, out3], axis=-1)
    if "wd" in p:
        res = jnp.einsum("nhwc,cd->nhwd",
                         relu(gn(x, p["g4"], p["b4"])), p["wd"], precision=HI)
    else:
        res = x
    return cat + res


def init_params(key, cin, cout):
    c1, c2 = cout // 2, cout // 4
    ks = jax.random.split(key, 12)
    n = lambda k, shape, s=0.1: (s * jax.random.normal(k, shape)).astype(jnp.float32)
    p = {
        "g1": 1.0 + n(ks[0], (1, cin)), "b1": n(ks[1], (1, cin)),
        "g2": 1.0 + n(ks[2], (1, c1)),  "b2": n(ks[3], (1, c1)),
        "g3": 1.0 + n(ks[4], (1, c2)),  "b3": n(ks[5], (1, c2)),
        "w1": n(ks[6], (3, 3, cin, c1)),   # HWIO; module has bias=False
        "w2": n(ks[7], (3, 3, c1, c2)),
        "w3": n(ks[8], (3, 3, c2, c2)),
    }
    if cin != cout:
        p["g4"] = 1.0 + n(ks[9], (1, cin))
        p["b4"] = n(ks[10], (1, cin))
        p["wd"] = n(ks[11], (cin, cout))   # 1x1 conv, no bias
    return p


if __name__ == "__main__":
    # GroupNorm(32, C) requires channel counts to be multiples of 32:
    #   N=2, in_channels=64, out_channels=128 (-> 64/32/32 branch channels,
    #   downsample active since 64 != 128), H=W=16.
    N, Cin, Cout, H, W = 2, 64, 128, 16, 16

    key = jax.random.PRNGKey(0)
    kx, kp = jax.random.split(key)
    x = jax.random.normal(kx, (N, H, W, Cin), dtype=jnp.float32)
    params = init_params(kp, Cin, Cout)

    ref = jax.block_until_ready(res_conv_block_reference(x, params))

    # f32 compute path: tight check against the f32 reference.
    out_f32 = jax.block_until_ready(
        res_conv_block_pallas(x, params, compute_dtype=jnp.float32))
    assert out_f32.shape == (N, H, W, Cout), out_f32.shape
    err_f32 = float(jnp.max(jnp.abs(out_f32 - ref)))
    assert jnp.allclose(out_f32, ref, atol=2e-3, rtol=2e-3), err_f32

    # bf16 MXU path (default): f32 accumulation + f32 residual path; looser
    # tolerance for bf16 matmul inputs.
    out_bf16 = jax.block_until_ready(res_conv_block_pallas(x, params))
    assert out_bf16.shape == (N, H, W, Cout), out_bf16.shape
    err_bf16 = float(jnp.max(jnp.abs(out_bf16 - ref)))
    assert jnp.allclose(out_bf16, ref, atol=1e-1, rtol=1e-1), err_bf16

    print("KERNEL_OK")
</pallas_src>

<mosaic_0001>
module attributes {stable_mosaic.version = 11 : i64} {
  func.func @res_conv_block_kernel(%arg0: i32, %arg1: memref<1x16x16x64xf32, #tpu.memory_space<vmem>>, %arg2: memref<1x64xf32, #tpu.memory_space<vmem>>, %arg3: memref<1x64xf32, #tpu.memory_space<vmem>>, %arg4: memref<1x64xf32, #tpu.memory_space<vmem>>, %arg5: memref<1x64xf32, #tpu.memory_space<vmem>>, %arg6: memref<1x32xf32, #tpu.memory_space<vmem>>, %arg7: memref<1x32xf32, #tpu.memory_space<vmem>>, %arg8: memref<1x64xf32, #tpu.memory_space<vmem>>, %arg9: memref<1x64xf32, #tpu.memory_space<vmem>>, %arg10: memref<64x64xf32, #tpu.memory_space<vmem>>, %arg11: memref<64x64xf32, #tpu.memory_space<vmem>>, %arg12: memref<32x32xf32, #tpu.memory_space<vmem>>, %arg13: memref<576x64xf32, #tpu.memory_space<vmem>>, %arg14: memref<576x32xf32, #tpu.memory_space<vmem>>, %arg15: memref<288x32xf32, #tpu.memory_space<vmem>>, %arg16: memref<64x128xf32, #tpu.memory_space<vmem>>, %arg17: memref<1x16x16x128xf32, #tpu.memory_space<vmem>>, %arg18: memref<18x24x64xf32, #tpu.memory_space<vmem>>, %arg19: memref<256x576xf32, #tpu.memory_space<vmem>>) attributes {dimension_semantics = [#tpu.dimension_semantics<parallel>], iteration_bounds = array<i64: 2>, scalar_prefetch = 0 : i64, scratch_operands = 2 : i64, tpu.core_type = #tpu.core_type<tc>, window_params = [{transform_indices = @transform_0, window_bounds = array<i64: 1, 16, 16, 64>}, {pipeline_mode = #tpu.pipeline_mode<synchronous>, transform_indices = @transform_1, window_bounds = array<i64: 1, 64>}, {pipeline_mode = #tpu.pipeline_mode<synchronous>, transform_indices = @transform_2, window_bounds = array<i64: 1, 64>}, {pipeline_mode = #tpu.pipeline_mode<synchronous>, transform_indices = @transform_3, window_bounds = array<i64: 1, 64>}, {pipeline_mode = #tpu.pipeline_mode<synchronous>, transform_indices = @transform_4, window_bounds = array<i64: 1, 64>}, {pipeline_mode = #tpu.pipeline_mode<synchronous>, transform_indices = @transform_5, window_bounds = array<i64: 1, 32>}, {pipeline_mode = #tpu.pipeline_mode<synchronous>, transform_indices = @transform_6, window_bounds = array<i64: 1, 32>}, {pipeline_mode = #tpu.pipeline_mode<synchronous>, transform_indices = @transform_7, window_bounds = array<i64: 1, 64>}, {pipeline_mode = #tpu.pipeline_mode<synchronous>, transform_indices = @transform_8, window_bounds = array<i64: 1, 64>}, {pipeline_mode = #tpu.pipeline_mode<synchronous>, transform_indices = @transform_9, window_bounds = array<i64: 64, 64>}, {pipeline_mode = #tpu.pipeline_mode<synchronous>, transform_indices = @transform_10, window_bounds = array<i64: 64, 64>}, {pipeline_mode = #tpu.pipeline_mode<synchronous>, transform_indices = @transform_11, window_bounds = array<i64: 32, 32>}, {pipeline_mode = #tpu.pipeline_mode<synchronous>, transform_indices = @transform_12, window_bounds = array<i64: 576, 64>}, {pipeline_mode = #tpu.pipeline_mode<synchronous>, transform_indices = @transform_13, window_bounds = array<i64: 576, 32>}, {pipeline_mode = #tpu.pipeline_mode<synchronous>, transform_indices = @transform_14, window_bounds = array<i64: 288, 32>}, {pipeline_mode = #tpu.pipeline_mode<synchronous>, transform_indices = @transform_15, window_bounds = array<i64: 64, 128>}, {transform_indices = @transform_16, window_bounds = array<i64: 1, 16, 16, 128>}]} {
    %cst = arith.constant 0.000000e+00 : f32
    %0 = vector.broadcast %cst : f32 to vector<1x24x64xf32>
    %cst_0 = arith.constant 0.000000e+00 : f32
    %1 = vector.broadcast %cst_0 : f32 to vector<18x1x64xf32>
    %c0 = arith.constant 0 : index
    %c0_1 = arith.constant 0 : index
    %c0_2 = arith.constant 0 : index
    %2 = vector.load %arg18[%c0, %c0_1, %c0_2] : memref<18x24x64xf32, #tpu.memory_space<vmem>>, vector<1x24x64xf32>
    tpu.vector_store %arg18[%c0, %c0_1, %c0_2], %0 {strides = array<i32>} : memref<18x24x64xf32, #tpu.memory_space<vmem>>, vector<1x24x64xf32>,
    %c17 = arith.constant 17 : index
    %c0_3 = arith.constant 0 : index
    %c0_4 = arith.constant 0 : index
    %3 = vector.load %arg18[%c17, %c0_3, %c0_4] : memref<18x24x64xf32, #tpu.memory_space<vmem>>, vector<1x24x64xf32>
    tpu.vector_store %arg18[%c17, %c0_3, %c0_4], %0 {strides = array<i32>} : memref<18x24x64xf32, #tpu.memory_space<vmem>>, vector<1x24x64xf32>,
    %c0_5 = arith.constant 0 : index
    %c0_6 = arith.constant 0 : index
    %c0_7 = arith.constant 0 : index
    %4 = vector.load %arg18[%c0_5, %c0_6, %c0_7] : memref<18x24x64xf32, #tpu.memory_space<vmem>>, vector<18x1x64xf32>
    tpu.vector_store %arg18[%c0_5, %c0_6, %c0_7], %1 {strides = array<i32>} : memref<18x24x64xf32, #tpu.memory_space<vmem>>, vector<18x1x64xf32>,
    %c0_8 = arith.constant 0 : index
    %c17_9 = arith.constant 17 : index
    %c0_10 = arith.constant 0 : index
    %5 = vector.load %arg18[%c0_8, %c17_9, %c0_10] : memref<18x24x64xf32, #tpu.memory_space<vmem>>, vector<18x1x64xf32>
    tpu.vector_store %arg18[%c0_8, %c17_9, %c0_10], %1 {strides = array<i32>} : memref<18x24x64xf32, #tpu.memory_space<vmem>>, vector<18x1x64xf32>,
    %c0_11 = arith.constant 0 : index
    %c0_12 = arith.constant 0 : index
    %c0_13 = arith.constant 0 : index
    %c0_14 = arith.constant 0 : index
    %6 = vector.load %arg1[%c0_11, %c0_12, %c0_13, %c0_14] : memref<1x16x16x64xf32, #tpu.memory_space<vmem>>, vector<1x16x16x64xf32>
    %7 = vector.shape_cast %6 : vector<1x16x16x64xf32> to vector<16x16x64xf32>
    %8 = vector.shape_cast %7 : vector<16x16x64xf32> to vector<256x64xf32>
    %cst_15 = arith.constant dense<0.000000e+00> : vector<64xf32>
    %9 = vector.multi_reduction <add>, %8, %cst_15 [0] : vector<256x64xf32> to vector<64xf32>
    %10 = vector.shape_cast %9 : vector<64xf32> to vector<1x64xf32>
    %11 = arith.mulf %8, %8 : vector<256x64xf32>
    %cst_16 = arith.constant dense<0.000000e+00> : vector<64xf32>
    %12 = vector.multi_reduction <add>, %11, %cst_16 [0] : vector<256x64xf32> to vector<64xf32>
    %13 = vector.shape_cast %12 : vector<64xf32> to vector<1x64xf32>
    %14 = tpu.concatenate %10, %13 in 0 : vector<1x64xf32>, vector<1x64xf32> -> vector<2x64xf32>
    %c0_17 = arith.constant 0 : index
    %c0_18 = arith.constant 0 : index
    %15 = vector.load %arg10[%c0_17, %c0_18] : memref<64x64xf32, #tpu.memory_space<vmem>>, vector<64x64xf32>
    %cst_19 = arith.constant dense<0.000000e+00> : vector<2x64xf32>
    %16 = tpu.matmul %14, %15, %cst_19 {dimension_numbers = #tpu.dot_dimension_numbers<[1], [0], [0], [1], [0, 0, 1, 1], [], []>} : vector<2x64xf32>, vector<64x64xf32>, vector<2x64xf32> -> vector<2x64xf32>
    %17 = vector.extract_strided_slice %16 {offsets = [0, 0], sizes = [1, 64], strides = [1, 1]} : vector<2x64xf32> to vector<1x64xf32>
    %18 = vector.extract_strided_slice %16 {offsets = [1, 0], sizes = [1, 64], strides = [1, 1]} : vector<2x64xf32> to vector<1x64xf32>
    %19 = arith.mulf %17, %17 : vector<1x64xf32>
    %20 = arith.subf %18, %19 : vector<1x64xf32>
    %cst_20 = arith.constant 9.99999974E-6 : f32
    %21 = vector.broadcast %cst_20 : f32 to vector<1x64xf32>
    %22 = arith.addf %20, %21 : vector<1x64xf32>
    %23 = math.rsqrt %22 : vector<1x64xf32>
    %24 = vector.broadcast %17 : vector<1x64xf32> to vector<256x64xf32>
    %25 = arith.subf %8, %24 : vector<256x64xf32>
    %c0_21 = arith.constant 0 : index
    %c0_22 = arith.constant 0 : index
    %26 = vector.load %arg2[%c0_21, %c0_22] : memref<1x64xf32, #tpu.memory_space<vmem>>, vector<1x64xf32>
    %27 = arith.mulf %23, %26 : vector<1x64xf32>
    %28 = vector.broadcast %27 : vector<1x64xf32> to vector<256x64xf32>
    %29 = arith.mulf %25, %28 : vector<256x64xf32>
    %c0_23 = arith.constant 0 : index
    %c0_24 = arith.constant 0 : index
    %30 = vector.load %arg3[%c0_23, %c0_24] : memref<1x64xf32, #tpu.memory_space<vmem>>, vector<1x64xf32>
    %31 = vector.broadcast %30 : vector<1x64xf32> to vector<256x64xf32>
    %32 = arith.addf %29, %31 : vector<256x64xf32>
    %cst_25 = arith.constant 0.000000e+00 : f32
    %33 = vector.broadcast %cst_25 : f32 to vector<256x64xf32>
    %34 = arith.maximumf %32, %33 : vector<256x64xf32>
    %35 = vector.shape_cast %34 : vector<256x64xf32> to vector<16x16x64xf32>
    %c1 = arith.constant 1 : index
    %c1_26 = arith.constant 1 : index
    %c0_27 = arith.constant 0 : index
    %36 = vector.load %arg18[%c1, %c1_26, %c0_27] : memref<18x24x64xf32, #tpu.memory_space<vmem>>, vector<16x16x64xf32>
    tpu.vector_store %arg18[%c1, %c1_26, %c0_27], %35 {strides = array<i32>} : memref<18x24x64xf32, #tpu.memory_space<vmem>>, vector<16x16x64xf32>,
    %c0_28 = arith.constant 0 : index
    %c0_29 = arith.constant 0 : index
    %c0_30 = arith.constant 0 : index
    %37 = vector.load %arg18[%c0_28, %c0_29, %c0_30] : memref<18x24x64xf32, #tpu.memory_space<vmem>>, vector<16x16x64xf32>
    %38 = vector.shape_cast %37 : vector<16x16x64xf32> to vector<256x64xf32>
    %c0_31 = arith.constant 0 : index
    %c1_32 = arith.constant 1 : index
    %c0_33 = arith.constant 0 : index
    %39 = vector.load %arg18[%c0_31, %c1_32, %c0_33] : memref<18x24x64xf32, #tpu.memory_space<vmem>>, vector<16x16x64xf32>
    %40 = vector.shape_cast %39 : vector<16x16x64xf32> to vector<256x64xf32>
    %41 = tpu.concatenate %38, %40 in 1 : vector<256x64xf32>, vector<256x64xf32> -> vector<256x128xf32>
    %c0_34 = arith.constant 0 : index
    %c0_35 = arith.constant 0 : index
    %42 = vector.load %arg19[%c0_34, %c0_35] : memref<256x576xf32, #tpu.memory_space<vmem>>, vector<256x128xf32>
    tpu.vector_store %arg19[%c0_34, %c0_35], %41 {strides = array<i32>} : memref<256x576xf32, #tpu.memory_space<vmem>>, vector<256x128xf32>,
    %c0_36 = arith.constant 0 : index
    %c2 = arith.constant 2 : index
    %c0_37 = arith.constant 0 : index
    %43 = vector.load %arg18[%c0_36, %c2, %c0_37] : memref<18x24x64xf32, #tpu.memory_space<vmem>>, vector<16x16x64xf32>
    %44 = vector.shape_cast %43 : vector<16x16x64xf32> to vector<256x64xf32>
    %c1_38 = arith.constant 1 : index
    %c0_39 = arith.constant 0 : index
    %c0_40 = arith.constant 0 : index
    %45 = vector.load %arg18[%c1_38, %c0_39, %c0_40] : memref<18x24x64xf32, #tpu.memory_space<vmem>>, vector<16x16x64xf32>
    %46 = vector.shape_cast %45 : vector<16x16x64xf32> to vector<256x64xf32>
    %47 = tpu.concatenate %44, %46 in 1 : vector<256x64xf32>, vector<256x64xf32> -> vector<256x128xf32>
    %c0_41 = arith.constant 0 : index
    %c128 = arith.constant 128 : index
    %48 = vector.load %arg19[%c0_41, %c128] : memref<256x576xf32, #tpu.memory_space<vmem>>, vector<256x128xf32>
    tpu.vector_store %arg19[%c0_41, %c128], %47 {strides = array<i32>} : memref<256x576xf32, #tpu.memory_space<vmem>>, vector<256x128xf32>,
    %c1_42 = arith.constant 1 : index
    %c1_43 = arith.constant 1 : index
    %c0_44 = arith.constant 0 : index
    %49 = vector.load %arg18[%c1_42, %c1_43, %c0_44] : memref<18x24x64xf32, #tpu.memory_space<vmem>>, vector<16x16x64xf32>
    %50 = vector.shape_cast %49 : vector<16x16x64xf32> to vector<256x64xf32>
    %c1_45 = arith.constant 1 : index
    %c2_46 = arith.constant 2 : index
    %c0_47 = arith.constant 0 : index
    %51 = vector.load %arg18[%c1_45, %c2_46, %c0_47] : memref<18x24x64xf32, #tpu.memory_space<vmem>>, vector<16x16x64xf32>
    %52 = vector.shape_cast %51 : vector<16x16x64xf32> to vector<256x64xf32>
    %53 = tpu.concatenate %50, %52 in 1 : vector<256x64xf32>, vector<256x64xf32> -> vector<256x128xf32>
    %c0_48 = arith.constant 0 : index
    %c256 = arith.constant 256 : index
    %54 = vector.load %arg19[%c0_48, %c256] : memref<256x576xf32, #tpu.memory_space<vmem>>, vector<256x128xf32>
    tpu.vector_store %arg19[%c0_48, %c256], %53 {strides = array<i32>} : memref<256x576xf32, #tpu.memory_space<vmem>>, vector<256x128xf32>,
    %c2_49 = arith.constant 2 : index
    %c0_50 = arith.constant 0 : index
    %c0_51 = arith.constant 0 : index
    %55 = vector.load %arg18[%c2_49, %c0_50, %c0_51] : memref<18x24x64xf32, #tpu.memory_space<vmem>>, vector<16x16x64xf32>
    %56 = vector.shape_cast %55 : vector<16x16x64xf32> to vector<256x64xf32>
    %c2_52 = arith.constant 2 : index
    %c1_53 = arith.constant 1 : index
    %c0_54 = arith.constant 0 : index
    %57 = vector.load %arg18[%c2_52, %c1_53, %c0_54] : memref<18x24x64xf32, #tpu.memory_space<vmem>>, vector<16x16x64xf32>
    %58 = vector.shape_cast %57 : vector<16x16x64xf32> to vector<256x64xf32>
    %59 = tpu.concatenate %56, %58 in 1 : vector<256x64xf32>, vector<256x64xf32> -> vector<256x128xf32>
    %c0_55 = arith.constant 0 : index
    %c384 = arith.constant 384 : index
    %60 = vector.load %arg19[%c0_55, %c384] : memref<256x576xf32, #tpu.memory_space<vmem>>, vector<256x128xf32>
    tpu.vector_store %arg19[%c0_55, %c384], %59 {strides = array<i32>} : memref<256x576xf32, #tpu.memory_space<vmem>>, vector<256x128xf32>,
    %c2_56 = arith.constant 2 : index
    %c2_57 = arith.constant 2 : index
    %c0_58 = arith.constant 0 : index
    %61 = vector.load %arg18[%c2_56, %c2_57, %c0_58] : memref<18x24x64xf32, #tpu.memory_space<vmem>>, vector<16x16x64xf32>
    %62 = vector.shape_cast %61 : vector<16x16x64xf32> to vector<256x64xf32>
    %c0_59 = arith.constant 0 : index
    %c512 = arith.constant 512 : index
    %63 = vector.load %arg19[%c0_59, %c512] : memref<256x576xf32, #tpu.memory_space<vmem>>, vector<256x64xf32>
    tpu.vector_store %arg19[%c0_59, %c512], %62 {strides = array<i32>} : memref<256x576xf32, #tpu.memory_space<vmem>>, vector<256x64xf32>,
    %c0_60 = arith.constant 0 : index
    %c0_61 = arith.constant 0 : index
    %64 = vector.load %arg19[%c0_60, %c0_61] : memref<256x576xf32, #tpu.memory_space<vmem>>, vector<256x576xf32>
    %c0_62 = arith.constant 0 : index
    %c0_63 = arith.constant 0 : index
    %65 = vector.load %arg13[%c0_62, %c0_63] : memref<576x64xf32, #tpu.memory_space<vmem>>, vector<576x64xf32>
    %cst_64 = arith.constant dense<0.000000e+00> : vector<256x64xf32>
    %66 = tpu.matmul %64, %65, %cst_64 {dimension_numbers = #tpu.dot_dimension_numbers<[1], [0], [0], [1], [0, 0, 1, 1], [], []>} : vector<256x576xf32>, vector<576x64xf32>, vector<256x64xf32> -> vector<256x64xf32>
    %cst_65 = arith.constant dense<0.000000e+00> : vector<64xf32>
    %67 = vector.multi_reduction <add>, %66, %cst_65 [0] : vector<256x64xf32> to vector<64xf32>
    %68 = vector.shape_cast %67 : vector<64xf32> to vector<1x64xf32>
    %69 = arith.mulf %66, %66 : vector<256x64xf32>
    %cst_66 = arith.constant dense<0.000000e+00> : vector<64xf32>
    %70 = vector.multi_reduction <add>, %69, %cst_66 [0] : vector<256x64xf32> to vector<64xf32>
    %71 = vector.shape_cast %70 : vector<64xf32> to vector<1x64xf32>
    %72 = tpu.concatenate %68, %71 in 0 : vector<1x64xf32>, vector<1x64xf32> -> vector<2x64xf32>
    %c0_67 = arith.constant 0 : index
    %c0_68 = arith.constant 0 : index
    %73 = vector.load %arg11[%c0_67, %c0_68] : memref<64x64xf32, #tpu.memory_space<vmem>>, vector<64x64xf32>
    %cst_69 = arith.constant dense<0.000000e+00> : vector<2x64xf32>
    %74 = tpu.matmul %72, %73, %cst_69 {dimension_numbers = #tpu.dot_dimension_numbers<[1], [0], [0], [1], [0, 0, 1, 1], [], []>} : vector<2x64xf32>, vector<64x64xf32>, vector<2x64xf32> -> vector<2x64xf32>
    %75 = vector.extract_strided_slice %74 {offsets = [0, 0], sizes = [1, 64], strides = [1, 1]} : vector<2x64xf32> to vector<1x64xf32>
    %76 = vector.extract_strided_slice %74 {offsets = [1, 0], sizes = [1, 64], strides = [1, 1]} : vector<2x64xf32> to vector<1x64xf32>
    %77 = arith.mulf %75, %75 : vector<1x64xf32>
    %78 = arith.subf %76, %77 : vector<1x64xf32>
    %cst_70 = arith.constant 9.99999974E-6 : f32
    %79 = vector.broadcast %cst_70 : f32 to vector<1x64xf32>
    %80 = arith.addf %78, %79 : vector<1x64xf32>
    %81 = math.rsqrt %80 : vector<1x64xf32>
    %82 = vector.broadcast %75 : vector<1x64xf32> to vector<256x64xf32>
    %83 = arith.subf %66, %82 : vector<256x64xf32>
    %c0_71 = arith.constant 0 : index
    %c0_72 = arith.constant 0 : index
    %84 = vector.load %arg4[%c0_71, %c0_72] : memref<1x64xf32, #tpu.memory_space<vmem>>, vector<1x64xf32>
    %85 = arith.mulf %81, %84 : vector<1x64xf32>
    %86 = vector.broadcast %85 : vector<1x64xf32> to vector<256x64xf32>
    %87 = arith.mulf %83, %86 : vector<256x64xf32>
    %c0_73 = arith.constant 0 : index
    %c0_74 = arith.constant 0 : index
    %88 = vector.load %arg5[%c0_73, %c0_74] : memref<1x64xf32, #tpu.memory_space<vmem>>, vector<1x64xf32>
    %89 = vector.broadcast %88 : vector<1x64xf32> to vector<256x64xf32>
    %90 = arith.addf %87, %89 : vector<256x64xf32>
    %cst_75 = arith.constant 0.000000e+00 : f32
    %91 = vector.broadcast %cst_75 : f32 to vector<256x64xf32>
    %92 = arith.maximumf %90, %91 : vector<256x64xf32>
    %93 = vector.shape_cast %92 : vector<256x64xf32> to vector<16x16x64xf32>
    %c1_76 = arith.constant 1 : index
    %c1_77 = arith.constant 1 : index
    %c0_78 = arith.constant 0 : index
    %94 = vector.load %arg18[%c1_76, %c1_77, %c0_78] : memref<18x24x64xf32, #tpu.memory_space<vmem>>, vector<16x16x64xf32>
    tpu.vector_store %arg18[%c1_76, %c1_77, %c0_78], %93 {strides = array<i32>} : memref<18x24x64xf32, #tpu.memory_space<vmem>>, vector<16x16x64xf32>,
    %c0_79 = arith.constant 0 : index
    %c0_80 = arith.constant 0 : index
    %c0_81 = arith.constant 0 : index
    %95 = vector.load %arg18[%c0_79, %c0_80, %c0_81] : memref<18x24x64xf32, #tpu.memory_space<vmem>>, vector<16x16x64xf32>
    %96 = vector.shape_cast %95 : vector<16x16x64xf32> to vector<256x64xf32>
    %c0_82 = arith.constant 0 : index
    %c1_83 = arith.constant 1 : index
    %c0_84 = arith.constant 0 : index
    %97 = vector.load %arg18[%c0_82, %c1_83, %c0_84] : memref<18x24x64xf32, #tpu.memory_space<vmem>>, vector<16x16x64xf32>
    %98 = vector.shape_cast %97 : vector<16x16x64xf32> to vector<256x64xf32>
    %99 = tpu.concatenate %96, %98 in 1 : vector<256x64xf32>, vector<256x64xf32> -> vector<256x128xf32>
    %c0_85 = arith.constant 0 : index
    %c0_86 = arith.constant 0 : index
    %100 = vector.load %arg19[%c0_85, %c0_86] : memref<256x576xf32, #tpu.memory_space<vmem>>, vector<256x128xf32>
    tpu.vector_store %arg19[%c0_85, %c0_86], %99 {strides = array<i32>} : memref<256x576xf32, #tpu.memory_space<vmem>>, vector<256x128xf32>,
    %c0_87 = arith.constant 0 : index
    %c2_88 = arith.constant 2 : index
    %c0_89 = arith.constant 0 : index
    %101 = vector.load %arg18[%c0_87, %c2_88, %c0_89] : memref<18x24x64xf32, #tpu.memory_space<vmem>>, vector<16x16x64xf32>
    %102 = vector.shape_cast %101 : vector<16x16x64xf32> to vector<256x64xf32>
    %c1_90 = arith.constant 1 : index
    %c0_91 = arith.constant 0 : index
    %c0_92 = arith.constant 0 : index
    %103 = vector.load %arg18[%c1_90, %c0_91, %c0_92] : memref<18x24x64xf32, #tpu.memory_space<vmem>>, vector<16x16x64xf32>
    %104 = vector.shape_cast %103 : vector<16x16x64xf32> to vector<256x64xf32>
    %105 = tpu.concatenate %102, %104 in 1 : vector<256x64xf32>, vector<256x64xf32> -> vector<256x128xf32>
    %c0_93 = arith.constant 0 : index
    %c128_94 = arith.constant 128 : index
    %106 = vector.load %arg19[%c0_93, %c128_94] : memref<256x576xf32, #tpu.memory_space<vmem>>, vector<256x128xf32>
    tpu.vector_store %arg19[%c0_93, %c128_94], %105 {strides = array<i32>} : memref<256x576xf32, #tpu.memory_space<vmem>>, vector<256x128xf32>,
    %c1_95 = arith.constant 1 : index
    %c1_96 = arith.constant 1 : index
    %c0_97 = arith.constant 0 : index
    %107 = vector.load %arg18[%c1_95, %c1_96, %c0_97] : memref<18x24x64xf32, #tpu.memory_space<vmem>>, vector<16x16x64xf32>
    %108 = vector.shape_cast %107 : vector<16x16x64xf32> to vector<256x64xf32>
    %c1_98 = arith.constant 1 : index
    %c2_99 = arith.constant 2 : index
    %c0_100 = arith.constant 0 : index
    %109 = vector.load %arg18[%c1_98, %c2_99, %c0_100] : memref<18x24x64xf32, #tpu.memory_space<vmem>>, vector<16x16x64xf32>
    %110 = vector.shape_cast %109 : vector<16x16x64xf32> to vector<256x64xf32>
    %111 = tpu.concatenate %108, %110 in 1 : vector<256x64xf32>, vector<256x64xf32> -> vector<256x128xf32>
    %c0_101 = arith.constant 0 : index
    %c256_102 = arith.constant 256 : index
    %112 = vector.load %arg19[%c0_101, %c256_102] : memref<256x576xf32, #tpu.memory_space<vmem>>, vector<256x128xf32>
    tpu.vector_store %arg19[%c0_101, %c256_102], %111 {strides = array<i32>} : memref<256x576xf32, #tpu.memory_space<vmem>>, vector<256x128xf32>,
    %c2_103 = arith.constant 2 : index
    %c0_104 = arith.constant 0 : index
    %c0_105 = arith.constant 0 : index
    %113 = vector.load %arg18[%c2_103, %c0_104, %c0_105] : memref<18x24x64xf32, #tpu.memory_space<vmem>>, vector<16x16x64xf32>
    %114 = vector.shape_cast %113 : vector<16x16x64xf32> to vector<256x64xf32>
    %c2_106 = arith.constant 2 : index
    %c1_107 = arith.constant 1 : index
    %c0_108 = arith.constant 0 : index
    %115 = vector.load %arg18[%c2_106, %c1_107, %c0_108] : memref<18x24x64xf32, #tpu.memory_space<vmem>>, vector<16x16x64xf32>
    %116 = vector.shape_cast %115 : vector<16x16x64xf32> to vector<256x64xf32>
    %117 = tpu.concatenate %114, %116 in 1 : vector<256x64xf32>, vector<256x64xf32> -> vector<256x128xf32>
    %c0_109 = arith.constant 0 : index
    %c384_110 = arith.constant 384 : index
    %118 = vector.load %arg19[%c0_109, %c384_110] : memref<256x576xf32, #tpu.memory_space<vmem>>, vector<256x128xf32>
    tpu.vector_store %arg19[%c0_109, %c384_110], %117 {strides = array<i32>} : memref<256x576xf32, #tpu.memory_space<vmem>>, vector<256x128xf32>,
    %c2_111 = arith.constant 2 : index
    %c2_112 = arith.constant 2 : index
    %c0_113 = arith.constant 0 : index
    %119 = vector.load %arg18[%c2_111, %c2_112, %c0_113] : memref<18x24x64xf32, #tpu.memory_space<vmem>>, vector<16x16x64xf32>
    %120 = vector.shape_cast %119 : vector<16x16x64xf32> to vector<256x64xf32>
    %c0_114 = arith.constant 0 : index
    %c512_115 = arith.constant 512 : index
    %121 = vector.load %arg19[%c0_114, %c512_115] : memref<256x576xf32, #tpu.memory_space<vmem>>, vector<256x64xf32>
    tpu.vector_store %arg19[%c0_114, %c512_115], %120 {strides = array<i32>} : memref<256x576xf32, #tpu.memory_space<vmem>>, vector<256x64xf32>,
    %c0_116 = arith.constant 0 : index
    %c0_117 = arith.constant 0 : index
    %122 = vector.load %arg19[%c0_116, %c0_117] : memref<256x576xf32, #tpu.memory_space<vmem>>, vector<256x576xf32>
    %c0_118 = arith.constant 0 : index
    %c0_119 = arith.constant 0 : index
    %123 = vector.load %arg14[%c0_118, %c0_119] : memref<576x32xf32, #tpu.memory_space<vmem>>, vector<576x32xf32>
    %cst_120 = arith.constant dense<0.000000e+00> : vector<256x32xf32>
    %124 = tpu.matmul %122, %123, %cst_120 {dimension_numbers = #tpu.dot_dimension_numbers<[1], [0], [0], [1], [0, 0, 1, 1], [], []>} : vector<256x576xf32>, vector<576x32xf32>, vector<256x32xf32> -> vector<256x32xf32>
    %cst_121 = arith.constant dense<0.000000e+00> : vector<32xf32>
    %125 = vector.multi_reduction <add>, %124, %cst_121 [0] : vector<256x32xf32> to vector<32xf32>
    %126 = vector.shape_cast %125 : vector<32xf32> to vector<1x32xf32>
    %127 = arith.mulf %124, %124 : vector<256x32xf32>
    %cst_122 = arith.constant dense<0.000000e+00> : vector<32xf32>
    %128 = vector.multi_reduction <add>, %127, %cst_122 [0] : vector<256x32xf32> to vector<32xf32>
    %129 = vector.shape_cast %128 : vector<32xf32> to vector<1x32xf32>
    %130 = tpu.concatenate %126, %129 in 0 : vector<1x32xf32>, vector<1x32xf32> -> vector<2x32xf32>
    %c0_123 = arith.constant 0 : index
    %c0_124 = arith.constant 0 : index
    %131 = vector.load %arg12[%c0_123, %c0_124] : memref<32x32xf32, #tpu.memory_space<vmem>>, vector<32x32xf32>
    %cst_125 = arith.constant dense<0.000000e+00> : vector<2x32xf32>
    %132 = tpu.matmul %130, %131, %cst_125 {dimension_numbers = #tpu.dot_dimension_numbers<[1], [0], [0], [1], [0, 0, 1, 1], [], []>} : vector<2x32xf32>, vector<32x32xf32>, vector<2x32xf32> -> vector<2x32xf32>
    %133 = vector.extract_strided_slice %132 {offsets = [0, 0], sizes = [1, 32], strides = [1, 1]} : vector<2x32xf32> to vector<1x32xf32>
    %134 = vector.extract_strided_slice %132 {offsets = [1, 0], sizes = [1, 32], strides = [1, 1]} : vector<2x32xf32> to vector<1x32xf32>
    %135 = arith.mulf %133, %133 : vector<1x32xf32>
    %136 = arith.subf %134, %135 : vector<1x32xf32>
    %cst_126 = arith.constant 9.99999974E-6 : f32
    %137 = vector.broadcast %cst_126 : f32 to vector<1x32xf32>
    %138 = arith.addf %136, %137 : vector<1x32xf32>
    %139 = math.rsqrt %138 : vector<1x32xf32>
    %140 = vector.broadcast %133 : vector<1x32xf32> to vector<256x32xf32>
    %141 = arith.subf %124, %140 : vector<256x32xf32>
    %c0_127 = arith.constant 0 : index
    %c0_128 = arith.constant 0 : index
    %142 = vector.load %arg6[%c0_127, %c0_128] : memref<1x32xf32, #tpu.memory_space<vmem>>, vector<1x32xf32>
    %143 = arith.mulf %139, %142 : vector<1x32xf32>
    %144 = vector.broadcast %143 : vector<1x32xf32> to vector<256x32xf32>
    %145 = arith.mulf %141, %144 : vector<256x32xf32>
    %c0_129 = arith.constant 0 : index
    %c0_130 = arith.constant 0 : index
    %146 = vector.load %arg7[%c0_129, %c0_130] : memref<1x32xf32, #tpu.memory_space<vmem>>, vector<1x32xf32>
    %147 = vector.broadcast %146 : vector<1x32xf32> to vector<256x32xf32>
    %148 = arith.addf %145, %147 : vector<256x32xf32>
    %cst_131 = arith.constant 0.000000e+00 : f32
    %149 = vector.broadcast %cst_131 : f32 to vector<256x32xf32>
    %150 = arith.maximumf %148, %149 : vector<256x32xf32>
    %151 = vector.shape_cast %150 : vector<256x32xf32> to vector<16x16x32xf32>
    %c1_132 = arith.constant 1 : index
    %c1_133 = arith.constant 1 : index
    %c0_134 = arith.constant 0 : index
    %152 = vector.load %arg18[%c1_132, %c1_133, %c0_134] : memref<18x24x64xf32, #tpu.memory_space<vmem>>, vector<16x16x32xf32>
    tpu.vector_store %arg18[%c1_132, %c1_133, %c0_134], %151 {strides = array<i32>} : memref<18x24x64xf32, #tpu.memory_space<vmem>>, vector<16x16x32xf32>,
    %c0_135 = arith.constant 0 : index
    %c0_136 = arith.constant 0 : index
    %c0_137 = arith.constant 0 : index
    %153 = vector.load %arg18[%c0_135, %c0_136, %c0_137] : memref<18x24x64xf32, #tpu.memory_space<vmem>>, vector<16x16x32xf32>
    %154 = vector.shape_cast %153 : vector<16x16x32xf32> to vector<256x32xf32>
    %c0_138 = arith.constant 0 : index
    %c1_139 = arith.constant 1 : index
    %c0_140 = arith.constant 0 : index
    %155 = vector.load %arg18[%c0_138, %c1_139, %c0_140] : memref<18x24x64xf32, #tpu.memory_space<vmem>>, vector<16x16x32xf32>
    %156 = vector.shape_cast %155 : vector<16x16x32xf32> to vector<256x32xf32>
    %c0_141 = arith.constant 0 : index
    %c2_142 = arith.constant 2 : index
    %c0_143 = arith.constant 0 : index
    %157 = vector.load %arg18[%c0_141, %c2_142, %c0_143] : memref<18x24x64xf32, #tpu.memory_space<vmem>>, vector<16x16x32xf32>
    %158 = vector.shape_cast %157 : vector<16x16x32xf32> to vector<256x32xf32>
    %c1_144 = arith.constant 1 : index
    %c0_145 = arith.constant 0 : index
    %c0_146 = arith.constant 0 : index
    %159 = vector.load %arg18[%c1_144, %c0_145, %c0_146] : memref<18x24x64xf32, #tpu.memory_space<vmem>>, vector<16x16x32xf32>
    %160 = vector.shape_cast %159 : vector<16x16x32xf32> to vector<256x32xf32>
    %161 = tpu.concatenate %154, %156, %158, %160 in 1 : vector<256x32xf32>, vector<256x32xf32>, vector<256x32xf32>, vector<256x32xf32> -> vector<256x128xf32>
    %c0_147 = arith.constant 0 : index
    %c0_148 = arith.constant 0 : index
    %162 = vector.load %arg19[%c0_147, %c0_148] : memref<256x576xf32, #tpu.memory_space<vmem>>, vector<256x128xf32>
    tpu.vector_store %arg19[%c0_147, %c0_148], %161 {strides = array<i32>} : memref<256x576xf32, #tpu.memory_space<vmem>>, vector<256x128xf32>,
    %c1_149 = arith.constant 1 : index
    %c1_150 = arith.constant 1 : index
    %c0_151 = arith.constant 0 : index
    %163 = vector.load %arg18[%c1_149, %c1_150, %c0_151] : memref<18x24x64xf32, #tpu.memory_space<vmem>>, vector<16x16x32xf32>
    %164 = vector.shape_cast %163 : vector<16x16x32xf32> to vector<256x32xf32>
    %c1_152 = arith.constant 1 : index
    %c2_153 = arith.constant 2 : index
    %c0_154 = arith.constant 0 : index
    %165 = vector.load %arg18[%c1_152, %c2_153, %c0_154] : memref<18x24x64xf32, #tpu.memory_space<vmem>>, vector<16x16x32xf32>
    %166 = vector.shape_cast %165 : vector<16x16x32xf32> to vector<256x32xf32>
    %c2_155 = arith.constant 2 : index
    %c0_156 = arith.constant 0 : index
    %c0_157 = arith.constant 0 : index
    %167 = vector.load %arg18[%c2_155, %c0_156, %c0_157] : memref<18x24x64xf32, #tpu.memory_space<vmem>>, vector<16x16x32xf32>
    %168 = vector.shape_cast %167 : vector<16x16x32xf32> to vector<256x32xf32>
    %c2_158 = arith.constant 2 : index
    %c1_159 = arith.constant 1 : index
    %c0_160 = arith.constant 0 : index
    %169 = vector.load %arg18[%c2_158, %c1_159, %c0_160] : memref<18x24x64xf32, #tpu.memory_space<vmem>>, vector<16x16x32xf32>
    %170 = vector.shape_cast %169 : vector<16x16x32xf32> to vector<256x32xf32>
    %171 = tpu.concatenate %164, %166, %168, %170 in 1 : vector<256x32xf32>, vector<256x32xf32>, vector<256x32xf32>, vector<256x32xf32> -> vector<256x128xf32>
    %c0_161 = arith.constant 0 : index
    %c128_162 = arith.constant 128 : index
    %172 = vector.load %arg19[%c0_161, %c128_162] : memref<256x576xf32, #tpu.memory_space<vmem>>, vector<256x128xf32>
    tpu.vector_store %arg19[%c0_161, %c128_162], %171 {strides = array<i32>} : memref<256x576xf32, #tpu.memory_space<vmem>>, vector<256x128xf32>,
    %c2_163 = arith.constant 2 : index
    %c2_164 = arith.constant 2 : index
    %c0_165 = arith.constant 0 : index
    %173 = vector.load %arg18[%c2_163, %c2_164, %c0_165] : memref<18x24x64xf32, #tpu.memory_space<vmem>>, vector<16x16x32xf32>
    %174 = vector.shape_cast %173 : vector<16x16x32xf32> to vector<256x32xf32>
    %c0_166 = arith.constant 0 : index
    %c256_167 = arith.constant 256 : index
    %175 = vector.load %arg19[%c0_166, %c256_167] : memref<256x576xf32, #tpu.memory_space<vmem>>, vector<256x32xf32>
    tpu.vector_store %arg19[%c0_166, %c256_167], %174 {strides = array<i32>} : memref<256x576xf32, #tpu.memory_space<vmem>>, vector<256x32xf32>,
    %c0_168 = arith.constant 0 : index
    %c0_169 = arith.constant 0 : index
    %176 = vector.load %arg19[%c0_168, %c0_169] : memref<256x576xf32, #tpu.memory_space<vmem>>, vector<256x288xf32>
    %c0_170 = arith.constant 0 : index
    %c0_171 = arith.constant 0 : index
    %177 = vector.load %arg15[%c0_170, %c0_171] : memref<288x32xf32, #tpu.memory_space<vmem>>, vector<288x32xf32>
    %cst_172 = arith.constant dense<0.000000e+00> : vector<256x32xf32>
    %178 = tpu.matmul %176, %177, %cst_172 {dimension_numbers = #tpu.dot_dimension_numbers<[1], [0], [0], [1], [0, 0, 1, 1], [], []>} : vector<256x288xf32>, vector<288x32xf32>, vector<256x32xf32> -> vector<256x32xf32>
    %179 = tpu.concatenate %66, %124, %178 in 1 : vector<256x64xf32>, vector<256x32xf32>, vector<256x32xf32> -> vector<256x128xf32>
    %cst_173 = arith.constant dense<0.000000e+00> : vector<64xf32>
    %180 = vector.multi_reduction <add>, %8, %cst_173 [0] : vector<256x64xf32> to vector<64xf32>
    %181 = vector.shape_cast %180 : vector<64xf32> to vector<1x64xf32>
    %182 = arith.mulf %8, %8 : vector<256x64xf32>
    %cst_174 = arith.constant dense<0.000000e+00> : vector<64xf32>
    %183 = vector.multi_reduction <add>, %182, %cst_174 [0] : vector<256x64xf32> to vector<64xf32>
    %184 = vector.shape_cast %183 : vector<64xf32> to vector<1x64xf32>
    %185 = tpu.concatenate %181, %184 in 0 : vector<1x64xf32>, vector<1x64xf32> -> vector<2x64xf32>
    %c0_175 = arith.constant 0 : index
    %c0_176 = arith.constant 0 : index
    %186 = vector.load %arg10[%c0_175, %c0_176] : memref<64x64xf32, #tpu.memory_space<vmem>>, vector<64x64xf32>
    %cst_177 = arith.constant dense<0.000000e+00> : vector<2x64xf32>
    %187 = tpu.matmul %185, %186, %cst_177 {dimension_numbers = #tpu.dot_dimension_numbers<[1], [0], [0], [1], [0, 0, 1, 1], [], []>} : vector<2x64xf32>, vector<64x64xf32>, vector<2x64xf32> -> vector<2x64xf32>
    %188 = vector.extract_strided_slice %187 {offsets = [0, 0], sizes = [1, 64], strides = [1, 1]} : vector<2x64xf32> to vector<1x64xf32>
    %189 = vector.extract_strided_slice %187 {offsets = [1, 0], sizes = [1, 64], strides = [1, 1]} : vector<2x64xf32> to vector<1x64xf32>
    %190 = arith.mulf %188, %188 : vector<1x64xf32>
    %191 = arith.subf %189, %190 : vector<1x64xf32>
    %cst_178 = arith.constant 9.99999974E-6 : f32
    %192 = vector.broadcast %cst_178 : f32 to vector<1x64xf32>
    %193 = arith.addf %191, %192 : vector<1x64xf32>
    %194 = math.rsqrt %193 : vector<1x64xf32>
    %195 = vector.broadcast %188 : vector<1x64xf32> to vector<256x64xf32>
    %196 = arith.subf %8, %195 : vector<256x64xf32>
    %c0_179 = arith.constant 0 : index
    %c0_180 = arith.constant 0 : index
    %197 = vector.load %arg8[%c0_179, %c0_180] : memref<1x64xf32, #tpu.memory_space<vmem>>, vector<1x64xf32>
    %198 = arith.mulf %194, %197 : vector<1x64xf32>
    %199 = vector.broadcast %198 : vector<1x64xf32> to vector<256x64xf32>
    %200 = arith.mulf %196, %199 : vector<256x64xf32>
    %c0_181 = arith.constant 0 : index
    %c0_182 = arith.constant 0 : index
    %201 = vector.load %arg9[%c0_181, %c0_182] : memref<1x64xf32, #tpu.memory_space<vmem>>, vector<1x64xf32>
    %202 = vector.broadcast %201 : vector<1x64xf32> to vector<256x64xf32>
    %203 = arith.addf %200, %202 : vector<256x64xf32>
    %cst_183 = arith.constant 0.000000e+00 : f32
    %204 = vector.broadcast %cst_183 : f32 to vector<256x64xf32>
    %205 = arith.maximumf %203, %204 : vector<256x64xf32>
    %c0_184 = arith.constant 0 : index
    %c0_185 = arith.constant 0 : index
    %206 = vector.load %arg16[%c0_184, %c0_185] : memref<64x128xf32, #tpu.memory_space<vmem>>, vector<64x128xf32>
    %cst_186 = arith.constant dense<0.000000e+00> : vector<256x128xf32>
    %207 = tpu.matmul %205, %206, %cst_186 {dimension_numbers = #tpu.dot_dimension_numbers<[1], [0], [0], [1], [0, 0, 1, 1], [], []>} : vector<256x64xf32>, vector<64x128xf32>, vector<256x128xf32> -> vector<256x128xf32>
    %208 = arith.addf %179, %207 : vector<256x128xf32>
    %209 = vector.shape_cast %208 : vector<256x128xf32> to vector<16x16x128xf32>
    %c0_187 = arith.constant 0 : index
    %c0_188 = arith.constant 0 : index
    %c0_189 = arith.constant 0 : index
    %c0_190 = arith.constant 0 : index
    %210 = vector.load %arg17[%c0_187, %c0_188, %c0_189, %c0_190] : memref<1x16x16x128xf32, #tpu.memory_space<vmem>>, vector<1x16x16x128xf32>
    %211 = vector.shape_cast %210 : vector<1x16x16x128xf32> to vector<16x16x128xf32>
    %212 = vector.shape_cast %209 : vector<16x16x128xf32> to vector<1x16x16x128xf32>
    tpu.vector_store %arg17[%c0_187, %c0_188, %c0_189, %c0_190], %212 {strides = array<i32>} : memref<1x16x16x128xf32, #tpu.memory_space<vmem>>, vector<1x16x16x128xf32>,
    return
  }
  func.func @transform_0(%arg0: i32) -> (i32, i32, i32, i32) {
    %c0_i32 = arith.constant 0 : i32
    %c0_i32_0 = arith.constant 0 : i32
    %c0_i32_1 = arith.constant 0 : i32
    %c0_i32_2 = arith.constant 0 : i32
    return %arg0, %c0_i32, %c0_i32_0, %c0_i32_1 : i32, i32, i32, i32
  }
  func.func @transform_1(%arg0: i32) -> (i32, i32) {
    %c0_i32 = arith.constant 0 : i32
    %c0_i32_0 = arith.constant 0 : i32
    %c0_i32_1 = arith.constant 0 : i32
    return %c0_i32, %c0_i32_0 : i32, i32
  }
  func.func @transform_2(%arg0: i32) -> (i32, i32) {
    %c0_i32 = arith.constant 0 : i32
    %c0_i32_0 = arith.constant 0 : i32
    %c0_i32_1 = arith.constant 0 : i32
    return %c0_i32, %c0_i32_0 : i32, i32
  }
  func.func @transform_3(%arg0: i32) -> (i32, i32) {
    %c0_i32 = arith.constant 0 : i32
    %c0_i32_0 = arith.constant 0 : i32
    %c0_i32_1 = arith.constant 0 : i32
    return %c0_i32, %c0_i32_0 : i32, i32
  }
  func.func @transform_4(%arg0: i32) -> (i32, i32) {
    %c0_i32 = arith.constant 0 : i32
    %c0_i32_0 = arith.constant 0 : i32
    %c0_i32_1 = arith.constant 0 : i32
    return %c0_i32, %c0_i32_0 : i32, i32
  }
  func.func @transform_5(%arg0: i32) -> (i32, i32) {
    %c0_i32 = arith.constant 0 : i32
    %c0_i32_0 = arith.constant 0 : i32
    %c0_i32_1 = arith.constant 0 : i32
    return %c0_i32, %c0_i32_0 : i32, i32
  }
  func.func @transform_6(%arg0: i32) -> (i32, i32) {
    %c0_i32 = arith.constant 0 : i32
    %c0_i32_0 = arith.constant 0 : i32
    %c0_i32_1 = arith.constant 0 : i32
    return %c0_i32, %c0_i32_0 : i32, i32
  }
  func.func @transform_7(%arg0: i32) -> (i32, i32) {
    %c0_i32 = arith.constant 0 : i32
    %c0_i32_0 = arith.constant 0 : i32
    %c0_i32_1 = arith.constant 0 : i32
    return %c0_i32, %c0_i32_0 : i32, i32
  }
  func.func @transform_8(%arg0: i32) -> (i32, i32) {
    %c0_i32 = arith.constant 0 : i32
    %c0_i32_0 = arith.constant 0 : i32
    %c0_i32_1 = arith.constant 0 : i32
    return %c0_i32, %c0_i32_0 : i32, i32
  }
  func.func @transform_9(%arg0: i32) -> (i32, i32) {
    %c0_i32 = arith.constant 0 : i32
    %c0_i32_0 = arith.constant 0 : i32
    %c0_i32_1 = arith.constant 0 : i32
    return %c0_i32, %c0_i32_0 : i32, i32
  }
  func.func @transform_10(%arg0: i32) -> (i32, i32) {
    %c0_i32 = arith.constant 0 : i32
    %c0_i32_0 = arith.constant 0 : i32
    %c0_i32_1 = arith.constant 0 : i32
    return %c0_i32, %c0_i32_0 : i32, i32
  }
  func.func @transform_11(%arg0: i32) -> (i32, i32) {
    %c0_i32 = arith.constant 0 : i32
    %c0_i32_0 = arith.constant 0 : i32
    %c0_i32_1 = arith.constant 0 : i32
    return %c0_i32, %c0_i32_0 : i32, i32
  }
  func.func @transform_12(%arg0: i32) -> (i32, i32) {
    %c0_i32 = arith.constant 0 : i32
    %c0_i32_0 = arith.constant 0 : i32
    %c0_i32_1 = arith.constant 0 : i32
    return %c0_i32, %c0_i32_0 : i32, i32
  }
  func.func @transform_13(%arg0: i32) -> (i32, i32) {
    %c0_i32 = arith.constant 0 : i32
    %c0_i32_0 = arith.constant 0 : i32
    %c0_i32_1 = arith.constant 0 : i32
    return %c0_i32, %c0_i32_0 : i32, i32
  }
  func.func @transform_14(%arg0: i32) -> (i32, i32) {
    %c0_i32 = arith.constant 0 : i32
    %c0_i32_0 = arith.constant 0 : i32
    %c0_i32_1 = arith.constant 0 : i32
    return %c0_i32, %c0_i32_0 : i32, i32
  }
  func.func @transform_15(%arg0: i32) -> (i32, i32) {
    %c0_i32 = arith.constant 0 : i32
    %c0_i32_0 = arith.constant 0 : i32
    %c0_i32_1 = arith.constant 0 : i32
    return %c0_i32, %c0_i32_0 : i32, i32
  }
  func.func @transform_16(%arg0: i32) -> (i32, i32, i32, i32) {
    %c0_i32 = arith.constant 0 : i32
    %c0_i32_0 = arith.constant 0 : i32
    %c0_i32_1 = arith.constant 0 : i32
    %c0_i32_2 = arith.constant 0 : i32
    return %arg0, %c0_i32, %c0_i32_0, %c0_i32_1 : i32, i32, i32, i32
  }
}

</mosaic_0001>

<llo_original>
// kernel: tpu_custom_call.1
$region0: #{tpu_custom_call.1}
  #allocation0 [shape = 'u32[]', space=smem, size = 0x4, offset = 0x4, fixed_abs, tag = 'smem constant byte address 0x4 - core index']
  #allocation1 [shape = 'u32[72,128]{1,0:T(1,128)}', space=vmem, size = 0x9000, scoped, tag = 'internal scratch']
  #allocation2 [shape = 'f32[18,24,64]{2,1,0:T(8,128)}', space=vmem, size = 0x36000, scoped, tag = 'scratch operand']
  #allocation3 [shape = 'f32[256,576]{1,0:T(8,128)}', space=vmem, size = 0xa0000, scoped, tag = 'scratch operand']
  %s0 = inlined_call_operand.vmem [shape: f32[2,16,16,64], index: 0, kind: input, shape index: {}]
  %s1 = inlined_call_operand.vmem [shape: f32[1,64], index: 1, kind: input, shape index: {}]
  %s2 = inlined_call_operand.vmem [shape: f32[1,64], index: 2, kind: input, shape index: {}]
  %s3 = inlined_call_operand.vmem [shape: f32[1,64], index: 3, kind: input, shape index: {}]
  %s4 = inlined_call_operand.vmem [shape: f32[1,64], index: 4, kind: input, shape index: {}]
  %s5 = inlined_call_operand.vmem [shape: f32[1,32], index: 5, kind: input, shape index: {}]
  %s6 = inlined_call_operand.vmem [shape: f32[1,32], index: 6, kind: input, shape index: {}]
  %s7 = inlined_call_operand.vmem [shape: f32[1,64], index: 7, kind: input, shape index: {}]
  %s8 = inlined_call_operand.vmem [shape: f32[1,64], index: 8, kind: input, shape index: {}]
  %s9 = inlined_call_operand.vmem [shape: f32[64,64], index: 9, kind: input, shape index: {}]
  %s10 = inlined_call_operand.vmem [shape: f32[64,64], index: 10, kind: input, shape index: {}]
  %s11 = inlined_call_operand.vmem [shape: f32[32,32], index: 11, kind: input, shape index: {}]
  %s12 = inlined_call_operand.vmem [shape: f32[576,64], index: 12, kind: input, shape index: {}]
  %s13 = inlined_call_operand.vmem [shape: f32[576,32], index: 13, kind: input, shape index: {}]
  %s14 = inlined_call_operand.vmem [shape: f32[288,32], index: 14, kind: input, shape index: {}]
  %s15 = inlined_call_operand.vmem [shape: f32[64,128], index: 15, kind: input, shape index: {}]
  %s16 = inlined_call_operand.hbm [shape: f32[2,16,16,128], index: 16, kind: output, shape index: {}]
  %s17 = sld [smem:[#allocation0]]
  $region97: #{tpu_custom_call.1} parent=0
    _
  %s19 = ssub.s32 1, %s17
  %s20 = scalar_select 0, %s19, %s17
  $region1: #{tpu_custom_call.1} parent=0
    #allocation4 [shape = 'u8[262144]{0}', space=vmem, size = 0x40000, scoped, tag = 'output window, operand 0']
    #allocation5 [shape = 's32[2]{0}', space=sflag, size = 0x8, scoped, tag = 'scoped memory for tpu_custom_call.1']
    %21 = vsyncpa [#allocation5], 0
    %s22 = scalar_lea.sflag [#allocation5], 1
    %23 = vsyncpa %s22, 0
    loop: start=0, step=1, limit=4
    $region2: #{tpu_custom_call.1} parent=1 // loop_pre_header
      _
    $region3: #{tpu_custom_call.1} parent=1 // loop_header
      %s25 = sphi 0, %s29
      %p26 = scmp.ge.s32.totalorder %s25, 4
      %s35 = sphi 0, %s37
      %s38 = sphi 0, %s35
      %s39 = sphi 0, %s38
      %s55 = sphi 0, %s39
      %s59 = sphi 0, %s59
      %s61 = sphi 0, %s59
      %s62 = sphi 0, %s61
      %s76 = sphi 0, %s62
      %s80 = sphi 0, %s80
      %s82 = sphi 0, %s80
      %s83 = sphi 0, %s82
      %s97 = sphi 0, %s83
      %s101 = sphi 0, %s101
      %s103 = sphi 0, %s101
      %s104 = sphi 0, %s103
      %s118 = sphi 0, %s104
      %s122 = sphi 0, %s122
      %s124 = sphi 0, %s122
      %s125 = sphi 0, %s124
      %s139 = sphi 0, %s125
      %s143 = sphi 0, %s143
      %s145 = sphi 0, %s143
      %s146 = sphi 0, %s145
      %s160 = sphi 0, %s146
      %s164 = sphi 0, %s164
      %s166 = sphi 0, %s164
      %s167 = sphi 0, %s166
      %s181 = sphi 0, %s167
      %s185 = sphi 0, %s185
      %s187 = sphi 0, %s185
      %s188 = sphi 0, %s187
      %s202 = sphi 0, %s188
      %s206 = sphi 0, %s206
      %s208 = sphi 0, %s206
      %s209 = sphi 0, %s208
      %s223 = sphi 0, %s209
      %s227 = sphi 0, %s227
      %s229 = sphi 0, %s227
      %s230 = sphi 0, %s229
      %s244 = sphi 0, %s230
      %s248 = sphi 0, %s248
      %s250 = sphi 0, %s248
      %s251 = sphi 0, %s250
      %s265 = sphi 0, %s251
      %s269 = sphi 0, %s269
      %s271 = sphi 0, %s269
      %s272 = sphi 0, %s271
      %s286 = sphi 0, %s272
      %s290 = sphi 0, %s290
      %s292 = sphi 0, %s290
      %s293 = sphi 0, %s292
      %s307 = sphi 0, %s293
      %s311 = sphi 0, %s311
      %s313 = sphi 0, %s311
      %s314 = sphi 0, %s313
      %s328 = sphi 0, %s314
      %s332 = sphi 0, %s332
      %s334 = sphi 0, %s332
      %s335 = sphi 0, %s334
      %s349 = sphi 0, %s335
      %s353 = sphi 0, %s353
      %s355 = sphi 0, %s353
      %s356 = sphi 0, %s355
      %s370 = sphi 0, %s356
      %s376 = sphi 0, %s378
      %s379 = sphi 0, %s376
      %s380 = sphi 0, %s379
      %s396 = sphi 0, %s380
    $region4: #{tpu_custom_call.1} parent=1 // loop_header_branch
      %28 = sbr.rel (%p26) target = $region8
    $region5: #{tpu_custom_call.1} parent=1 // loop_body
      %s30 = ssub.s32 %s25, 1
      %s31 = ssub.s32 %s25, 2
      %s32 = sadd.s32 %s25, 1
      %s33 = ssub.s32 %s25, %s32
      %p34 = scmp.eq.s32.totalorder %s33, 0
      %s36 = sadd.s32 %s35, 1
      %s37 = scalar_select %p34, %s35, %s36
      %p40 = pneg %p34
      %p41 = scmp.eq.s32.totalorder %s25, 1
      %p42 = por %p40, %p41
      %p43 = scmp.ne.s32.totalorder %s35, %s38
      %p44 = scmp.eq.s32.totalorder %s25, 0
      %p45 = por %p43, %p44
      %p46 = scmp.ne.s32.totalorder %s35, %s38
      %p47 = scmp.eq.s32.totalorder %s30, 1
      %p48 = por %p46, %p47
      %p49 = scmp.ne.s32.totalorder %s38, %s39
      %p50 = scmp.eq.s32.totalorder %s30, 0
      %p51 = por %p49, %p50
      %p52 = scmp.ne.s32.totalorder %s38, %s39
      %p53 = scmp.eq.s32.totalorder %s31, 1
      %p54 = por %p52, %p53
      %p56 = scmp.ne.s32.totalorder %s39, %s55
      %p57 = scmp.eq.s32.totalorder %s31, 0
      %p58 = por %p56, %p57
      %s60 = sadd.s32 %s59, 1
      %p63 = scmp.eq.s32.totalorder %s25, 1
      %p64 = scmp.ne.s32.totalorder %s59, %s61
      %p65 = scmp.eq.s32.totalorder %s25, 0
      %p66 = por %p64, %p65
      %p67 = scmp.ne.s32.totalorder %s59, %s61
      %p68 = scmp.eq.s32.totalorder %s30, 1
      %p69 = por %p67, %p68
      %p70 = scmp.ne.s32.totalorder %s61, %s62
      %p71 = scmp.eq.s32.totalorder %s30, 0
      %p72 = por %p70, %p71
      %p73 = scmp.ne.s32.totalorder %s61, %s62
      %p74 = scmp.eq.s32.totalorder %s31, 1
      %p75 = por %p73, %p74
      %p77 = scmp.ne.s32.totalorder %s62, %s76
      %p78 = scmp.eq.s32.totalorder %s31, 0
      %p79 = por %p77, %p78
      %s81 = sadd.s32 %s80, 1
      %p84 = scmp.eq.s32.totalorder %s25, 1
      %p85 = scmp.ne.s32.totalorder %s80, %s82
      %p86 = scmp.eq.s32.totalorder %s25, 0
      %p87 = por %p85, %p86
      %p88 = scmp.ne.s32.totalorder %s80, %s82
      %p89 = scmp.eq.s32.totalorder %s30, 1
      %p90 = por %p88, %p89
      %p91 = scmp.ne.s32.totalorder %s82, %s83
      %p92 = scmp.eq.s32.totalorder %s30, 0
      %p93 = por %p91, %p92
      %p94 = scmp.ne.s32.totalorder %s82, %s83
      %p95 = scmp.eq.s32.totalorder %s31, 1
      %p96 = por %p94, %p95
      %p98 = scmp.ne.s32.totalorder %s83, %s97
      %p99 = scmp.eq.s32.totalorder %s31, 0
      %p100 = por %p98, %p99
      %s102 = sadd.s32 %s101, 1
      %p105 = scmp.eq.s32.totalorder %s25, 1
      %p106 = scmp.ne.s32.totalorder %s101, %s103
      %p107 = scmp.eq.s32.totalorder %s25, 0
      %p108 = por %p106, %p107
      %p109 = scmp.ne.s32.totalorder %s101, %s103
      %p110 = scmp.eq.s32.totalorder %s30, 1
      %p111 = por %p109, %p110
      %p112 = scmp.ne.s32.totalorder %s103, %s104
      %p113 = scmp.eq.s32.totalorder %s30, 0
      %p114 = por %p112, %p113
      %p115 = scmp.ne.s32.totalorder %s103, %s104
      %p116 = scmp.eq.s32.totalorder %s31, 1
      %p117 = por %p115, %p116
      %p119 = scmp.ne.s32.totalorder %s104, %s118
      %p120 = scmp.eq.s32.totalorder %s31, 0
      %p121 = por %p119, %p120
      %s123 = sadd.s32 %s122, 1
      %p126 = scmp.eq.s32.totalorder %s25, 1
      %p127 = scmp.ne.s32.totalorder %s122, %s124
      %p128 = scmp.eq.s32.totalorder %s25, 0
      %p129 = por %p127, %p128
      %p130 = scmp.ne.s32.totalorder %s122, %s124
      %p131 = scmp.eq.s32.totalorder %s30, 1
      %p132 = por %p130, %p131
      %p133 = scmp.ne.s32.totalorder %s124, %s125
      %p134 = scmp.eq.s32.totalorder %s30, 0
      %p135 = por %p133, %p134
      %p136 = scmp.ne.s32.totalorder %s124, %s125
      %p137 = scmp.eq.s32.totalorder %s31, 1
      %p138 = por %p136, %p137
      %p140 = scmp.ne.s32.totalorder %s125, %s139
      %p141 = scmp.eq.s32.totalorder %s31, 0
      %p142 = por %p140, %p141
      %s144 = sadd.s32 %s143, 1
      %p147 = scmp.eq.s32.totalorder %s25, 1
      %p148 = scmp.ne.s32.totalorder %s143, %s145
      %p149 = scmp.eq.s32.totalorder %s25, 0
      %p150 = por %p148, %p149
      %p151 = scmp.ne.s32.totalorder %s143, %s145
      %p152 = scmp.eq.s32.totalorder %s30, 1
      %p153 = por %p151, %p152
      %p154 = scmp.ne.s32.totalorder %s145, %s146
      %p155 = scmp.eq.s32.totalorder %s30, 0
      %p156 = por %p154, %p155
      %p157 = scmp.ne.s32.totalorder %s145, %s146
      %p158 = scmp.eq.s32.totalorder %s31, 1
      %p159 = por %p157, %p158
      %p161 = scmp.ne.s32.totalorder %s146, %s160
      %p162 = scmp.eq.s32.totalorder %s31, 0
      %p163 = por %p161, %p162
      %s165 = sadd.s32 %s164, 1
      %p168 = scmp.eq.s32.totalorder %s25, 1
      %p169 = scmp.ne.s32.totalorder %s164, %s166
      %p170 = scmp.eq.s32.totalorder %s25, 0
      %p171 = por %p169, %p170
      %p172 = scmp.ne.s32.totalorder %s164, %s166
      %p173 = scmp.eq.s32.totalorder %s30, 1
      %p174 = por %p172, %p173
      %p175 = scmp.ne.s32.totalorder %s166, %s167
      %p176 = scmp.eq.s32.totalorder %s30, 0
      %p177 = por %p175, %p176
      %p178 = scmp.ne.s32.totalorder %s166, %s167
      %p179 = scmp.eq.s32.totalorder %s31, 1
      %p180 = por %p178, %p179
      %p182 = scmp.ne.s32.totalorder %s167, %s181
      %p183 = scmp.eq.s32.totalorder %s31, 0
      %p184 = por %p182, %p183
      %s186 = sadd.s32 %s185, 1
      %p189 = scmp.eq.s32.totalorder %s25, 1
      %p190 = scmp.ne.s32.totalorder %s185, %s187
      %p191 = scmp.eq.s32.totalorder %s25, 0
      %p192 = por %p190, %p191
      %p193 = scmp.ne.s32.totalorder %s185, %s187
      %p194 = scmp.eq.s32.totalorder %s30, 1
      %p195 = por %p193, %p194
      %p196 = scmp.ne.s32.totalorder %s187, %s188
      %p197 = scmp.eq.s32.totalorder %s30, 0
      %p198 = por %p196, %p197
      %p199 = scmp.ne.s32.totalorder %s187, %s188
      %p200 = scmp.eq.s32.totalorder %s31, 1
      %p201 = por %p199, %p200
      %p203 = scmp.ne.s32.totalorder %s188, %s202
      %p204 = scmp.eq.s32.totalorder %s31, 0
      %p205 = por %p203, %p204
      %s207 = sadd.s32 %s206, 1
      %p210 = scmp.eq.s32.totalorder %s25, 1
      %p211 = scmp.ne.s32.totalorder %s206, %s208
      %p212 = scmp.eq.s32.totalorder %s25, 0
      %p213 = por %p211, %p212
      %p214 = scmp.ne.s32.totalorder %s206, %s208
      %p215 = scmp.eq.s32.totalorder %s30, 1
      %p216 = por %p214, %p215
      %p217 = scmp.ne.s32.totalorder %s208, %s209
      %p218 = scmp.eq.s32.totalorder %s30, 0
      %p219 = por %p217, %p218
      %p220 = scmp.ne.s32.totalorder %s208, %s209
      %p221 = scmp.eq.s32.totalorder %s31, 1
      %p222 = por %p220, %p221
      %p224 = scmp.ne.s32.totalorder %s209, %s223
      %p225 = scmp.eq.s32.totalorder %s31, 0
      %p226 = por %p224, %p225
      %s228 = sadd.s32 %s227, 1
      %p231 = scmp.eq.s32.totalorder %s25, 1
      %p232 = scmp.ne.s32.totalorder %s227, %s229
      %p233 = scmp.eq.s32.totalorder %s25, 0
      %p234 = por %p232, %p233
      %p235 = scmp.ne.s32.totalorder %s227, %s229
      %p236 = scmp.eq.s32.totalorder %s30, 1
      %p237 = por %p235, %p236
      %p238 = scmp.ne.s32.totalorder %s229, %s230
      %p239 = scmp.eq.s32.totalorder %s30, 0
      %p240 = por %p238, %p239
      %p241 = scmp.ne.s32.totalorder %s229, %s230
      %p242 = scmp.eq.s32.totalorder %s31, 1
      %p243 = por %p241, %p242
      %p245 = scmp.ne.s32.totalorder %s230, %s244
      %p246 = scmp.eq.s32.totalorder %s31, 0
      %p247 = por %p245, %p246
      %s249 = sadd.s32 %s248, 1
      %p252 = scmp.eq.s32.totalorder %s25, 1
      %p253 = scmp.ne.s32.totalorder %s248, %s250
      %p254 = scmp.eq.s32.totalorder %s25, 0
      %p255 = por %p253, %p254
      %p256 = scmp.ne.s32.totalorder %s248, %s250
      %p257 = scmp.eq.s32.totalorder %s30, 1
      %p258 = por %p256, %p257
      %p259 = scmp.ne.s32.totalorder %s250, %s251
      %p260 = scmp.eq.s32.totalorder %s30, 0
      %p261 = por %p259, %p260
      %p262 = scmp.ne.s32.totalorder %s250, %s251
      %p263 = scmp.eq.s32.totalorder %s31, 1
      %p264 = por %p262, %p263
      %p266 = scmp.ne.s32.totalorder %s251, %s265
      %p267 = scmp.eq.s32.totalorder %s31, 0
      %p268 = por %p266, %p267
      %s270 = sadd.s32 %s269, 1
      %p273 = scmp.eq.s32.totalorder %s25, 1
      %p274 = scmp.ne.s32.totalorder %s269, %s271
      %p275 = scmp.eq.s32.totalorder %s25, 0
      %p276 = por %p274, %p275
      %p277 = scmp.ne.s32.totalorder %s269, %s271
      %p278 = scmp.eq.s32.totalorder %s30, 1
      %p279 = por %p277, %p278
      %p280 = scmp.ne.s32.totalorder %s271, %s272
      %p281 = scmp.eq.s32.totalorder %s30, 0
      %p282 = por %p280, %p281
      %p283 = scmp.ne.s32.totalorder %s271, %s272
      %p284 = scmp.eq.s32.totalorder %s31, 1
      %p285 = por %p283, %p284
      %p287 = scmp.ne.s32.totalorder %s272, %s286
      %p288 = scmp.eq.s32.totalorder %s31, 0
      %p289 = por %p287, %p288
      %s291 = sadd.s32 %s290, 1
      %p294 = scmp.eq.s32.totalorder %s25, 1
      %p295 = scmp.ne.s32.totalorder %s290, %s292
      %p296 = scmp.eq.s32.totalorder %s25, 0
      %p297 = por %p295, %p296
      %p298 = scmp.ne.s32.totalorder %s290, %s292
      %p299 = scmp.eq.s32.totalorder %s30, 1
      %p300 = por %p298, %p299
      %p301 = scmp.ne.s32.totalorder %s292, %s293
      %p302 = scmp.eq.s32.totalorder %s30, 0
      %p303 = por %p301, %p302
      %p304 = scmp.ne.s32.totalorder %s292, %s293
      %p305 = scmp.eq.s32.totalorder %s31, 1
      %p306 = por %p304, %p305
      %p308 = scmp.ne.s32.totalorder %s293, %s307
      %p309 = scmp.eq.s32.totalorder %s31, 0
      %p310 = por %p308, %p309
      %s312 = sadd.s32 %s311, 1
      %p315 = scmp.eq.s32.totalorder %s25, 1
      %p316 = scmp.ne.s32.totalorder %s311, %s313
      %p317 = scmp.eq.s32.totalorder %s25, 0
      %p318 = por %p316, %p317
      %p319 = scmp.ne.s32.totalorder %s311, %s313
      %p320 = scmp.eq.s32.totalorder %s30, 1
      %p321 = por %p319, %p320
      %p322 = scmp.ne.s32.totalorder %s313, %s314
      %p323 = scmp.eq.s32.totalorder %s30, 0
      %p324 = por %p322, %p323
      %p325 = scmp.ne.s32.totalorder %s313, %s314
      %p326 = scmp.eq.s32.totalorder %s31, 1
      %p327 = por %p325, %p326
      %p329 = scmp.ne.s32.totalorder %s314, %s328
      %p330 = scmp.eq.s32.totalorder %s31, 0
      %p331 = por %p329, %p330
      %s333 = sadd.s32 %s332, 1
      %p336 = scmp.eq.s32.totalorder %s25, 1
      %p337 = scmp.ne.s32.totalorder %s332, %s334
      %p338 = scmp.eq.s32.totalorder %s25, 0
      %p339 = por %p337, %p338
      %p340 = scmp.ne.s32.totalorder %s332, %s334
      %p341 = scmp.eq.s32.totalorder %s30, 1
      %p342 = por %p340, %p341
      %p343 = scmp.ne.s32.totalorder %s334, %s335
      %p344 = scmp.eq.s32.totalorder %s30, 0
      %p345 = por %p343, %p344
      %p346 = scmp.ne.s32.totalorder %s334, %s335
      %p347 = scmp.eq.s32.totalorder %s31, 1
      %p348 = por %p346, %p347
      %p350 = scmp.ne.s32.totalorder %s335, %s349
      %p351 = scmp.eq.s32.totalorder %s31, 0
      %p352 = por %p350, %p351
      %s354 = sadd.s32 %s353, 1
      %p357 = scmp.eq.s32.totalorder %s25, 1
      %p358 = scmp.ne.s32.totalorder %s353, %s355
      %p359 = scmp.eq.s32.totalorder %s25, 0
      %p360 = por %p358, %p359
      %p361 = scmp.ne.s32.totalorder %s353, %s355
      %p362 = scmp.eq.s32.totalorder %s30, 1
      %p363 = por %p361, %p362
      %p364 = scmp.ne.s32.totalorder %s355, %s356
      %p365 = scmp.eq.s32.totalorder %s30, 0
      %p366 = por %p364, %p365
      %p367 = scmp.ne.s32.totalorder %s355, %s356
      %p368 = scmp.eq.s32.totalorder %s31, 1
      %p369 = por %p367, %p368
      %p371 = scmp.ne.s32.totalorder %s356, %s370
      %p372 = scmp.eq.s32.totalorder %s31, 0
      %p373 = por %p371, %p372
      %s374 = ssub.s32 %s25, %s32
      %p375 = scmp.eq.s32.totalorder %s374, 0
      %s377 = sadd.s32 %s376, 1
      %s378 = scalar_select %p375, %s376, %s377
      %p381 = pneg %p375
      %p382 = scmp.eq.s32.totalorder %s25, 1
      %p383 = por %p381, %p382
      %p384 = scmp.ne.s32.totalorder %s376, %s379
      %p385 = scmp.eq.s32.totalorder %s25, 0
      %p386 = por %p384, %p385
      %p387 = scmp.ne.s32.totalorder %s376, %s379
      %p388 = scmp.eq.s32.totalorder %s30, 1
      %p389 = por %p387, %p388
      %p390 = scmp.ne.s32.totalorder %s379, %s380
      %p391 = scmp.eq.s32.totalorder %s30, 0
      %p392 = por %p390, %p391
      %p393 = scmp.ne.s32.totalorder %s379, %s380
      %p394 = scmp.eq.s32.totalorder %s31, 1
      %p395 = por %p393, %p394
      %p397 = scmp.ne.s32.totalorder %s380, %s396
      %p398 = scmp.eq.s32.totalorder %s31, 0
      %p399 = por %p397, %p398
      %p400 = scmp.le.s32.totalorder 1, %s25
      %p401 = scmp.lt.s32.totalorder %s25, 3
      %p402 = pnand %p400, %p401
      %p403 = pneg %p402
      // Predicated region
      $region9: #{tpu_custom_call.1} parent=5 // pred_check
        _
      $region10: #{tpu_custom_call.1} parent=5 // pred_check_branch
        %405 = sbr.rel (%p402) target = $region12
      $region11: #{tpu_custom_call.1} parent=5 // pred_region
        %s406 = ssub.s32 %s25, 1
        // Predicated region
        $region13: #{tpu_custom_call.1} parent=11 // pred_check
          %p407 = pneg %p72
        $region14: #{tpu_custom_call.1} parent=11 // pred_check_branch
          %409 = sbr.rel (%p407) target = $region16
        $region15: #{tpu_custom_call.1} parent=11 // pred_region
          _
        $region16: #{tpu_custom_call.1} parent=11 // pred_fallthru
          _
        // Predicated region
        $region17: #{tpu_custom_call.1} parent=11 // pred_check
          %p410 = pneg %p93
        $region18: #{tpu_custom_call.1} parent=11 // pred_check_branch
          %412 = sbr.rel (%p410) target = $region20
        $region19: #{tpu_custom_call.1} parent=11 // pred_region
          _
        $region20: #{tpu_custom_call.1} parent=11 // pred_fallthru
          _
        // Predicated region
        $region21: #{tpu_custom_call.1} parent=11 // pred_check
          %p413 = pneg %p114
        $region22: #{tpu_custom_call.1} parent=11 // pred_check_branch
          %415 = sbr.rel (%p413) target = $region24
        $region23: #{tpu_custom_call.1} parent=11 // pred_region
          _
        $region24: #{tpu_custom_call.1} parent=11 // pred_fallthru
          _
        // Predicated region
        $region25: #{tpu_custom_call.1} parent=11 // pred_check
          %p416 = pneg %p135
        $region26: #{tpu_custom_call.1} parent=11 // pred_check_branch
          %418 = sbr.rel (%p416) target = $region28
        $region27: #{tpu_custom_call.1} parent=11 // pred_region
          _
        $region28: #{tpu_custom_call.1} parent=11 // pred_fallthru
          _
        // Predicated region
        $region29: #{tpu_custom_call.1} parent=11 // pred_check
          %p419 = pneg %p156
        $region30: #{tpu_custom_call.1} parent=11 // pred_check_branch
          %421 = sbr.rel (%p419) target = $region32
        $region31: #{tpu_custom_call.1} parent=11 // pred_region
          _
        $region32: #{tpu_custom_call.1} parent=11 // pred_fallthru
          _
        // Predicated region
        $region33: #{tpu_custom_call.1} parent=11 // pred_check
          %p422 = pneg %p177
        $region34: #{tpu_custom_call.1} parent=11 // pred_check_branch
          %424 = sbr.rel (%p422) target = $region36
        $region35: #{tpu_custom_call.1} parent=11 // pred_region
          _
        $region36: #{tpu_custom_call.1} parent=11 // pred_fallthru
          _
        // Predicated region
        $region37: #{tpu_custom_call.1} parent=11 // pred_check
          %p425 = pneg %p198
        $region38: #{tpu_custom_call.1} parent=11 // pred_check_branch
          %427 = sbr.rel (%p425) target = $region40
        $region39: #{tpu_custom_call.1} parent=11 // pred_region
          _
        $region40: #{tpu_custom_call.1} parent=11 // pred_fallthru
          _
        // Predicated region
        $region41: #{tpu_custom_call.1} parent=11 // pred_check
          %p428 = pneg %p219
        $region42: #{tpu_custom_call.1} parent=11 // pred_check_branch
          %430 = sbr.rel (%p428) target = $region44
        $region43: #{tpu_custom_call.1} parent=11 // pred_region
          _
        $region44: #{tpu_custom_call.1} parent=11 // pred_fallthru
          _
        // Predicated region
        $region45: #{tpu_custom_call.1} parent=11 // pred_check
          %p431 = pneg %p240
        $region46: #{tpu_custom_call.1} parent=11 // pred_check_branch
          %433 = sbr.rel (%p431) target = $region48
        $region47: #{tpu_custom_call.1} parent=11 // pred_region
          _
        $region48: #{tpu_custom_call.1} parent=11 // pred_fallthru
          _
        // Predicated region
        $region49: #{tpu_custom_call.1} parent=11 // pred_check
          %p434 = pneg %p261
        $region50: #{tpu_custom_call.1} parent=11 // pred_check_branch
          %436 = sbr.rel (%p434) target = $region52
        $region51: #{tpu_custom_call.1} parent=11 // pred_region
          _
        $region52: #{tpu_custom_call.1} parent=11 // pred_fallthru
          _
        // Predicated region
        $region53: #{tpu_custom_call.1} parent=11 // pred_check
          %p437 = pneg %p282
        $region54: #{tpu_custom_call.1} parent=11 // pred_check_branch
          %439 = sbr.rel (%p437) target = $region56
        $region55: #{tpu_custom_call.1} parent=11 // pred_region
          _
        $region56: #{tpu_custom_call.1} parent=11 // pred_fallthru
          _
        // Predicated region
        $region57: #{tpu_custom_call.1} parent=11 // pred_check
          %p440 = pneg %p303
        $region58: #{tpu_custom_call.1} parent=11 // pred_check_branch
          %442 = sbr.rel (%p440) target = $region60
        $region59: #{tpu_custom_call.1} parent=11 // pred_region
          _
        $region60: #{tpu_custom_call.1} parent=11 // pred_fallthru
          _
        // Predicated region
        $region61: #{tpu_custom_call.1} parent=11 // pred_check
          %p443 = pneg %p324
        $region62: #{tpu_custom_call.1} parent=11 // pred_check_branch
          %445 = sbr.rel (%p443) target = $region64
        $region63: #{tpu_custom_call.1} parent=11 // pred_region
          _
        $region64: #{tpu_custom_call.1} parent=11 // pred_fallthru
          _
        // Predicated region
        $region65: #{tpu_custom_call.1} parent=11 // pred_check
          %p446 = pneg %p345
        $region66: #{tpu_custom_call.1} parent=11 // pred_check_branch
          %448 = sbr.rel (%p446) target = $region68
        $region67: #{tpu_custom_call.1} parent=11 // pred_region
          _
        $region68: #{tpu_custom_call.1} parent=11 // pred_fallthru
          _
        // Predicated region
        $region69: #{tpu_custom_call.1} parent=11 // pred_check
          %p449 = pneg %p366
        $region70: #{tpu_custom_call.1} parent=11 // pred_check_branch
          %451 = sbr.rel (%p449) target = $region72
        $region71: #{tpu_custom_call.1} parent=11 // pred_region
          _
        $region72: #{tpu_custom_call.1} parent=11 // pred_fallthru
          _
      $region12: #{tpu_custom_call.1} parent=5 // pred_fallthru
        _
      %p452 = scmp.lt.s32.totalorder %s25, 2
      // Predicated region
      $region73: #{tpu_custom_call.1} parent=5 // pred_check
        %p453 = pneg %p452
      $region74: #{tpu_custom_call.1} parent=5 // pred_check_branch
        %455 = sbr.rel (%p453) target = $region76
      $region75: #{tpu_custom_call.1} parent=5 // pred_region
        // Predicated region
        $region77: #{tpu_custom_call.1} parent=75 // pred_check
          %p456 = pneg %p45
        $region78: #{tpu_custom_call.1} parent=75 // pred_check_branch
          %458 = sbr.rel (%p456) target = $region80
        $region79: #{tpu_custom_call.1} parent=75 // pred_region
          %p459 = scmp.lt.s32.totalorder %s25, 1
          %s460 = scalar_select %p459, %s25, 1
          %s461 = smul.addr %s460, 32
          %s462 = smul.addr %s461, 8
          %s463 = scalar_lea.vmem %s0, %s462
        $region80: #{tpu_custom_call.1} parent=75 // pred_fallthru
          _
      $region76: #{tpu_custom_call.1} parent=5 // pred_fallthru
        _
      %p464 = scmp.le.s32.totalorder 1, %s25
      %p465 = scmp.lt.s32.totalorder %s25, 3
      %p466 = pnand %p464, %p465
      %p467 = pneg %p466
      // Predicated region
      $region81: #{tpu_custom_call.1} parent=5 // pred_check
        _
      $region82: #{tpu_custom_call.1} parent=5 // pred_check_branch
        %469 = sbr.rel (%p466) target = $region84
      $region83: #{tpu_custom_call.1} parent=5 // pred_region
        %s470 = ssub.s32 %s25, 1
        %p471 = scmp.lt.s32.totalorder %s30, 1
        %s472 = scalar_select %p471, %s30, 1
        %s473 = smul.addr %s472, 32
        %s474 = smul.addr %s473, 8
        %s475 = scalar_lea.vmem %s0, %s474
        %p476 = pneg %p51
        %p477 = pneg %p48
        %p478 = pneg %p72
        %p479 = pneg %p69
        %p480 = pneg %p93
        %p481 = pneg %p90
        %p482 = pneg %p114
        %p483 = pneg %p111
        %p484 = pneg %p135
        %p485 = pneg %p132
        %p486 = pneg %p156
        %p487 = pneg %p153
        %p488 = pneg %p177
        %p489 = pneg %p174
        %p490 = pneg %p198
        %p491 = pneg %p195
        %p492 = pneg %p219
        %p493 = pneg %p216
        %p494 = pneg %p240
        %p495 = pneg %p237
        %p496 = pneg %p261
        %p497 = pneg %p258
        %p498 = pneg %p282
        %p499 = pneg %p279
        %p500 = pneg %p303
        %p501 = pneg %p300
        %p502 = pneg %p324
        %p503 = pneg %p321
        %p504 = pneg %p345
        %p505 = pneg %p342
        %p506 = pneg %p366
        %p507 = pneg %p363
        %p508 = pneg %p392
        %p509 = pneg %p389
        %s510 = sand.u32 %s379, 1
        %s511 = scalar_lea.sflag [#allocation5], %s510
        %s512 = sand.u32 %s379, 1
        %s513 = smul.addr %s512, 256
        %s514 = scalar_lea.vmem [#allocation4], %s513
        %p515 = scmp.lt.s32.totalorder %s30, 1
        %s516 = scalar_select %p515, %s30, 1
        %s517 = smul.addr %s516, 32
        %s518 = smul.addr %s517, 8
        %s519 = scalar_lea.vmem %s0, %s518
        %vm520 = vcmask 523264
        %521 = vst.msk [vmem:[#allocation2] sm:$0xff] %vm520, 0.0
        %522 = vst.msk [vmem:[#allocation2 + $0x8] sm:$0xff] %vm520, 0.0
        %523 = vst.msk [vmem:[#allocation2 + $0x10] sm:$0xff] %vm520, 0.0
        %s524 = scalar_lea.vmem [#allocation2], 408
        %525 = vst.msk [vmem:[%s524] sm:$0xff] %vm520, 0.0
        %526 = vst.msk [vmem:[%s524 + $0x8] sm:$0xff] %vm520, 0.0
        %527 = vst.msk [vmem:[%s524 + $0x10] sm:$0xff] %vm520, 0.0
        %vm528 = vcmask 516096
        %529 = vst.msk [vmem:[#allocation2] sm:$0x1] %vm528, 0.0
        %530 = vst.msk [vmem:[#allocation2 + $0x18] sm:$0x1] %vm528, 0.0
        %531 = vst.msk [vmem:[#allocation2 + $0x30] sm:$0x1] %vm528, 0.0
        %532 = vst.msk [vmem:[#allocation2 + $0x48] sm:$0x1] %vm528, 0.0
        %533 = vst.msk [vmem:[#allocation2 + $0x60] sm:$0x1] %vm528, 0.0
        %534 = vst.msk [vmem:[#allocation2 + $0x78] sm:$0x1] %vm528, 0.0
        %535 = vst.msk [vmem:[#allocation2 + $0x90] sm:$0x1] %vm528, 0.0
        %536 = vst.msk [vmem:[#allocation2 + $0xa8] sm:$0x1] %vm528, 0.0
        %537 = vst.msk [vmem:[#allocation2 + $0xc0] sm:$0x1] %vm528, 0.0
        %538 = vst.msk [vmem:[#allocation2 + $0xd8] sm:$0x1] %vm528, 0.0
        %539 = vst.msk [vmem:[#allocation2 + $0xf0] sm:$0x1] %vm528, 0.0
        %540 = vst.msk [vmem:[#allocation2 + $0x108] sm:$0x1] %vm528, 0.0
        %541 = vst.msk [vmem:[#allocation2 + $0x120] sm:$0x1] %vm528, 0.0
        %542 = vst.msk [vmem:[#allocation2 + $0x138] sm:$0x1] %vm528, 0.0
        %543 = vst.msk [vmem:[#allocation2 + $0x150] sm:$0x1] %vm528, 0.0
        %544 = vst.msk [vmem:[#allocation2 + $0x168] sm:$0x1] %vm528, 0.0
        %545 = vst.msk [vmem:[#allocation2 + $0x180] sm:$0x1] %vm528, 0.0
        %546 = vst.msk [vmem:[#allocation2 + $0x198] sm:$0x1] %vm528, 0.0
        %547 = vst.msk [vmem:[#allocation2 + $0x11] sm:$0x1] %vm528, 0.0
        %548 = vst.msk [vmem:[#allocation2 + $0x29] sm:$0x1] %vm528, 0.0
        %549 = vst.msk [vmem:[#allocation2 + $0x41] sm:$0x1] %vm528, 0.0
        %550 = vst.msk [vmem:[#allocation2 + $0x59] sm:$0x1] %vm528, 0.0
        %551 = vst.msk [vmem:[#allocation2 + $0x71] sm:$0x1] %vm528, 0.0
        %552 = vst.msk [vmem:[#allocation2 + $0x89] sm:$0x1] %vm528, 0.0
        %553 = vst.msk [vmem:[#allocation2 + $0xa1] sm:$0x1] %vm528, 0.0
        %554 = vst.msk [vmem:[#allocation2 + $0xb9] sm:$0x1] %vm528, 0.0
        %555 = vst.msk [vmem:[#allocation2 + $0xd1] sm:$0x1] %vm528, 0.0
        %556 = vst.msk [vmem:[#allocation2 + $0xe9] sm:$0x1] %vm528, 0.0
        %557 = vst.msk [vmem:[#allocation2 + $0x101] sm:$0x1] %vm528, 0.0
        %558 = vst.msk [vmem:[#allocation2 + $0x119] sm:$0x1] %vm528, 0.0
        %559 = vst.msk [vmem:[#allocation2 + $0x131] sm:$0x1] %vm528, 0.0
        %560 = vst.msk [vmem:[#allocation2 + $0x149] sm:$0x1] %vm528, 0.0
        %561 = vst.msk [vmem:[#allocation2 + $0x161] sm:$0x1] %vm528, 0.0
        %562 = vst.msk [vmem:[#allocation2 + $0x179] sm:$0x1] %vm528, 0.0
        %563 = vst.msk [vmem:[#allocation2 + $0x191] sm:$0x1] %vm528, 0.0
        %564 = vst.msk [vmem:[#allocation2 + $0x1a9] sm:$0x1] %vm528, 0.0
        %v565 = vld [vmem:[%s519] sm:$0xff]
        %v566 = vld [vmem:[%s519 + $0x8] sm:$0xff]
        %v567 = vld [vmem:[%s519 + $0x10] sm:$0xff]
        %v568 = vld [vmem:[%s519 + $0x18] sm:$0xff]
        %v569 = vld [vmem:[%s519 + $0x20] sm:$0xff]
        %v570 = vld [vmem:[%s519 + $0x28] sm:$0xff]
        %v571 = vld [vmem:[%s519 + $0x30] sm:$0xff]
        %v572 = vld [vmem:[%s519 + $0x38] sm:$0xff]
        %v573 = vld [vmem:[%s519 + $0x40] sm:$0xff]
        %v574 = vld [vmem:[%s519 + $0x48] sm:$0xff]
        %v575 = vld [vmem:[%s519 + $0x50] sm:$0xff]
        %v576 = vld [vmem:[%s519 + $0x58] sm:$0xff]
        %v577 = vld [vmem:[%s519 + $0x60] sm:$0xff]
        %v578 = vld [vmem:[%s519 + $0x68] sm:$0xff]
        %v579 = vld [vmem:[%s519 + $0x70] sm:$0xff]
        %v580 = vld [vmem:[%s519 + $0x78] sm:$0xff]
        %v581 = vld [vmem:[%s519 + $0x80] sm:$0xff]
        %v582 = vld [vmem:[%s519 + $0x88] sm:$0xff]
        %v583 = vld [vmem:[%s519 + $0x90] sm:$0xff]
        %v584 = vld [vmem:[%s519 + $0x98] sm:$0xff]
        %v585 = vld [vmem:[%s519 + $0xa0] sm:$0xff]
        %v586 = vld [vmem:[%s519 + $0xa8] sm:$0xff]
        %v587 = vld [vmem:[%s519 + $0xb0] sm:$0xff]
        %v588 = vld [vmem:[%s519 + $0xb8] sm:$0xff]
        %v589 = vld [vmem:[%s519 + $0xc0] sm:$0xff]
        %v590 = vld [vmem:[%s519 + $0xc8] sm:$0xff]
        %v591 = vld [vmem:[%s519 + $0xd0] sm:$0xff]
        %v592 = vld [vmem:[%s519 + $0xd8] sm:$0xff]
        %v593 = vld [vmem:[%s519 + $0xe0] sm:$0xff]
        %v594 = vld [vmem:[%s519 + $0xe8] sm:$0xff]
        %v595 = vld [vmem:[%s519 + $0xf0] sm:$0xff]
        %v596 = vld [vmem:[%s519 + $0xf8] sm:$0xff]
        %v597 = vsel %vm520, %v565, 0.0
        %v598 = vsel %vm520, %v566, 0.0
        %v599 = vadd.f32 %v597, %v598
        %v600 = vsel %vm520, %v567, 0.0
        %v601 = vadd.f32 %v599, %v600
        %v602 = vsel %vm520, %v568, 0.0
        %v603 = vadd.f32 %v601, %v602
        %v604 = vsel %vm520, %v569, 0.0
        %v605 = vadd.f32 %v603, %v604
        %v606 = vsel %vm520, %v570, 0.0
        %v607 = vadd.f32 %v605, %v606
        %v608 = vsel %vm520, %v571, 0.0
        %v609 = vadd.f32 %v607, %v608
        %v610 = vsel %vm520, %v572, 0.0
        %v611 = vadd.f32 %v609, %v610
        %v612 = vsel %vm520, %v573, 0.0
        %v613 = vadd.f32 %v611, %v612
        %v614 = vsel %vm520, %v574, 0.0
        %v615 = vadd.f32 %v613, %v614
        %v616 = vsel %vm520, %v575, 0.0
        %v617 = vadd.f32 %v615, %v616
        %v618 = vsel %vm520, %v576, 0.0
        %v619 = vadd.f32 %v617, %v618
        %v620 = vsel %vm520, %v577, 0.0
        %v621 = vadd.f32 %v619, %v620
        %v622 = vsel %vm520, %v578, 0.0
        %v623 = vadd.f32 %v621, %v622
        %v624 = vsel %vm520, %v579, 0.0
        %v625 = vadd.f32 %v623, %v624
        %v626 = vsel %vm520, %v580, 0.0
        %v627 = vadd.f32 %v625, %v626
        %v628 = vsel %vm520, %v581, 0.0
        %v629 = vadd.f32 %v627, %v628
        %v630 = vsel %vm520, %v582, 0.0
        %v631 = vadd.f32 %v629, %v630
        %v632 = vsel %vm520, %v583, 0.0
        %v633 = vadd.f32 %v631, %v632
        %v634 = vsel %vm520, %v584, 0.0
        %v635 = vadd.f32 %v633, %v634
        %v636 = vsel %vm520, %v585, 0.0
        %v637 = vadd.f32 %v635, %v636
        %v638 = vsel %vm520, %v586, 0.0
        %v639 = vadd.f32 %v637, %v638
        %v640 = vsel %vm520, %v587, 0.0
        %v641 = vadd.f32 %v639, %v640
        %v642 = vsel %vm520, %v588, 0.0
        %v643 = vadd.f32 %v641, %v642
        %v644 = vsel %vm520, %v589, 0.0
        %v645 = vadd.f32 %v643, %v644
        %v646 = vsel %vm520, %v590, 0.0
        %v647 = vadd.f32 %v645, %v646
        %v648 = vsel %vm520, %v591, 0.0
        %v649 = vadd.f32 %v647, %v648
        %v650 = vsel %vm520, %v592, 0.0
        %v651 = vadd.f32 %v649, %v650
        %v652 = vsel %vm520, %v593, 0.0
        %v653 = vadd.f32 %v651, %v652
        %v654 = vsel %vm520, %v594, 0.0
        %v655 = vadd.f32 %v653, %v654
        %v656 = vsel %vm520, %v595, 0.0
        %v657 = vadd.f32 %v655, %v656
        %v658 = vsel %vm520, %v596, 0.0
        %v659 = vadd.f32 %v657, %v658
        %v660 = vrot.slane %v659, 4
        %v661 = vadd.f32 %v659, %v660
        %v662 = vrot.slane %v661, 2
        %v663 = vadd.f32 %v661, %v662
        %v664 = vrot.slane %v663, 1
        %v665 = vadd.f32 %v663, %v664
        %v666 = vmul.f32 %v565, %v565
        %v667 = vmul.f32 %v566, %v566
        %v668 = vmul.f32 %v567, %v567
        %v669 = vmul.f32 %v568, %v568
        %v670 = vmul.f32 %v569, %v569
        %v671 = vmul.f32 %v570, %v570
        %v672 = vmul.f32 %v571, %v571
        %v673 = vmul.f32 %v572, %v572
        %v674 = vmul.f32 %v573, %v573
        %v675 = vmul.f32 %v574, %v574
        %v676 = vmul.f32 %v575, %v575
        %v677 = vmul.f32 %v576, %v576
        %v678 = vmul.f32 %v577, %v577
        %v679 = vmul.f32 %v578, %v578
        %v680 = vmul.f32 %v579, %v579
        %v681 = vmul.f32 %v580, %v580
        %v682 = vmul.f32 %v581, %v581
        %v683 = vmul.f32 %v582, %v582
        %v684 = vmul.f32 %v583, %v583
        %v685 = vmul.f32 %v584, %v584
        %v686 = vmul.f32 %v585, %v585
        %v687 = vmul.f32 %v586, %v586
        %v688 = vmul.f32 %v587, %v587
        %v689 = vmul.f32 %v588, %v588
        %v690 = vmul.f32 %v589, %v589
        %v691 = vmul.f32 %v590, %v590
        %v692 = vmul.f32 %v591, %v591
        %v693 = vmul.f32 %v592, %v592
        %v694 = vmul.f32 %v593, %v593
        %v695 = vmul.f32 %v594, %v594
        %v696 = vmul.f32 %v595, %v595
        %v697 = vmul.f32 %v596, %v596
        %v698 = vsel %vm520, %v666, 0.0
        %v699 = vsel %vm520, %v667, 0.0
        %v700 = vadd.f32 %v698, %v699
        %v701 = vsel %vm520, %v668, 0.0
        %v702 = vadd.f32 %v700, %v701
        %v703 = vsel %vm520, %v669, 0.0
        %v704 = vadd.f32 %v702, %v703
        %v705 = vsel %vm520, %v670, 0.0
        %v706 = vadd.f32 %v704, %v705
        %v707 = vsel %vm520, %v671, 0.0
        %v708 = vadd.f32 %v706, %v707
        %v709 = vsel %vm520, %v672, 0.0
        %v710 = vadd.f32 %v708, %v709
        %v711 = vsel %vm520, %v673, 0.0
        %v712 = vadd.f32 %v710, %v711
        %v713 = vsel %vm520, %v674, 0.0
        %v714 = vadd.f32 %v712, %v713
        %v715 = vsel %vm520, %v675, 0.0
        %v716 = vadd.f32 %v714, %v715
        %v717 = vsel %vm520, %v676, 0.0
        %v718 = vadd.f32 %v716, %v717
        %v719 = vsel %vm520, %v677, 0.0
        %v720 = vadd.f32 %v718, %v719
        %v721 = vsel %vm520, %v678, 0.0
        %v722 = vadd.f32 %v720, %v721
        %v723 = vsel %vm520, %v679, 0.0
        %v724 = vadd.f32 %v722, %v723
        %v725 = vsel %vm520, %v680, 0.0
        %v726 = vadd.f32 %v724, %v725
        %v727 = vsel %vm520, %v681, 0.0
        %v728 = vadd.f32 %v726, %v727
        %v729 = vsel %vm520, %v682, 0.0
        %v730 = vadd.f32 %v728, %v729
        %v731 = vsel %vm520, %v683, 0.0
        %v732 = vadd.f32 %v730, %v731
        %v733 = vsel %vm520, %v684, 0.0
        %v734 = vadd.f32 %v732, %v733
        %v735 = vsel %vm520, %v685, 0.0
        %v736 = vadd.f32 %v734, %v735
        %v737 = vsel %vm520, %v686, 0.0
        %v738 = vadd.f32 %v736, %v737
        %v739 = vsel %vm520, %v687, 0.0
        %v740 = vadd.f32 %v738, %v739
        %v741 = vsel %vm520, %v688, 0.0
        %v742 = vadd.f32 %v740, %v741
        %v743 = vsel %vm520, %v689, 0.0
        %v744 = vadd.f32 %v742, %v743
        %v745 = vsel %vm520, %v690, 0.0
        %v746 = vadd.f32 %v744, %v745
        %v747 = vsel %vm520, %v691, 0.0
        %v748 = vadd.f32 %v746, %v747
        %v749 = vsel %vm520, %v692, 0.0
        %v750 = vadd.f32 %v748, %v749
        %v751 = vsel %vm520, %v693, 0.0
        %v752 = vadd.f32 %v750, %v751
        %v753 = vsel %vm520, %v694, 0.0
        %v754 = vadd.f32 %v752, %v753
        %v755 = vsel %vm520, %v695, 0.0
        %v756 = vadd.f32 %v754, %v755
        %v757 = vsel %vm520, %v696, 0.0
        %v758 = vadd.f32 %v756, %v757
        %v759 = vsel %vm520, %v697, 0.0
        %v760 = vadd.f32 %v758, %v759
        %v761 = vrot.slane %v760, 4
        %v762 = vadd.f32 %v760, %v761
        %v763 = vrot.slane %v762, 2
        %v764 = vadd.f32 %v762, %v763
        %v765 = vrot.slane %v764, 1
        %v766 = vadd.f32 %v764, %v765
        %vm767 = vcmask 1040384
        %v768 = vsel %vm767, %v665, %v766
        %v769 = vld [vmem:[%s9] sm:$0xff]
        %v770 = vld [vmem:[%s9 + $0x8] sm:$0xff]
        %v771 = vld [vmem:[%s9 + $0x10] sm:$0xff]
        %v772 = vld [vmem:[%s9 + $0x18] sm:$0xff]
        %v773 = vld [vmem:[%s9 + $0x20] sm:$0xff]
        %v774 = vld [vmem:[%s9 + $0x28] sm:$0xff]
        %v775 = vld [vmem:[%s9 + $0x30] sm:$0xff]
        %v776 = vld [vmem:[%s9 + $0x38] sm:$0xff]
        %v778 = vsel %vm520, %v768, 0
        %780 = vmatpush.msra.mxu0 0.0
        %781 = vmatpush.msra.mxu0 0.0
        %782 = vmatpush.msra.mxu0 0.0
        %783 = vmatpush.msra.mxu0 0.0
        %784 = vmatpush.msra.mxu0 0.0
        %785 = vmatpush.msra.mxu0 0.0
        %786 = vmatpush.msra.mxu0 0.0
        %787 = vmatpush.msra.mxu0 0.0
        %788 = vmatpush.msra.mxu0 %v776
        %789 = vmatpush.msra.mxu0 %v775
        %790 = vmatpush.msra.mxu0 %v774
        %791 = vmatpush.msra.mxu0 %v773
        %792 = vmatpush.msra.mxu0 %v772
        %793 = vmatpush.msra.mxu0 %v771
        %794 = vmatpush.msra.mxu0 %v770
        %795 = vmatpush.msra.mxu0 %v769
        %796 = vmatmul.f32.gmra.mxu0 %v778
        %v797 = vpop.f32.mrf.mxu0
        %v798 = vadd.f32 0.0, %v797
        %799 = vdwg.mxu0
        %v800 = vmul.f32 %v798, %v798
        %v802 = vrot.slane %v800, 7
        %v804 = vsub.f32 %v798, %v802
        %v805 = vadd.f32 %v804, 1e-05
        %v806 = vrsqrt.pop %v805
        %v807 = vmul.f32 %v806, %v805
        %v808 = vmul.f32 %v807, %v806
        %v809 = vmul.f32 0.5, %v808
        %v810 = vsub.f32 1.5, %v809
        %v811 = vmul.f32 %v806, %v810
        %vm812 = vweird.f32 %v805
        %vm813 = vweird.f32 %v806
        %vm814 = vmor %vm812, %vm813
        %v815 = vsel %vm814, %v806, %v811
        %v816 = vperm.slane %v798, 0
        %v817 = vsub.f32 %v565, %v816
        %v818 = vsub.f32 %v566, %v816
        %v819 = vsub.f32 %v567, %v816
        %v820 = vsub.f32 %v568, %v816
        %v821 = vsub.f32 %v569, %v816
        %v822 = vsub.f32 %v570, %v816
        %v823 = vsub.f32 %v571, %v816
        %v824 = vsub.f32 %v572, %v816
        %v825 = vsub.f32 %v573, %v816
        %v826 = vsub.f32 %v574, %v816
        %v827 = vsub.f32 %v575, %v816
        %v828 = vsub.f32 %v576, %v816
        %v829 = vsub.f32 %v577, %v816
        %v830 = vsub.f32 %v578, %v816
        %v831 = vsub.f32 %v579, %v816
        %v832 = vsub.f32 %v580, %v816
        %v833 = vsub.f32 %v581, %v816
        %v834 = vsub.f32 %v582, %v816
        %v835 = vsub.f32 %v583, %v816
        %v836 = vsub.f32 %v584, %v816
        %v837 = vsub.f32 %v585, %v816
        %v838 = vsub.f32 %v586, %v816
        %v839 = vsub.f32 %v587, %v816
        %v840 = vsub.f32 %v588, %v816
        %v841 = vsub.f32 %v589, %v816
        %v842 = vsub.f32 %v590, %v816
        %v843 = vsub.f32 %v591, %v816
        %v844 = vsub.f32 %v592, %v816
        %v845 = vsub.f32 %v593, %v816
        %v846 = vsub.f32 %v594, %v816
        %v847 = vsub.f32 %v595, %v816
        %v848 = vsub.f32 %v596, %v816
        %v849 = vld [vmem:[%s1] sm:$0x1]
        %v851 = vperm.slane %v849, 0
        %v853 = vmul.f32 %v815, %v851
        %v854 = vperm.slane %v853, 1
        %v855 = vmul.f32 %v817, %v854
        %v856 = vmul.f32 %v818, %v854
        %v857 = vmul.f32 %v819, %v854
        %v858 = vmul.f32 %v820, %v854
        %v859 = vmul.f32 %v821, %v854
        %v860 = vmul.f32 %v822, %v854
        %v861 = vmul.f32 %v823, %v854
        %v862 = vmul.f32 %v824, %v854
        %v863 = vmul.f32 %v825, %v854
        %v864 = vmul.f32 %v826, %v854
        %v865 = vmul.f32 %v827, %v854
        %v866 = vmul.f32 %v828, %v854
        %v867 = vmul.f32 %v829, %v854
        %v868 = vmul.f32 %v830, %v854
        %v869 = vmul.f32 %v831, %v854
        %v870 = vmul.f32 %v832, %v854
        %v871 = vmul.f32 %v833, %v854
        %v872 = vmul.f32 %v834, %v854
        %v873 = vmul.f32 %v835, %v854
        %v874 = vmul.f32 %v836, %v854
        %v875 = vmul.f32 %v837, %v854
        %v876 = vmul.f32 %v838, %v854
        %v877 = vmul.f32 %v839, %v854
        %v878 = vmul.f32 %v840, %v854
        %v879 = vmul.f32 %v841, %v854
        %v880 = vmul.f32 %v842, %v854
        %v881 = vmul.f32 %v843, %v854
        %v882 = vmul.f32 %v844, %v854
        %v883 = vmul.f32 %v845, %v854
        %v884 = vmul.f32 %v846, %v854
        %v885 = vmul.f32 %v847, %v854
        %v886 = vmul.f32 %v848, %v854
        %v887 = vld [vmem:[%s2] sm:$0x1]
        %v889 = vperm.slane %v887, 0
        %v891 = vadd.f32 %v855, %v889
        %v892 = vadd.f32 %v856, %v889
        %v893 = vadd.f32 %v857, %v889
        %v894 = vadd.f32 %v858, %v889
        %v895 = vadd.f32 %v859, %v889
        %v896 = vadd.f32 %v860, %v889
        %v897 = vadd.f32 %v861, %v889
        %v898 = vadd.f32 %v862, %v889
        %v899 = vadd.f32 %v863, %v889
        %v900 = vadd.f32 %v864, %v889
        %v901 = vadd.f32 %v865, %v889
        %v902 = vadd.f32 %v866, %v889
        %v903 = vadd.f32 %v867, %v889
        %v904 = vadd.f32 %v868, %v889
        %v905 = vadd.f32 %v869, %v889
        %v906 = vadd.f32 %v870, %v889
        %v907 = vadd.f32 %v871, %v889
        %v908 = vadd.f32 %v872, %v889
        %v909 = vadd.f32 %v873, %v889
        %v910 = vadd.f32 %v874, %v889
        %v911 = vadd.f32 %v875, %v889
        %v912 = vadd.f32 %v876, %v889
        %v913 = vadd.f32 %v877, %v889
        %v914 = vadd.f32 %v878, %v889
        %v915 = vadd.f32 %v879, %v889
        %v916 = vadd.f32 %v880, %v889
        %v917 = vadd.f32 %v881, %v889
        %v918 = vadd.f32 %v882, %v889
        %v919 = vadd.f32 %v883, %v889
        %v920 = vadd.f32 %v884, %v889
        %v921 = vadd.f32 %v885, %v889
        %v922 = vadd.f32 %v886, %v889
        %v923 = vmax.f32 %v891, 0.0
        %v924 = vmax.f32 %v892, 0.0
        %v925 = vmax.f32 %v893, 0.0
        %v926 = vmax.f32 %v894, 0.0
        %v927 = vmax.f32 %v895, 0.0
        %v928 = vmax.f32 %v896, 0.0
        %v929 = vmax.f32 %v897, 0.0
        %v930 = vmax.f32 %v898, 0.0
        %v931 = vmax.f32 %v899, 0.0
        %v932 = vmax.f32 %v900, 0.0
        %v933 = vmax.f32 %v901, 0.0
        %v934 = vmax.f32 %v902, 0.0
        %v935 = vmax.f32 %v903, 0.0
        %v936 = vmax.f32 %v904, 0.0
        %v937 = vmax.f32 %v905, 0.0
        %v938 = vmax.f32 %v906, 0.0
        %v939 = vmax.f32 %v907, 0.0
        %v940 = vmax.f32 %v908, 0.0
        %v941 = vmax.f32 %v909, 0.0
        %v942 = vmax.f32 %v910, 0.0
        %v943 = vmax.f32 %v911, 0.0
        %v944 = vmax.f32 %v912, 0.0
        %v945 = vmax.f32 %v913, 0.0
        %v946 = vmax.f32 %v914, 0.0
        %v947 = vmax.f32 %v915, 0.0
        %v948 = vmax.f32 %v916, 0.0
        %v949 = vmax.f32 %v917, 0.0
        %v950 = vmax.f32 %v918, 0.0
        %v951 = vmax.f32 %v919, 0.0
        %v952 = vmax.f32 %v920, 0.0
        %v953 = vmax.f32 %v921, 0.0
        %v954 = vmax.f32 %v922, 0.0
        %s955 = scalar_lea.vmem [#allocation2], 24
        %956 = vst.msk [vmem:[%s955 + $0x1] sm:$0xff] %vm520, %v923
        %957 = vst.msk [vmem:[%s955 + $0x9] sm:$0xff] %vm520, %v924
        %958 = vst.msk [vmem:[%s955 + $0x19] sm:$0xff] %vm520, %v925
        %959 = vst.msk [vmem:[%s955 + $0x21] sm:$0xff] %vm520, %v926
        %960 = vst.msk [vmem:[%s955 + $0x31] sm:$0xff] %vm520, %v927
        %961 = vst.msk [vmem:[%s955 + $0x39] sm:$0xff] %vm520, %v928
        %962 = vst.msk [vmem:[%s955 + $0x49] sm:$0xff] %vm520, %v929
        %963 = vst.msk [vmem:[%s955 + $0x51] sm:$0xff] %vm520, %v930
        %964 = vst.msk [vmem:[%s955 + $0x61] sm:$0xff] %vm520, %v931
        %965 = vst.msk [vmem:[%s955 + $0x69] sm:$0xff] %vm520, %v932
        %966 = vst.msk [vmem:[%s955 + $0x79] sm:$0xff] %vm520, %v933
        %967 = vst.msk [vmem:[%s955 + $0x81] sm:$0xff] %vm520, %v934
        %968 = vst.msk [vmem:[%s955 + $0x91] sm:$0xff] %vm520, %v935
        %969 = vst.msk [vmem:[%s955 + $0x99] sm:$0xff] %vm520, %v936
        %970 = vst.msk [vmem:[%s955 + $0xa9] sm:$0xff] %vm520, %v937
        %971 = vst.msk [vmem:[%s955 + $0xb1] sm:$0xff] %vm520, %v938
        %972 = vst.msk [vmem:[%s955 + $0xc1] sm:$0xff] %vm520, %v939
        %973 = vst.msk [vmem:[%s955 + $0xc9] sm:$0xff] %vm520, %v940
        %974 = vst.msk [vmem:[%s955 + $0xd9] sm:$0xff] %vm520, %v941
        %975 = vst.msk [vmem:[%s955 + $0xe1] sm:$0xff] %vm520, %v942
        %976 = vst.msk [vmem:[%s955 + $0xf1] sm:$0xff] %vm520, %v943
        %977 = vst.msk [vmem:[%s955 + $0xf9] sm:$0xff] %vm520, %v944
        %978 = vst.msk [vmem:[%s955 + $0x109] sm:$0xff] %vm520, %v945
        %979 = vst.msk [vmem:[%s955 + $0x111] sm:$0xff] %vm520, %v946
        %980 = vst.msk [vmem:[%s955 + $0x121] sm:$0xff] %vm520, %v947
        %981 = vst.msk [vmem:[%s955 + $0x129] sm:$0xff] %vm520, %v948
        %982 = vst.msk [vmem:[%s955 + $0x139] sm:$0xff] %vm520, %v949
        %983 = vst.msk [vmem:[%s955 + $0x141] sm:$0xff] %vm520, %v950
        %984 = vst.msk [vmem:[%s955 + $0x151] sm:$0xff] %vm520, %v951
        %985 = vst.msk [vmem:[%s955 + $0x159] sm:$0xff] %vm520, %v952
        %986 = vst.msk [vmem:[%s955 + $0x169] sm:$0xff] %vm520, %v953
        %987 = vst.msk [vmem:[%s955 + $0x171] sm:$0xff] %vm520, %v954
        %v988 = vld [vmem:[#allocation2] sm:$0xff]
        %v989 = vld [vmem:[#allocation2 + $0x8] sm:$0xff]
        %v990 = vld [vmem:[#allocation2 + $0x18] sm:$0xff]
        %v991 = vld [vmem:[#allocation2 + $0x20] sm:$0xff]
        %v992 = vld [vmem:[#allocation2 + $0x30] sm:$0xff]
        %v993 = vld [vmem:[#allocation2 + $0x38] sm:$0xff]
        %v994 = vld [vmem:[#allocation2 + $0x48] sm:$0xff]
        %v995 = vld [vmem:[#allocation2 + $0x50] sm:$0xff]
        %v996 = vld [vmem:[#allocation2 + $0x60] sm:$0xff]
        %v997 = vld [vmem:[#allocation2 + $0x68] sm:$0xff]
        %v998 = vld [vmem:[#allocation2 + $0x78] sm:$0xff]
        %v999 = vld [vmem:[#allocation2 + $0x80] sm:$0xff]
        %v1000 = vld [vmem:[#allocation2 + $0x90] sm:$0xff]
        %v1001 = vld [vmem:[#allocation2 + $0x98] sm:$0xff]
        %v1002 = vld [vmem:[#allocation2 + $0xa8] sm:$0xff]
        %v1003 = vld [vmem:[#allocation2 + $0xb0] sm:$0xff]
        %v1004 = vld [vmem:[#allocation2 + $0xc0] sm:$0xff]
        %v1005 = vld [vmem:[#allocation2 + $0xc8] sm:$0xff]
        %v1006 = vld [vmem:[#allocation2 + $0xd8] sm:$0xff]
        %v1007 = vld [vmem:[#allocation2 + $0xe0] sm:$0xff]
        %v1008 = vld [vmem:[#allocation2 + $0xf0] sm:$0xff]
        %v1009 = vld [vmem:[#allocation2 + $0xf8] sm:$0xff]
        %v1010 = vld [vmem:[#allocation2 + $0x108] sm:$0xff]
        %v1011 = vld [vmem:[#allocation2 + $0x110] sm:$0xff]
        %v1012 = vld [vmem:[#allocation2 + $0x120] sm:$0xff]
        %v1013 = vld [vmem:[#allocation2 + $0x128] sm:$0xff]
        %v1014 = vld [vmem:[#allocation2 + $0x138] sm:$0xff]
        %v1015 = vld [vmem:[#allocation2 + $0x140] sm:$0xff]
        %v1016 = vld [vmem:[#allocation2 + $0x150] sm:$0xff]
        %v1017 = vld [vmem:[#allocation2 + $0x158] sm:$0xff]
        %v1018 = vld [vmem:[#allocation2 + $0x168] sm:$0xff]
        %v1019 = vld [vmem:[#allocation2 + $0x170] sm:$0xff]
        %v1020 = vld [vmem:[#allocation2 + $0x1] sm:$0xff]
        %v1021 = vld [vmem:[#allocation2 + $0x9] sm:$0xff]
        %v1022 = vld [vmem:[#allocation2 + $0x19] sm:$0xff]
        %v1023 = vld [vmem:[#allocation2 + $0x21] sm:$0xff]
        %v1024 = vld [vmem:[#allocation2 + $0x31] sm:$0xff]
        %v1025 = vld [vmem:[#allocation2 + $0x39] sm:$0xff]
        %v1026 = vld [vmem:[#allocation2 + $0x49] sm:$0xff]
        %v1027 = vld [vmem:[#allocation2 + $0x51] sm:$0xff]
        %v1028 = vld [vmem:[#allocation2 + $0x61] sm:$0xff]
        %v1029 = vld [vmem:[#allocation2 + $0x69] sm:$0xff]
        %v1030 = vld [vmem:[#allocation2 + $0x79] sm:$0xff]
        %v1031 = vld [vmem:[#allocation2 + $0x81] sm:$0xff]
        %v1032 = vld [vmem:[#allocation2 + $0x91] sm:$0xff]
        %v1033 = vld [vmem:[#allocation2 + $0x99] sm:$0xff]
        %v1034 = vld [vmem:[#allocation2 + $0xa9] sm:$0xff]
        %v1035 = vld [vmem:[#allocation2 + $0xb1] sm:$0xff]
        %v1036 = vld [vmem:[#allocation2 + $0xc1] sm:$0xff]
        %v1037 = vld [vmem:[#allocation2 + $0xc9] sm:$0xff]
        %v1038 = vld [vmem:[#allocation2 + $0xd9] sm:$0xff]
        %v1039 = vld [vmem:[#allocation2 + $0xe1] sm:$0xff]
        %v1040 = vld [vmem:[#allocation2 + $0xf1] sm:$0xff]
        %v1041 = vld [vmem:[#allocation2 + $0xf9] sm:$0xff]
        %v1042 = vld [vmem:[#allocation2 + $0x109] sm:$0xff]
        %v1043 = vld [vmem:[#allocation2 + $0x111] sm:$0xff]
        %v1044 = vld [vmem:[#allocation2 + $0x121] sm:$0xff]
        %v1045 = vld [vmem:[#allocation2 + $0x129] sm:$0xff]
        %v1046 = vld [vmem:[#allocation2 + $0x139] sm:$0xff]
        %v1047 = vld [vmem:[#allocation2 + $0x141] sm:$0xff]
        %v1048 = vld [vmem:[#allocation2 + $0x151] sm:$0xff]
        %v1049 = vld [vmem:[#allocation2 + $0x159] sm:$0xff]
        %v1050 = vld [vmem:[#allocation2 + $0x169] sm:$0xff]
        %v1051 = vld [vmem:[#allocation2 + $0x171] sm:$0xff]
        %1084 = vrot.lane.b32.xlu0 %v1020, 64
        %v1085 = vpop.permute.xlu0 %1084
        %1086 = vrot.lane.b32.xlu0 %v1021, 64
        %v1087 = vpop.permute.xlu0 %1086
        %1088 = vrot.lane.b32.xlu0 %v1022, 64
        %v1089 = vpop.permute.xlu0 %1088
        %1090 = vrot.lane.b32.xlu0 %v1023, 64
        %v1091 = vpop.permute.xlu0 %1090
        %1092 = vrot.lane.b32.xlu0 %v1024, 64
        %v1093 = vpop.permute.xlu0 %1092
        %1094 = vrot.lane.b32.xlu0 %v1025, 64
        %v1095 = vpop.permute.xlu0 %1094
        %1096 = vrot.lane.b32.xlu0 %v1026, 64
        %v1097 = vpop.permute.xlu0 %1096
        %1098 = vrot.lane.b32.xlu0 %v1027, 64
        %v1099 = vpop.permute.xlu0 %1098
        %1100 = vrot.lane.b32.xlu0 %v1028, 64
        %v1101 = vpop.permute.xlu0 %1100
        %1102 = vrot.lane.b32.xlu0 %v1029, 64
        %v1103 = vpop.permute.xlu0 %1102
        %1104 = vrot.lane.b32.xlu0 %v1030, 64
        %v1105 = vpop.permute.xlu0 %1104
        %1106 = vrot.lane.b32.xlu0 %v1031, 64
        %v1107 = vpop.permute.xlu0 %1106
        %1108 = vrot.lane.b32.xlu0 %v1032, 64
        %v1109 = vpop.permute.xlu0 %1108
        %1110 = vrot.lane.b32.xlu0 %v1033, 64
        %v1111 = vpop.permute.xlu0 %1110
        %1112 = vrot.lane.b32.xlu0 %v1034, 64
        %v1113 = vpop.permute.xlu0 %1112
        %1114 = vrot.lane.b32.xlu0 %v1035, 64
        %v1115 = vpop.permute.xlu0 %1114
        %1116 = vrot.lane.b32.xlu0 %v1036, 64
        %v1117 = vpop.permute.xlu0 %1116
        %1118 = vrot.lane.b32.xlu0 %v1037, 64
        %v1119 = vpop.permute.xlu0 %1118
        %1120 = vrot.lane.b32.xlu0 %v1038, 64
        %v1121 = vpop.permute.xlu0 %1120
        %1122 = vrot.lane.b32.xlu0 %v1039, 64
        %v1123 = vpop.permute.xlu0 %1122
        %1124 = vrot.lane.b32.xlu0 %v1040, 64
        %v1125 = vpop.permute.xlu0 %1124
        %1126 = vrot.lane.b32.xlu0 %v1041, 64
        %v1127 = vpop.permute.xlu0 %1126
        %1128 = vrot.lane.b32.xlu0 %v1042, 64
        %v1129 = vpop.permute.xlu0 %1128
        %1130 = vrot.lane.b32.xlu0 %v1043, 64
        %v1131 = vpop.permute.xlu0 %1130
        %1132 = vrot.lane.b32.xlu0 %v1044, 64
        %v1133 = vpop.permute.xlu0 %1132
        %1134 = vrot.lane.b32.xlu0 %v1045, 64
        %v1135 = vpop.permute.xlu0 %1134
        %1136 = vrot.lane.b32.xlu0 %v1046, 64
        %v1137 = vpop.permute.xlu0 %1136
        %1138 = vrot.lane.b32.xlu0 %v1047, 64
        %v1139 = vpop.permute.xlu0 %1138
        %1140 = vrot.lane.b32.xlu0 %v1048, 64
        %v1141 = vpop.permute.xlu0 %1140
        %1142 = vrot.lane.b32.xlu0 %v1049, 64
        %v1143 = vpop.permute.xlu0 %1142
        %1144 = vrot.lane.b32.xlu0 %v1050, 64
        %v1145 = vpop.permute.xlu0 %1144
        %1146 = vrot.lane.b32.xlu0 %v1051, 64
        %v1147 = vpop.permute.xlu0 %1146
        %v1180 = vsel %vm520, %v988, %v1085
        %v1181 = vsel %vm520, %v989, %v1087
        %v1182 = vsel %vm520, %v990, %v1089
        %v1183 = vsel %vm520, %v991, %v1091
        %v1184 = vsel %vm520, %v992, %v1093
        %v1185 = vsel %vm520, %v993, %v1095
        %v1186 = vsel %vm520, %v994, %v1097
        %v1187 = vsel %vm520, %v995, %v1099
        %v1188 = vsel %vm520, %v996, %v1101
        %v1189 = vsel %vm520, %v997, %v1103
        %v1190 = vsel %vm520, %v998, %v1105
        %v1191 = vsel %vm520, %v999, %v1107
        %v1192 = vsel %vm520, %v1000, %v1109
        %v1193 = vsel %vm520, %v1001, %v1111
        %v1194 = vsel %vm520, %v1002, %v1113
        %v1195 = vsel %vm520, %v1003, %v1115
        %v1196 = vsel %vm520, %v1004, %v1117
        %v1197 = vsel %vm520, %v1005, %v1119
        %v1198 = vsel %vm520, %v1006, %v1121
        %v1199 = vsel %vm520, %v1007, %v1123
        %v1200 = vsel %vm520, %v1008, %v1125
        %v1201 = vsel %vm520, %v1009, %v1127
        %v1202 = vsel %vm520, %v1010, %v1129
        %v1203 = vsel %vm520, %v1011, %v1131
        %v1204 = vsel %vm520, %v1012, %v1133
        %v1205 = vsel %vm520, %v1013, %v1135
        %v1206 = vsel %vm520, %v1014, %v1137
        %v1207 = vsel %vm520, %v1015, %v1139
        %v1208 = vsel %vm520, %v1016, %v1141
        %v1209 = vsel %vm520, %v1017, %v1143
        %v1210 = vsel %vm520, %v1018, %v1145
        %v1211 = vsel %vm520, %v1019, %v1147
        %1212 = vst [vmem:[#allocation3] sm:$0xff] %v1180
        %1213 = vst [vmem:[#allocation3 + $0x28] sm:$0xff] %v1181
        %1214 = vst [vmem:[#allocation3 + $0x50] sm:$0xff] %v1182
        %1215 = vst [vmem:[#allocation3 + $0x78] sm:$0xff] %v1183
        %1216 = vst [vmem:[#allocation3 + $0xa0] sm:$0xff] %v1184
        %1217 = vst [vmem:[#allocation3 + $0xc8] sm:$0xff] %v1185
        %1218 = vst [vmem:[#allocation3 + $0xf0] sm:$0xff] %v1186
        %1219 = vst [vmem:[#allocation3 + $0x118] sm:$0xff] %v1187
        %1220 = vst [vmem:[#allocation3 + $0x140] sm:$0xff] %v1188
        %1221 = vst [vmem:[#allocation3 + $0x168] sm:$0xff] %v1189
        %1222 = vst [vmem:[#allocation3 + $0x190] sm:$0xff] %v1190
        %1223 = vst [vmem:[#allocation3 + $0x1b8] sm:$0xff] %v1191
        %1224 = vst [vmem:[#allocation3 + $0x1e0] sm:$0xff] %v1192
        %1225 = vst [vmem:[#allocation3 + $0x208] sm:$0xff] %v1193
        %1226 = vst [vmem:[#allocation3 + $0x230] sm:$0xff] %v1194
        %1227 = vst [vmem:[#allocation3 + $0x258] sm:$0xff] %v1195
        %1228 = vst [vmem:[#allocation3 + $0x280] sm:$0xff] %v1196
        %1229 = vst [vmem:[#allocation3 + $0x2a8] sm:$0xff] %v1197
        %1230 = vst [vmem:[#allocation3 + $0x2d0] sm:$0xff] %v1198
        %1231 = vst [vmem:[#allocation3 + $0x2f8] sm:$0xff] %v1199
        %1232 = vst [vmem:[#allocation3 + $0x320] sm:$0xff] %v1200
        %1233 = vst [vmem:[#allocation3 + $0x348] sm:$0xff] %v1201
        %1234 = vst [vmem:[#allocation3 + $0x370] sm:$0xff] %v1202
        %1235 = vst [vmem:[#allocation3 + $0x398] sm:$0xff] %v1203
        %1236 = vst [vmem:[#allocation3 + $0x3c0] sm:$0xff] %v1204
        %1237 = vst [vmem:[#allocation3 + $0x3e8] sm:$0xff] %v1205
        %1238 = vst [vmem:[#allocation3 + $0x410] sm:$0xff] %v1206
        %1239 = vst [vmem:[#allocation3 + $0x438] sm:$0xff] %v1207
        %1240 = vst [vmem:[#allocation3 + $0x460] sm:$0xff] %v1208
        %1241 = vst [vmem:[#allocation3 + $0x488] sm:$0xff] %v1209
        %1242 = vst [vmem:[#allocation3 + $0x4b0] sm:$0xff] %v1210
        %1243 = vst [vmem:[#allocation3 + $0x4d8] sm:$0xff] %v1211
        %v1244 = vld [vmem:[#allocation2 + $0x2] sm:$0xff]
        %v1245 = vld [vmem:[#allocation2 + $0xa] sm:$0xff]
        %v1246 = vld [vmem:[#allocation2 + $0x1a] sm:$0xff]
        %v1247 = vld [vmem:[#allocation2 + $0x22] sm:$0xff]
        %v1248 = vld [vmem:[#allocation2 + $0x32] sm:$0xff]
        %v1249 = vld [vmem:[#allocation2 + $0x3a] sm:$0xff]
        %v1250 = vld [vmem:[#allocation2 + $0x4a] sm:$0xff]
        %v1251 = vld [vmem:[#allocation2 + $0x52] sm:$0xff]
        %v1252 = vld [vmem:[#allocation2 + $0x62] sm:$0xff]
        %v1253 = vld [vmem:[#allocation2 + $0x6a] sm:$0xff]
        %v1254 = vld [vmem:[#allocation2 + $0x7a] sm:$0xff]
        %v1255 = vld [vmem:[#allocation2 + $0x82] sm:$0xff]
        %v1256 = vld [vmem:[#allocation2 + $0x92] sm:$0xff]
        %v1257 = vld [vmem:[#allocation2 + $0x9a] sm:$0xff]
        %v1258 = vld [vmem:[#allocation2 + $0xaa] sm:$0xff]
        %v1259 = vld [vmem:[#allocation2 + $0xb2] sm:$0xff]
        %v1260 = vld [vmem:[#allocation2 + $0xc2] sm:$0xff]
        %v1261 = vld [vmem:[#allocation2 + $0xca] sm:$0xff]
        %v1262 = vld [vmem:[#allocation2 + $0xda] sm:$0xff]
        %v1263 = vld [vmem:[#allocation2 + $0xe2] sm:$0xff]
        %v1264 = vld [vmem:[#allocation2 + $0xf2] sm:$0xff]
        %v1265 = vld [vmem:[#allocation2 + $0xfa] sm:$0xff]
        %v1266 = vld [vmem:[#allocation2 + $0x10a] sm:$0xff]
        %v1267 = vld [vmem:[#allocation2 + $0x112] sm:$0xff]
        %v1268 = vld [vmem:[#allocation2 + $0x122] sm:$0xff]
        %v1269 = vld [vmem:[#allocation2 + $0x12a] sm:$0xff]
        %v1270 = vld [vmem:[#allocation2 + $0x13a] sm:$0xff]
        %v1271 = vld [vmem:[#allocation2 + $0x142] sm:$0xff]
        %v1272 = vld [vmem:[#allocation2 + $0x152] sm:$0xff]
        %v1273 = vld [vmem:[#allocation2 + $0x15a] sm:$0xff]
        %v1274 = vld [vmem:[#allocation2 + $0x16a] sm:$0xff]
        %v1275 = vld [vmem:[#allocation2 + $0x172] sm:$0xff]
        %v1276 = vld [vmem:[%s955] sm:$0xff]
        %v1277 = vld [vmem:[%s955 + $0x8] sm:$0xff]
        %v1278 = vld [vmem:[%s955 + $0x18] sm:$0xff]
        %v1279 = vld [vmem:[%s955 + $0x20] sm:$0xff]
        %v1280 = vld [vmem:[%s955 + $0x30] sm:$0xff]
        %v1281 = vld [vmem:[%s955 + $0x38] sm:$0xff]
        %v1282 = vld [vmem:[%s955 + $0x48] sm:$0xff]
        %v1283 = vld [vmem:[%s955 + $0x50] sm:$0xff]
        %v1284 = vld [vmem:[%s955 + $0x60] sm:$0xff]
        %v1285 = vld [vmem:[%s955 + $0x68] sm:$0xff]
        %v1286 = vld [vmem:[%s955 + $0x78] sm:$0xff]
        %v1287 = vld [vmem:[%s955 + $0x80] sm:$0xff]
        %v1288 = vld [vmem:[%s955 + $0x90] sm:$0xff]
        %v1289 = vld [vmem:[%s955 + $0x98] sm:$0xff]
        %v1290 = vld [vmem:[%s955 + $0xa8] sm:$0xff]
        %v1291 = vld [vmem:[%s955 + $0xb0] sm:$0xff]
        %v1292 = vld [vmem:[%s955 + $0xc0] sm:$0xff]
        %v1293 = vld [vmem:[%s955 + $0xc8] sm:$0xff]
        %v1294 = vld [vmem:[%s955 + $0xd8] sm:$0xff]
        %v1295 = vld [vmem:[%s955 + $0xe0] sm:$0xff]
        %v1296 = vld [vmem:[%s955 + $0xf0] sm:$0xff]
        %v1297 = vld [vmem:[%s955 + $0xf8] sm:$0xff]
        %v1298 = vld [vmem:[%s955 + $0x108] sm:$0xff]
        %v1299 = vld [vmem:[%s955 + $0x110] sm:$0xff]
        %v1300 = vld [vmem:[%s955 + $0x120] sm:$0xff]
        %v1301 = vld [vmem:[%s955 + $0x128] sm:$0xff]
        %v1302 = vld [vmem:[%s955 + $0x138] sm:$0xff]
        %v1303 = vld [vmem:[%s955 + $0x140] sm:$0xff]
        %v1304 = vld [vmem:[%s955 + $0x150] sm:$0xff]
        %v1305 = vld [vmem:[%s955 + $0x158] sm:$0xff]
        %v1306 = vld [vmem:[%s955 + $0x168] sm:$0xff]
        %v1307 = vld [vmem:[%s955 + $0x170] sm:$0xff]
        %1340 = vrot.lane.b32.xlu0 %v1276, 64
        %v1341 = vpop.permute.xlu0 %1340
        %1342 = vrot.lane.b32.xlu0 %v1277, 64
        %v1343 = vpop.permute.xlu0 %1342
        %1344 = vrot.lane.b32.xlu0 %v1278, 64
        %v1345 = vpop.permute.xlu0 %1344
        %1346 = vrot.lane.b32.xlu0 %v1279, 64
        %v1347 = vpop.permute.xlu0 %1346
        %1348 = vrot.lane.b32.xlu0 %v1280, 64
        %v1349 = vpop.permute.xlu0 %1348
        %1350 = vrot.lane.b32.xlu0 %v1281, 64
        %v1351 = vpop.permute.xlu0 %1350
        %1352 = vrot.lane.b32.xlu0 %v1282, 64
        %v1353 = vpop.permute.xlu0 %1352
        %1354 = vrot.lane.b32.xlu0 %v1283, 64
        %v1355 = vpop.permute.xlu0 %1354
        %1356 = vrot.lane.b32.xlu0 %v1284, 64
        %v1357 = vpop.permute.xlu0 %1356
        %1358 = vrot.lane.b32.xlu0 %v1285, 64
        %v1359 = vpop.permute.xlu0 %1358
        %1360 = vrot.lane.b32.xlu0 %v1286, 64
        %v1361 = vpop.permute.xlu0 %1360
        %1362 = vrot.lane.b32.xlu0 %v1287, 64
        %v1363 = vpop.permute.xlu0 %1362
        %1364 = vrot.lane.b32.xlu0 %v1288, 64
        %v1365 = vpop.permute.xlu0 %1364
        %1366 = vrot.lane.b32.xlu0 %v1289, 64
        %v1367 = vpop.permute.xlu0 %1366
        %1368 = vrot.lane.b32.xlu0 %v1290, 64
        %v1369 = vpop.permute.xlu0 %1368
        %1370 = vrot.lane.b32.xlu0 %v1291, 64
        %v1371 = vpop.permute.xlu0 %1370
        %1372 = vrot.lane.b32.xlu0 %v1292, 64
        %v1373 = vpop.permute.xlu0 %1372
        %1374 = vrot.lane.b32.xlu0 %v1293, 64
        %v1375 = vpop.permute.xlu0 %1374
        %1376 = vrot.lane.b32.xlu0 %v1294, 64
        %v1377 = vpop.permute.xlu0 %1376
        %1378 = vrot.lane.b32.xlu0 %v1295, 64
        %v1379 = vpop.permute.xlu0 %1378
        %1380 = vrot.lane.b32.xlu0 %v1296, 64
        %v1381 = vpop.permute.xlu0 %1380
        %1382 = vrot.lane.b32.xlu0 %v1297, 64
        %v1383 = vpop.permute.xlu0 %1382
        %1384 = vrot.lane.b32.xlu0 %v1298, 64
        %v1385 = vpop.permute.xlu0 %1384
        %1386 = vrot.lane.b32.xlu0 %v1299, 64
        %v1387 = vpop.permute.xlu0 %1386
        %1388 = vrot.lane.b32.xlu0 %v1300, 64
        %v1389 = vpop.permute.xlu0 %1388
        %1390 = vrot.lane.b32.xlu0 %v1301, 64
        %v1391 = vpop.permute.xlu0 %1390
        %1392 = vrot.lane.b32.xlu0 %v1302, 64
        %v1393 = vpop.permute.xlu0 %1392
        %1394 = vrot.lane.b32.xlu0 %v1303, 64
        %v1395 = vpop.permute.xlu0 %1394
        %1396 = vrot.lane.b32.xlu0 %v1304, 64
        %v1397 = vpop.permute.xlu0 %1396
        %1398 = vrot.lane.b32.xlu0 %v1305, 64
        %v1399 = vpop.permute.xlu0 %1398
        %1400 = vrot.lane.b32.xlu0 %v1306, 64
        %v1401 = vpop.permute.xlu0 %1400
        %1402 = vrot.lane.b32.xlu0 %v1307, 64
        %v1403 = vpop.permute.xlu0 %1402
        %v1436 = vsel %vm520, %v1244, %v1341
        %v1437 = vsel %vm520, %v1245, %v1343
        %v1438 = vsel %vm520, %v1246, %v1345
        %v1439 = vsel %vm520, %v1247, %v1347
        %v1440 = vsel %vm520, %v1248, %v1349
        %v1441 = vsel %vm520, %v1249, %v1351
        %v1442 = vsel %vm520, %v1250, %v1353
        %v1443 = vsel %vm520, %v1251, %v1355
        %v1444 = vsel %vm520, %v1252, %v1357
        %v1445 = vsel %vm520, %v1253, %v1359
        %v1446 = vsel %vm520, %v1254, %v1361
        %v1447 = vsel %vm520, %v1255, %v1363
        %v1448 = vsel %vm520, %v1256, %v1365
        %v1449 = vsel %vm520, %v1257, %v1367
        %v1450 = vsel %vm520, %v1258, %v1369
        %v1451 = vsel %vm520, %v1259, %v1371
        %v1452 = vsel %vm520, %v1260, %v1373
        %v1453 = vsel %vm520, %v1261, %v1375
        %v1454 = vsel %vm520, %v1262, %v1377
        %v1455 = vsel %vm520, %v1263, %v1379
        %v1456 = vsel %vm520, %v1264, %v1381
        %v1457 = vsel %vm520, %v1265, %v1383
        %v1458 = vsel %vm520, %v1266, %v1385
        %v1459 = vsel %vm520, %v1267, %v1387
        %v1460 = vsel %vm520, %v1268, %v1389
        %v1461 = vsel %vm520, %v1269, %v1391
        %v1462 = vsel %vm520, %v1270, %v1393
        %v1463 = vsel %vm520, %v1271, %v1395
        %v1464 = vsel %vm520, %v1272, %v1397
        %v1465 = vsel %vm520, %v1273, %v1399
        %v1466 = vsel %vm520, %v1274, %v1401
        %v1467 = vsel %vm520, %v1275, %v1403
        %1468 = vst [vmem:[#allocation3 + $0x8] sm:$0xff] %v1436
        %1469 = vst [vmem:[#allocation3 + $0x30] sm:$0xff] %v1437
        %1470 = vst [vmem:[#allocation3 + $0x58] sm:$0xff] %v1438
        %1471 = vst [vmem:[#allocation3 + $0x80] sm:$0xff] %v1439
        %1472 = vst [vmem:[#allocation3 + $0xa8] sm:$0xff] %v1440
        %1473 = vst [vmem:[#allocation3 + $0xd0] sm:$0xff] %v1441
        %1474 = vst [vmem:[#allocation3 + $0xf8] sm:$0xff] %v1442
        %1475 = vst [vmem:[#allocation3 + $0x120] sm:$0xff] %v1443
        %1476 = vst [vmem:[#allocation3 + $0x148] sm:$0xff] %v1444
        %1477 = vst [vmem:[#allocation3 + $0x170] sm:$0xff] %v1445
        %1478 = vst [vmem:[#allocation3 + $0x198] sm:$0xff] %v1446
        %1479 = vst [vmem:[#allocation3 + $0x1c0] sm:$0xff] %v1447
        %1480 = vst [vmem:[#allocation3 + $0x1e8] sm:$0xff] %v1448
        %1481 = vst [vmem:[#allocation3 + $0x210] sm:$0xff] %v1449
        %1482 = vst [vmem:[#allocation3 + $0x238] sm:$0xff] %v1450
        %1483 = vst [vmem:[#allocation3 + $0x260] sm:$0xff] %v1451
        %1484 = vst [vmem:[#allocation3 + $0x288] sm:$0xff] %v1452
        %1485 = vst [vmem:[#allocation3 + $0x2b0] sm:$0xff] %v1453
        %1486 = vst [vmem:[#allocation3 + $0x2d8] sm:$0xff] %v1454
        %1487 = vst [vmem:[#allocation3 + $0x300] sm:$0xff] %v1455
        %1488 = vst [vmem:[#allocation3 + $0x328] sm:$0xff] %v1456
        %1489 = vst [vmem:[#allocation3 + $0x350] sm:$0xff] %v1457
        %1490 = vst [vmem:[#allocation3 + $0x378] sm:$0xff] %v1458
        %1491 = vst [vmem:[#allocation3 + $0x3a0] sm:$0xff] %v1459
        %1492 = vst [vmem:[#allocation3 + $0x3c8] sm:$0xff] %v1460
        %1493 = vst [vmem:[#allocation3 + $0x3f0] sm:$0xff] %v1461
        %1494 = vst [vmem:[#allocation3 + $0x418] sm:$0xff] %v1462
        %1495 = vst [vmem:[#allocation3 + $0x440] sm:$0xff] %v1463
        %1496 = vst [vmem:[#allocation3 + $0x468] sm:$0xff] %v1464
        %1497 = vst [vmem:[#allocation3 + $0x490] sm:$0xff] %v1465
        %1498 = vst [vmem:[#allocation3 + $0x4b8] sm:$0xff] %v1466
        %1499 = vst [vmem:[#allocation3 + $0x4e0] sm:$0xff] %v1467
        %v1500 = vld [vmem:[%s955 + $0x1] sm:$0xff]
        %v1501 = vld [vmem:[%s955 + $0x9] sm:$0xff]
        %v1502 = vld [vmem:[%s955 + $0x19] sm:$0xff]
        %v1503 = vld [vmem:[%s955 + $0x21] sm:$0xff]
        %v1504 = vld [vmem:[%s955 + $0x31] sm:$0xff]
        %v1505 = vld [vmem:[%s955 + $0x39] sm:$0xff]
        %v1506 = vld [vmem:[%s955 + $0x49] sm:$0xff]
        %v1507 = vld [vmem:[%s955 + $0x51] sm:$0xff]
        %v1508 = vld [vmem:[%s955 + $0x61] sm:$0xff]
        %v1509 = vld [vmem:[%s955 + $0x69] sm:$0xff]
        %v1510 = vld [vmem:[%s955 + $0x79] sm:$0xff]
        %v1511 = vld [vmem:[%s955 + $0x81] sm:$0xff]
        %v1512 = vld [vmem:[%s955 + $0x91] sm:$0xff]
        %v1513 = vld [vmem:[%s955 + $0x99] sm:$0xff]
        %v1514 = vld [vmem:[%s955 + $0xa9] sm:$0xff]
        %v1515 = vld [vmem:[%s955 + $0xb1] sm:$0xff]
        %v1516 = vld [vmem:[%s955 + $0xc1] sm:$0xff]
        %v1517 = vld [vmem:[%s955 + $0xc9] sm:$0xff]
        %v1518 = vld [vmem:[%s955 + $0xd9] sm:$0xff]
        %v1519 = vld [vmem:[%s955 + $0xe1] sm:$0xff]
        %v1520 = vld [vmem:[%s955 + $0xf1] sm:$0xff]
        %v1521 = vld [vmem:[%s955 + $0xf9] sm:$0xff]
        %v1522 = vld [vmem:[%s955 + $0x109] sm:$0xff]
        %v1523 = vld [vmem:[%s955 + $0x111] sm:$0xff]
        %v1524 = vld [vmem:[%s955 + $0x121] sm:$0xff]
        %v1525 = vld [vmem:[%s955 + $0x129] sm:$0xff]
        %v1526 = vld [vmem:[%s955 + $0x139] sm:$0xff]
        %v1527 = vld [vmem:[%s955 + $0x141] sm:$0xff]
        %v1528 = vld [vmem:[%s955 + $0x151] sm:$0xff]
        %v1529 = vld [vmem:[%s955 + $0x159] sm:$0xff]
        %v1530 = vld [vmem:[%s955 + $0x169] sm:$0xff]
        %v1531 = vld [vmem:[%s955 + $0x171] sm:$0xff]
        %v1532 = vld [vmem:[%s955 + $0x2] sm:$0xff]
        %v1533 = vld [vmem:[%s955 + $0xa] sm:$0xff]
        %v1534 = vld [vmem:[%s955 + $0x1a] sm:$0xff]
        %v1535 = vld [vmem:[%s955 + $0x22] sm:$0xff]
        %v1536 = vld [vmem:[%s955 + $0x32] sm:$0xff]
        %v1537 = vld [vmem:[%s955 + $0x3a] sm:$0xff]
        %v1538 = vld [vmem:[%s955 + $0x4a] sm:$0xff]
        %v1539 = vld [vmem:[%s955 + $0x52] sm:$0xff]
        %v1540 = vld [vmem:[%s955 + $0x62] sm:$0xff]
        %v1541 = vld [vmem:[%s955 + $0x6a] sm:$0xff]
        %v1542 = vld [vmem:[%s955 + $0x7a] sm:$0xff]
        %v1543 = vld [vmem:[%s955 + $0x82] sm:$0xff]
        %v1544 = vld [vmem:[%s955 + $0x92] sm:$0xff]
        %v1545 = vld [vmem:[%s955 + $0x9a] sm:$0xff]
        %v1546 = vld [vmem:[%s955 + $0xaa] sm:$0xff]
        %v1547 = vld [vmem:[%s955 + $0xb2] sm:$0xff]
        %v1548 = vld [vmem:[%s955 + $0xc2] sm:$0xff]
        %v1549 = vld [vmem:[%s955 + $0xca] sm:$0xff]
        %v1550 = vld [vmem:[%s955 + $0xda] sm:$0xff]
        %v1551 = vld [vmem:[%s955 + $0xe2] sm:$0xff]
        %v1552 = vld [vmem:[%s955 + $0xf2] sm:$0xff]
        %v1553 = vld [vmem:[%s955 + $0xfa] sm:$0xff]
        %v1554 = vld [vmem:[%s955 + $0x10a] sm:$0xff]
        %v1555 = vld [vmem:[%s955 + $0x112] sm:$0xff]
        %v1556 = vld [vmem:[%s955 + $0x122] sm:$0xff]
        %v1557 = vld [vmem:[%s955 + $0x12a] sm:$0xff]
        %v1558 = vld [vmem:[%s955 + $0x13a] sm:$0xff]
        %v1559 = vld [vmem:[%s955 + $0x142] sm:$0xff]
        %v1560 = vld [vmem:[%s955 + $0x152] sm:$0xff]
        %v1561 = vld [vmem:[%s955 + $0x15a] sm:$0xff]
        %v1562 = vld [vmem:[%s955 + $0x16a] sm:$0xff]
        %v1563 = vld [vmem:[%s955 + $0x172] sm:$0xff]
        %1596 = vrot.lane.b32.xlu0 %v1532, 64
        %v1597 = vpop.permute.xlu0 %1596
        %1598 = vrot.lane.b32.xlu0 %v1533, 64
        %v1599 = vpop.permute.xlu0 %1598
        %1600 = vrot.lane.b32.xlu0 %v1534, 64
        %v1601 = vpop.permute.xlu0 %1600
        %1602 = vrot.lane.b32.xlu0 %v1535, 64
        %v1603 = vpop.permute.xlu0 %1602
        %1604 = vrot.lane.b32.xlu0 %v1536, 64
        %v1605 = vpop.permute.xlu0 %1604
        %1606 = vrot.lane.b32.xlu0 %v1537, 64
        %v1607 = vpop.permute.xlu0 %1606
        %1608 = vrot.lane.b32.xlu0 %v1538, 64
        %v1609 = vpop.permute.xlu0 %1608
        %1610 = vrot.lane.b32.xlu0 %v1539, 64
        %v1611 = vpop.permute.xlu0 %1610
        %1612 = vrot.lane.b32.xlu0 %v1540, 64
        %v1613 = vpop.permute.xlu0 %1612
        %1614 = vrot.lane.b32.xlu0 %v1541, 64
        %v1615 = vpop.permute.xlu0 %1614
        %1616 = vrot.lane.b32.xlu0 %v1542, 64
        %v1617 = vpop.permute.xlu0 %1616
        %1618 = vrot.lane.b32.xlu0 %v1543, 64
        %v1619 = vpop.permute.xlu0 %1618
        %1620 = vrot.lane.b32.xlu0 %v1544, 64
        %v1621 = vpop.permute.xlu0 %1620
        %1622 = vrot.lane.b32.xlu0 %v1545, 64
        %v1623 = vpop.permute.xlu0 %1622
        %1624 = vrot.lane.b32.xlu0 %v1546, 64
        %v1625 = vpop.permute.xlu0 %1624
        %1626 = vrot.lane.b32.xlu0 %v1547, 64
        %v1627 = vpop.permute.xlu0 %1626
        %1628 = vrot.lane.b32.xlu0 %v1548, 64
        %v1629 = vpop.permute.xlu0 %1628
        %1630 = vrot.lane.b32.xlu0 %v1549, 64
        %v1631 = vpop.permute.xlu0 %1630
        %1632 = vrot.lane.b32.xlu0 %v1550, 64
        %v1633 = vpop.permute.xlu0 %1632
        %1634 = vrot.lane.b32.xlu0 %v1551, 64
        %v1635 = vpop.permute.xlu0 %1634
        %1636 = vrot.lane.b32.xlu0 %v1552, 64
        %v1637 = vpop.permute.xlu0 %1636
        %1638 = vrot.lane.b32.xlu0 %v1553, 64
        %v1639 = vpop.permute.xlu0 %1638
        %1640 = vrot.lane.b32.xlu0 %v1554, 64
        %v1641 = vpop.permute.xlu0 %1640
        %1642 = vrot.lane.b32.xlu0 %v1555, 64
        %v1643 = vpop.permute.xlu0 %1642
        %1644 = vrot.lane.b32.xlu0 %v1556, 64
        %v1645 = vpop.permute.xlu0 %1644
        %1646 = vrot.lane.b32.xlu0 %v1557, 64
        %v1647 = vpop.permute.xlu0 %1646
        %1648 = vrot.lane.b32.xlu0 %v1558, 64
        %v1649 = vpop.permute.xlu0 %1648
        %1650 = vrot.lane.b32.xlu0 %v1559, 64
        %v1651 = vpop.permute.xlu0 %1650
        %1652 = vrot.lane.b32.xlu0 %v1560, 64
        %v1653 = vpop.permute.xlu0 %1652
        %1654 = vrot.lane.b32.xlu0 %v1561, 64
        %v1655 = vpop.permute.xlu0 %1654
        %1656 = vrot.lane.b32.xlu0 %v1562, 64
        %v1657 = vpop.permute.xlu0 %1656
        %1658 = vrot.lane.b32.xlu0 %v1563, 64
        %v1659 = vpop.permute.xlu0 %1658
        %v1692 = vsel %vm520, %v1500, %v1597
        %v1693 = vsel %vm520, %v1501, %v1599
        %v1694 = vsel %vm520, %v1502, %v1601
        %v1695 = vsel %vm520, %v1503, %v1603
        %v1696 = vsel %vm520, %v1504, %v1605
        %v1697 = vsel %vm520, %v1505, %v1607
        %v1698 = vsel %vm520, %v1506, %v1609
        %v1699 = vsel %vm520, %v1507, %v1611
        %v1700 = vsel %vm520, %v1508, %v1613
        %v1701 = vsel %vm520, %v1509, %v1615
        %v1702 = vsel %vm520, %v1510, %v1617
        %v1703 = vsel %vm520, %v1511, %v1619
        %v1704 = vsel %vm520, %v1512, %v1621
        %v1705 = vsel %vm520, %v1513, %v1623
        %v1706 = vsel %vm520, %v1514, %v1625
        %v1707 = vsel %vm520, %v1515, %v1627
        %v1708 = vsel %vm520, %v1516, %v1629
        %v1709 = vsel %vm520, %v1517, %v1631
        %v1710 = vsel %vm520, %v1518, %v1633
        %v1711 = vsel %vm520, %v1519, %v1635
        %v1712 = vsel %vm520, %v1520, %v1637
        %v1713 = vsel %vm520, %v1521, %v1639
        %v1714 = vsel %vm520, %v1522, %v1641
        %v1715 = vsel %vm520, %v1523, %v1643
        %v1716 = vsel %vm520, %v1524, %v1645
        %v1717 = vsel %vm520, %v1525, %v1647
        %v1718 = vsel %vm520, %v1526, %v1649
        %v1719 = vsel %vm520, %v1527, %v1651
        %v1720 = vsel %vm520, %v1528, %v1653
        %v1721 = vsel %vm520, %v1529, %v1655
        %v1722 = vsel %vm520, %v1530, %v1657
        %v1723 = vsel %vm520, %v1531, %v1659
        %1724 = vst [vmem:[#allocation3 + $0x10] sm:$0xff] %v1692
        %1725 = vst [vmem:[#allocation3 + $0x38] sm:$0xff] %v1693
        %1726 = vst [vmem:[#allocation3 + $0x60] sm:$0xff] %v1694
        %1727 = vst [vmem:[#allocation3 + $0x88] sm:$0xff] %v1695
        %1728 = vst [vmem:[#allocation3 + $0xb0] sm:$0xff] %v1696
        %1729 = vst [vmem:[#allocation3 + $0xd8] sm:$0xff] %v1697
        %1730 = vst [vmem:[#allocation3 + $0x100] sm:$0xff] %v1698
        %1731 = vst [vmem:[#allocation3 + $0x128] sm:$0xff] %v1699
        %1732 = vst [vmem:[#allocation3 + $0x150] sm:$0xff] %v1700
        %1733 = vst [vmem:[#allocation3 + $0x178] sm:$0xff] %v1701
        %1734 = vst [vmem:[#allocation3 + $0x1a0] sm:$0xff] %v1702
        %1735 = vst [vmem:[#allocation3 + $0x1c8] sm:$0xff] %v1703
        %1736 = vst [vmem:[#allocation3 + $0x1f0] sm:$0xff] %v1704
        %1737 = vst [vmem:[#allocation3 + $0x218] sm:$0xff] %v1705
        %1738 = vst [vmem:[#allocation3 + $0x240] sm:$0xff] %v1706
        %1739 = vst [vmem:[#allocation3 + $0x268] sm:$0xff] %v1707
        %1740 = vst [vmem:[#allocation3 + $0x290] sm:$0xff] %v1708
        %1741 = vst [vmem:[#allocation3 + $0x2b8] sm:$0xff] %v1709
        %1742 = vst [vmem:[#allocation3 + $0x2e0] sm:$0xff] %v1710
        %1743 = vst [vmem:[#allocation3 + $0x308] sm:$0xff] %v1711
        %1744 = vst [vmem:[#allocation3 + $0x330] sm:$0xff] %v1712
        %1745 = vst [vmem:[#allocation3 + $0x358] sm:$0xff] %v1713
        %1746 = vst [vmem:[#allocation3 + $0x380] sm:$0xff] %v1714
        %1747 = vst [vmem:[#allocation3 + $0x3a8] sm:$0xff] %v1715
        %1748 = vst [vmem:[#allocation3 + $0x3d0] sm:$0xff] %v1716
        %1749 = vst [vmem:[#allocation3 + $0x3f8] sm:$0xff] %v1717
        %1750 = vst [vmem:[#allocation3 + $0x420] sm:$0xff] %v1718
        %1751 = vst [vmem:[#allocation3 + $0x448] sm:$0xff] %v1719
        %1752 = vst [vmem:[#allocation3 + $0x470] sm:$0xff] %v1720
        %1753 = vst [vmem:[#allocation3 + $0x498] sm:$0xff] %v1721
        %1754 = vst [vmem:[#allocation3 + $0x4c0] sm:$0xff] %v1722
        %1755 = vst [vmem:[#allocation3 + $0x4e8] sm:$0xff] %v1723
        %s1756 = scalar_lea.vmem [#allocation2], 48
        %v1757 = vld [vmem:[%s1756] sm:$0xff]
        %v1758 = vld [vmem:[%s1756 + $0x8] sm:$0xff]
        %v1759 = vld [vmem:[%s1756 + $0x18] sm:$0xff]
        %v1760 = vld [vmem:[%s1756 + $0x20] sm:$0xff]
        %v1761 = vld [vmem:[%s1756 + $0x30] sm:$0xff]
        %v1762 = vld [vmem:[%s1756 + $0x38] sm:$0xff]
        %v1763 = vld [vmem:[%s1756 + $0x48] sm:$0xff]
        %v1764 = vld [vmem:[%s1756 + $0x50] sm:$0xff]
        %v1765 = vld [vmem:[%s1756 + $0x60] sm:$0xff]
        %v1766 = vld [vmem:[%s1756 + $0x68] sm:$0xff]
        %v1767 = vld [vmem:[%s1756 + $0x78] sm:$0xff]
        %v1768 = vld [vmem:[%s1756 + $0x80] sm:$0xff]
        %v1769 = vld [vmem:[%s1756 + $0x90] sm:$0xff]
        %v1770 = vld [vmem:[%s1756 + $0x98] sm:$0xff]
        %v1771 = vld [vmem:[%s1756 + $0xa8] sm:$0xff]
        %v1772 = vld [vmem:[%s1756 + $0xb0] sm:$0xff]
        %v1773 = vld [vmem:[%s1756 + $0xc0] sm:$0xff]
        %v1774 = vld [vmem:[%s1756 + $0xc8] sm:$0xff]
        %v1775 = vld [vmem:[%s1756 + $0xd8] sm:$0xff]
        %v1776 = vld [vmem:[%s1756 + $0xe0] sm:$0xff]
        %v1777 = vld [vmem:[%s1756 + $0xf0] sm:$0xff]
        %v1778 = vld [vmem:[%s1756 + $0xf8] sm:$0xff]
        %v1779 = vld [vmem:[%s1756 + $0x108] sm:$0xff]
        %v1780 = vld [vmem:[%s1756 + $0x110] sm:$0xff]
        %v1781 = vld [vmem:[%s1756 + $0x120] sm:$0xff]
        %v1782 = vld [vmem:[%s1756 + $0x128] sm:$0xff]
        %v1783 = vld [vmem:[%s1756 + $0x138] sm:$0xff]
        %v1784 = vld [vmem:[%s1756 + $0x140] sm:$0xff]
        %v1785 = vld [vmem:[%s1756 + $0x150] sm:$0xff]
        %v1786 = vld [vmem:[%s1756 + $0x158] sm:$0xff]
        %v1787 = vld [vmem:[%s1756 + $0x168] sm:$0xff]
        %v1788 = vld [vmem:[%s1756 + $0x170] sm:$0xff]
        %v1789 = vld [vmem:[%s1756 + $0x1] sm:$0xff]
        %v1790 = vld [vmem:[%s1756 + $0x9] sm:$0xff]
        %v1791 = vld [vmem:[%s1756 + $0x19] sm:$0xff]
        %v1792 = vld [vmem:[%s1756 + $0x21] sm:$0xff]
        %v1793 = vld [vmem:[%s1756 + $0x31] sm:$0xff]
        %v1794 = vld [vmem:[%s1756 + $0x39] sm:$0xff]
        %v1795 = vld [vmem:[%s1756 + $0x49] sm:$0xff]
        %v1796 = vld [vmem:[%s1756 + $0x51] sm:$0xff]
        %v1797 = vld [vmem:[%s1756 + $0x61] sm:$0xff]
        %v1798 = vld [vmem:[%s1756 + $0x69] sm:$0xff]
        %v1799 = vld [vmem:[%s1756 + $0x79] sm:$0xff]
        %v1800 = vld [vmem:[%s1756 + $0x81] sm:$0xff]
        %v1801 = vld [vmem:[%s1756 + $0x91] sm:$0xff]
        %v1802 = vld [vmem:[%s1756 + $0x99] sm:$0xff]
        %v1803 = vld [vmem:[%s1756 + $0xa9] sm:$0xff]
        %v1804 = vld [vmem:[%s1756 + $0xb1] sm:$0xff]
        %v1805 = vld [vmem:[%s1756 + $0xc1] sm:$0xff]
        %v1806 = vld [vmem:[%s1756 + $0xc9] sm:$0xff]
        %v1807 = vld [vmem:[%s1756 + $0xd9] sm:$0xff]
        %v1808 = vld [vmem:[%s1756 + $0xe1] sm:$0xff]
        %v1809 = vld [vmem:[%s1756 + $0xf1] sm:$0xff]
        %v1810 = vld [vmem:[%s1756 + $0xf9] sm:$0xff]
        %v1811 = vld [vmem:[%s1756 + $0x109] sm:$0xff]
        %v1812 = vld [vmem:[%s1756 + $0x111] sm:$0xff]
        %v1813 = vld [vmem:[%s1756 + $0x121] sm:$0xff]
        %v1814 = vld [vmem:[%s1756 + $0x129] sm:$0xff]
        %v1815 = vld [vmem:[%s1756 + $0x139] sm:$0xff]
        %v1816 = vld [vmem:[%s1756 + $0x141] sm:$0xff]
        %v1817 = vld [vmem:[%s1756 + $0x151] sm:$0xff]
        %v1818 = vld [vmem:[%s1756 + $0x159] sm:$0xff]
        %v1819 = vld [vmem:[%s1756 + $0x169] sm:$0xff]
        %v1820 = vld [vmem:[%s1756 + $0x171] sm:$0xff]
        %1853 = vrot.lane.b32.xlu0 %v1789, 64
        %v1854 = vpop.permute.xlu0 %1853
        %1855 = vrot.lane.b32.xlu0 %v1790, 64
        %v1856 = vpop.permute.xlu0 %1855
        %1857 = vrot.lane.b32.xlu0 %v1791, 64
        %v1858 = vpop.permute.xlu0 %1857
        %1859 = vrot.lane.b32.xlu0 %v1792, 64
        %v1860 = vpop.permute.xlu0 %1859
        %1861 = vrot.lane.b32.xlu0 %v1793, 64
        %v1862 = vpop.permute.xlu0 %1861
        %1863 = vrot.lane.b32.xlu0 %v1794, 64
        %v1864 = vpop.permute.xlu0 %1863
        %1865 = vrot.lane.b32.xlu0 %v1795, 64
        %v1866 = vpop.permute.xlu0 %1865
        %1867 = vrot.lane.b32.xlu0 %v1796, 64
        %v1868 = vpop.permute.xlu0 %1867
        %1869 = vrot.lane.b32.xlu0 %v1797, 64
        %v1870 = vpop.permute.xlu0 %1869
        %1871 = vrot.lane.b32.xlu0 %v1798, 64
        %v1872 = vpop.permute.xlu0 %1871
        %1873 = vrot.lane.b32.xlu0 %v1799, 64
        %v1874 = vpop.permute.xlu0 %1873
        %1875 = vrot.lane.b32.xlu0 %v1800, 64
        %v1876 = vpop.permute.xlu0 %1875
        %1877 = vrot.lane.b32.xlu0 %v1801, 64
        %v1878 = vpop.permute.xlu0 %1877
        %1879 = vrot.lane.b32.xlu0 %v1802, 64
        %v1880 = vpop.permute.xlu0 %1879
        %1881 = vrot.lane.b32.xlu0 %v1803, 64
        %v1882 = vpop.permute.xlu0 %1881
        %1883 = vrot.lane.b32.xlu0 %v1804, 64
        %v1884 = vpop.permute.xlu0 %1883
        %1885 = vrot.lane.b32.xlu0 %v1805, 64
        %v1886 = vpop.permute.xlu0 %1885
        %1887 = vrot.lane.b32.xlu0 %v1806, 64
        %v1888 = vpop.permute.xlu0 %1887
        %1889 = vrot.lane.b32.xlu0 %v1807, 64
        %v1890 = vpop.permute.xlu0 %1889
        %1891 = vrot.lane.b32.xlu0 %v1808, 64
        %v1892 = vpop.permute.xlu0 %1891
        %1893 = vrot.lane.b32.xlu0 %v1809, 64
        %v1894 = vpop.permute.xlu0 %1893
        %1895 = vrot.lane.b32.xlu0 %v1810, 64
        %v1896 = vpop.permute.xlu0 %1895
        %1897 = vrot.lane.b32.xlu0 %v1811, 64
        %v1898 = vpop.permute.xlu0 %1897
        %1899 = vrot.lane.b32.xlu0 %v1812, 64
        %v1900 = vpop.permute.xlu0 %1899
        %1901 = vrot.lane.b32.xlu0 %v1813, 64
        %v1902 = vpop.permute.xlu0 %1901
        %1903 = vrot.lane.b32.xlu0 %v1814, 64
        %v1904 = vpop.permute.xlu0 %1903
        %1905 = vrot.lane.b32.xlu0 %v1815, 64
        %v1906 = vpop.permute.xlu0 %1905
        %1907 = vrot.lane.b32.xlu0 %v1816, 64
        %v1908 = vpop.permute.xlu0 %1907
        %1909 = vrot.lane.b32.xlu0 %v1817, 64
        %v1910 = vpop.permute.xlu0 %1909
        %1911 = vrot.lane.b32.xlu0 %v1818, 64
        %v1912 = vpop.permute.xlu0 %1911
        %1913 = vrot.lane.b32.xlu0 %v1819, 64
        %v1914 = vpop.permute.xlu0 %1913
        %1915 = vrot.lane.b32.xlu0 %v1820, 64
        %v1916 = vpop.permute.xlu0 %1915
        %v1949 = vsel %vm520, %v1757, %v1854
        %v1950 = vsel %vm520, %v1758, %v1856
        %v1951 = vsel %vm520, %v1759, %v1858
        %v1952 = vsel %vm520, %v1760, %v1860
        %v1953 = vsel %vm520, %v1761, %v1862
        %v1954 = vsel %vm520, %v1762, %v1864
        %v1955 = vsel %vm520, %v1763, %v1866
        %v1956 = vsel %vm520, %v1764, %v1868
        %v1957 = vsel %vm520, %v1765, %v1870
        %v1958 = vsel %vm520, %v1766, %v1872
        %v1959 = vsel %vm520, %v1767, %v1874
        %v1960 = vsel %vm520, %v1768, %v1876
        %v1961 = vsel %vm520, %v1769, %v1878
        %v1962 = vsel %vm520, %v1770, %v1880
        %v1963 = vsel %vm520, %v1771, %v1882
        %v1964 = vsel %vm520, %v1772, %v1884
        %v1965 = vsel %vm520, %v1773, %v1886
        %v1966 = vsel %vm520, %v1774, %v1888
        %v1967 = vsel %vm520, %v1775, %v1890
        %v1968 = vsel %vm520, %v1776, %v1892
        %v1969 = vsel %vm520, %v1777, %v1894
        %v1970 = vsel %vm520, %v1778, %v1896
        %v1971 = vsel %vm520, %v1779, %v1898
        %v1972 = vsel %vm520, %v1780, %v1900
        %v1973 = vsel %vm520, %v1781, %v1902
        %v1974 = vsel %vm520, %v1782, %v1904
        %v1975 = vsel %vm520, %v1783, %v1906
        %v1976 = vsel %vm520, %v1784, %v1908
        %v1977 = vsel %vm520, %v1785, %v1910
        %v1978 = vsel %vm520, %v1786, %v1912
        %v1979 = vsel %vm520, %v1787, %v1914
        %v1980 = vsel %vm520, %v1788, %v1916
        %1981 = vst [vmem:[#allocation3 + $0x18] sm:$0xff] %v1949
        %1982 = vst [vmem:[#allocation3 + $0x40] sm:$0xff] %v1950
        %1983 = vst [vmem:[#allocation3 + $0x68] sm:$0xff] %v1951
        %1984 = vst [vmem:[#allocation3 + $0x90] sm:$0xff] %v1952
        %1985 = vst [vmem:[#allocation3 + $0xb8] sm:$0xff] %v1953
        %1986 = vst [vmem:[#allocation3 + $0xe0] sm:$0xff] %v1954
        %1987 = vst [vmem:[#allocation3 + $0x108] sm:$0xff] %v1955
        %1988 = vst [vmem:[#allocation3 + $0x130] sm:$0xff] %v1956
        %1989 = vst [vmem:[#allocation3 + $0x158] sm:$0xff] %v1957
        %1990 = vst [vmem:[#allocation3 + $0x180] sm:$0xff] %v1958
        %1991 = vst [vmem:[#allocation3 + $0x1a8] sm:$0xff] %v1959
        %1992 = vst [vmem:[#allocation3 + $0x1d0] sm:$0xff] %v1960
        %1993 = vst [vmem:[#allocation3 + $0x1f8] sm:$0xff] %v1961
        %1994 = vst [vmem:[#allocation3 + $0x220] sm:$0xff] %v1962
        %1995 = vst [vmem:[#allocation3 + $0x248] sm:$0xff] %v1963
        %1996 = vst [vmem:[#allocation3 + $0x270] sm:$0xff] %v1964
        %1997 = vst [vmem:[#allocation3 + $0x298] sm:$0xff] %v1965
        %1998 = vst [vmem:[#allocation3 + $0x2c0] sm:$0xff] %v1966
        %1999 = vst [vmem:[#allocation3 + $0x2e8] sm:$0xff] %v1967
        %2000 = vst [vmem:[#allocation3 + $0x310] sm:$0xff] %v1968
        %2001 = vst [vmem:[#allocation3 + $0x338] sm:$0xff] %v1969
        %2002 = vst [vmem:[#allocation3 + $0x360] sm:$0xff] %v1970
        %2003 = vst [vmem:[#allocation3 + $0x388] sm:$0xff] %v1971
        %2004 = vst [vmem:[#allocation3 + $0x3b0] sm:$0xff] %v1972
        %2005 = vst [vmem:[#allocation3 + $0x3d8] sm:$0xff] %v1973
        %2006 = vst [vmem:[#allocation3 + $0x400] sm:$0xff] %v1974
        %2007 = vst [vmem:[#allocation3 + $0x428] sm:$0xff] %v1975
        %2008 = vst [vmem:[#allocation3 + $0x450] sm:$0xff] %v1976
        %2009 = vst [vmem:[#allocation3 + $0x478] sm:$0xff] %v1977
        %2010 = vst [vmem:[#allocation3 + $0x4a0] sm:$0xff] %v1978
        %2011 = vst [vmem:[#allocation3 + $0x4c8] sm:$0xff] %v1979
        %2012 = vst [vmem:[#allocation3 + $0x4f0] sm:$0xff] %v1980
        %v2013 = vld [vmem:[%s1756 + $0x2] sm:$0xff]
        %v2014 = vld [vmem:[%s1756 + $0xa] sm:$0xff]
        %v2015 = vld [vmem:[%s1756 + $0x1a] sm:$0xff]
        %v2016 = vld [vmem:[%s1756 + $0x22] sm:$0xff]
        %v2017 = vld [vmem:[%s1756 + $0x32] sm:$0xff]
        %v2018 = vld [vmem:[%s1756 + $0x3a] sm:$0xff]
        %v2019 = vld [vmem:[%s1756 + $0x4a] sm:$0xff]
        %v2020 = vld [vmem:[%s1756 + $0x52] sm:$0xff]
        %v2021 = vld [vmem:[%s1756 + $0x62] sm:$0xff]
        %v2022 = vld [vmem:[%s1756 + $0x6a] sm:$0xff]
        %v2023 = vld [vmem:[%s1756 + $0x7a] sm:$0xff]
        %v2024 = vld [vmem:[%s1756 + $0x82] sm:$0xff]
        %v2025 = vld [vmem:[%s1756 + $0x92] sm:$0xff]
        %v2026 = vld [vmem:[%s1756 + $0x9a] sm:$0xff]
        %v2027 = vld [vmem:[%s1756 + $0xaa] sm:$0xff]
        %v2028 = vld [vmem:[%s1756 + $0xb2] sm:$0xff]
        %v2029 = vld [vmem:[%s1756 + $0xc2] sm:$0xff]
        %v2030 = vld [vmem:[%s1756 + $0xca] sm:$0xff]
        %v2031 = vld [vmem:[%s1756 + $0xda] sm:$0xff]
        %v2032 = vld [vmem:[%s1756 + $0xe2] sm:$0xff]
        %v2033 = vld [vmem:[%s1756 + $0xf2] sm:$0xff]
        %v2034 = vld [vmem:[%s1756 + $0xfa] sm:$0xff]
        %v2035 = vld [vmem:[%s1756 + $0x10a] sm:$0xff]
        %v2036 = vld [vmem:[%s1756 + $0x112] sm:$0xff]
        %v2037 = vld [vmem:[%s1756 + $0x122] sm:$0xff]
        %v2038 = vld [vmem:[%s1756 + $0x12a] sm:$0xff]
        %v2039 = vld [vmem:[%s1756 + $0x13a] sm:$0xff]
        %v2040 = vld [vmem:[%s1756 + $0x142] sm:$0xff]
        %v2041 = vld [vmem:[%s1756 + $0x152] sm:$0xff]
        %v2042 = vld [vmem:[%s1756 + $0x15a] sm:$0xff]
        %v2043 = vld [vmem:[%s1756 + $0x16a] sm:$0xff]
        %v2044 = vld [vmem:[%s1756 + $0x172] sm:$0xff]
        %2045 = vst.msk [vmem:[#allocation3 + $0x20] sm:$0xff] %vm520, %v2013
        %2046 = vst.msk [vmem:[#allocation3 + $0x48] sm:$0xff] %vm520, %v2014
        %2047 = vst.msk [vmem:[#allocation3 + $0x70] sm:$0xff] %vm520, %v2015
        %2048 = vst.msk [vmem:[#allocation3 + $0x98] sm:$0xff] %vm520, %v2016
        %2049 = vst.msk [vmem:[#allocation3 + $0xc0] sm:$0xff] %vm520, %v2017
        %2050 = vst.msk [vmem:[#allocation3 + $0xe8] sm:$0xff] %vm520, %v2018
        %2051 = vst.msk [vmem:[#allocation3 + $0x110] sm:$0xff] %vm520, %v2019
        %2052 = vst.msk [vmem:[#allocation3 + $0x138] sm:$0xff] %vm520, %v2020
        %2053 = vst.msk [vmem:[#allocation3 + $0x160] sm:$0xff] %vm520, %v2021
        %2054 = vst.msk [vmem:[#allocation3 + $0x188] sm:$0xff] %vm520, %v2022
        %2055 = vst.msk [vmem:[#allocation3 + $0x1b0] sm:$0xff] %vm520, %v2023
        %2056 = vst.msk [vmem:[#allocation3 + $0x1d8] sm:$0xff] %vm520, %v2024
        %2057 = vst.msk [vmem:[#allocation3 + $0x200] sm:$0xff] %vm520, %v2025
        %2058 = vst.msk [vmem:[#allocation3 + $0x228] sm:$0xff] %vm520, %v2026
        %2059 = vst.msk [vmem:[#allocation3 + $0x250] sm:$0xff] %vm520, %v2027
        %2060 = vst.msk [vmem:[#allocation3 + $0x278] sm:$0xff] %vm520, %v2028
        %2061 = vst.msk [vmem:[#allocation3 + $0x2a0] sm:$0xff] %vm520, %v2029
        %2062 = vst.msk [vmem:[#allocation3 + $0x2c8] sm:$0xff] %vm520, %v2030
        %2063 = vst.msk [vmem:[#allocation3 + $0x2f0] sm:$0xff] %vm520, %v2031
        %2064 = vst.msk [vmem:[#allocation3 + $0x318] sm:$0xff] %vm520, %v2032
        %2065 = vst.msk [vmem:[#allocation3 + $0x340] sm:$0xff] %vm520, %v2033
        %2066 = vst.msk [vmem:[#allocation3 + $0x368] sm:$0xff] %vm520, %v2034
        %2067 = vst.msk [vmem:[#allocation3 + $0x390] sm:$0xff] %vm520, %v2035
        %2068 = vst.msk [vmem:[#allocation3 + $0x3b8] sm:$0xff] %vm520, %v2036
        %2069 = vst.msk [vmem:[#allocation3 + $0x3e0] sm:$0xff] %vm520, %v2037
        %2070 = vst.msk [vmem:[#allocation3 + $0x408] sm:$0xff] %vm520, %v2038
        %2071 = vst.msk [vmem:[#allocation3 + $0x430] sm:$0xff] %vm520, %v2039
        %2072 = vst.msk [vmem:[#allocation3 + $0x458] sm:$0xff] %vm520, %v2040
        %2073 = vst.msk [vmem:[#allocation3 + $0x480] sm:$0xff] %vm520, %v2041
        %2074 = vst.msk [vmem:[#allocation3 + $0x4a8] sm:$0xff] %vm520, %v2042
        %2075 = vst.msk [vmem:[#allocation3 + $0x4d0] sm:$0xff] %vm520, %v2043
        %2076 = vst.msk [vmem:[#allocation3 + $0x4f8] sm:$0xff] %vm520, %v2044
        %v2077 = vld [vmem:[#allocation3] sm:$0xff]
        %v2078 = vld [vmem:[#allocation3 + $0x8] sm:$0xff]
        %v2079 = vld [vmem:[#allocation3 + $0x10] sm:$0xff]
        %v2080 = vld [vmem:[#allocation3 + $0x18] sm:$0xff]
        %v2081 = vld [vmem:[#allocation3 + $0x20] sm:$0xff]
        %v2082 = vld [vmem:[#allocation3 + $0x28] sm:$0xff]
        %v2083 = vld [vmem:[#allocation3 + $0x30] sm:$0xff]
        %v2084 = vld [vmem:[#allocation3 + $0x38] sm:$0xff]
        %v2085 = vld [vmem:[#allocation3 + $0x40] sm:$0xff]
        %v2086 = vld [vmem:[#allocation3 + $0x48] sm:$0xff]
        %v2087 = vld [vmem:[#allocation3 + $0x50] sm:$0xff]
        %v2088 = vld [vmem:[#allocation3 + $0x58] sm:$0xff]
        %v2089 = vld [vmem:[#allocation3 + $0x60] sm:$0xff]
        %v2090 = vld [vmem:[#allocation3 + $0x68] sm:$0xff]
        %v2091 = vld [vmem:[#allocation3 + $0x70] sm:$0xff]
        %v2092 = vld [vmem:[#allocation3 + $0x78] sm:$0xff]
        %v2093 = vld [vmem:[#allocation3 + $0x80] sm:$0xff]
        %v2094 = vld [vmem:[#allocation3 + $0x88] sm:$0xff]
        %v2095 = vld [vmem:[#allocation3 + $0x90] sm:$0xff]
        %v2096 = vld [vmem:[#allocation3 + $0x98] sm:$0xff]
        %v2097 = vld [vmem:[#allocation3 + $0xa0] sm:$0xff]
        %v2098 = vld [vmem:[#allocation3 + $0xa8] sm:$0xff]
        %v2099 = vld [vmem:[#allocation3 + $0xb0] sm:$0xff]
        %v2100 = vld [vmem:[#allocation3 + $0xb8] sm:$0xff]
        %v2101 = vld [vmem:[#allocation3 + $0xc0] sm:$0xff]
        %v2102 = vld [vmem:[#allocation3 + $0xc8] sm:$0xff]
        %v2103 = vld [vmem:[#allocation3 + $0xd0] sm:$0xff]
        %v2104 = vld [vmem:[#allocation3 + $0xd8] sm:$0xff]
        %v2105 = vld [vmem:[#allocation3 + $0xe0] sm:$0xff]
        %v2106 = vld [vmem:[#allocation3 + $0xe8] sm:$0xff]
        %v2107 = vld [vmem:[#allocation3 + $0xf0] sm:$0xff]
        %v2108 = vld [vmem:[#allocation3 + $0xf8] sm:$0xff]
        %v2109 = vld [vmem:[#allocation3 + $0x100] sm:$0xff]
        %v2110 = vld [vmem:[#allocation3 + $0x108] sm:$0xff]
        %v2111 = vld [vmem:[#allocation3 + $0x110] sm:$0xff]
        %v2112 = vld [vmem:[#allocation3 + $0x118] sm:$0xff]
        %v2113 = vld [vmem:[#allocation3 + $0x120] sm:$0xff]
        %v2114 = vld [vmem:[#allocation3 + $0x128] sm:$0xff]
        %v2115 = vld [vmem:[#allocation3 + $0x130] sm:$0xff]
        %v2116 = vld [vmem:[#allocation3 + $0x138] sm:$0xff]
        %v2117 = vld [vmem:[#allocation3 + $0x140] sm:$0xff]
        %v2118 = vld [vmem:[#allocation3 + $0x148] sm:$0xff]
        %v2119 = vld [vmem:[#allocation3 + $0x150] sm:$0xff]
        %v2120 = vld [vmem:[#allocation3 + $0x158] sm:$0xff]
        %v2121 = vld [vmem:[#allocation3 + $0x160] sm:$0xff]
        %v2122 = vld [vmem:[#allocation3 + $0x168] sm:$0xff]
        %v2123 = vld [vmem:[#allocation3 + $0x170] sm:$0xff]
        %v2124 = vld [vmem:[#allocation3 + $0x178] sm:$0xff]
        %v2125 = vld [vmem:[#allocation3 + $0x180] sm:$0xff]
        %v2126 = vld [vmem:[#allocation3 + $0x188] sm:$0xff]
        %v2127 = vld [vmem:[#allocation3 + $0x190] sm:$0xff]
        %v2128 = vld [vmem:[#allocation3 + $0x198] sm:$0xff]
        %v2129 = vld [vmem:[#allocation3 + $0x1a0] sm:$0xff]
        %v2130 = vld [vmem:[#allocation3 + $0x1a8] sm:$0xff]
        %v2131 = vld [vmem:[#allocation3 + $0x1b0] sm:$0xff]
        %v2132 = vld [vmem:[#allocation3 + $0x1b8] sm:$0xff]
        %v2133 = vld [vmem:[#allocation3 + $0x1c0] sm:$0xff]
        %v2134 = vld [vmem:[#allocation3 + $0x1c8] sm:$0xff]
        %v2135 = vld [vmem:[#allocation3 + $0x1d0] sm:$0xff]
        %v2136 = vld [vmem:[#allocation3 + $0x1d8] sm:$0xff]
        %v2137 = vld [vmem:[#allocation3 + $0x1e0] sm:$0xff]
        %v2138 = vld [vmem:[#allocation3 + $0x1e8] sm:$0xff]
        %v2139 = vld [vmem:[#allocation3 + $0x1f0] sm:$0xff]
        %v2140 = vld [vmem:[#allocation3 + $0x1f8] sm:$0xff]
        %v2141 = vld [vmem:[#allocation3 + $0x200] sm:$0xff]
        %v2142 = vld [vmem:[#allocation3 + $0x208] sm:$0xff]
        %v2143 = vld [vmem:[#allocation3 + $0x210] sm:$0xff]
        %v2144 = vld [vmem:[#allocation3 + $0x218] sm:$0xff]
        %v2145 = vld [vmem:[#allocation3 + $0x220] sm:$0xff]
        %v2146 = vld [vmem:[#allocation3 + $0x228] sm:$0xff]
        %v2147 = vld [vmem:[#allocation3 + $0x230] sm:$0xff]
        %v2148 = vld [vmem:[#allocation3 + $0x238] sm:$0xff]
        %v2149 = vld [vmem:[#allocation3 + $0x240] sm:$0xff]
        %v2150 = vld [vmem:[#allocation3 + $0x248] sm:$0xff]
        %v2151 = vld [vmem:[#allocation3 + $0x250] sm:$0xff]
        %v2152 = vld [vmem:[#allocation3 + $0x258] sm:$0xff]
        %v2153 = vld [vmem:[#allocation3 + $0x260] sm:$0xff]
        %v2154 = vld [vmem:[#allocation3 + $0x268] sm:$0xff]
        %v2155 = vld [vmem:[#allocation3 + $0x270] sm:$0xff]
        %v2156 = vld [vmem:[#allocation3 + $0x278] sm:$0xff]
        %v2157 = vld [vmem:[#allocation3 + $0x280] sm:$0xff]
        %v2158 = vld [vmem:[#allocation3 + $0x288] sm:$0xff]
        %v2159 = vld [vmem:[#allocation3 + $0x290] sm:$0xff]
        %v2160 = vld [vmem:[#allocation3 + $0x298] sm:$0xff]
        %v2161 = vld [vmem:[#allocation3 + $0x2a0] sm:$0xff]
        %v2162 = vld [vmem:[#allocation3 + $0x2a8] sm:$0xff]
        %v2163 = vld [vmem:[#allocation3 + $0x2b0] sm:$0xff]
        %v2164 = vld [vmem:[#allocation3 + $0x2b8] sm:$0xff]
        %v2165 = vld [vmem:[#allocation3 + $0x2c0] sm:$0xff]
        %v2166 = vld [vmem:[#allocation3 + $0x2c8] sm:$0xff]
        %v2167 = vld [vmem:[#allocation3 + $0x2d0] sm:$0xff]
        %v2168 = vld [vmem:[#allocation3 + $0x2d8] sm:$0xff]
        %v2169 = vld [vmem:[#allocation3 + $0x2e0] sm:$0xff]
        %v2170 = vld [vmem:[#allocation3 + $0x2e8] sm:$0xff]
        %v2171 = vld [vmem:[#allocation3 + $0x2f0] sm:$0xff]
        %v2172 = vld [vmem:[#allocation3 + $0x2f8] sm:$0xff]
        %v2173 = vld [vmem:[#allocation3 + $0x300] sm:$0xff]
        %v2174 = vld [vmem:[#allocation3 + $0x308] sm:$0xff]
        %v2175 = vld [vmem:[#allocation3 + $0x310] sm:$0xff]
        %v2176 = vld [vmem:[#allocation3 + $0x318] sm:$0xff]
        %v2177 = vld [vmem:[#allocation3 + $0x320] sm:$0xff]
        %v2178 = vld [vmem:[#allocation3 + $0x328] sm:$0xff]
        %v2179 = vld [vmem:[#allocation3 + $0x330] sm:$0xff]
        %v2180 = vld [vmem:[#allocation3 + $0x338] sm:$0xff]
        %v2181 = vld [vmem:[#allocation3 + $0x340] sm:$0xff]
        %v2182 = vld [vmem:[#allocation3 + $0x348] sm:$0xff]
        %v2183 = vld [vmem:[#allocation3 + $0x350] sm:$0xff]
        %v2184 = vld [vmem:[#allocation3 + $0x358] sm:$0xff]
        %v2185 = vld [vmem:[#allocation3 + $0x360] sm:$0xff]
        %v2186 = vld [vmem:[#allocation3 + $0x368] sm:$0xff]
        %v2187 = vld [vmem:[#allocation3 + $0x370] sm:$0xff]
        %v2188 = vld [vmem:[#allocation3 + $0x378] sm:$0xff]
        %v2189 = vld [vmem:[#allocation3 + $0x380] sm:$0xff]
        %v2190 = vld [vmem:[#allocation3 + $0x388] sm:$0xff]
        %v2191 = vld [vmem:[#allocation3 + $0x390] sm:$0xff]
        %v2192 = vld [vmem:[#allocation3 + $0x398] sm:$0xff]
        %v2193 = vld [vmem:[#allocation3 + $0x3a0] sm:$0xff]
        %v2194 = vld [vmem:[#allocation3 + $0x3a8] sm:$0xff]
        %v2195 = vld [vmem:[#allocation3 + $0x3b0] sm:$0xff]
        %v2196 = vld [vmem:[#allocation3 + $0x3b8] sm:$0xff]
        %v2197 = vld [vmem:[#allocation3 + $0x3c0] sm:$0xff]
        %v2198 = vld [vmem:[#allocation3 + $0x3c8] sm:$0xff]
        %v2199 = vld [vmem:[#allocation3 + $0x3d0] sm:$0xff]
        %v2200 = vld [vmem:[#allocation3 + $0x3d8] sm:$0xff]
        %v2201 = vld [vmem:[#allocation3 + $0x3e0] sm:$0xff]
        %v2202 = vld [vmem:[#allocation3 + $0x3e8] sm:$0xff]
        %v2203 = vld [vmem:[#allocation3 + $0x3f0] sm:$0xff]
        %v2204 = vld [vmem:[#allocation3 + $0x3f8] sm:$0xff]
        %v2205 = vld [vmem:[#allocation3 + $0x400] sm:$0xff]
        %v2206 = vld [vmem:[#allocation3 + $0x408] sm:$0xff]
        %v2207 = vld [vmem:[#allocation3 + $0x410] sm:$0xff]
        %v2208 = vld [vmem:[#allocation3 + $0x418] sm:$0xff]
        %v2209 = vld [vmem:[#allocation3 + $0x420] sm:$0xff]
        %v2210 = vld [vmem:[#allocation3 + $0x428] sm:$0xff]
        %v2211 = vld [vmem:[#allocation3 + $0x430] sm:$0xff]
        %v2212 = vld [vmem:[#allocation3 + $0x438] sm:$0xff]
        %v2213 = vld [vmem:[#allocation3 + $0x440] sm:$0xff]
        %v2214 = vld [vmem:[#allocation3 + $0x448] sm:$0xff]
        %v2215 = vld [vmem:[#allocation3 + $0x450] sm:$0xff]
        %v2216 = vld [vmem:[#allocation3 + $0x458] sm:$0xff]
        %v2217 = vld [vmem:[#allocation3 + $0x460] sm:$0xff]
        %v2218 = vld [vmem:[#allocation3 + $0x468] sm:$0xff]
        %v2219 = vld [vmem:[#allocation3 + $0x470] sm:$0xff]
        %v2220 = vld [vmem:[#allocation3 + $0x478] sm:$0xff]
        %v2221 = vld [vmem:[#allocation3 + $0x480] sm:$0xff]
        %v2222 = vld [vmem:[#allocation3 + $0x488] sm:$0xff]
        %v2223 = vld [vmem:[#allocation3 + $0x490] sm:$0xff]
        %v2224 = vld [vmem:[#allocation3 + $0x498] sm:$0xff]
        %v2225 = vld [vmem:[#allocation3 + $0x4a0] sm:$0xff]
        %v2226 = vld [vmem:[#allocation3 + $0x4a8] sm:$0xff]
        %v2227 = vld [vmem:[#allocation3 + $0x4b0] sm:$0xff]
        %v2228 = vld [vmem:[#allocation3 + $0x4b8] sm:$0xff]
        %v2229 = vld [vmem:[#allocation3 + $0x4c0] sm:$0xff]
        %v2230 = vld [vmem:[#allocation3 + $0x4c8] sm:$0xff]
        %v2231 = vld [vmem:[#allocation3 + $0x4d0] sm:$0xff]
        %v2232 = vld [vmem:[#allocation3 + $0x4d8] sm:$0xff]
        %v2233 = vld [vmem:[#allocation3 + $0x4e0] sm:$0xff]
        %v2234 = vld [vmem:[#allocation3 + $0x4e8] sm:$0xff]
        %v2235 = vld [vmem:[#allocation3 + $0x4f0] sm:$0xff]
        %v2236 = vld [vmem:[#allocation3 + $0x4f8] sm:$0xff]
        %v2237 = vld [vmem:[%s12] sm:$0xff]
        %v2238 = vld [vmem:[%s12 + $0x8] sm:$0xff]
        %v2239 = vld [vmem:[%s12 + $0x10] sm:$0xff]
        %v2240 = vld [vmem:[%s12 + $0x18] sm:$0xff]
        %v2241 = vld [vmem:[%s12 + $0x20] sm:$0xff]
        %v2242 = vld [vmem:[%s12 + $0x28] sm:$0xff]
        %v2243 = vld [vmem:[%s12 + $0x30] sm:$0xff]
        %v2244 = vld [vmem:[%s12 + $0x38] sm:$0xff]
        %v2245 = vld [vmem:[%s12 + $0x40] sm:$0xff]
        %v2246 = vld [vmem:[%s12 + $0x48] sm:$0xff]
        %v2247 = vld [vmem:[%s12 + $0x50] sm:$0xff]
        %v2248 = vld [vmem:[%s12 + $0x58] sm:$0xff]
        %v2249 = vld [vmem:[%s12 + $0x60] sm:$0xff]
        %v2250 = vld [vmem:[%s12 + $0x68] sm:$0xff]
        %v2251 = vld [vmem:[%s12 + $0x70] sm:$0xff]
        %v2252 = vld [vmem:[%s12 + $0x78] sm:$0xff]
        %v2253 = vld [vmem:[%s12 + $0x80] sm:$0xff]
        %v2254 = vld [vmem:[%s12 + $0x88] sm:$0xff]
        %v2255 = vld [vmem:[%s12 + $0x90] sm:$0xff]
        %v2256 = vld [vmem:[%s12 + $0x98] sm:$0xff]
        %v2257 = vld [vmem:[%s12 + $0xa0] sm:$0xff]
        %v2258 = vld [vmem:[%s12 + $0xa8] sm:$0xff]
        %v2259 = vld [vmem:[%s12 + $0xb0] sm:$0xff]
        %v2260 = vld [vmem:[%s12 + $0xb8] sm:$0xff]
        %v2261 = vld [vmem:[%s12 + $0xc0] sm:$0xff]
        %v2262 = vld [vmem:[%s12 + $0xc8] sm:$0xff]
        %v2263 = vld [vmem:[%s12 + $0xd0] sm:$0xff]
        %v2264 = vld [vmem:[%s12 + $0xd8] sm:$0xff]
        %v2265 = vld [vmem:[%s12 + $0xe0] sm:$0xff]
        %v2266 = vld [vmem:[%s12 + $0xe8] sm:$0xff]
        %v2267 = vld [vmem:[%s12 + $0xf0] sm:$0xff]
        %v2268 = vld [vmem:[%s12 + $0xf8] sm:$0xff]
        %v2269 = vld [vmem:[%s12 + $0x100] sm:$0xff]
        %v2270 = vld [vmem:[%s12 + $0x108] sm:$0xff]
        %v2271 = vld [vmem:[%s12 + $0x110] sm:$0xff]
        %v2272 = vld [vmem:[%s12 + $0x118] sm:$0xff]
        %v2273 = vld [vmem:[%s12 + $0x120] sm:$0xff]
        %v2274 = vld [vmem:[%s12 + $0x128] sm:$0xff]
        %v2275 = vld [vmem:[%s12 + $0x130] sm:$0xff]
        %v2276 = vld [vmem:[%s12 + $0x138] sm:$0xff]
        %v2277 = vld [vmem:[%s12 + $0x140] sm:$0xff]
        %v2278 = vld [vmem:[%s12 + $0x148] sm:$0xff]
        %v2279 = vld [vmem:[%s12 + $0x150] sm:$0xff]
        %v2280 = vld [vmem:[%s12 + $0x158] sm:$0xff]
        %v2281 = vld [vmem:[%s12 + $0x160] sm:$0xff]
        %v2282 = vld [vmem:[%s12 + $0x168] sm:$0xff]
        %v2283 = vld [vmem:[%s12 + $0x170] sm:$0xff]
        %v2284 = vld [vmem:[%s12 + $0x178] sm:$0xff]
        %v2285 = vld [vmem:[%s12 + $0x180] sm:$0xff]
        %v2286 = vld [vmem:[%s12 + $0x188] sm:$0xff]
        %v2287 = vld [vmem:[%s12 + $0x190] sm:$0xff]
        %v2288 = vld [vmem:[%s12 + $0x198] sm:$0xff]
        %v2289 = vld [vmem:[%s12 + $0x1a0] sm:$0xff]
        %v2290 = vld [vmem:[%s12 + $0x1a8] sm:$0xff]
        %v2291 = vld [vmem:[%s12 + $0x1b0] sm:$0xff]
        %v2292 = vld [vmem:[%s12 + $0x1b8] sm:$0xff]
        %v2293 = vld [vmem:[%s12 + $0x1c0] sm:$0xff]
        %v2294 = vld [vmem:[%s12 + $0x1c8] sm:$0xff]
        %v2295 = vld [vmem:[%s12 + $0x1d0] sm:$0xff]
        %v2296 = vld [vmem:[%s12 + $0x1d8] sm:$0xff]
        %v2297 = vld [vmem:[%s12 + $0x1e0] sm:$0xff]
        %v2298 = vld [vmem:[%s12 + $0x1e8] sm:$0xff]
        %v2299 = vld [vmem:[%s12 + $0x1f0] sm:$0xff]
        %v2300 = vld [vmem:[%s12 + $0x1f8] sm:$0xff]
        %v2301 = vld [vmem:[%s12 + $0x200] sm:$0xff]
        %v2302 = vld [vmem:[%s12 + $0x208] sm:$0xff]
        %v2303 = vld [vmem:[%s12 + $0x210] sm:$0xff]
        %v2304 = vld [vmem:[%s12 + $0x218] sm:$0xff]
        %v2305 = vld [vmem:[%s12 + $0x220] sm:$0xff]
        %v2306 = vld [vmem:[%s12 + $0x228] sm:$0xff]
        %v2307 = vld [vmem:[%s12 + $0x230] sm:$0xff]
        %v2308 = vld [vmem:[%s12 + $0x238] sm:$0xff]
        %v2310 = vsel %vm520, %v2081, 0
        %v2313 = vsel %vm520, %v2086, 0
        %v2316 = vsel %vm520, %v2091, 0
        %v2319 = vsel %vm520, %v2096, 0
        %v2322 = vsel %vm520, %v2101, 0
        %v2325 = vsel %vm520, %v2106, 0
        %v2328 = vsel %vm520, %v2111, 0
        %v2331 = vsel %vm520, %v2116, 0
        %v2334 = vsel %vm520, %v2121, 0
        %v2337 = vsel %vm520, %v2126, 0
        %v2340 = vsel %vm520, %v2131, 0
        %v2343 = vsel %vm520, %v2136, 0
        %v2346 = vsel %vm520, %v2141, 0
        %v2349 = vsel %vm520, %v2146, 0
        %v2352 = vsel %vm520, %v2151, 0
        %v2355 = vsel %vm520, %v2156, 0
        %v2358 = vsel %vm520, %v2161, 0
        %v2361 = vsel %vm520, %v2166, 0
        %v2364 = vsel %vm520, %v2171, 0
        %v2367 = vsel %vm520, %v2176, 0
        %v2370 = vsel %vm520, %v2181, 0
        %v2373 = vsel %vm520, %v2186, 0
        %v2376 = vsel %vm520, %v2191, 0
        %v2379 = vsel %vm520, %v2196, 0
        %v2382 = vsel %vm520, %v2201, 0
        %v2385 = vsel %vm520, %v2206, 0
        %v2388 = vsel %vm520, %v2211, 0
        %v2391 = vsel %vm520, %v2216, 0
        %v2394 = vsel %vm520, %v2221, 0
        %v2397 = vsel %vm520, %v2226, 0
        %v2400 = vsel %vm520, %v2231, 0
        %v2403 = vsel %vm520, %v2236, 0
        %2405 = vmatpush.msra.mxu0 %v2252
        %2406 = vmatpush.msra.mxu0 %v2251
        %2407 = vmatpush.msra.mxu0 %v2250
        %2408 = vmatpush.msra.mxu0 %v2249
        %2409 = vmatpush.msra.mxu0 %v2248
        %2410 = vmatpush.msra.mxu0 %v2247
        %2411 = vmatpush.msra.mxu0 %v2246
        %2412 = vmatpush.msra.mxu0 %v2245
        %2413 = vmatpush.msra.mxu0 %v2244
        %2414 = vmatpush.msra.mxu0 %v2243
        %2415 = vmatpush.msra.mxu0 %v2242
        %2416 = vmatpush.msra.mxu0 %v2241
        %2417 = vmatpush.msra.mxu0 %v2240
        %2418 = vmatpush.msra.mxu0 %v2239
        %2419 = vmatpush.msra.mxu0 %v2238
        %2420 = vmatpush.msra.mxu0 %v2237
        %2421 = vmatmul.f32.gmra.mxu0 %v2077
        %v2422 = vpop.f32.mrf.mxu0
        %v2423 = vadd.f32 0.0, %v2422
        %2424 = vmatmul.f32.gmra.mxu0 %v2082
        %v2425 = vpop.f32.mrf.mxu0
        %v2426 = vadd.f32 0.0, %v2425
        %2427 = vmatmul.f32.gmra.mxu0 %v2087
        %v2428 = vpop.f32.mrf.mxu0
        %v2429 = vadd.f32 0.0, %v2428
        %2430 = vmatmul.f32.gmra.mxu0 %v2092
        %v2431 = vpop.f32.mrf.mxu0
        %v2432 = vadd.f32 0.0, %v2431
        %2433 = vmatmul.f32.gmra.mxu0 %v2097
        %v2434 = vpop.f32.mrf.mxu0
        %v2435 = vadd.f32 0.0, %v2434
        %2436 = vmatmul.f32.gmra.mxu0 %v2102
        %v2437 = vpop.f32.mrf.mxu0
        %v2438 = vadd.f32 0.0, %v2437
        %2439 = vmatmul.f32.gmra.mxu0 %v2107
        %v2440 = vpop.f32.mrf.mxu0
        %v2441 = vadd.f32 0.0, %v2440
        %2442 = vmatmul.f32.gmra.mxu0 %v2112
        %v2443 = vpop.f32.mrf.mxu0
        %v2444 = vadd.f32 0.0, %v2443
        %2445 = vmatmul.f32.gmra.mxu0 %v2117
        %v2446 = vpop.f32.mrf.mxu0
        %v2447 = vadd.f32 0.0, %v2446
        %2448 = vmatmul.f32.gmra.mxu0 %v2122
        %v2449 = vpop.f32.mrf.mxu0
        %v2450 = vadd.f32 0.0, %v2449
        %2451 = vmatmul.f32.gmra.mxu0 %v2127
        %v2452 = vpop.f32.mrf.mxu0
        %v2453 = vadd.f32 0.0, %v2452
        %2454 = vmatmul.f32.gmra.mxu0 %v2132
        %v2455 = vpop.f32.mrf.mxu0
        %v2456 = vadd.f32 0.0, %v2455
        %2457 = vmatmul.f32.gmra.mxu0 %v2137
        %v2458 = vpop.f32.mrf.mxu0
        %v2459 = vadd.f32 0.0, %v2458
        %2460 = vmatmul.f32.gmra.mxu0 %v2142
        %v2461 = vpop.f32.mrf.mxu0
        %v2462 = vadd.f32 0.0, %v2461
        %2463 = vmatmul.f32.gmra.mxu0 %v2147
        %v2464 = vpop.f32.mrf.mxu0
        %v2465 = vadd.f32 0.0, %v2464
        %2466 = vmatmul.f32.gmra.mxu0 %v2152
        %v2467 = vpop.f32.mrf.mxu0
        %v2468 = vadd.f32 0.0, %v2467
        %2469 = vmatmul.f32.gmra.mxu0 %v2157
        %v2470 = vpop.f32.mrf.mxu0
        %v2471 = vadd.f32 0.0, %v2470
        %2472 = vmatmul.f32.gmra.mxu0 %v2162
        %v2473 = vpop.f32.mrf.mxu0
        %v2474 = vadd.f32 0.0, %v2473
        %2475 = vmatmul.f32.gmra.mxu0 %v2167
        %v2476 = vpop.f32.mrf.mxu0
        %v2477 = vadd.f32 0.0, %v2476
        %2478 = vmatmul.f32.gmra.mxu0 %v2172
        %v2479 = vpop.f32.mrf.mxu0
        %v2480 = vadd.f32 0.0, %v2479
        %2481 = vmatmul.f32.gmra.mxu0 %v2177
        %v2482 = vpop.f32.mrf.mxu0
        %v2483 = vadd.f32 0.0, %v2482
        %2484 = vmatmul.f32.gmra.mxu0 %v2182
        %v2485 = vpop.f32.mrf.mxu0
        %v2486 = vadd.f32 0.0, %v2485
        %2487 = vmatmul.f32.gmra.mxu0 %v2187
        %v2488 = vpop.f32.mrf.mxu0
        %v2489 = vadd.f32 0.0, %v2488
        %2490 = vmatmul.f32.gmra.mxu0 %v2192
        %v2491 = vpop.f32.mrf.mxu0
        %v2492 = vadd.f32 0.0, %v2491
        %2493 = vmatmul.f32.gmra.mxu0 %v2197
        %v2494 = vpop.f32.mrf.mxu0
        %v2495 = vadd.f32 0.0, %v2494
        %2496 = vmatmul.f32.gmra.mxu0 %v2202
        %v2497 = vpop.f32.mrf.mxu0
        %v2498 = vadd.f32 0.0, %v2497
        %2499 = vmatmul.f32.gmra.mxu0 %v2207
        %v2500 = vpop.f32.mrf.mxu0
        %v2501 = vadd.f32 0.0, %v2500
        %2502 = vmatmul.f32.gmra.mxu0 %v2212
        %v2503 = vpop.f32.mrf.mxu0
        %v2504 = vadd.f32 0.0, %v2503
        %2505 = vmatmul.f32.gmra.mxu0 %v2217
        %v2506 = vpop.f32.mrf.mxu0
        %v2507 = vadd.f32 0.0, %v2506
        %2508 = vmatmul.f32.gmra.mxu0 %v2222
        %v2509 = vpop.f32.mrf.mxu0
        %v2510 = vadd.f32 0.0, %v2509
        %2511 = vmatmul.f32.gmra.mxu0 %v2227
        %v2512 = vpop.f32.mrf.mxu0
        %v2513 = vadd.f32 0.0, %v2512
        %2514 = vmatmul.f32.gmra.mxu0 %v2232
        %v2515 = vpop.f32.mrf.mxu0
        %v2516 = vadd.f32 0.0, %v2515
        %2517 = vdwg.mxu0
        %2518 = vmatpush.msra.mxu0 %v2268
        %2519 = vmatpush.msra.mxu0 %v2267
        %2520 = vmatpush.msra.mxu0 %v2266
        %2521 = vmatpush.msra.mxu0 %v2265
        %2522 = vmatpush.msra.mxu0 %v2264
        %2523 = vmatpush.msra.mxu0 %v2263
        %2524 = vmatpush.msra.mxu0 %v2262
        %2525 = vmatpush.msra.mxu0 %v2261
        %2526 = vmatpush.msra.mxu0 %v2260
        %2527 = vmatpush.msra.mxu0 %v2259
        %2528 = vmatpush.msra.mxu0 %v2258
        %2529 = vmatpush.msra.mxu0 %v2257
        %2530 = vmatpush.msra.mxu0 %v2256
        %2531 = vmatpush.msra.mxu0 %v2255
        %2532 = vmatpush.msra.mxu0 %v2254
        %2533 = vmatpush.msra.mxu0 %v2253
        %2534 = vmatmul.f32.gmra.mxu0 %v2078
        %v2535 = vpop.f32.mrf.mxu0
        %v2536 = vadd.f32 %v2423, %v2535
        %2537 = vmatmul.f32.gmra.mxu0 %v2083
        %v2538 = vpop.f32.mrf.mxu0
        %v2539 = vadd.f32 %v2426, %v2538
        %2540 = vmatmul.f32.gmra.mxu0 %v2088
        %v2541 = vpop.f32.mrf.mxu0
        %v2542 = vadd.f32 %v2429, %v2541
        %2543 = vmatmul.f32.gmra.mxu0 %v2093
        %v2544 = vpop.f32.mrf.mxu0
        %v2545 = vadd.f32 %v2432, %v2544
        %2546 = vmatmul.f32.gmra.mxu0 %v2098
        %v2547 = vpop.f32.mrf.mxu0
        %v2548 = vadd.f32 %v2435, %v2547
        %2549 = vmatmul.f32.gmra.mxu0 %v2103
        %v2550 = vpop.f32.mrf.mxu0
        %v2551 = vadd.f32 %v2438, %v2550
        %2552 = vmatmul.f32.gmra.mxu0 %v2108
        %v2553 = vpop.f32.mrf.mxu0
        %v2554 = vadd.f32 %v2441, %v2553
        %2555 = vmatmul.f32.gmra.mxu0 %v2113
        %v2556 = vpop.f32.mrf.mxu0
        %v2557 = vadd.f32 %v2444, %v2556
        %2558 = vmatmul.f32.gmra.mxu0 %v2118
        %v2559 = vpop.f32.mrf.mxu0
        %v2560 = vadd.f32 %v2447, %v2559
        %2561 = vmatmul.f32.gmra.mxu0 %v2123
        %v2562 = vpop.f32.mrf.mxu0
        %v2563 = vadd.f32 %v2450, %v2562
        %2564 = vmatmul.f32.gmra.mxu0 %v2128
        %v2565 = vpop.f32.mrf.mxu0
        %v2566 = vadd.f32 %v2453, %v2565
        %2567 = vmatmul.f32.gmra.mxu0 %v2133
        %v2568 = vpop.f32.mrf.mxu0
        %v2569 = vadd.f32 %v2456, %v2568
        %2570 = vmatmul.f32.gmra.mxu0 %v2138
        %v2571 = vpop.f32.mrf.mxu0
        %v2572 = vadd.f32 %v2459, %v2571
        %2573 = vmatmul.f32.gmra.mxu0 %v2143
        %v2574 = vpop.f32.mrf.mxu0
        %v2575 = vadd.f32 %v2462, %v2574
        %2576 = vmatmul.f32.gmra.mxu0 %v2148
        %v2577 = vpop.f32.mrf.mxu0
        %v2578 = vadd.f32 %v2465, %v2577
        %2579 = vmatmul.f32.gmra.mxu0 %v2153
        %v2580 = vpop.f32.mrf.mxu0
        %v2581 = vadd.f32 %v2468, %v2580
        %2582 = vmatmul.f32.gmra.mxu0 %v2158
        %v2583 = vpop.f32.mrf.mxu0
        %v2584 = vadd.f32 %v2471, %v2583
        %2585 = vmatmul.f32.gmra.mxu0 %v2163
        %v2586 = vpop.f32.mrf.mxu0
        %v2587 = vadd.f32 %v2474, %v2586
        %2588 = vmatmul.f32.gmra.mxu0 %v2168
        %v2589 = vpop.f32.mrf.mxu0
        %v2590 = vadd.f32 %v2477, %v2589
        %2591 = vmatmul.f32.gmra.mxu0 %v2173
        %v2592 = vpop.f32.mrf.mxu0
        %v2593 = vadd.f32 %v2480, %v2592
        %2594 = vmatmul.f32.gmra.mxu0 %v2178
        %v2595 = vpop.f32.mrf.mxu0
        %v2596 = vadd.f32 %v2483, %v2595
        %2597 = vmatmul.f32.gmra.mxu0 %v2183
        %v2598 = vpop.f32.mrf.mxu0
        %v2599 = vadd.f32 %v2486, %v2598
        %2600 = vmatmul.f32.gmra.mxu0 %v2188
        %v2601 = vpop.f32.mrf.mxu0
        %v2602 = vadd.f32 %v2489, %v2601
        %2603 = vmatmul.f32.gmra.mxu0 %v2193
        %v2604 = vpop.f32.mrf.mxu0
        %v2605 = vadd.f32 %v2492, %v2604
        %2606 = vmatmul.f32.gmra.mxu0 %v2198
        %v2607 = vpop.f32.mrf.mxu0
        %v2608 = vadd.f32 %v2495, %v2607
        %2609 = vmatmul.f32.gmra.mxu0 %v2203
        %v2610 = vpop.f32.mrf.mxu0
        %v2611 = vadd.f32 %v2498, %v2610
        %2612 = vmatmul.f32.gmra.mxu0 %v2208
        %v2613 = vpop.f32.mrf.mxu0
        %v2614 = vadd.f32 %v2501, %v2613
        %2615 = vmatmul.f32.gmra.mxu0 %v2213
        %v2616 = vpop.f32.mrf.mxu0
        %v2617 = vadd.f32 %v2504, %v2616
        %2618 = vmatmul.f32.gmra.mxu0 %v2218
        %v2619 = vpop.f32.mrf.mxu0
        %v2620 = vadd.f32 %v2507, %v2619
        %2621 = vmatmul.f32.gmra.mxu0 %v2223
        %v2622 = vpop.f32.mrf.mxu0
        %v2623 = vadd.f32 %v2510, %v2622
        %2624 = vmatmul.f32.gmra.mxu0 %v2228
        %v2625 = vpop.f32.mrf.mxu0
        %v2626 = vadd.f32 %v2513, %v2625
        %2627 = vmatmul.f32.gmra.mxu0 %v2233
        %v2628 = vpop.f32.mrf.mxu0
        %v2629 = vadd.f32 %v2516, %v2628
        %2630 = vdwg.mxu0
        %2631 = vmatpush.msra.mxu0 %v2284
        %2632 = vmatpush.msra.mxu0 %v2283
        %2633 = vmatpush.msra.mxu0 %v2282
        %2634 = vmatpush.msra.mxu0 %v2281
        %2635 = vmatpush.msra.mxu0 %v2280
        %2636 = vmatpush.msra.mxu0 %v2279
        %2637 = vmatpush.msra.mxu0 %v2278
        %2638 = vmatpush.msra.mxu0 %v2277
        %2639 = vmatpush.msra.mxu0 %v2276
        %2640 = vmatpush.msra.mxu0 %v2275
        %2641 = vmatpush.msra.mxu0 %v2274
        %2642 = vmatpush.msra.mxu0 %v2273
        %2643 = vmatpush.msra.mxu0 %v2272
        %2644 = vmatpush.msra.mxu0 %v2271
        %2645 = vmatpush.msra.mxu0 %v2270
        %2646 = vmatpush.msra.mxu0 %v2269
        %2647 = vmatmul.f32.gmra.mxu0 %v2079
        %v2648 = vpop.f32.mrf.mxu0
        %v2649 = vadd.f32 %v2536, %v2648
        %2650 = vmatmul.f32.gmra.mxu0 %v2084
        %v2651 = vpop.f32.mrf.mxu0
        %v2652 = vadd.f32 %v2539, %v2651
        %2653 = vmatmul.f32.gmra.mxu0 %v2089
        %v2654 = vpop.f32.mrf.mxu0
        %v2655 = vadd.f32 %v2542, %v2654
        %2656 = vmatmul.f32.gmra.mxu0 %v2094
        %v2657 = vpop.f32.mrf.mxu0
        %v2658 = vadd.f32 %v2545, %v2657
        %2659 = vmatmul.f32.gmra.mxu0 %v2099
        %v2660 = vpop.f32.mrf.mxu0
        %v2661 = vadd.f32 %v2548, %v2660
        %2662 = vmatmul.f32.gmra.mxu0 %v2104
        %v2663 = vpop.f32.mrf.mxu0
        %v2664 = vadd.f32 %v2551, %v2663
        %2665 = vmatmul.f32.gmra.mxu0 %v2109
        %v2666 = vpop.f32.mrf.mxu0
        %v2667 = vadd.f32 %v2554, %v2666
        %2668 = vmatmul.f32.gmra.mxu0 %v2114
        %v2669 = vpop.f32.mrf.mxu0
        %v2670 = vadd.f32 %v2557, %v2669
        %2671 = vmatmul.f32.gmra.mxu0 %v2119
        %v2672 = vpop.f32.mrf.mxu0
        %v2673 = vadd.f32 %v2560, %v2672
        %2674 = vmatmul.f32.gmra.mxu0 %v2124
        %v2675 = vpop.f32.mrf.mxu0
        %v2676 = vadd.f32 %v2563, %v2675
        %2677 = vmatmul.f32.gmra.mxu0 %v2129
        %v2678 = vpop.f32.mrf.mxu0
        %v2679 = vadd.f32 %v2566, %v2678
        %2680 = vmatmul.f32.gmra.mxu0 %v2134
        %v2681 = vpop.f32.mrf.mxu0
        %v2682 = vadd.f32 %v2569, %v2681
        %2683 = vmatmul.f32.gmra.mxu0 %v2139
        %v2684 = vpop.f32.mrf.mxu0
        %v2685 = vadd.f32 %v2572, %v2684
        %2686 = vmatmul.f32.gmra.mxu0 %v2144
        %v2687 = vpop.f32.mrf.mxu0
        %v2688 = vadd.f32 %v2575, %v2687
        %2689 = vmatmul.f32.gmra.mxu0 %v2149
        %v2690 = vpop.f32.mrf.mxu0
        %v2691 = vadd.f32 %v2578, %v2690
        %2692 = vmatmul.f32.gmra.mxu0 %v2154
        %v2693 = vpop.f32.mrf.mxu0
        %v2694 = vadd.f32 %v2581, %v2693
        %2695 = vmatmul.f32.gmra.mxu0 %v2159
        %v2696 = vpop.f32.mrf.mxu0
        %v2697 = vadd.f32 %v2584, %v2696
        %2698 = vmatmul.f32.gmra.mxu0 %v2164
        %v2699 = vpop.f32.mrf.mxu0
        %v2700 = vadd.f32 %v2587, %v2699
        %2701 = vmatmul.f32.gmra.mxu0 %v2169
        %v2702 = vpop.f32.mrf.mxu0
        %v2703 = vadd.f32 %v2590, %v2702
        %2704 = vmatmul.f32.gmra.mxu0 %v2174
        %v2705 = vpop.f32.mrf.mxu0
        %v2706 = vadd.f32 %v2593, %v2705
        %2707 = vmatmul.f32.gmra.mxu0 %v2179
        %v2708 = vpop.f32.mrf.mxu0
        %v2709 = vadd.f32 %v2596, %v2708
        %2710 = vmatmul.f32.gmra.mxu0 %v2184
        %v2711 = vpop.f32.mrf.mxu0
        %v2712 = vadd.f32 %v2599, %v2711
        %2713 = vmatmul.f32.gmra.mxu0 %v2189
        %v2714 = vpop.f32.mrf.mxu0
        %v2715 = vadd.f32 %v2602, %v2714
        %2716 = vmatmul.f32.gmra.mxu0 %v2194
        %v2717 = vpop.f32.mrf.mxu0
        %v2718 = vadd.f32 %v2605, %v2717
        %2719 = vmatmul.f32.gmra.mxu0 %v2199
        %v2720 = vpop.f32.mrf.mxu0
        %v2721 = vadd.f32 %v2608, %v2720
        %2722 = vmatmul.f32.gmra.mxu0 %v2204
        %v2723 = vpop.f32.mrf.mxu0
        %v2724 = vadd.f32 %v2611, %v2723
        %2725 = vmatmul.f32.gmra.mxu0 %v2209
        %v2726 = vpop.f32.mrf.mxu0
        %v2727 = vadd.f32 %v2614, %v2726
        %2728 = vmatmul.f32.gmra.mxu0 %v2214
        %v2729 = vpop.f32.mrf.mxu0
        %v2730 = vadd.f32 %v2617, %v2729
        %2731 = vmatmul.f32.gmra.mxu0 %v2219
        %v2732 = vpop.f32.mrf.mxu0
        %v2733 = vadd.f32 %v2620, %v2732
        %2734 = vmatmul.f32.gmra.mxu0 %v2224
        %v2735 = vpop.f32.mrf.mxu0
        %v2736 = vadd.f32 %v2623, %v2735
        %2737 = vmatmul.f32.gmra.mxu0 %v2229
        %v2738 = vpop.f32.mrf.mxu0
        %v2739 = vadd.f32 %v2626, %v2738
        %2740 = vmatmul.f32.gmra.mxu0 %v2234
        %v2741 = vpop.f32.mrf.mxu0
        %v2742 = vadd.f32 %v2629, %v2741
        %2743 = vdwg.mxu0
        %2744 = vmatpush.msra.mxu0 %v2300
        %2745 = vmatpush.msra.mxu0 %v2299
        %2746 = vmatpush.msra.mxu0 %v2298
        %2747 = vmatpush.msra.mxu0 %v2297
        %2748 = vmatpush.msra.mxu0 %v2296
        %2749 = vmatpush.msra.mxu0 %v2295
        %2750 = vmatpush.msra.mxu0 %v2294
        %2751 = vmatpush.msra.mxu0 %v2293
        %2752 = vmatpush.msra.mxu0 %v2292
        %2753 = vmatpush.msra.mxu0 %v2291
        %2754 = vmatpush.msra.mxu0 %v2290
        %2755 = vmatpush.msra.mxu0 %v2289
        %2756 = vmatpush.msra.mxu0 %v2288
        %2757 = vmatpush.msra.mxu0 %v2287
        %2758 = vmatpush.msra.mxu0 %v2286
        %2759 = vmatpush.msra.mxu0 %v2285
        %2760 = vmatmul.f32.gmra.mxu0 %v2080
        %v2761 = vpop.f32.mrf.mxu0
        %v2762 = vadd.f32 %v2649, %v2761
        %2763 = vmatmul.f32.gmra.mxu0 %v2085
        %v2764 = vpop.f32.mrf.mxu0
        %v2765 = vadd.f32 %v2652, %v2764
        %2766 = vmatmul.f32.gmra.mxu0 %v2090
        %v2767 = vpop.f32.mrf.mxu0
        %v2768 = vadd.f32 %v2655, %v2767
        %2769 = vmatmul.f32.gmra.mxu0 %v2095
        %v2770 = vpop.f32.mrf.mxu0
        %v2771 = vadd.f32 %v2658, %v2770
        %2772 = vmatmul.f32.gmra.mxu0 %v2100
        %v2773 = vpop.f32.mrf.mxu0
        %v2774 = vadd.f32 %v2661, %v2773
        %2775 = vmatmul.f32.gmra.mxu0 %v2105
        %v2776 = vpop.f32.mrf.mxu0
        %v2777 = vadd.f32 %v2664, %v2776
        %2778 = vmatmul.f32.gmra.mxu0 %v2110
        %v2779 = vpop.f32.mrf.mxu0
        %v2780 = vadd.f32 %v2667, %v2779
        %2781 = vmatmul.f32.gmra.mxu0 %v2115
        %v2782 = vpop.f32.mrf.mxu0
        %v2783 = vadd.f32 %v2670, %v2782
        %2784 = vmatmul.f32.gmra.mxu0 %v2120
        %v2785 = vpop.f32.mrf.mxu0
        %v2786 = vadd.f32 %v2673, %v2785
        %2787 = vmatmul.f32.gmra.mxu0 %v2125
        %v2788 = vpop.f32.mrf.mxu0
        %v2789 = vadd.f32 %v2676, %v2788
        %2790 = vmatmul.f32.gmra.mxu0 %v2130
        %v2791 = vpop.f32.mrf.mxu0
        %v2792 = vadd.f32 %v2679, %v2791
        %2793 = vmatmul.f32.gmra.mxu0 %v2135
        %v2794 = vpop.f32.mrf.mxu0
        %v2795 = vadd.f32 %v2682, %v2794
        %2796 = vmatmul.f32.gmra.mxu0 %v2140
        %v2797 = vpop.f32.mrf.mxu0
        %v2798 = vadd.f32 %v2685, %v2797
        %2799 = vmatmul.f32.gmra.mxu0 %v2145
        %v2800 = vpop.f32.mrf.mxu0
        %v2801 = vadd.f32 %v2688, %v2800
        %2802 = vmatmul.f32.gmra.mxu0 %v2150
        %v2803 = vpop.f32.mrf.mxu0
        %v2804 = vadd.f32 %v2691, %v2803
        %2805 = vmatmul.f32.gmra.mxu0 %v2155
        %v2806 = vpop.f32.mrf.mxu0
        %v2807 = vadd.f32 %v2694, %v2806
        %2808 = vmatmul.f32.gmra.mxu0 %v2160
        %v2809 = vpop.f32.mrf.mxu0
        %v2810 = vadd.f32 %v2697, %v2809
        %2811 = vmatmul.f32.gmra.mxu0 %v2165
        %v2812 = vpop.f32.mrf.mxu0
        %v2813 = vadd.f32 %v2700, %v2812
        %2814 = vmatmul.f32.gmra.mxu0 %v2170
        %v2815 = vpop.f32.mrf.mxu0
        %v2816 = vadd.f32 %v2703, %v2815
        %2817 = vmatmul.f32.gmra.mxu0 %v2175
        %v2818 = vpop.f32.mrf.mxu0
        %v2819 = vadd.f32 %v2706, %v2818
        %2820 = vmatmul.f32.gmra.mxu0 %v2180
        %v2821 = vpop.f32.mrf.mxu0
        %v2822 = vadd.f32 %v2709, %v2821
        %2823 = vmatmul.f32.gmra.mxu0 %v2185
        %v2824 = vpop.f32.mrf.mxu0
        %v2825 = vadd.f32 %v2712, %v2824
        %2826 = vmatmul.f32.gmra.mxu0 %v2190
        %v2827 = vpop.f32.mrf.mxu0
        %v2828 = vadd.f32 %v2715, %v2827
        %2829 = vmatmul.f32.gmra.mxu0 %v2195
        %v2830 = vpop.f32.mrf.mxu0
        %v2831 = vadd.f32 %v2718, %v2830
        %2832 = vmatmul.f32.gmra.mxu0 %v2200
        %v2833 = vpop.f32.mrf.mxu0
        %v2834 = vadd.f32 %v2721, %v2833
        %2835 = vmatmul.f32.gmra.mxu0 %v2205
        %v2836 = vpop.f32.mrf.mxu0
        %v2837 = vadd.f32 %v2724, %v2836
        %2838 = vmatmul.f32.gmra.mxu0 %v2210
        %v2839 = vpop.f32.mrf.mxu0
        %v2840 = vadd.f32 %v2727, %v2839
        %2841 = vmatmul.f32.gmra.mxu0 %v2215
        %v2842 = vpop.f32.mrf.mxu0
        %v2843 = vadd.f32 %v2730, %v2842
        %2844 = vmatmul.f32.gmra.mxu0 %v2220
        %v2845 = vpop.f32.mrf.mxu0
        %v2846 = vadd.f32 %v2733, %v2845
        %2847 = vmatmul.f32.gmra.mxu0 %v2225
        %v2848 = vpop.f32.mrf.mxu0
        %v2849 = vadd.f32 %v2736, %v2848
        %2850 = vmatmul.f32.gmra.mxu0 %v2230
        %v2851 = vpop.f32.mrf.mxu0
        %v2852 = vadd.f32 %v2739, %v2851
        %2853 = vmatmul.f32.gmra.mxu0 %v2235
        %v2854 = vpop.f32.mrf.mxu0
        %v2855 = vadd.f32 %v2742, %v2854
        %2856 = vdwg.mxu0
        %2857 = vmatpush.msra.mxu0 0.0
        %2858 = vmatpush.msra.mxu0 0.0
        %2859 = vmatpush.msra.mxu0 0.0
        %2860 = vmatpush.msra.mxu0 0.0
        %2861 = vmatpush.msra.mxu0 0.0
        %2862 = vmatpush.msra.mxu0 0.0
        %2863 = vmatpush.msra.mxu0 0.0
        %2864 = vmatpush.msra.mxu0 0.0
        %2865 = vmatpush.msra.mxu0 %v2308
        %2866 = vmatpush.msra.mxu0 %v2307
        %2867 = vmatpush.msra.mxu0 %v2306
        %2868 = vmatpush.msra.mxu0 %v2305
        %2869 = vmatpush.msra.mxu0 %v2304
        %2870 = vmatpush.msra.mxu0 %v2303
        %2871 = vmatpush.msra.mxu0 %v2302
        %2872 = vmatpush.msra.mxu0 %v2301
        %2873 = vmatmul.f32.gmra.mxu0 %v2310
        %v2874 = vpop.f32.mrf.mxu0
        %v2875 = vadd.f32 %v2762, %v2874
        %2876 = vmatmul.f32.gmra.mxu0 %v2313
        %v2877 = vpop.f32.mrf.mxu0
        %v2878 = vadd.f32 %v2765, %v2877
        %2879 = vmatmul.f32.gmra.mxu0 %v2316
        %v2880 = vpop.f32.mrf.mxu0
        %v2881 = vadd.f32 %v2768, %v2880
        %2882 = vmatmul.f32.gmra.mxu0 %v2319
        %v2883 = vpop.f32.mrf.mxu0
        %v2884 = vadd.f32 %v2771, %v2883
        %2885 = vmatmul.f32.gmra.mxu0 %v2322
        %v2886 = vpop.f32.mrf.mxu0
        %v2887 = vadd.f32 %v2774, %v2886
        %2888 = vmatmul.f32.gmra.mxu0 %v2325
        %v2889 = vpop.f32.mrf.mxu0
        %v2890 = vadd.f32 %v2777, %v2889
        %2891 = vmatmul.f32.gmra.mxu0 %v2328
        %v2892 = vpop.f32.mrf.mxu0
        %v2893 = vadd.f32 %v2780, %v2892
        %2894 = vmatmul.f32.gmra.mxu0 %v2331
        %v2895 = vpop.f32.mrf.mxu0
        %v2896 = vadd.f32 %v2783, %v2895
        %2897 = vmatmul.f32.gmra.mxu0 %v2334
        %v2898 = vpop.f32.mrf.mxu0
        %v2899 = vadd.f32 %v2786, %v2898
        %2900 = vmatmul.f32.gmra.mxu0 %v2337
        %v2901 = vpop.f32.mrf.mxu0
        %v2902 = vadd.f32 %v2789, %v2901
        %2903 = vmatmul.f32.gmra.mxu0 %v2340
        %v2904 = vpop.f32.mrf.mxu0
        %v2905 = vadd.f32 %v2792, %v2904
        %2906 = vmatmul.f32.gmra.mxu0 %v2343
        %v2907 = vpop.f32.mrf.mxu0
        %v2908 = vadd.f32 %v2795, %v2907
        %2909 = vmatmul.f32.gmra.mxu0 %v2346
        %v2910 = vpop.f32.mrf.mxu0
        %v2911 = vadd.f32 %v2798, %v2910
        %2912 = vmatmul.f32.gmra.mxu0 %v2349
        %v2913 = vpop.f32.mrf.mxu0
        %v2914 = vadd.f32 %v2801, %v2913
        %2915 = vmatmul.f32.gmra.mxu0 %v2352
        %v2916 = vpop.f32.mrf.mxu0
        %v2917 = vadd.f32 %v2804, %v2916
        %2918 = vmatmul.f32.gmra.mxu0 %v2355
        %v2919 = vpop.f32.mrf.mxu0
        %v2920 = vadd.f32 %v2807, %v2919
        %2921 = vmatmul.f32.gmra.mxu0 %v2358
        %v2922 = vpop.f32.mrf.mxu0
        %v2923 = vadd.f32 %v2810, %v2922
        %2924 = vmatmul.f32.gmra.mxu0 %v2361
        %v2925 = vpop.f32.mrf.mxu0
        %v2926 = vadd.f32 %v2813, %v2925
        %2927 = vmatmul.f32.gmra.mxu0 %v2364
        %v2928 = vpop.f32.mrf.mxu0
        %v2929 = vadd.f32 %v2816, %v2928
        %2930 = vmatmul.f32.gmra.mxu0 %v2367
        %v2931 = vpop.f32.mrf.mxu0
        %v2932 = vadd.f32 %v2819, %v2931
        %2933 = vmatmul.f32.gmra.mxu0 %v2370
        %v2934 = vpop.f32.mrf.mxu0
        %v2935 = vadd.f32 %v2822, %v2934
        %2936 = vmatmul.f32.gmra.mxu0 %v2373
        %v2937 = vpop.f32.mrf.mxu0
        %v2938 = vadd.f32 %v2825, %v2937
        %2939 = vmatmul.f32.gmra.mxu0 %v2376
        %v2940 = vpop.f32.mrf.mxu0
        %v2941 = vadd.f32 %v2828, %v2940
        %2942 = vmatmul.f32.gmra.mxu0 %v2379
        %v2943 = vpop.f32.mrf.mxu0
        %v2944 = vadd.f32 %v2831, %v2943
        %2945 = vmatmul.f32.gmra.mxu0 %v2382
        %v2946 = vpop.f32.mrf.mxu0
        %v2947 = vadd.f32 %v2834, %v2946
        %2948 = vmatmul.f32.gmra.mxu0 %v2385
        %v2949 = vpop.f32.mrf.mxu0
        %v2950 = vadd.f32 %v2837, %v2949
        %2951 = vmatmul.f32.gmra.mxu0 %v2388
        %v2952 = vpop.f32.mrf.mxu0
        %v2953 = vadd.f32 %v2840, %v2952
        %2954 = vmatmul.f32.gmra.mxu0 %v2391
        %v2955 = vpop.f32.mrf.mxu0
        %v2956 = vadd.f32 %v2843, %v2955
        %2957 = vmatmul.f32.gmra.mxu0 %v2394
        %v2958 = vpop.f32.mrf.mxu0
        %v2959 = vadd.f32 %v2846, %v2958
        %2960 = vmatmul.f32.gmra.mxu0 %v2397
        %v2961 = vpop.f32.mrf.mxu0
        %v2962 = vadd.f32 %v2849, %v2961
        %2963 = vmatmul.f32.gmra.mxu0 %v2400
        %v2964 = vpop.f32.mrf.mxu0
        %v2965 = vadd.f32 %v2852, %v2964
        %2966 = vmatmul.f32.gmra.mxu0 %v2403
        %v2967 = vpop.f32.mrf.mxu0
        %v2968 = vadd.f32 %v2855, %v2967
        %2969 = vdwg.mxu0
        %v2970 = vsel %vm520, %v2875, 0.0
        %v2971 = vsel %vm520, %v2878, 0.0
        %v2972 = vadd.f32 %v2970, %v2971
        %v2973 = vsel %vm520, %v2881, 0.0
        %v2974 = vadd.f32 %v2972, %v2973
        %v2975 = vsel %vm520, %v2884, 0.0
        %v2976 = vadd.f32 %v2974, %v2975
        %v2977 = vsel %vm520, %v2887, 0.0
        %v2978 = vadd.f32 %v2976, %v2977
        %v2979 = vsel %vm520, %v2890, 0.0
        %v2980 = vadd.f32 %v2978, %v2979
        %v2981 = vsel %vm520, %v2893, 0.0
        %v2982 = vadd.f32 %v2980, %v2981
        %v2983 = vsel %vm520, %v2896, 0.0
        %v2984 = vadd.f32 %v2982, %v2983
        %v2985 = vsel %vm520, %v2899, 0.0
        %v2986 = vadd.f32 %v2984, %v2985
        %v2987 = vsel %vm520, %v2902, 0.0
        %v2988 = vadd.f32 %v2986, %v2987
        %v2989 = vsel %vm520, %v2905, 0.0
        %v2990 = vadd.f32 %v2988, %v2989
        %v2991 = vsel %vm520, %v2908, 0.0
        %v2992 = vadd.f32 %v2990, %v2991
        %v2993 = vsel %vm520, %v2911, 0.0
        %v2994 = vadd.f32 %v2992, %v2993
        %v2995 = vsel %vm520, %v2914, 0.0
        %v2996 = vadd.f32 %v2994, %v2995
        %v2997 = vsel %vm520, %v2917, 0.0
        %v2998 = vadd.f32 %v2996, %v2997
        %v2999 = vsel %vm520, %v2920, 0.0
        %v3000 = vadd.f32 %v2998, %v2999
        %v3001 = vsel %vm520, %v2923, 0.0
        %v3002 = vadd.f32 %v3000, %v3001
        %v3003 = vsel %vm520, %v2926, 0.0
        %v3004 = vadd.f32 %v3002, %v3003
        %v3005 = vsel %vm520, %v2929, 0.0
        %v3006 = vadd.f32 %v3004, %v3005
        %v3007 = vsel %vm520, %v2932, 0.0
        %v3008 = vadd.f32 %v3006, %v3007
        %v3009 = vsel %vm520, %v2935, 0.0
        %v3010 = vadd.f32 %v3008, %v3009
        %v3011 = vsel %vm520, %v2938, 0.0
        %v3012 = vadd.f32 %v3010, %v3011
        %v3013 = vsel %vm520, %v2941, 0.0
        %v3014 = vadd.f32 %v3012, %v3013
        %v3015 = vsel %vm520, %v2944, 0.0
        %v3016 = vadd.f32 %v3014, %v3015
        %v3017 = vsel %vm520, %v2947, 0.0
        %v3018 = vadd.f32 %v3016, %v3017
        %v3019 = vsel %vm520, %v2950, 0.0
        %v3020 = vadd.f32 %v3018, %v3019
        %v3021 = vsel %vm520, %v2953, 0.0
        %v3022 = vadd.f32 %v3020, %v3021
        %v3023 = vsel %vm520, %v2956, 0.0
        %v3024 = vadd.f32 %v3022, %v3023
        %v3025 = vsel %vm520, %v2959, 0.0
        %v3026 = vadd.f32 %v3024, %v3025
        %v3027 = vsel %vm520, %v2962, 0.0
        %v3028 = vadd.f32 %v3026, %v3027
        %v3029 = vsel %vm520, %v2965, 0.0
        %v3030 = vadd.f32 %v3028, %v3029
        %v3031 = vsel %vm520, %v2968, 0.0
        %v3032 = vadd.f32 %v3030, %v3031
        %v3033 = vrot.slane %v3032, 4
        %v3034 = vadd.f32 %v3032, %v3033
        %v3035 = vrot.slane %v3034, 2
        %v3036 = vadd.f32 %v3034, %v3035
        %v3037 = vrot.slane %v3036, 1
        %v3038 = vadd.f32 %v3036, %v3037
        %v3039 = vmul.f32 %v2875, %v2875
        %v3040 = vmul.f32 %v2878, %v2878
        %v3041 = vmul.f32 %v2881, %v2881
        %v3042 = vmul.f32 %v2884, %v2884
        %v3043 = vmul.f32 %v2887, %v2887
        %v3044 = vmul.f32 %v2890, %v2890
        %v3045 = vmul.f32 %v2893, %v2893
        %v3046 = vmul.f32 %v2896, %v2896
        %v3047 = vmul.f32 %v2899, %v2899
        %v3048 = vmul.f32 %v2902, %v2902
        %v3049 = vmul.f32 %v2905, %v2905
        %v3050 = vmul.f32 %v2908, %v2908
        %v3051 = vmul.f32 %v2911, %v2911
        %v3052 = vmul.f32 %v2914, %v2914
        %v3053 = vmul.f32 %v2917, %v2917
        %v3054 = vmul.f32 %v2920, %v2920
        %v3055 = vmul.f32 %v2923, %v2923
        %v3056 = vmul.f32 %v2926, %v2926
        %v3057 = vmul.f32 %v2929, %v2929
        %v3058 = vmul.f32 %v2932, %v2932
        %v3059 = vmul.f32 %v2935, %v2935
        %v3060 = vmul.f32 %v2938, %v2938
        %v3061 = vmul.f32 %v2941, %v2941
        %v3062 = vmul.f32 %v2944, %v2944
        %v3063 = vmul.f32 %v2947, %v2947
        %v3064 = vmul.f32 %v2950, %v2950
        %v3065 = vmul.f32 %v2953, %v2953
        %v3066 = vmul.f32 %v2956, %v2956
        %v3067 = vmul.f32 %v2959, %v2959
        %v3068 = vmul.f32 %v2962, %v2962
        %v3069 = vmul.f32 %v2965, %v2965
        %v3070 = vmul.f32 %v2968, %v2968
        %v3071 = vsel %vm520, %v3039, 0.0
        %v3072 = vsel %vm520, %v3040, 0.0
        %v3073 = vadd.f32 %v3071, %v3072
        %v3074 = vsel %vm520, %v3041, 0.0
        %v3075 = vadd.f32 %v3073, %v3074
        %v3076 = vsel %vm520, %v3042, 0.0
        %v3077 = vadd.f32 %v3075, %v3076
        %v3078 = vsel %vm520, %v3043, 0.0
        %v3079 = vadd.f32 %v3077, %v3078
        %v3080 = vsel %vm520, %v3044, 0.0
        %v3081 = vadd.f32 %v3079, %v3080
        %v3082 = vsel %vm520, %v3045, 0.0
        %v3083 = vadd.f32 %v3081, %v3082
        %v3084 = vsel %vm520, %v3046, 0.0
        %v3085 = vadd.f32 %v3083, %v3084
        %v3086 = vsel %vm520, %v3047, 0.0
        %v3087 = vadd.f32 %v3085, %v3086
        %v3088 = vsel %vm520, %v3048, 0.0
        %v3089 = vadd.f32 %v3087, %v3088
        %v3090 = vsel %vm520, %v3049, 0.0
        %v3091 = vadd.f32 %v3089, %v3090
        %v3092 = vsel %vm520, %v3050, 0.0
        %v3093 = vadd.f32 %v3091, %v3092
        %v3094 = vsel %vm520, %v3051, 0.0
        %v3095 = vadd.f32 %v3093, %v3094
        %v3096 = vsel %vm520, %v3052, 0.0
        %v3097 = vadd.f32 %v3095, %v3096
        %v3098 = vsel %vm520, %v3053, 0.0
        %v3099 = vadd.f32 %v3097, %v3098
        %v3100 = vsel %vm520, %v3054, 0.0
        %v3101 = vadd.f32 %v3099, %v3100
        %v3102 = vsel %vm520, %v3055, 0.0
        %v3103 = vadd.f32 %v3101, %v3102
        %v3104 = vsel %vm520, %v3056, 0.0
        %v3105 = vadd.f32 %v3103, %v3104
        %v3106 = vsel %vm520, %v3057, 0.0
        %v3107 = vadd.f32 %v3105, %v3106
        %v3108 = vsel %vm520, %v3058, 0.0
        %v3109 = vadd.f32 %v3107, %v3108
        %v3110 = vsel %vm520, %v3059, 0.0
        %v3111 = vadd.f32 %v3109, %v3110
        %v3112 = vsel %vm520, %v3060, 0.0
        %v3113 = vadd.f32 %v3111, %v3112
        %v3114 = vsel %vm520, %v3061, 0.0
        %v3115 = vadd.f32 %v3113, %v3114
        %v3116 = vsel %vm520, %v3062, 0.0
        %v3117 = vadd.f32 %v3115, %v3116
        %v3118 = vsel %vm520, %v3063, 0.0
        %v3119 = vadd.f32 %v3117, %v3118
        %v3120 = vsel %vm520, %v3064, 0.0
        %v3121 = vadd.f32 %v3119, %v3120
        %v3122 = vsel %vm520, %v3065, 0.0
        %v3123 = vadd.f32 %v3121, %v3122
        %v3124 = vsel %vm520, %v3066, 0.0
        %v3125 = vadd.f32 %v3123, %v3124
        %v3126 = vsel %vm520, %v3067, 0.0
        %v3127 = vadd.f32 %v3125, %v3126
        %v3128 = vsel %vm520, %v3068, 0.0
        %v3129 = vadd.f32 %v3127, %v3128
        %v3130 = vsel %vm520, %v3069, 0.0
        %v3131 = vadd.f32 %v3129, %v3130
        %v3132 = vsel %vm520, %v3070, 0.0
        %v3133 = vadd.f32 %v3131, %v3132
        %v3134 = vrot.slane %v3133, 4
        %v3135 = vadd.f32 %v3133, %v3134
        %v3136 = vrot.slane %v3135, 2
        %v3137 = vadd.f32 %v3135, %v3136
        %v3138 = vrot.slane %v3137, 1
        %v3139 = vadd.f32 %v3137, %v3138
        %v3140 = vsel %vm767, %v3038, %v3139
        %v3141 = vld [vmem:[%s10] sm:$0xff]
        %v3142 = vld [vmem:[%s10 + $0x8] sm:$0xff]
        %v3143 = vld [vmem:[%s10 + $0x10] sm:$0xff]
        %v3144 = vld [vmem:[%s10 + $0x18] sm:$0xff]
        %v3145 = vld [vmem:[%s10 + $0x20] sm:$0xff]
        %v3146 = vld [vmem:[%s10 + $0x28] sm:$0xff]
        %v3147 = vld [vmem:[%s10 + $0x30] sm:$0xff]
        %v3148 = vld [vmem:[%s10 + $0x38] sm:$0xff]
        %v3150 = vsel %vm520, %v3140, 0
        %3152 = vmatpush.msra.mxu0 0.0
        %3153 = vmatpush.msra.mxu0 0.0
        %3154 = vmatpush.msra.mxu0 0.0
        %3155 = vmatpush.msra.mxu0 0.0
        %3156 = vmatpush.msra.mxu0 0.0
        %3157 = vmatpush.msra.mxu0 0.0
        %3158 = vmatpush.msra.mxu0 0.0
        %3159 = vmatpush.msra.mxu0 0.0
        %3160 = vmatpush.msra.mxu0 %v3148
        %3161 = vmatpush.msra.mxu0 %v3147
        %3162 = vmatpush.msra.mxu0 %v3146
        %3163 = vmatpush.msra.mxu0 %v3145
        %3164 = vmatpush.msra.mxu0 %v3144
        %3165 = vmatpush.msra.mxu0 %v3143
        %3166 = vmatpush.msra.mxu0 %v3142
        %3167 = vmatpush.msra.mxu0 %v3141
        %3168 = vmatmul.f32.gmra.mxu0 %v3150
        %v3169 = vpop.f32.mrf.mxu0
        %v3170 = vadd.f32 0.0, %v3169
        %3171 = vdwg.mxu0
        %v3172 = vmul.f32 %v3170, %v3170
        %v3174 = vrot.slane %v3172, 7
        %v3176 = vsub.f32 %v3170, %v3174
        %v3177 = vadd.f32 %v3176, 1e-05
        %v3178 = vrsqrt.pop %v3177
        %v3179 = vmul.f32 %v3178, %v3177
        %v3180 = vmul.f32 %v3179, %v3178
        %v3181 = vmul.f32 0.5, %v3180
        %v3182 = vsub.f32 1.5, %v3181
        %v3183 = vmul.f32 %v3178, %v3182
        %vm3184 = vweird.f32 %v3177
        %vm3185 = vweird.f32 %v3178
        %vm3186 = vmor %vm3184, %vm3185
        %v3187 = vsel %vm3186, %v3178, %v3183
        %v3188 = vperm.slane %v3170, 0
        %v3189 = vsub.f32 %v2875, %v3188
        %v3190 = vsub.f32 %v2878, %v3188
        %v3191 = vsub.f32 %v2881, %v3188
        %v3192 = vsub.f32 %v2884, %v3188
        %v3193 = vsub.f32 %v2887, %v3188
        %v3194 = vsub.f32 %v2890, %v3188
        %v3195 = vsub.f32 %v2893, %v3188
        %v3196 = vsub.f32 %v2896, %v3188
        %v3197 = vsub.f32 %v2899, %v3188
        %v3198 = vsub.f32 %v2902, %v3188
        %v3199 = vsub.f32 %v2905, %v3188
        %v3200 = vsub.f32 %v2908, %v3188
        %v3201 = vsub.f32 %v2911, %v3188
        %v3202 = vsub.f32 %v2914, %v3188
        %v3203 = vsub.f32 %v2917, %v3188
        %v3204 = vsub.f32 %v2920, %v3188
        %v3205 = vsub.f32 %v2923, %v3188
        %v3206 = vsub.f32 %v2926, %v3188
        %v3207 = vsub.f32 %v2929, %v3188
        %v3208 = vsub.f32 %v2932, %v3188
        %v3209 = vsub.f32 %v2935, %v3188
        %v3210 = vsub.f32 %v2938, %v3188
        %v3211 = vsub.f32 %v2941, %v3188
        %v3212 = vsub.f32 %v2944, %v3188
        %v3213 = vsub.f32 %v2947, %v3188
        %v3214 = vsub.f32 %v2950, %v3188
        %v3215 = vsub.f32 %v2953, %v3188
        %v3216 = vsub.f32 %v2956, %v3188
        %v3217 = vsub.f32 %v2959, %v3188
        %v3218 = vsub.f32 %v2962, %v3188
        %v3219 = vsub.f32 %v2965, %v3188
        %v3220 = vsub.f32 %v2968, %v3188
        %v3221 = vld [vmem:[%s3] sm:$0x1]
        %v3223 = vperm.slane %v3221, 0
        %v3225 = vmul.f32 %v3187, %v3223
        %v3226 = vperm.slane %v3225, 1
        %v3227 = vmul.f32 %v3189, %v3226
        %v3228 = vmul.f32 %v3190, %v3226
        %v3229 = vmul.f32 %v3191, %v3226
        %v3230 = vmul.f32 %v3192, %v3226
        %v3231 = vmul.f32 %v3193, %v3226
        %v3232 = vmul.f32 %v3194, %v3226
        %v3233 = vmul.f32 %v3195, %v3226
        %v3234 = vmul.f32 %v3196, %v3226
        %v3235 = vmul.f32 %v3197, %v3226
        %v3236 = vmul.f32 %v3198, %v3226
        %v3237 = vmul.f32 %v3199, %v3226
        %v3238 = vmul.f32 %v3200, %v3226
        %v3239 = vmul.f32 %v3201, %v3226
        %v3240 = vmul.f32 %v3202, %v3226
        %v3241 = vmul.f32 %v3203, %v3226
        %v3242 = vmul.f32 %v3204, %v3226
        %v3243 = vmul.f32 %v3205, %v3226
        %v3244 = vmul.f32 %v3206, %v3226
        %v3245 = vmul.f32 %v3207, %v3226
        %v3246 = vmul.f32 %v3208, %v3226
        %v3247 = vmul.f32 %v3209, %v3226
        %v3248 = vmul.f32 %v3210, %v3226
        %v3249 = vmul.f32 %v3211, %v3226
        %v3250 = vmul.f32 %v3212, %v3226
        %v3251 = vmul.f32 %v3213, %v3226
        %v3252 = vmul.f32 %v3214, %v3226
        %v3253 = vmul.f32 %v3215, %v3226
        %v3254 = vmul.f32 %v3216, %v3226
        %v3255 = vmul.f32 %v3217, %v3226
        %v3256 = vmul.f32 %v3218, %v3226
        %v3257 = vmul.f32 %v3219, %v3226
        %v3258 = vmul.f32 %v3220, %v3226
        %v3259 = vld [vmem:[%s4] sm:$0x1]
        %v3261 = vperm.slane %v3259, 0
        %v3263 = vadd.f32 %v3227, %v3261
        %v3264 = vadd.f32 %v3228, %v3261
        %v3265 = vadd.f32 %v3229, %v3261
        %v3266 = vadd.f32 %v3230, %v3261
        %v3267 = vadd.f32 %v3231, %v3261
        %v3268 = vadd.f32 %v3232, %v3261
        %v3269 = vadd.f32 %v3233, %v3261
        %v3270 = vadd.f32 %v3234, %v3261
        %v3271 = vadd.f32 %v3235, %v3261
        %v3272 = vadd.f32 %v3236, %v3261
        %v3273 = vadd.f32 %v3237, %v3261
        %v3274 = vadd.f32 %v3238, %v3261
        %v3275 = vadd.f32 %v3239, %v3261
        %v3276 = vadd.f32 %v3240, %v3261
        %v3277 = vadd.f32 %v3241, %v3261
        %v3278 = vadd.f32 %v3242, %v3261
        %v3279 = vadd.f32 %v3243, %v3261
        %v3280 = vadd.f32 %v3244, %v3261
        %v3281 = vadd.f32 %v3245, %v3261
        %v3282 = vadd.f32 %v3246, %v3261
        %v3283 = vadd.f32 %v3247, %v3261
        %v3284 = vadd.f32 %v3248, %v3261
        %v3285 = vadd.f32 %v3249, %v3261
        %v3286 = vadd.f32 %v3250, %v3261
        %v3287 = vadd.f32 %v3251, %v3261
        %v3288 = vadd.f32 %v3252, %v3261
        %v3289 = vadd.f32 %v3253, %v3261
        %v3290 = vadd.f32 %v3254, %v3261
        %v3291 = vadd.f32 %v3255, %v3261
        %v3292 = vadd.f32 %v3256, %v3261
        %v3293 = vadd.f32 %v3257, %v3261
        %v3294 = vadd.f32 %v3258, %v3261
        %v3295 = vmax.f32 %v3263, 0.0
        %v3296 = vmax.f32 %v3264, 0.0
        %v3297 = vmax.f32 %v3265, 0.0
        %v3298 = vmax.f32 %v3266, 0.0
        %v3299 = vmax.f32 %v3267, 0.0
        %v3300 = vmax.f32 %v3268, 0.0
        %v3301 = vmax.f32 %v3269, 0.0
        %v3302 = vmax.f32 %v3270, 0.0
        %v3303 = vmax.f32 %v3271, 0.0
        %v3304 = vmax.f32 %v3272, 0.0
        %v3305 = vmax.f32 %v3273, 0.0
        %v3306 = vmax.f32 %v3274, 0.0
        %v3307 = vmax.f32 %v3275, 0.0
        %v3308 = vmax.f32 %v3276, 0.0
        %v3309 = vmax.f32 %v3277, 0.0
        %v3310 = vmax.f32 %v3278, 0.0
        %v3311 = vmax.f32 %v3279, 0.0
        %v3312 = vmax.f32 %v3280, 0.0
        %v3313 = vmax.f32 %v3281, 0.0
        %v3314 = vmax.f32 %v3282, 0.0
        %v3315 = vmax.f32 %v3283, 0.0
        %v3316 = vmax.f32 %v3284, 0.0
        %v3317 = vmax.f32 %v3285, 0.0
        %v3318 = vmax.f32 %v3286, 0.0
        %v3319 = vmax.f32 %v3287, 0.0
        %v3320 = vmax.f32 %v3288, 0.0
        %v3321 = vmax.f32 %v3289, 0.0
        %v3322 = vmax.f32 %v3290, 0.0
        %v3323 = vmax.f32 %v3291, 0.0
        %v3324 = vmax.f32 %v3292, 0.0
        %v3325 = vmax.f32 %v3293, 0.0
        %v3326 = vmax.f32 %v3294, 0.0
        %3327 = vst.msk [vmem:[%s955 + $0x1] sm:$0xff] %vm520, %v3295
        %3328 = vst.msk [vmem:[%s955 + $0x9] sm:$0xff] %vm520, %v3296
        %3329 = vst.msk [vmem:[%s955 + $0x19] sm:$0xff] %vm520, %v3297
        %3330 = vst.msk [vmem:[%s955 + $0x21] sm:$0xff] %vm520, %v3298
        %3331 = vst.msk [vmem:[%s955 + $0x31] sm:$0xff] %vm520, %v3299
        %3332 = vst.msk [vmem:[%s955 + $0x39] sm:$0xff] %vm520, %v3300
        %3333 = vst.msk [vmem:[%s955 + $0x49] sm:$0xff] %vm520, %v3301
        %3334 = vst.msk [vmem:[%s955 + $0x51] sm:$0xff] %vm520, %v3302
        %3335 = vst.msk [vmem:[%s955 + $0x61] sm:$0xff] %vm520, %v3303
        %3336 = vst.msk [vmem:[%s955 + $0x69] sm:$0xff] %vm520, %v3304
        %3337 = vst.msk [vmem:[%s955 + $0x79] sm:$0xff] %vm520, %v3305
        %3338 = vst.msk [vmem:[%s955 + $0x81] sm:$0xff] %vm520, %v3306
        %3339 = vst.msk [vmem:[%s955 + $0x91] sm:$0xff] %vm520, %v3307
        %3340 = vst.msk [vmem:[%s955 + $0x99] sm:$0xff] %vm520, %v3308
        %3341 = vst.msk [vmem:[%s955 + $0xa9] sm:$0xff] %vm520, %v3309
        %3342 = vst.msk [vmem:[%s955 + $0xb1] sm:$0xff] %vm520, %v3310
        %3343 = vst.msk [vmem:[%s955 + $0xc1] sm:$0xff] %vm520, %v3311
        %3344 = vst.msk [vmem:[%s955 + $0xc9] sm:$0xff] %vm520, %v3312
        %3345 = vst.msk [vmem:[%s955 + $0xd9] sm:$0xff] %vm520, %v3313
        %3346 = vst.msk [vmem:[%s955 + $0xe1] sm:$0xff] %vm520, %v3314
        %3347 = vst.msk [vmem:[%s955 + $0xf1] sm:$0xff] %vm520, %v3315
        %3348 = vst.msk [vmem:[%s955 + $0xf9] sm:$0xff] %vm520, %v3316
        %3349 = vst.msk [vmem:[%s955 + $0x109] sm:$0xff] %vm520, %v3317
        %3350 = vst.msk [vmem:[%s955 + $0x111] sm:$0xff] %vm520, %v3318
        %3351 = vst.msk [vmem:[%s955 + $0x121] sm:$0xff] %vm520, %v3319
        %3352 = vst.msk [vmem:[%s955 + $0x129] sm:$0xff] %vm520, %v3320
        %3353 = vst.msk [vmem:[%s955 + $0x139] sm:$0xff] %vm520, %v3321
        %3354 = vst.msk [vmem:[%s955 + $0x141] sm:$0xff] %vm520, %v3322
        %3355 = vst.msk [vmem:[%s955 + $0x151] sm:$0xff] %vm520, %v3323
        %3356 = vst.msk [vmem:[%s955 + $0x159] sm:$0xff] %vm520, %v3324
        %3357 = vst.msk [vmem:[%s955 + $0x169] sm:$0xff] %vm520, %v3325
        %3358 = vst.msk [vmem:[%s955 + $0x171] sm:$0xff] %vm520, %v3326
        %v3359 = vld [vmem:[#allocation2] sm:$0xff]
        %v3360 = vld [vmem:[#allocation2 + $0x8] sm:$0xff]
        %v3361 = vld [vmem:[#allocation2 + $0x18] sm:$0xff]
        %v3362 = vld [vmem:[#allocation2 + $0x20] sm:$0xff]
        %v3363 = vld [vmem:[#allocation2 + $0x30] sm:$0xff]
        %v3364 = vld [vmem:[#allocation2 + $0x38] sm:$0xff]
        %v3365 = vld [vmem:[#allocation2 + $0x48] sm:$0xff]
        %v3366 = vld [vmem:[#allocation2 + $0x50] sm:$0xff]
        %v3367 = vld [vmem:[#allocation2 + $0x60] sm:$0xff]
        %v3368 = vld [vmem:[#allocation2 + $0x68] sm:$0xff]
        %v3369 = vld [vmem:[#allocation2 + $0x78] sm:$0xff]
        %v3370 = vld [vmem:[#allocation2 + $0x80] sm:$0xff]
        %v3371 = vld [vmem:[#allocation2 + $0x90] sm:$0xff]
        %v3372 = vld [vmem:[#allocation2 + $0x98] sm:$0xff]
        %v3373 = vld [vmem:[#allocation2 + $0xa8] sm:$0xff]
        %v3374 = vld [vmem:[#allocation2 + $0xb0] sm:$0xff]
        %v3375 = vld [vmem:[#allocation2 + $0xc0] sm:$0xff]
        %v3376 = vld [vmem:[#allocation2 + $0xc8] sm:$0xff]
        %v3377 = vld [vmem:[#allocation2 + $0xd8] sm:$0xff]
        %v3378 = vld [vmem:[#allocation2 + $0xe0] sm:$0xff]
        %v3379 = vld [vmem:[#allocation2 + $0xf0] sm:$0xff]
        %v3380 = vld [vmem:[#allocation2 + $0xf8] sm:$0xff]
        %v3381 = vld [vmem:[#allocation2 + $0x108] sm:$0xff]
        %v3382 = vld [vmem:[#allocation2 + $0x110] sm:$0xff]
        %v3383 = vld [vmem:[#allocation2 + $0x120] sm:$0xff]
        %v3384 = vld [vmem:[#allocation2 + $0x128] sm:$0xff]
        %v3385 = vld [vmem:[#allocation2 + $0x138] sm:$0xff]
        %v3386 = vld [vmem:[#allocation2 + $0x140] sm:$0xff]
        %v3387 = vld [vmem:[#allocation2 + $0x150] sm:$0xff]
        %v3388 = vld [vmem:[#allocation2 + $0x158] sm:$0xff]
        %v3389 = vld [vmem:[#allocation2 + $0x168] sm:$0xff]
        %v3390 = vld [vmem:[#allocation2 + $0x170] sm:$0xff]
        %v3391 = vld [vmem:[#allocation2 + $0x1] sm:$0xff]
        %v3392 = vld [vmem:[#allocation2 + $0x9] sm:$0xff]
        %v3393 = vld [vmem:[#allocation2 + $0x19] sm:$0xff]
        %v3394 = vld [vmem:[#allocation2 + $0x21] sm:$0xff]
        %v3395 = vld [vmem:[#allocation2 + $0x31] sm:$0xff]
        %v3396 = vld [vmem:[#allocation2 + $0x39] sm:$0xff]
        %v3397 = vld [vmem:[#allocation2 + $0x49] sm:$0xff]
        %v3398 = vld [vmem:[#allocation2 + $0x51] sm:$0xff]
        %v3399 = vld [vmem:[#allocation2 + $0x61] sm:$0xff]
        %v3400 = vld [vmem:[#allocation2 + $0x69] sm:$0xff]
        %v3401 = vld [vmem:[#allocation2 + $0x79] sm:$0xff]
        %v3402 = vld [vmem:[#allocation2 + $0x81] sm:$0xff]
        %v3403 = vld [vmem:[#allocation2 + $0x91] sm:$0xff]
        %v3404 = vld [vmem:[#allocation2 + $0x99] sm:$0xff]
        %v3405 = vld [vmem:[#allocation2 + $0xa9] sm:$0xff]
        %v3406 = vld [vmem:[#allocation2 + $0xb1] sm:$0xff]
        %v3407 = vld [vmem:[#allocation2 + $0xc1] sm:$0xff]
        %v3408 = vld [vmem:[#allocation2 + $0xc9] sm:$0xff]
        %v3409 = vld [vmem:[#allocation2 + $0xd9] sm:$0xff]
        %v3410 = vld [vmem:[#allocation2 + $0xe1] sm:$0xff]
        %v3411 = vld [vmem:[#allocation2 + $0xf1] sm:$0xff]
        %v3412 = vld [vmem:[#allocation2 + $0xf9] sm:$0xff]
        %v3413 = vld [vmem:[#allocation2 + $0x109] sm:$0xff]
        %v3414 = vld [vmem:[#allocation2 + $0x111] sm:$0xff]
        %v3415 = vld [vmem:[#allocation2 + $0x121] sm:$0xff]
        %v3416 = vld [vmem:[#allocation2 + $0x129] sm:$0xff]
        %v3417 = vld [vmem:[#allocation2 + $0x139] sm:$0xff]
        %v3418 = vld [vmem:[#allocation2 + $0x141] sm:$0xff]
        %v3419 = vld [vmem:[#allocation2 + $0x151] sm:$0xff]
        %v3420 = vld [vmem:[#allocation2 + $0x159] sm:$0xff]
        %v3421 = vld [vmem:[#allocation2 + $0x169] sm:$0xff]
        %v3422 = vld [vmem:[#allocation2 + $0x171] sm:$0xff]
        %3455 = vrot.lane.b32.xlu0 %v3391, 64
        %v3456 = vpop.permute.xlu0 %3455
        %3457 = vrot.lane.b32.xlu0 %v3392, 64
        %v3458 = vpop.permute.xlu0 %3457
        %3459 = vrot.lane.b32.xlu0 %v3393, 64
        %v3460 = vpop.permute.xlu0 %3459
        %3461 = vrot.lane.b32.xlu0 %v3394, 64
        %v3462 = vpop.permute.xlu0 %3461
        %3463 = vrot.lane.b32.xlu0 %v3395, 64
        %v3464 = vpop.permute.xlu0 %3463
        %3465 = vrot.lane.b32.xlu0 %v3396, 64
        %v3466 = vpop.permute.xlu0 %3465
        %3467 = vrot.lane.b32.xlu0 %v3397, 64
        %v3468 = vpop.permute.xlu0 %3467
        %3469 = vrot.lane.b32.xlu0 %v3398, 64
        %v3470 = vpop.permute.xlu0 %3469
        %3471 = vrot.lane.b32.xlu0 %v3399, 64
        %v3472 = vpop.permute.xlu0 %3471
        %3473 = vrot.lane.b32.xlu0 %v3400, 64
        %v3474 = vpop.permute.xlu0 %3473
        %3475 = vrot.lane.b32.xlu0 %v3401, 64
        %v3476 = vpop.permute.xlu0 %3475
        %3477 = vrot.lane.b32.xlu0 %v3402, 64
        %v3478 = vpop.permute.xlu0 %3477
        %3479 = vrot.lane.b32.xlu0 %v3403, 64
        %v3480 = vpop.permute.xlu0 %3479
        %3481 = vrot.lane.b32.xlu0 %v3404, 64
        %v3482 = vpop.permute.xlu0 %3481
        %3483 = vrot.lane.b32.xlu0 %v3405, 64
        %v3484 = vpop.permute.xlu0 %3483
        %3485 = vrot.lane.b32.xlu0 %v3406, 64
        %v3486 = vpop.permute.xlu0 %3485
        %3487 = vrot.lane.b32.xlu0 %v3407, 64
        %v3488 = vpop.permute.xlu0 %3487
        %3489 = vrot.lane.b32.xlu0 %v3408, 64
        %v3490 = vpop.permute.xlu0 %3489
        %3491 = vrot.lane.b32.xlu0 %v3409, 64
        %v3492 = vpop.permute.xlu0 %3491
        %3493 = vrot.lane.b32.xlu0 %v3410, 64
        %v3494 = vpop.permute.xlu0 %3493
        %3495 = vrot.lane.b32.xlu0 %v3411, 64
        %v3496 = vpop.permute.xlu0 %3495
        %3497 = vrot.lane.b32.xlu0 %v3412, 64
        %v3498 = vpop.permute.xlu0 %3497
        %3499 = vrot.lane.b32.xlu0 %v3413, 64
        %v3500 = vpop.permute.xlu0 %3499
        %3501 = vrot.lane.b32.xlu0 %v3414, 64
        %v3502 = vpop.permute.xlu0 %3501
        %3503 = vrot.lane.b32.xlu0 %v3415, 64
        %v3504 = vpop.permute.xlu0 %3503
        %3505 = vrot.lane.b32.xlu0 %v3416, 64
        %v3506 = vpop.permute.xlu0 %3505
        %3507 = vrot.lane.b32.xlu0 %v3417, 64
        %v3508 = vpop.permute.xlu0 %3507
        %3509 = vrot.lane.b32.xlu0 %v3418, 64
        %v3510 = vpop.permute.xlu0 %3509
        %3511 = vrot.lane.b32.xlu0 %v3419, 64
        %v3512 = vpop.permute.xlu0 %3511
        %3513 = vrot.lane.b32.xlu0 %v3420, 64
        %v3514 = vpop.permute.xlu0 %3513
        %3515 = vrot.lane.b32.xlu0 %v3421, 64
        %v3516 = vpop.permute.xlu0 %3515
        %3517 = vrot.lane.b32.xlu0 %v3422, 64
        %v3518 = vpop.permute.xlu0 %3517
        %v3551 = vsel %vm520, %v3359, %v3456
        %v3552 = vsel %vm520, %v3360, %v3458
        %v3553 = vsel %vm520, %v3361, %v3460
        %v3554 = vsel %vm520, %v3362, %v3462
        %v3555 = vsel %vm520, %v3363, %v3464
        %v3556 = vsel %vm520, %v3364, %v3466
        %v3557 = vsel %vm520, %v3365, %v3468
        %v3558 = vsel %vm520, %v3366, %v3470
        %v3559 = vsel %vm520, %v3367, %v3472
        %v3560 = vsel %vm520, %v3368, %v3474
        %v3561 = vsel %vm520, %v3369, %v3476
        %v3562 = vsel %vm520, %v3370, %v3478
        %v3563 = vsel %vm520, %v3371, %v3480
        %v3564 = vsel %vm520, %v3372, %v3482
        %v3565 = vsel %vm520, %v3373, %v3484
        %v3566 = vsel %vm520, %v3374, %v3486
        %v3567 = vsel %vm520, %v3375, %v3488
        %v3568 = vsel %vm520, %v3376, %v3490
        %v3569 = vsel %vm520, %v3377, %v3492
        %v3570 = vsel %vm520, %v3378, %v3494
        %v3571 = vsel %vm520, %v3379, %v3496
        %v3572 = vsel %vm520, %v3380, %v3498
        %v3573 = vsel %vm520, %v3381, %v3500
        %v3574 = vsel %vm520, %v3382, %v3502
        %v3575 = vsel %vm520, %v3383, %v3504
        %v3576 = vsel %vm520, %v3384, %v3506
        %v3577 = vsel %vm520, %v3385, %v3508
        %v3578 = vsel %vm520, %v3386, %v3510
        %v3579 = vsel %vm520, %v3387, %v3512
        %v3580 = vsel %vm520, %v3388, %v3514
        %v3581 = vsel %vm520, %v3389, %v3516
        %v3582 = vsel %vm520, %v3390, %v3518
        %3583 = vst [vmem:[#allocation3] sm:$0xff] %v3551
        %3584 = vst [vmem:[#allocation3 + $0x28] sm:$0xff] %v3552
        %3585 = vst [vmem:[#allocation3 + $0x50] sm:$0xff] %v3553
        %3586 = vst [vmem:[#allocation3 + $0x78] sm:$0xff] %v3554
        %3587 = vst [vmem:[#allocation3 + $0xa0] sm:$0xff] %v3555
        %3588 = vst [vmem:[#allocation3 + $0xc8] sm:$0xff] %v3556
        %3589 = vst [vmem:[#allocation3 + $0xf0] sm:$0xff] %v3557
        %3590 = vst [vmem:[#allocation3 + $0x118] sm:$0xff] %v3558
        %3591 = vst [vmem:[#allocation3 + $0x140] sm:$0xff] %v3559
        %3592 = vst [vmem:[#allocation3 + $0x168] sm:$0xff] %v3560
        %3593 = vst [vmem:[#allocation3 + $0x190] sm:$0xff] %v3561
        %3594 = vst [vmem:[#allocation3 + $0x1b8] sm:$0xff] %v3562
        %3595 = vst [vmem:[#allocation3 + $0x1e0] sm:$0xff] %v3563
        %3596 = vst [vmem:[#allocation3 + $0x208] sm:$0xff] %v3564
        %3597 = vst [vmem:[#allocation3 + $0x230] sm:$0xff] %v3565
        %3598 = vst [vmem:[#allocation3 + $0x258] sm:$0xff] %v3566
        %3599 = vst [vmem:[#allocation3 + $0x280] sm:$0xff] %v3567
        %3600 = vst [vmem:[#allocation3 + $0x2a8] sm:$0xff] %v3568
        %3601 = vst [vmem:[#allocation3 + $0x2d0] sm:$0xff] %v3569
        %3602 = vst [vmem:[#allocation3 + $0x2f8] sm:$0xff] %v3570
        %3603 = vst [vmem:[#allocation3 + $0x320] sm:$0xff] %v3571
        %3604 = vst [vmem:[#allocation3 + $0x348] sm:$0xff] %v3572
        %3605 = vst [vmem:[#allocation3 + $0x370] sm:$0xff] %v3573
        %3606 = vst [vmem:[#allocation3 + $0x398] sm:$0xff] %v3574
        %3607 = vst [vmem:[#allocation3 + $0x3c0] sm:$0xff] %v3575
        %3608 = vst [vmem:[#allocation3 + $0x3e8] sm:$0xff] %v3576
        %3609 = vst [vmem:[#allocation3 + $0x410] sm:$0xff] %v3577
        %3610 = vst [vmem:[#allocation3 + $0x438] sm:$0xff] %v3578
        %3611 = vst [vmem:[#allocation3 + $0x460] sm:$0xff] %v3579
        %3612 = vst [vmem:[#allocation3 + $0x488] sm:$0xff] %v3580
        %3613 = vst [vmem:[#allocation3 + $0x4b0] sm:$0xff] %v3581
        %3614 = vst [vmem:[#allocation3 + $0x4d8] sm:$0xff] %v3582
        %v3615 = vld [vmem:[#allocation2 + $0x2] sm:$0xff]
        %v3616 = vld [vmem:[#allocation2 + $0xa] sm:$0xff]
        %v3617 = vld [vmem:[#allocation2 + $0x1a] sm:$0xff]
        %v3618 = vld [vmem:[#allocation2 + $0x22] sm:$0xff]
        %v3619 = vld [vmem:[#allocation2 + $0x32] sm:$0xff]
        %v3620 = vld [vmem:[#allocation2 + $0x3a] sm:$0xff]
        %v3621 = vld [vmem:[#allocation2 + $0x4a] sm:$0xff]
        %v3622 = vld [vmem:[#allocation2 + $0x52] sm:$0xff]
        %v3623 = vld [vmem:[#allocation2 + $0x62] sm:$0xff]
        %v3624 = vld [vmem:[#allocation2 + $0x6a] sm:$0xff]
        %v3625 = vld [vmem:[#allocation2 + $0x7a] sm:$0xff]
        %v3626 = vld [vmem:[#allocation2 + $0x82] sm:$0xff]
        %v3627 = vld [vmem:[#allocation2 + $0x92] sm:$0xff]
        %v3628 = vld [vmem:[#allocation2 + $0x9a] sm:$0xff]
        %v3629 = vld [vmem:[#allocation2 + $0xaa] sm:$0xff]
        %v3630 = vld [vmem:[#allocation2 + $0xb2] sm:$0xff]
        %v3631 = vld [vmem:[#allocation2 + $0xc2] sm:$0xff]
        %v3632 = vld [vmem:[#allocation2 + $0xca] sm:$0xff]
        %v3633 = vld [vmem:[#allocation2 + $0xda] sm:$0xff]
        %v3634 = vld [vmem:[#allocation2 + $0xe2] sm:$0xff]
        %v3635 = vld [vmem:[#allocation2 + $0xf2] sm:$0xff]
        %v3636 = vld [vmem:[#allocation2 + $0xfa] sm:$0xff]
        %v3637 = vld [vmem:[#allocation2 + $0x10a] sm:$0xff]
        %v3638 = vld [vmem:[#allocation2 + $0x112] sm:$0xff]
        %v3639 = vld [vmem:[#allocation2 + $0x122] sm:$0xff]
        %v3640 = vld [vmem:[#allocation2 + $0x12a] sm:$0xff]
        %v3641 = vld [vmem:[#allocation2 + $0x13a] sm:$0xff]
        %v3642 = vld [vmem:[#allocation2 + $0x142] sm:$0xff]
        %v3643 = vld [vmem:[#allocation2 + $0x152] sm:$0xff]
        %v3644 = vld [vmem:[#allocation2 + $0x15a] sm:$0xff]
        %v3645 = vld [vmem:[#allocation2 + $0x16a] sm:$0xff]
        %v3646 = vld [vmem:[#allocation2 + $0x172] sm:$0xff]
        %v3647 = vld [vmem:[%s955] sm:$0xff]
        %v3648 = vld [vmem:[%s955 + $0x8] sm:$0xff]
        %v3649 = vld [vmem:[%s955 + $0x18] sm:$0xff]
        %v3650 = vld [vmem:[%s955 + $0x20] sm:$0xff]
        %v3651 = vld [vmem:[%s955 + $0x30] sm:$0xff]
        %v3652 = vld [vmem:[%s955 + $0x38] sm:$0xff]
        %v3653 = vld [vmem:[%s955 + $0x48] sm:$0xff]
        %v3654 = vld [vmem:[%s955 + $0x50] sm:$0xff]
        %v3655 = vld [vmem:[%s955 + $0x60] sm:$0xff]
        %v3656 = vld [vmem:[%s955 + $0x68] sm:$0xff]
        %v3657 = vld [vmem:[%s955 + $0x78] sm:$0xff]
        %v3658 = vld [vmem:[%s955 + $0x80] sm:$0xff]
        %v3659 = vld [vmem:[%s955 + $0x90] sm:$0xff]
        %v3660 = vld [vmem:[%s955 + $0x98] sm:$0xff]
        %v3661 = vld [vmem:[%s955 + $0xa8] sm:$0xff]
        %v3662 = vld [vmem:[%s955 + $0xb0] sm:$0xff]
        %v3663 = vld [vmem:[%s955 + $0xc0] sm:$0xff]
        %v3664 = vld [vmem:[%s955 + $0xc8] sm:$0xff]
        %v3665 = vld [vmem:[%s955 + $0xd8] sm:$0xff]
        %v3666 = vld [vmem:[%s955 + $0xe0] sm:$0xff]
        %v3667 = vld [vmem:[%s955 + $0xf0] sm:$0xff]
        %v3668 = vld [vmem:[%s955 + $0xf8] sm:$0xff]
        %v3669 = vld [vmem:[%s955 + $0x108] sm:$0xff]
        %v3670 = vld [vmem:[%s955 + $0x110] sm:$0xff]
        %v3671 = vld [vmem:[%s955 + $0x120] sm:$0xff]
        %v3672 = vld [vmem:[%s955 + $0x128] sm:$0xff]
        %v3673 = vld [vmem:[%s955 + $0x138] sm:$0xff]
        %v3674 = vld [vmem:[%s955 + $0x140] sm:$0xff]
        %v3675 = vld [vmem:[%s955 + $0x150] sm:$0xff]
        %v3676 = vld [vmem:[%s955 + $0x158] sm:$0xff]
        %v3677 = vld [vmem:[%s955 + $0x168] sm:$0xff]
        %v3678 = vld [vmem:[%s955 + $0x170] sm:$0xff]
        %3711 = vrot.lane.b32.xlu0 %v3647, 64
        %v3712 = vpop.permute.xlu0 %3711
        %3713 = vrot.lane.b32.xlu0 %v3648, 64
        %v3714 = vpop.permute.xlu0 %3713
        %3715 = vrot.lane.b32.xlu0 %v3649, 64
        %v3716 = vpop.permute.xlu0 %3715
        %3717 = vrot.lane.b32.xlu0 %v3650, 64
        %v3718 = vpop.permute.xlu0 %3717
        %3719 = vrot.lane.b32.xlu0 %v3651, 64
        %v3720 = vpop.permute.xlu0 %3719
        %3721 = vrot.lane.b32.xlu0 %v3652, 64
        %v3722 = vpop.permute.xlu0 %3721
        %3723 = vrot.lane.b32.xlu0 %v3653, 64
        %v3724 = vpop.permute.xlu0 %3723
        %3725 = vrot.lane.b32.xlu0 %v3654, 64
        %v3726 = vpop.permute.xlu0 %3725
        %3727 = vrot.lane.b32.xlu0 %v3655, 64
        %v3728 = vpop.permute.xlu0 %3727
        %3729 = vrot.lane.b32.xlu0 %v3656, 64
        %v3730 = vpop.permute.xlu0 %3729
        %3731 = vrot.lane.b32.xlu0 %v3657, 64
        %v3732 = vpop.permute.xlu0 %3731
        %3733 = vrot.lane.b32.xlu0 %v3658, 64
        %v3734 = vpop.permute.xlu0 %3733
        %3735 = vrot.lane.b32.xlu0 %v3659, 64
        %v3736 = vpop.permute.xlu0 %3735
        %3737 = vrot.lane.b32.xlu0 %v3660, 64
        %v3738 = vpop.permute.xlu0 %3737
        %3739 = vrot.lane.b32.xlu0 %v3661, 64
        %v3740 = vpop.permute.xlu0 %3739
        %3741 = vrot.lane.b32.xlu0 %v3662, 64
        %v3742 = vpop.permute.xlu0 %3741
        %3743 = vrot.lane.b32.xlu0 %v3663, 64
        %v3744 = vpop.permute.xlu0 %3743
        %3745 = vrot.lane.b32.xlu0 %v3664, 64
        %v3746 = vpop.permute.xlu0 %3745
        %3747 = vrot.lane.b32.xlu0 %v3665, 64
        %v3748 = vpop.permute.xlu0 %3747
        %3749 = vrot.lane.b32.xlu0 %v3666, 64
        %v3750 = vpop.permute.xlu0 %3749
        %3751 = vrot.lane.b32.xlu0 %v3667, 64
        %v3752 = vpop.permute.xlu0 %3751
        %3753 = vrot.lane.b32.xlu0 %v3668, 64
        %v3754 = vpop.permute.xlu0 %3753
        %3755 = vrot.lane.b32.xlu0 %v3669, 64
        %v3756 = vpop.permute.xlu0 %3755
        %3757 = vrot.lane.b32.xlu0 %v3670, 64
        %v3758 = vpop.permute.xlu0 %3757
        %3759 = vrot.lane.b32.xlu0 %v3671, 64
        %v3760 = vpop.permute.xlu0 %3759
        %3761 = vrot.lane.b32.xlu0 %v3672, 64
        %v3762 = vpop.permute.xlu0 %3761
        %3763 = vrot.lane.b32.xlu0 %v3673, 64
        %v3764 = vpop.permute.xlu0 %3763
        %3765 = vrot.lane.b32.xlu0 %v3674, 64
        %v3766 = vpop.permute.xlu0 %3765
        %3767 = vrot.lane.b32.xlu0 %v3675, 64
        %v3768 = vpop.permute.xlu0 %3767
        %3769 = vrot.lane.b32.xlu0 %v3676, 64
        %v3770 = vpop.permute.xlu0 %3769
        %3771 = vrot.lane.b32.xlu0 %v3677, 64
        %v3772 = vpop.permute.xlu0 %3771
        %3773 = vrot.lane.b32.xlu0 %v3678, 64
        %v3774 = vpop.permute.xlu0 %3773
        %v3807 = vsel %vm520, %v3615, %v3712
        %v3808 = vsel %vm520, %v3616, %v3714
        %v3809 = vsel %vm520, %v3617, %v3716
        %v3810 = vsel %vm520, %v3618, %v3718
        %v3811 = vsel %vm520, %v3619, %v3720
        %v3812 = vsel %vm520, %v3620, %v3722
        %v3813 = vsel %vm520, %v3621, %v3724
        %v3814 = vsel %vm520, %v3622, %v3726
        %v3815 = vsel %vm520, %v3623, %v3728
        %v3816 = vsel %vm520, %v3624, %v3730
        %v3817 = vsel %vm520, %v3625, %v3732
        %v3818 = vsel %vm520, %v3626, %v3734
        %v3819 = vsel %vm520, %v3627, %v3736
        %v3820 = vsel %vm520, %v3628, %v3738
        %v3821 = vsel %vm520, %v3629, %v3740
        %v3822 = vsel %vm520, %v3630, %v3742
        %v3823 = vsel %vm520, %v3631, %v3744
        %v3824 = vsel %vm520, %v3632, %v3746
        %v3825 = vsel %vm520, %v3633, %v3748
        %v3826 = vsel %vm520, %v3634, %v3750
        %v3827 = vsel %vm520, %v3635, %v3752
        %v3828 = vsel %vm520, %v3636, %v3754
        %v3829 = vsel %vm520, %v3637, %v3756
        %v3830 = vsel %vm520, %v3638, %v3758
        %v3831 = vsel %vm520, %v3639, %v3760
        %v3832 = vsel %vm520, %v3640, %v3762
        %v3833 = vsel %vm520, %v3641, %v3764
        %v3834 = vsel %vm520, %v3642, %v3766
        %v3835 = vsel %vm520, %v3643, %v3768
        %v3836 = vsel %vm520, %v3644, %v3770
        %v3837 = vsel %vm520, %v3645, %v3772
        %v3838 = vsel %vm520, %v3646, %v3774
        %3839 = vst [vmem:[#allocation3 + $0x8] sm:$0xff] %v3807
        %3840 = vst [vmem:[#allocation3 + $0x30] sm:$0xff] %v3808
        %3841 = vst [vmem:[#allocation3 + $0x58] sm:$0xff] %v3809
        %3842 = vst [vmem:[#allocation3 + $0x80] sm:$0xff] %v3810
        %3843 = vst [vmem:[#allocation3 + $0xa8] sm:$0xff] %v3811
        %3844 = vst [vmem:[#allocation3 + $0xd0] sm:$0xff] %v3812
        %3845 = vst [vmem:[#allocation3 + $0xf8] sm:$0xff] %v3813
        %3846 = vst [vmem:[#allocation3 + $0x120] sm:$0xff] %v3814
        %3847 = vst [vmem:[#allocation3 + $0x148] sm:$0xff] %v3815
        %3848 = vst [vmem:[#allocation3 + $0x170] sm:$0xff] %v3816
        %3849 = vst [vmem:[#allocation3 + $0x198] sm:$0xff] %v3817
        %3850 = vst [vmem:[#allocation3 + $0x1c0] sm:$0xff] %v3818
        %3851 = vst [vmem:[#allocation3 + $0x1e8] sm:$0xff] %v3819
        %3852 = vst [vmem:[#allocation3 + $0x210] sm:$0xff] %v3820
        %3853 = vst [vmem:[#allocation3 + $0x238] sm:$0xff] %v3821
        %3854 = vst [vmem:[#allocation3 + $0x260] sm:$0xff] %v3822
        %3855 = vst [vmem:[#allocation3 + $0x288] sm:$0xff] %v3823
        %3856 = vst [vmem:[#allocation3 + $0x2b0] sm:$0xff] %v3824
        %3857 = vst [vmem:[#allocation3 + $0x2d8] sm:$0xff] %v3825
        %3858 = vst [vmem:[#allocation3 + $0x300] sm:$0xff] %v3826
        %3859 = vst [vmem:[#allocation3 + $0x328] sm:$0xff] %v3827
        %3860 = vst [vmem:[#allocation3 + $0x350] sm:$0xff] %v3828
        %3861 = vst [vmem:[#allocation3 + $0x378] sm:$0xff] %v3829
        %3862 = vst [vmem:[#allocation3 + $0x3a0] sm:$0xff] %v3830
        %3863 = vst [vmem:[#allocation3 + $0x3c8] sm:$0xff] %v3831
        %3864 = vst [vmem:[#allocation3 + $0x3f0] sm:$0xff] %v3832
        %3865 = vst [vmem:[#allocation3 + $0x418] sm:$0xff] %v3833
        %3866 = vst [vmem:[#allocation3 + $0x440] sm:$0xff] %v3834
        %3867 = vst [vmem:[#allocation3 + $0x468] sm:$0xff] %v3835
        %3868 = vst [vmem:[#allocation3 + $0x490] sm:$0xff] %v3836
        %3869 = vst [vmem:[#allocation3 + $0x4b8] sm:$0xff] %v3837
        %3870 = vst [vmem:[#allocation3 + $0x4e0] sm:$0xff] %v3838
        %v3871 = vld [vmem:[%s955 + $0x1] sm:$0xff]
        %v3872 = vld [vmem:[%s955 + $0x9] sm:$0xff]
        %v3873 = vld [vmem:[%s955 + $0x19] sm:$0xff]
        %v3874 = vld [vmem:[%s955 + $0x21] sm:$0xff]
        %v3875 = vld [vmem:[%s955 + $0x31] sm:$0xff]
        %v3876 = vld [vmem:[%s955 + $0x39] sm:$0xff]
        %v3877 = vld [vmem:[%s955 + $0x49] sm:$0xff]
        %v3878 = vld [vmem:[%s955 + $0x51] sm:$0xff]
        %v3879 = vld [vmem:[%s955 + $0x61] sm:$0xff]
        %v3880 = vld [vmem:[%s955 + $0x69] sm:$0xff]
        %v3881 = vld [vmem:[%s955 + $0x79] sm:$0xff]
        %v3882 = vld [vmem:[%s955 + $0x81] sm:$0xff]
        %v3883 = vld [vmem:[%s955 + $0x91] sm:$0xff]
        %v3884 = vld [vmem:[%s955 + $0x99] sm:$0xff]
        %v3885 = vld [vmem:[%s955 + $0xa9] sm:$0xff]
        %v3886 = vld [vmem:[%s955 + $0xb1] sm:$0xff]
        %v3887 = vld [vmem:[%s955 + $0xc1] sm:$0xff]
        %v3888 = vld [vmem:[%s955 + $0xc9] sm:$0xff]
        %v3889 = vld [vmem:[%s955 + $0xd9] sm:$0xff]
        %v3890 = vld [vmem:[%s955 + $0xe1] sm:$0xff]
        %v3891 = vld [vmem:[%s955 + $0xf1] sm:$0xff]
        %v3892 = vld [vmem:[%s955 + $0xf9] sm:$0xff]
        %v3893 = vld [vmem:[%s955 + $0x109] sm:$0xff]
        %v3894 = vld [vmem:[%s955 + $0x111] sm:$0xff]
        %v3895 = vld [vmem:[%s955 + $0x121] sm:$0xff]
        %v3896 = vld [vmem:[%s955 + $0x129] sm:$0xff]
        %v3897 = vld [vmem:[%s955 + $0x139] sm:$0xff]
        %v3898 = vld [vmem:[%s955 + $0x141] sm:$0xff]
        %v3899 = vld [vmem:[%s955 + $0x151] sm:$0xff]
        %v3900 = vld [vmem:[%s955 + $0x159] sm:$0xff]
        %v3901 = vld [vmem:[%s955 + $0x169] sm:$0xff]
        %v3902 = vld [vmem:[%s955 + $0x171] sm:$0xff]
        %v3903 = vld [vmem:[%s955 + $0x2] sm:$0xff]
        %v3904 = vld [vmem:[%s955 + $0xa] sm:$0xff]
        %v3905 = vld [vmem:[%s955 + $0x1a] sm:$0xff]
        %v3906 = vld [vmem:[%s955 + $0x22] sm:$0xff]
        %v3907 = vld [vmem:[%s955 + $0x32] sm:$0xff]
        %v3908 = vld [vmem:[%s955 + $0x3a] sm:$0xff]
        %v3909 = vld [vmem:[%s955 + $0x4a] sm:$0xff]
        %v3910 = vld [vmem:[%s955 + $0x52] sm:$0xff]
        %v3911 = vld [vmem:[%s955 + $0x62] sm:$0xff]
        %v3912 = vld [vmem:[%s955 + $0x6a] sm:$0xff]
        %v3913 = vld [vmem:[%s955 + $0x7a] sm:$0xff]
        %v3914 = vld [vmem:[%s955 + $0x82] sm:$0xff]
        %v3915 = vld [vmem:[%s955 + $0x92] sm:$0xff]
        %v3916 = vld [vmem:[%s955 + $0x9a] sm:$0xff]
        %v3917 = vld [vmem:[%s955 + $0xaa] sm:$0xff]
        %v3918 = vld [vmem:[%s955 + $0xb2] sm:$0xff]
        %v3919 = vld [vmem:[%s955 + $0xc2] sm:$0xff]
        %v3920 = vld [vmem:[%s955 + $0xca] sm:$0xff]
        %v3921 = vld [vmem:[%s955 + $0xda] sm:$0xff]
        %v3922 = vld [vmem:[%s955 + $0xe2] sm:$0xff]
        %v3923 = vld [vmem:[%s955 + $0xf2] sm:$0xff]
        %v3924 = vld [vmem:[%s955 + $0xfa] sm:$0xff]
        %v3925 = vld [vmem:[%s955 + $0x10a] sm:$0xff]
        %v3926 = vld [vmem:[%s955 + $0x112] sm:$0xff]
        %v3927 = vld [vmem:[%s955 + $0x122] sm:$0xff]
        %v3928 = vld [vmem:[%s955 + $0x12a] sm:$0xff]
        %v3929 = vld [vmem:[%s955 + $0x13a] sm:$0xff]
        %v3930 = vld [vmem:[%s955 + $0x142] sm:$0xff]
        %v3931 = vld [vmem:[%s955 + $0x152] sm:$0xff]
        %v3932 = vld [vmem:[%s955 + $0x15a] sm:$0xff]
        %v3933 = vld [vmem:[%s955 + $0x16a] sm:$0xff]
        %v3934 = vld [vmem:[%s955 + $0x172] sm:$0xff]
        %3967 = vrot.lane.b32.xlu0 %v3903, 64
        %v3968 = vpop.permute.xlu0 %3967
        %3969 = vrot.lane.b32.xlu0 %v3904, 64
        %v3970 = vpop.permute.xlu0 %3969
        %3971 = vrot.lane.b32.xlu0 %v3905, 64
        %v3972 = vpop.permute.xlu0 %3971
        %3973 = vrot.lane.b32.xlu0 %v3906, 64
        %v3974 = vpop.permute.xlu0 %3973
        %3975 = vrot.lane.b32.xlu0 %v3907, 64
        %v3976 = vpop.permute.xlu0 %3975
        %3977 = vrot.lane.b32.xlu0 %v3908, 64
        %v3978 = vpop.permute.xlu0 %3977
        %3979 = vrot.lane.b32.xlu0 %v3909, 64
        %v3980 = vpop.permute.xlu0 %3979
        %3981 = vrot.lane.b32.xlu0 %v3910, 64
        %v3982 = vpop.permute.xlu0 %3981
        %3983 = vrot.lane.b32.xlu0 %v3911, 64
        %v3984 = vpop.permute.xlu0 %3983
        %3985 = vrot.lane.b32.xlu0 %v3912, 64
        %v3986 = vpop.permute.xlu0 %3985
        %3987 = vrot.lane.b32.xlu0 %v3913, 64
        %v3988 = vpop.permute.xlu0 %3987
        %3989 = vrot.lane.b32.xlu0 %v3914, 64
        %v3990 = vpop.permute.xlu0 %3989
        %3991 = vrot.lane.b32.xlu0 %v3915, 64
        %v3992 = vpop.permute.xlu0 %3991
        %3993 = vrot.lane.b32.xlu0 %v3916, 64
        %v3994 = vpop.permute.xlu0 %3993
        %3995 = vrot.lane.b32.xlu0 %v3917, 64
        %v3996 = vpop.permute.xlu0 %3995
        %3997 = vrot.lane.b32.xlu0 %v3918, 64
        %v3998 = vpop.permute.xlu0 %3997
        %3999 = vrot.lane.b32.xlu0 %v3919, 64
        %v4000 = vpop.permute.xlu0 %3999
        %4001 = vrot.lane.b32.xlu0 %v3920, 64
        %v4002 = vpop.permute.xlu0 %4001
        %4003 = vrot.lane.b32.xlu0 %v3921, 64
        %v4004 = vpop.permute.xlu0 %4003
        %4005 = vrot.lane.b32.xlu0 %v3922, 64
        %v4006 = vpop.permute.xlu0 %4005
        %4007 = vrot.lane.b32.xlu0 %v3923, 64
        %v4008 = vpop.permute.xlu0 %4007
        %4009 = vrot.lane.b32.xlu0 %v3924, 64
        %v4010 = vpop.permute.xlu0 %4009
        %4011 = vrot.lane.b32.xlu0 %v3925, 64
        %v4012 = vpop.permute.xlu0 %4011
        %4013 = vrot.lane.b32.xlu0 %v3926, 64
        %v4014 = vpop.permute.xlu0 %4013
        %4015 = vrot.lane.b32.xlu0 %v3927, 64
        %v4016 = vpop.permute.xlu0 %4015
        %4017 = vrot.lane.b32.xlu0 %v3928, 64
        %v4018 = vpop.permute.xlu0 %4017
        %4019 = vrot.lane.b32.xlu0 %v3929, 64
        %v4020 = vpop.permute.xlu0 %4019
        %4021 = vrot.lane.b32.xlu0 %v3930, 64
        %v4022 = vpop.permute.xlu0 %4021
        %4023 = vrot.lane.b32.xlu0 %v3931, 64
        %v4024 = vpop.permute.xlu0 %4023
        %4025 = vrot.lane.b32.xlu0 %v3932, 64
        %v4026 = vpop.permute.xlu0 %4025
        %4027 = vrot.lane.b32.xlu0 %v3933, 64
        %v4028 = vpop.permute.xlu0 %4027
        %4029 = vrot.lane.b32.xlu0 %v3934, 64
        %v4030 = vpop.permute.xlu0 %4029
        %v4063 = vsel %vm520, %v3871, %v3968
        %v4064 = vsel %vm520, %v3872, %v3970
        %v4065 = vsel %vm520, %v3873, %v3972
        %v4066 = vsel %vm520, %v3874, %v3974
        %v4067 = vsel %vm520, %v3875, %v3976
        %v4068 = vsel %vm520, %v3876, %v3978
        %v4069 = vsel %vm520, %v3877, %v3980
        %v4070 = vsel %vm520, %v3878, %v3982
        %v4071 = vsel %vm520, %v3879, %v3984
        %v4072 = vsel %vm520, %v3880, %v3986
        %v4073 = vsel %vm520, %v3881, %v3988
        %v4074 = vsel %vm520, %v3882, %v3990
        %v4075 = vsel %vm520, %v3883, %v3992
        %v4076 = vsel %vm520, %v3884, %v3994
        %v4077 = vsel %vm520, %v3885, %v3996
        %v4078 = vsel %vm520, %v3886, %v3998
        %v4079 = vsel %vm520, %v3887, %v4000
        %v4080 = vsel %vm520, %v3888, %v4002
        %v4081 = vsel %vm520, %v3889, %v4004
        %v4082 = vsel %vm520, %v3890, %v4006
        %v4083 = vsel %vm520, %v3891, %v4008
        %v4084 = vsel %vm520, %v3892, %v4010
        %v4085 = vsel %vm520, %v3893, %v4012
        %v4086 = vsel %vm520, %v3894, %v4014
        %v4087 = vsel %vm520, %v3895, %v4016
        %v4088 = vsel %vm520, %v3896, %v4018
        %v4089 = vsel %vm520, %v3897, %v4020
        %v4090 = vsel %vm520, %v3898, %v4022
        %v4091 = vsel %vm520, %v3899, %v4024
        %v4092 = vsel %vm520, %v3900, %v4026
        %v4093 = vsel %vm520, %v3901, %v4028
        %v4094 = vsel %vm520, %v3902, %v4030
        %4095 = vst [vmem:[#allocation3 + $0x10] sm:$0xff] %v4063
        %4096 = vst [vmem:[#allocation3 + $0x38] sm:$0xff] %v4064
        %4097 = vst [vmem:[#allocation3 + $0x60] sm:$0xff] %v4065
        %4098 = vst [vmem:[#allocation3 + $0x88] sm:$0xff] %v4066
        %4099 = vst [vmem:[#allocation3 + $0xb0] sm:$0xff] %v4067
        %4100 = vst [vmem:[#allocation3 + $0xd8] sm:$0xff] %v4068
        %4101 = vst [vmem:[#allocation3 + $0x100] sm:$0xff] %v4069
        %4102 = vst [vmem:[#allocation3 + $0x128] sm:$0xff] %v4070
        %4103 = vst [vmem:[#allocation3 + $0x150] sm:$0xff] %v4071
        %4104 = vst [vmem:[#allocation3 + $0x178] sm:$0xff] %v4072
        %4105 = vst [vmem:[#allocation3 + $0x1a0] sm:$0xff] %v4073
        %4106 = vst [vmem:[#allocation3 + $0x1c8] sm:$0xff] %v4074
        %4107 = vst [vmem:[#allocation3 + $0x1f0] sm:$0xff] %v4075
        %4108 = vst [vmem:[#allocation3 + $0x218] sm:$0xff] %v4076
        %4109 = vst [vmem:[#allocation3 + $0x240] sm:$0xff] %v4077
        %4110 = vst [vmem:[#allocation3 + $0x268] sm:$0xff] %v4078
        %4111 = vst [vmem:[#allocation3 + $0x290] sm:$0xff] %v4079
        %4112 = vst [vmem:[#allocation3 + $0x2b8] sm:$0xff] %v4080
        %4113 = vst [vmem:[#allocation3 + $0x2e0] sm:$0xff] %v4081
        %4114 = vst [vmem:[#allocation3 + $0x308] sm:$0xff] %v4082
        %4115 = vst [vmem:[#allocation3 + $0x330] sm:$0xff] %v4083
        %4116 = vst [vmem:[#allocation3 + $0x358] sm:$0xff] %v4084
        %4117 = vst [vmem:[#allocation3 + $0x380] sm:$0xff] %v4085
        %4118 = vst [vmem:[#allocation3 + $0x3a8] sm:$0xff] %v4086
        %4119 = vst [vmem:[#allocation3 + $0x3d0] sm:$0xff] %v4087
        %4120 = vst [vmem:[#allocation3 + $0x3f8] sm:$0xff] %v4088
        %4121 = vst [vmem:[#allocation3 + $0x420] sm:$0xff] %v4089
        %4122 = vst [vmem:[#allocation3 + $0x448] sm:$0xff] %v4090
        %4123 = vst [vmem:[#allocation3 + $0x470] sm:$0xff] %v4091
        %4124 = vst [vmem:[#allocation3 + $0x498] sm:$0xff] %v4092
        %4125 = vst [vmem:[#allocation3 + $0x4c0] sm:$0xff] %v4093
        %4126 = vst [vmem:[#allocation3 + $0x4e8] sm:$0xff] %v4094
        %v4127 = vld [vmem:[%s1756] sm:$0xff]
        %v4128 = vld [vmem:[%s1756 + $0x8] sm:$0xff]
        %v4129 = vld [vmem:[%s1756 + $0x18] sm:$0xff]
        %v4130 = vld [vmem:[%s1756 + $0x20] sm:$0xff]
        %v4131 = vld [vmem:[%s1756 + $0x30] sm:$0xff]
        %v4132 = vld [vmem:[%s1756 + $0x38] sm:$0xff]
        %v4133 = vld [vmem:[%s1756 + $0x48] sm:$0xff]
        %v4134 = vld [vmem:[%s1756 + $0x50] sm:$0xff]
        %v4135 = vld [vmem:[%s1756 + $0x60] sm:$0xff]
        %v4136 = vld [vmem:[%s1756 + $0x68] sm:$0xff]
        %v4137 = vld [vmem:[%s1756 + $0x78] sm:$0xff]
        %v4138 = vld [vmem:[%s1756 + $0x80] sm:$0xff]
        %v4139 = vld [vmem:[%s1756 + $0x90] sm:$0xff]
        %v4140 = vld [vmem:[%s1756 + $0x98] sm:$0xff]
        %v4141 = vld [vmem:[%s1756 + $0xa8] sm:$0xff]
        %v4142 = vld [vmem:[%s1756 + $0xb0] sm:$0xff]
        %v4143 = vld [vmem:[%s1756 + $0xc0] sm:$0xff]
        %v4144 = vld [vmem:[%s1756 + $0xc8] sm:$0xff]
        %v4145 = vld [vmem:[%s1756 + $0xd8] sm:$0xff]
        %v4146 = vld [vmem:[%s1756 + $0xe0] sm:$0xff]
        %v4147 = vld [vmem:[%s1756 + $0xf0] sm:$0xff]
        %v4148 = vld [vmem:[%s1756 + $0xf8] sm:$0xff]
        %v4149 = vld [vmem:[%s1756 + $0x108] sm:$0xff]
        %v4150 = vld [vmem:[%s1756 + $0x110] sm:$0xff]
        %v4151 = vld [vmem:[%s1756 + $0x120] sm:$0xff]
        %v4152 = vld [vmem:[%s1756 + $0x128] sm:$0xff]
        %v4153 = vld [vmem:[%s1756 + $0x138] sm:$0xff]
        %v4154 = vld [vmem:[%s1756 + $0x140] sm:$0xff]
        %v4155 = vld [vmem:[%s1756 + $0x150] sm:$0xff]
        %v4156 = vld [vmem:[%s1756 + $0x158] sm:$0xff]
        %v4157 = vld [vmem:[%s1756 + $0x168] sm:$0xff]
        %v4158 = vld [vmem:[%s1756 + $0x170] sm:$0xff]
        %v4159 = vld [vmem:[%s1756 + $0x1] sm:$0xff]
        %v4160 = vld [vmem:[%s1756 + $0x9] sm:$0xff]
        %v4161 = vld [vmem:[%s1756 + $0x19] sm:$0xff]
        %v4162 = vld [vmem:[%s1756 + $0x21] sm:$0xff]
        %v4163 = vld [vmem:[%s1756 + $0x31] sm:$0xff]
        %v4164 = vld [vmem:[%s1756 + $0x39] sm:$0xff]
        %v4165 = vld [vmem:[%s1756 + $0x49] sm:$0xff]
        %v4166 = vld [vmem:[%s1756 + $0x51] sm:$0xff]
        %v4167 = vld [vmem:[%s1756 + $0x61] sm:$0xff]
        %v4168 = vld [vmem:[%s1756 + $0x69] sm:$0xff]
        %v4169 = vld [vmem:[%s1756 + $0x79] sm:$0xff]
        %v4170 = vld [vmem:[%s1756 + $0x81] sm:$0xff]
        %v4171 = vld [vmem:[%s1756 + $0x91] sm:$0xff]
        %v4172 = vld [vmem:[%s1756 + $0x99] sm:$0xff]
        %v4173 = vld [vmem:[%s1756 + $0xa9] sm:$0xff]
        %v4174 = vld [vmem:[%s1756 + $0xb1] sm:$0xff]
        %v4175 = vld [vmem:[%s1756 + $0xc1] sm:$0xff]
        %v4176 = vld [vmem:[%s1756 + $0xc9] sm:$0xff]
        %v4177 = vld [vmem:[%s1756 + $0xd9] sm:$0xff]
        %v4178 = vld [vmem:[%s1756 + $0xe1] sm:$0xff]
        %v4179 = vld [vmem:[%s1756 + $0xf1] sm:$0xff]
        %v4180 = vld [vmem:[%s1756 + $0xf9] sm:$0xff]
        %v4181 = vld [vmem:[%s1756 + $0x109] sm:$0xff]
        %v4182 = vld [vmem:[%s1756 + $0x111] sm:$0xff]
        %v4183 = vld [vmem:[%s1756 + $0x121] sm:$0xff]
        %v4184 = vld [vmem:[%s1756 + $0x129] sm:$0xff]
        %v4185 = vld [vmem:[%s1756 + $0x139] sm:$0xff]
        %v4186 = vld [vmem:[%s1756 + $0x141] sm:$0xff]
        %v4187 = vld [vmem:[%s1756 + $0x151] sm:$0xff]
        %v4188 = vld [vmem:[%s1756 + $0x159] sm:$0xff]
        %v4189 = vld [vmem:[%s1756 + $0x169] sm:$0xff]
        %v4190 = vld [vmem:[%s1756 + $0x171] sm:$0xff]
        %4223 = vrot.lane.b32.xlu0 %v4159, 64
        %v4224 = vpop.permute.xlu0 %4223
        %4225 = vrot.lane.b32.xlu0 %v4160, 64
        %v4226 = vpop.permute.xlu0 %4225
        %4227 = vrot.lane.b32.xlu0 %v4161, 64
        %v4228 = vpop.permute.xlu0 %4227
        %4229 = vrot.lane.b32.xlu0 %v4162, 64
        %v4230 = vpop.permute.xlu0 %4229
        %4231 = vrot.lane.b32.xlu0 %v4163, 64
        %v4232 = vpop.permute.xlu0 %4231
        %4233 = vrot.lane.b32.xlu0 %v4164, 64
        %v4234 = vpop.permute.xlu0 %4233
        %4235 = vrot.lane.b32.xlu0 %v4165, 64
        %v4236 = vpop.permute.xlu0 %4235
        %4237 = vrot.lane.b32.xlu0 %v4166, 64
        %v4238 = vpop.permute.xlu0 %4237
        %4239 = vrot.lane.b32.xlu0 %v4167, 64
        %v4240 = vpop.permute.xlu0 %4239
        %4241 = vrot.lane.b32.xlu0 %v4168, 64
        %v4242 = vpop.permute.xlu0 %4241
        %4243 = vrot.lane.b32.xlu0 %v4169, 64
        %v4244 = vpop.permute.xlu0 %4243
        %4245 = vrot.lane.b32.xlu0 %v4170, 64
        %v4246 = vpop.permute.xlu0 %4245
        %4247 = vrot.lane.b32.xlu0 %v4171, 64
        %v4248 = vpop.permute.xlu0 %4247
        %4249 = vrot.lane.b32.xlu0 %v4172, 64
        %v4250 = vpop.permute.xlu0 %4249
        %4251 = vrot.lane.b32.xlu0 %v4173, 64
        %v4252 = vpop.permute.xlu0 %4251
        %4253 = vrot.lane.b32.xlu0 %v4174, 64
        %v4254 = vpop.permute.xlu0 %4253
        %4255 = vrot.lane.b32.xlu0 %v4175, 64
        %v4256 = vpop.permute.xlu0 %4255
        %4257 = vrot.lane.b32.xlu0 %v4176, 64
        %v4258 = vpop.permute.xlu0 %4257
        %4259 = vrot.lane.b32.xlu0 %v4177, 64
        %v4260 = vpop.permute.xlu0 %4259
        %4261 = vrot.lane.b32.xlu0 %v4178, 64
        %v4262 = vpop.permute.xlu0 %4261
        %4263 = vrot.lane.b32.xlu0 %v4179, 64
        %v4264 = vpop.permute.xlu0 %4263
        %4265 = vrot.lane.b32.xlu0 %v4180, 64
        %v4266 = vpop.permute.xlu0 %4265
        %4267 = vrot.lane.b32.xlu0 %v4181, 64
        %v4268 = vpop.permute.xlu0 %4267
        %4269 = vrot.lane.b32.xlu0 %v4182, 64
        %v4270 = vpop.permute.xlu0 %4269
        %4271 = vrot.lane.b32.xlu0 %v4183, 64
        %v4272 = vpop.permute.xlu0 %4271
        %4273 = vrot.lane.b32.xlu0 %v4184, 64
        %v4274 = vpop.permute.xlu0 %4273
        %4275 = vrot.lane.b32.xlu0 %v4185, 64
        %v4276 = vpop.permute.xlu0 %4275
        %4277 = vrot.lane.b32.xlu0 %v4186, 64
        %v4278 = vpop.permute.xlu0 %4277
        %4279 = vrot.lane.b32.xlu0 %v4187, 64
        %v4280 = vpop.permute.xlu0 %4279
        %4281 = vrot.lane.b32.xlu0 %v4188, 64
        %v4282 = vpop.permute.xlu0 %4281
        %4283 = vrot.lane.b32.xlu0 %v4189, 64
        %v4284 = vpop.permute.xlu0 %4283
        %4285 = vrot.lane.b32.xlu0 %v4190, 64
        %v4286 = vpop.permute.xlu0 %4285
        %v4319 = vsel %vm520, %v4127, %v4224
        %v4320 = vsel %vm520, %v4128, %v4226
        %v4321 = vsel %vm520, %v4129, %v4228
        %v4322 = vsel %vm520, %v4130, %v4230
        %v4323 = vsel %vm520, %v4131, %v4232
        %v4324 = vsel %vm520, %v4132, %v4234
        %v4325 = vsel %vm520, %v4133, %v4236
        %v4326 = vsel %vm520, %v4134, %v4238
        %v4327 = vsel %vm520, %v4135, %v4240
        %v4328 = vsel %vm520, %v4136, %v4242
        %v4329 = vsel %vm520, %v4137, %v4244
        %v4330 = vsel %vm520, %v4138, %v4246
        %v4331 = vsel %vm520, %v4139, %v4248
        %v4332 = vsel %vm520, %v4140, %v4250
        %v4333 = vsel %vm520, %v4141, %v4252
        %v4334 = vsel %vm520, %v4142, %v4254
        %v4335 = vsel %vm520, %v4143, %v4256
        %v4336 = vsel %vm520, %v4144, %v4258
        %v4337 = vsel %vm520, %v4145, %v4260
        %v4338 = vsel %vm520, %v4146, %v4262
        %v4339 = vsel %vm520, %v4147, %v4264
        %v4340 = vsel %vm520, %v4148, %v4266
        %v4341 = vsel %vm520, %v4149, %v4268
        %v4342 = vsel %vm520, %v4150, %v4270
        %v4343 = vsel %vm520, %v4151, %v4272
        %v4344 = vsel %vm520, %v4152, %v4274
        %v4345 = vsel %vm520, %v4153, %v4276
        %v4346 = vsel %vm520, %v4154, %v4278
        %v4347 = vsel %vm520, %v4155, %v4280
        %v4348 = vsel %vm520, %v4156, %v4282
        %v4349 = vsel %vm520, %v4157, %v4284
        %v4350 = vsel %vm520, %v4158, %v4286
        %4351 = vst [vmem:[#allocation3 + $0x18] sm:$0xff] %v4319
        %4352 = vst [vmem:[#allocation3 + $0x40] sm:$0xff] %v4320
        %4353 = vst [vmem:[#allocation3 + $0x68] sm:$0xff] %v4321
        %4354 = vst [vmem:[#allocation3 + $0x90] sm:$0xff] %v4322
        %4355 = vst [vmem:[#allocation3 + $0xb8] sm:$0xff] %v4323
        %4356 = vst [vmem:[#allocation3 + $0xe0] sm:$0xff] %v4324
        %4357 = vst [vmem:[#allocation3 + $0x108] sm:$0xff] %v4325
        %4358 = vst [vmem:[#allocation3 + $0x130] sm:$0xff] %v4326
        %4359 = vst [vmem:[#allocation3 + $0x158] sm:$0xff] %v4327
        %4360 = vst [vmem:[#allocation3 + $0x180] sm:$0xff] %v4328
        %4361 = vst [vmem:[#allocation3 + $0x1a8] sm:$0xff] %v4329
        %4362 = vst [vmem:[#allocation3 + $0x1d0] sm:$0xff] %v4330
        %4363 = vst [vmem:[#allocation3 + $0x1f8] sm:$0xff] %v4331
        %4364 = vst [vmem:[#allocation3 + $0x220] sm:$0xff] %v4332
        %4365 = vst [vmem:[#allocation3 + $0x248] sm:$0xff] %v4333
        %4366 = vst [vmem:[#allocation3 + $0x270] sm:$0xff] %v4334
        %4367 = vst [vmem:[#allocation3 + $0x298] sm:$0xff] %v4335
        %4368 = vst [vmem:[#allocation3 + $0x2c0] sm:$0xff] %v4336
        %4369 = vst [vmem:[#allocation3 + $0x2e8] sm:$0xff] %v4337
        %4370 = vst [vmem:[#allocation3 + $0x310] sm:$0xff] %v4338
        %4371 = vst [vmem:[#allocation3 + $0x338] sm:$0xff] %v4339
        %4372 = vst [vmem:[#allocation3 + $0x360] sm:$0xff] %v4340
        %4373 = vst [vmem:[#allocation3 + $0x388] sm:$0xff] %v4341
        %4374 = vst [vmem:[#allocation3 + $0x3b0] sm:$0xff] %v4342
        %4375 = vst [vmem:[#allocation3 + $0x3d8] sm:$0xff] %v4343
        %4376 = vst [vmem:[#allocation3 + $0x400] sm:$0xff] %v4344
        %4377 = vst [vmem:[#allocation3 + $0x428] sm:$0xff] %v4345
        %4378 = vst [vmem:[#allocation3 + $0x450] sm:$0xff] %v4346
        %4379 = vst [vmem:[#allocation3 + $0x478] sm:$0xff] %v4347
        %4380 = vst [vmem:[#allocation3 + $0x4a0] sm:$0xff] %v4348
        %4381 = vst [vmem:[#allocation3 + $0x4c8] sm:$0xff] %v4349
        %4382 = vst [vmem:[#allocation3 + $0x4f0] sm:$0xff] %v4350
        %v4383 = vld [vmem:[%s1756 + $0x2] sm:$0xff]
        %v4384 = vld [vmem:[%s1756 + $0xa] sm:$0xff]
        %v4385 = vld [vmem:[%s1756 + $0x1a] sm:$0xff]
        %v4386 = vld [vmem:[%s1756 + $0x22] sm:$0xff]
        %v4387 = vld [vmem:[%s1756 + $0x32] sm:$0xff]
        %v4388 = vld [vmem:[%s1756 + $0x3a] sm:$0xff]
        %v4389 = vld [vmem:[%s1756 + $0x4a] sm:$0xff]
        %v4390 = vld [vmem:[%s1756 + $0x52] sm:$0xff]
        %v4391 = vld [vmem:[%s1756 + $0x62] sm:$0xff]
        %v4392 = vld [vmem:[%s1756 + $0x6a] sm:$0xff]
        %v4393 = vld [vmem:[%s1756 + $0x7a] sm:$0xff]
        %v4394 = vld [vmem:[%s1756 + $0x82] sm:$0xff]
        %v4395 = vld [vmem:[%s1756 + $0x92] sm:$0xff]
        %v4396 = vld [vmem:[%s1756 + $0x9a] sm:$0xff]
        %v4397 = vld [vmem:[%s1756 + $0xaa] sm:$0xff]
        %v4398 = vld [vmem:[%s1756 + $0xb2] sm:$0xff]
        %v4399 = vld [vmem:[%s1756 + $0xc2] sm:$0xff]
        %v4400 = vld [vmem:[%s1756 + $0xca] sm:$0xff]
        %v4401 = vld [vmem:[%s1756 + $0xda] sm:$0xff]
        %v4402 = vld [vmem:[%s1756 + $0xe2] sm:$0xff]
        %v4403 = vld [vmem:[%s1756 + $0xf2] sm:$0xff]
        %v4404 = vld [vmem:[%s1756 + $0xfa] sm:$0xff]
        %v4405 = vld [vmem:[%s1756 + $0x10a] sm:$0xff]
        %v4406 = vld [vmem:[%s1756 + $0x112] sm:$0xff]
        %v4407 = vld [vmem:[%s1756 + $0x122] sm:$0xff]
        %v4408 = vld [vmem:[%s1756 + $0x12a] sm:$0xff]
        %v4409 = vld [vmem:[%s1756 + $0x13a] sm:$0xff]
        %v4410 = vld [vmem:[%s1756 + $0x142] sm:$0xff]
        %v4411 = vld [vmem:[%s1756 + $0x152] sm:$0xff]
        %v4412 = vld [vmem:[%s1756 + $0x15a] sm:$0xff]
        %v4413 = vld [vmem:[%s1756 + $0x16a] sm:$0xff]
        %v4414 = vld [vmem:[%s1756 + $0x172] sm:$0xff]
        %4415 = vst.msk [vmem:[#allocation3 + $0x20] sm:$0xff] %vm520, %v4383
        %4416 = vst.msk [vmem:[#allocation3 + $0x48] sm:$0xff] %vm520, %v4384
        %4417 = vst.msk [vmem:[#allocation3 + $0x70] sm:$0xff] %vm520, %v4385
        %4418 = vst.msk [vmem:[#allocation3 + $0x98] sm:$0xff] %vm520, %v4386
        %4419 = vst.msk [vmem:[#allocation3 + $0xc0] sm:$0xff] %vm520, %v4387
        %4420 = vst.msk [vmem:[#allocation3 + $0xe8] sm:$0xff] %vm520, %v4388
        %4421 = vst.msk [vmem:[#allocation3 + $0x110] sm:$0xff] %vm520, %v4389
        %4422 = vst.msk [vmem:[#allocation3 + $0x138] sm:$0xff] %vm520, %v4390
        %4423 = vst.msk [vmem:[#allocation3 + $0x160] sm:$0xff] %vm520, %v4391
        %4424 = vst.msk [vmem:[#allocation3 + $0x188] sm:$0xff] %vm520, %v4392
        %4425 = vst.msk [vmem:[#allocation3 + $0x1b0] sm:$0xff] %vm520, %v4393
        %4426 = vst.msk [vmem:[#allocation3 + $0x1d8] sm:$0xff] %vm520, %v4394
        %4427 = vst.msk [vmem:[#allocation3 + $0x200] sm:$0xff] %vm520, %v4395
        %4428 = vst.msk [vmem:[#allocation3 + $0x228] sm:$0xff] %vm520, %v4396
        %4429 = vst.msk [vmem:[#allocation3 + $0x250] sm:$0xff] %vm520, %v4397
        %4430 = vst.msk [vmem:[#allocation3 + $0x278] sm:$0xff] %vm520, %v4398
        %4431 = vst.msk [vmem:[#allocation3 + $0x2a0] sm:$0xff] %vm520, %v4399
        %4432 = vst.msk [vmem:[#allocation3 + $0x2c8] sm:$0xff] %vm520, %v4400
        %4433 = vst.msk [vmem:[#allocation3 + $0x2f0] sm:$0xff] %vm520, %v4401
        %4434 = vst.msk [vmem:[#allocation3 + $0x318] sm:$0xff] %vm520, %v4402
        %4435 = vst.msk [vmem:[#allocation3 + $0x340] sm:$0xff] %vm520, %v4403
        %4436 = vst.msk [vmem:[#allocation3 + $0x368] sm:$0xff] %vm520, %v4404
        %4437 = vst.msk [vmem:[#allocation3 + $0x390] sm:$0xff] %vm520, %v4405
        %4438 = vst.msk [vmem:[#allocation3 + $0x3b8] sm:$0xff] %vm520, %v4406
        %4439 = vst.msk [vmem:[#allocation3 + $0x3e0] sm:$0xff] %vm520, %v4407
        %4440 = vst.msk [vmem:[#allocation3 + $0x408] sm:$0xff] %vm520, %v4408
        %4441 = vst.msk [vmem:[#allocation3 + $0x430] sm:$0xff] %vm520, %v4409
        %4442 = vst.msk [vmem:[#allocation3 + $0x458] sm:$0xff] %vm520, %v4410
        %4443 = vst.msk [vmem:[#allocation3 + $0x480] sm:$0xff] %vm520, %v4411
        %4444 = vst.msk [vmem:[#allocation3 + $0x4a8] sm:$0xff] %vm520, %v4412
        %4445 = vst.msk [vmem:[#allocation3 + $0x4d0] sm:$0xff] %vm520, %v4413
        %4446 = vst.msk [vmem:[#allocation3 + $0x4f8] sm:$0xff] %vm520, %v4414
        %v4447 = vld [vmem:[#allocation3] sm:$0xff]
        %v4448 = vld [vmem:[#allocation3 + $0x8] sm:$0xff]
        %v4449 = vld [vmem:[#allocation3 + $0x10] sm:$0xff]
        %v4450 = vld [vmem:[#allocation3 + $0x18] sm:$0xff]
        %v4451 = vld [vmem:[#allocation3 + $0x20] sm:$0xff]
        %v4452 = vld [vmem:[#allocation3 + $0x28] sm:$0xff]
        %v4453 = vld [vmem:[#allocation3 + $0x30] sm:$0xff]
        %v4454 = vld [vmem:[#allocation3 + $0x38] sm:$0xff]
        %v4455 = vld [vmem:[#allocation3 + $0x40] sm:$0xff]
        %v4456 = vld [vmem:[#allocation3 + $0x48] sm:$0xff]
        %v4457 = vld [vmem:[#allocation3 + $0x50] sm:$0xff]
        %v4458 = vld [vmem:[#allocation3 + $0x58] sm:$0xff]
        %v4459 = vld [vmem:[#allocation3 + $0x60] sm:$0xff]
        %v4460 = vld [vmem:[#allocation3 + $0x68] sm:$0xff]
        %v4461 = vld [vmem:[#allocation3 + $0x70] sm:$0xff]
        %v4462 = vld [vmem:[#allocation3 + $0x78] sm:$0xff]
        %v4463 = vld [vmem:[#allocation3 + $0x80] sm:$0xff]
        %v4464 = vld [vmem:[#allocation3 + $0x88] sm:$0xff]
        %v4465 = vld [vmem:[#allocation3 + $0x90] sm:$0xff]
        %v4466 = vld [vmem:[#allocation3 + $0x98] sm:$0xff]
        %v4467 = vld [vmem:[#allocation3 + $0xa0] sm:$0xff]
        %v4468 = vld [vmem:[#allocation3 + $0xa8] sm:$0xff]
        %v4469 = vld [vmem:[#allocation3 + $0xb0] sm:$0xff]
        %v4470 = vld [vmem:[#allocation3 + $0xb8] sm:$0xff]
        %v4471 = vld [vmem:[#allocation3 + $0xc0] sm:$0xff]
        %v4472 = vld [vmem:[#allocation3 + $0xc8] sm:$0xff]
        %v4473 = vld [vmem:[#allocation3 + $0xd0] sm:$0xff]
        %v4474 = vld [vmem:[#allocation3 + $0xd8] sm:$0xff]
        %v4475 = vld [vmem:[#allocation3 + $0xe0] sm:$0xff]
        %v4476 = vld [vmem:[#allocation3 + $0xe8] sm:$0xff]
        %v4477 = vld [vmem:[#allocation3 + $0xf0] sm:$0xff]
        %v4478 = vld [vmem:[#allocation3 + $0xf8] sm:$0xff]
        %v4479 = vld [vmem:[#allocation3 + $0x100] sm:$0xff]
        %v4480 = vld [vmem:[#allocation3 + $0x108] sm:$0xff]
        %v4481 = vld [vmem:[#allocation3 + $0x110] sm:$0xff]
        %v4482 = vld [vmem:[#allocation3 + $0x118] sm:$0xff]
        %v4483 = vld [vmem:[#allocation3 + $0x120] sm:$0xff]
        %v4484 = vld [vmem:[#allocation3 + $0x128] sm:$0xff]
        %v4485 = vld [vmem:[#allocation3 + $0x130] sm:$0xff]
        %v4486 = vld [vmem:[#allocation3 + $0x138] sm:$0xff]
        %v4487 = vld [vmem:[#allocation3 + $0x140] sm:$0xff]
        %v4488 = vld [vmem:[#allocation3 + $0x148] sm:$0xff]
        %v4489 = vld [vmem:[#allocation3 + $0x150] sm:$0xff]
        %v4490 = vld [vmem:[#allocation3 + $0x158] sm:$0xff]
        %v4491 = vld [vmem:[#allocation3 + $0x160] sm:$0xff]
        %v4492 = vld [vmem:[#allocation3 + $0x168] sm:$0xff]
        %v4493 = vld [vmem:[#allocation3 + $0x170] sm:$0xff]
        %v4494 = vld [vmem:[#allocation3 + $0x178] sm:$0xff]
        %v4495 = vld [vmem:[#allocation3 + $0x180] sm:$0xff]
        %v4496 = vld [vmem:[#allocation3 + $0x188] sm:$0xff]
        %v4497 = vld [vmem:[#allocation3 + $0x190] sm:$0xff]
        %v4498 = vld [vmem:[#allocation3 + $0x198] sm:$0xff]
        %v4499 = vld [vmem:[#allocation3 + $0x1a0] sm:$0xff]
        %v4500 = vld [vmem:[#allocation3 + $0x1a8] sm:$0xff]
        %v4501 = vld [vmem:[#allocation3 + $0x1b0] sm:$0xff]
        %v4502 = vld [vmem:[#allocation3 + $0x1b8] sm:$0xff]
        %v4503 = vld [vmem:[#allocation3 + $0x1c0] sm:$0xff]
        %v4504 = vld [vmem:[#allocation3 + $0x1c8] sm:$0xff]
        %v4505 = vld [vmem:[#allocation3 + $0x1d0] sm:$0xff]
        %v4506 = vld [vmem:[#allocation3 + $0x1d8] sm:$0xff]
        %v4507 = vld [vmem:[#allocation3 + $0x1e0] sm:$0xff]
        %v4508 = vld [vmem:[#allocation3 + $0x1e8] sm:$0xff]
        %v4509 = vld [vmem:[#allocation3 + $0x1f0] sm:$0xff]
        %v4510 = vld [vmem:[#allocation3 + $0x1f8] sm:$0xff]
        %v4511 = vld [vmem:[#allocation3 + $0x200] sm:$0xff]
        %v4512 = vld [vmem:[#allocation3 + $0x208] sm:$0xff]
        %v4513 = vld [vmem:[#allocation3 + $0x210] sm:$0xff]
        %v4514 = vld [vmem:[#allocation3 + $0x218] sm:$0xff]
        %v4515 = vld [vmem:[#allocation3 + $0x220] sm:$0xff]
        %v4516 = vld [vmem:[#allocation3 + $0x228] sm:$0xff]
        %v4517 = vld [vmem:[#allocation3 + $0x230] sm:$0xff]
        %v4518 = vld [vmem:[#allocation3 + $0x238] sm:$0xff]
        %v4519 = vld [vmem:[#allocation3 + $0x240] sm:$0xff]
        %v4520 = vld [vmem:[#allocation3 + $0x248] sm:$0xff]
        %v4521 = vld [vmem:[#allocation3 + $0x250] sm:$0xff]
        %v4522 = vld [vmem:[#allocation3 + $0x258] sm:$0xff]
        %v4523 = vld [vmem:[#allocation3 + $0x260] sm:$0xff]
        %v4524 = vld [vmem:[#allocation3 + $0x268] sm:$0xff]
        %v4525 = vld [vmem:[#allocation3 + $0x270] sm:$0xff]
        %v4526 = vld [vmem:[#allocation3 + $0x278] sm:$0xff]
        %v4527 = vld [vmem:[#allocation3 + $0x280] sm:$0xff]
        %v4528 = vld [vmem:[#allocation3 + $0x288] sm:$0xff]
        %v4529 = vld [vmem:[#allocation3 + $0x290] sm:$0xff]
        %v4530 = vld [vmem:[#allocation3 + $0x298] sm:$0xff]
        %v4531 = vld [vmem:[#allocation3 + $0x2a0] sm:$0xff]
        %v4532 = vld [vmem:[#allocation3 + $0x2a8] sm:$0xff]
        %v4533 = vld [vmem:[#allocation3 + $0x2b0] sm:$0xff]
        %v4534 = vld [vmem:[#allocation3 + $0x2b8] sm:$0xff]
        %v4535 = vld [vmem:[#allocation3 + $0x2c0] sm:$0xff]
        %v4536 = vld [vmem:[#allocation3 + $0x2c8] sm:$0xff]
        %v4537 = vld [vmem:[#allocation3 + $0x2d0] sm:$0xff]
        %v4538 = vld [vmem:[#allocation3 + $0x2d8] sm:$0xff]
        %v4539 = vld [vmem:[#allocation3 + $0x2e0] sm:$0xff]
        %v4540 = vld [vmem:[#allocation3 + $0x2e8] sm:$0xff]
        %v4541 = vld [vmem:[#allocation3 + $0x2f0] sm:$0xff]
        %v4542 = vld [vmem:[#allocation3 + $0x2f8] sm:$0xff]
        %v4543 = vld [vmem:[#allocation3 + $0x300] sm:$0xff]
        %v4544 = vld [vmem:[#allocation3 + $0x308] sm:$0xff]
        %v4545 = vld [vmem:[#allocation3 + $0x310] sm:$0xff]
        %v4546 = vld [vmem:[#allocation3 + $0x318] sm:$0xff]
        %v4547 = vld [vmem:[#allocation3 + $0x320] sm:$0xff]
        %v4548 = vld [vmem:[#allocation3 + $0x328] sm:$0xff]
        %v4549 = vld [vmem:[#allocation3 + $0x330] sm:$0xff]
        %v4550 = vld [vmem:[#allocation3 + $0x338] sm:$0xff]
        %v4551 = vld [vmem:[#allocation3 + $0x340] sm:$0xff]
        %v4552 = vld [vmem:[#allocation3 + $0x348] sm:$0xff]
        %v4553 = vld [vmem:[#allocation3 + $0x350] sm:$0xff]
        %v4554 = vld [vmem:[#allocation3 + $0x358] sm:$0xff]
        %v4555 = vld [vmem:[#allocation3 + $0x360] sm:$0xff]
        %v4556 = vld [vmem:[#allocation3 + $0x368] sm:$0xff]
        %v4557 = vld [vmem:[#allocation3 + $0x370] sm:$0xff]
        %v4558 = vld [vmem:[#allocation3 + $0x378] sm:$0xff]
        %v4559 = vld [vmem:[#allocation3 + $0x380] sm:$0xff]
        %v4560 = vld [vmem:[#allocation3 + $0x388] sm:$0xff]
        %v4561 = vld [vmem:[#allocation3 + $0x390] sm:$0xff]
        %v4562 = vld [vmem:[#allocation3 + $0x398] sm:$0xff]
        %v4563 = vld [vmem:[#allocation3 + $0x3a0] sm:$0xff]
        %v4564 = vld [vmem:[#allocation3 + $0x3a8] sm:$0xff]
        %v4565 = vld [vmem:[#allocation3 + $0x3b0] sm:$0xff]
        %v4566 = vld [vmem:[#allocation3 + $0x3b8] sm:$0xff]
        %v4567 = vld [vmem:[#allocation3 + $0x3c0] sm:$0xff]
        %v4568 = vld [vmem:[#allocation3 + $0x3c8] sm:$0xff]
        %v4569 = vld [vmem:[#allocation3 + $0x3d0] sm:$0xff]
        %v4570 = vld [vmem:[#allocation3 + $0x3d8] sm:$0xff]
        %v4571 = vld [vmem:[#allocation3 + $0x3e0] sm:$0xff]
        %v4572 = vld [vmem:[#allocation3 + $0x3e8] sm:$0xff]
        %v4573 = vld [vmem:[#allocation3 + $0x3f0] sm:$0xff]
        %v4574 = vld [vmem:[#allocation3 + $0x3f8] sm:$0xff]
        %v4575 = vld [vmem:[#allocation3 + $0x400] sm:$0xff]
        %v4576 = vld [vmem:[#allocation3 + $0x408] sm:$0xff]
        %v4577 = vld [vmem:[#allocation3 + $0x410] sm:$0xff]
        %v4578 = vld [vmem:[#allocation3 + $0x418] sm:$0xff]
        %v4579 = vld [vmem:[#allocation3 + $0x420] sm:$0xff]
        %v4580 = vld [vmem:[#allocation3 + $0x428] sm:$0xff]
        %v4581 = vld [vmem:[#allocation3 + $0x430] sm:$0xff]
        %v4582 = vld [vmem:[#allocation3 + $0x438] sm:$0xff]
        %v4583 = vld [vmem:[#allocation3 + $0x440] sm:$0xff]
        %v4584 = vld [vmem:[#allocation3 + $0x448] sm:$0xff]
        %v4585 = vld [vmem:[#allocation3 + $0x450] sm:$0xff]
        %v4586 = vld [vmem:[#allocation3 + $0x458] sm:$0xff]
        %v4587 = vld [vmem:[#allocation3 + $0x460] sm:$0xff]
        %v4588 = vld [vmem:[#allocation3 + $0x468] sm:$0xff]
        %v4589 = vld [vmem:[#allocation3 + $0x470] sm:$0xff]
        %v4590 = vld [vmem:[#allocation3 + $0x478] sm:$0xff]
        %v4591 = vld [vmem:[#allocation3 + $0x480] sm:$0xff]
        %v4592 = vld [vmem:[#allocation3 + $0x488] sm:$0xff]
        %v4593 = vld [vmem:[#allocation3 + $0x490] sm:$0xff]
        %v4594 = vld [vmem:[#allocation3 + $0x498] sm:$0xff]
        %v4595 = vld [vmem:[#allocation3 + $0x4a0] sm:$0xff]
        %v4596 = vld [vmem:[#allocation3 + $0x4a8] sm:$0xff]
        %v4597 = vld [vmem:[#allocation3 + $0x4b0] sm:$0xff]
        %v4598 = vld [vmem:[#allocation3 + $0x4b8] sm:$0xff]
        %v4599 = vld [vmem:[#allocation3 + $0x4c0] sm:$0xff]
        %v4600 = vld [vmem:[#allocation3 + $0x4c8] sm:$0xff]
        %v4601 = vld [vmem:[#allocation3 + $0x4d0] sm:$0xff]
        %v4602 = vld [vmem:[#allocation3 + $0x4d8] sm:$0xff]
        %v4603 = vld [vmem:[#allocation3 + $0x4e0] sm:$0xff]
        %v4604 = vld [vmem:[#allocation3 + $0x4e8] sm:$0xff]
        %v4605 = vld [vmem:[#allocation3 + $0x4f0] sm:$0xff]
        %v4606 = vld [vmem:[#allocation3 + $0x4f8] sm:$0xff]
        %v4607 = vld [vmem:[%s13] sm:$0xff]
        %v4608 = vld [vmem:[%s13 + $0x8] sm:$0xff]
        %v4609 = vld [vmem:[%s13 + $0x10] sm:$0xff]
        %v4610 = vld [vmem:[%s13 + $0x18] sm:$0xff]
        %v4611 = vld [vmem:[%s13 + $0x20] sm:$0xff]
        %v4612 = vld [vmem:[%s13 + $0x28] sm:$0xff]
        %v4613 = vld [vmem:[%s13 + $0x30] sm:$0xff]
        %v4614 = vld [vmem:[%s13 + $0x38] sm:$0xff]
        %v4615 = vld [vmem:[%s13 + $0x40] sm:$0xff]
        %v4616 = vld [vmem:[%s13 + $0x48] sm:$0xff]
        %v4617 = vld [vmem:[%s13 + $0x50] sm:$0xff]
        %v4618 = vld [vmem:[%s13 + $0x58] sm:$0xff]
        %v4619 = vld [vmem:[%s13 + $0x60] sm:$0xff]
        %v4620 = vld [vmem:[%s13 + $0x68] sm:$0xff]
        %v4621 = vld [vmem:[%s13 + $0x70] sm:$0xff]
        %v4622 = vld [vmem:[%s13 + $0x78] sm:$0xff]
        %v4623 = vld [vmem:[%s13 + $0x80] sm:$0xff]
        %v4624 = vld [vmem:[%s13 + $0x88] sm:$0xff]
        %v4625 = vld [vmem:[%s13 + $0x90] sm:$0xff]
        %v4626 = vld [vmem:[%s13 + $0x98] sm:$0xff]
        %v4627 = vld [vmem:[%s13 + $0xa0] sm:$0xff]
        %v4628 = vld [vmem:[%s13 + $0xa8] sm:$0xff]
        %v4629 = vld [vmem:[%s13 + $0xb0] sm:$0xff]
        %v4630 = vld [vmem:[%s13 + $0xb8] sm:$0xff]
        %v4631 = vld [vmem:[%s13 + $0xc0] sm:$0xff]
        %v4632 = vld [vmem:[%s13 + $0xc8] sm:$0xff]
        %v4633 = vld [vmem:[%s13 + $0xd0] sm:$0xff]
        %v4634 = vld [vmem:[%s13 + $0xd8] sm:$0xff]
        %v4635 = vld [vmem:[%s13 + $0xe0] sm:$0xff]
        %v4636 = vld [vmem:[%s13 + $0xe8] sm:$0xff]
        %v4637 = vld [vmem:[%s13 + $0xf0] sm:$0xff]
        %v4638 = vld [vmem:[%s13 + $0xf8] sm:$0xff]
        %v4639 = vld [vmem:[%s13 + $0x100] sm:$0xff]
        %v4640 = vld [vmem:[%s13 + $0x108] sm:$0xff]
        %v4641 = vld [vmem:[%s13 + $0x110] sm:$0xff]
        %v4642 = vld [vmem:[%s13 + $0x118] sm:$0xff]
        %v4643 = vld [vmem:[%s13 + $0x120] sm:$0xff]
        %v4644 = vld [vmem:[%s13 + $0x128] sm:$0xff]
        %v4645 = vld [vmem:[%s13 + $0x130] sm:$0xff]
        %v4646 = vld [vmem:[%s13 + $0x138] sm:$0xff]
        %v4647 = vld [vmem:[%s13 + $0x140] sm:$0xff]
        %v4648 = vld [vmem:[%s13 + $0x148] sm:$0xff]
        %v4649 = vld [vmem:[%s13 + $0x150] sm:$0xff]
        %v4650 = vld [vmem:[%s13 + $0x158] sm:$0xff]
        %v4651 = vld [vmem:[%s13 + $0x160] sm:$0xff]
        %v4652 = vld [vmem:[%s13 + $0x168] sm:$0xff]
        %v4653 = vld [vmem:[%s13 + $0x170] sm:$0xff]
        %v4654 = vld [vmem:[%s13 + $0x178] sm:$0xff]
        %v4655 = vld [vmem:[%s13 + $0x180] sm:$0xff]
        %v4656 = vld [vmem:[%s13 + $0x188] sm:$0xff]
        %v4657 = vld [vmem:[%s13 + $0x190] sm:$0xff]
        %v4658 = vld [vmem:[%s13 + $0x198] sm:$0xff]
        %v4659 = vld [vmem:[%s13 + $0x1a0] sm:$0xff]
        %v4660 = vld [vmem:[%s13 + $0x1a8] sm:$0xff]
        %v4661 = vld [vmem:[%s13 + $0x1b0] sm:$0xff]
        %v4662 = vld [vmem:[%s13 + $0x1b8] sm:$0xff]
        %v4663 = vld [vmem:[%s13 + $0x1c0] sm:$0xff]
        %v4664 = vld [vmem:[%s13 + $0x1c8] sm:$0xff]
        %v4665 = vld [vmem:[%s13 + $0x1d0] sm:$0xff]
        %v4666 = vld [vmem:[%s13 + $0x1d8] sm:$0xff]
        %v4667 = vld [vmem:[%s13 + $0x1e0] sm:$0xff]
        %v4668 = vld [vmem:[%s13 + $0x1e8] sm:$0xff]
        %v4669 = vld [vmem:[%s13 + $0x1f0] sm:$0xff]
        %v4670 = vld [vmem:[%s13 + $0x1f8] sm:$0xff]
        %v4671 = vld [vmem:[%s13 + $0x200] sm:$0xff]
        %v4672 = vld [vmem:[%s13 + $0x208] sm:$0xff]
        %v4673 = vld [vmem:[%s13 + $0x210] sm:$0xff]
        %v4674 = vld [vmem:[%s13 + $0x218] sm:$0xff]
        %v4675 = vld [vmem:[%s13 + $0x220] sm:$0xff]
        %v4676 = vld [vmem:[%s13 + $0x228] sm:$0xff]
        %v4677 = vld [vmem:[%s13 + $0x230] sm:$0xff]
        %v4678 = vld [vmem:[%s13 + $0x238] sm:$0xff]
        %v4680 = vsel %vm520, %v4451, 0
        %v4683 = vsel %vm520, %v4456, 0
        %v4686 = vsel %vm520, %v4461, 0
        %v4689 = vsel %vm520, %v4466, 0
        %v4692 = vsel %vm520, %v4471, 0
        %v4695 = vsel %vm520, %v4476, 0
        %v4698 = vsel %vm520, %v4481, 0
        %v4701 = vsel %vm520, %v4486, 0
        %v4704 = vsel %vm520, %v4491, 0
        %v4707 = vsel %vm520, %v4496, 0
        %v4710 = vsel %vm520, %v4501, 0
        %v4713 = vsel %vm520, %v4506, 0
        %v4716 = vsel %vm520, %v4511, 0
        %v4719 = vsel %vm520, %v4516, 0
        %v4722 = vsel %vm520, %v4521, 0
        %v4725 = vsel %vm520, %v4526, 0
        %v4728 = vsel %vm520, %v4531, 0
        %v4731 = vsel %vm520, %v4536, 0
        %v4734 = vsel %vm520, %v4541, 0
        %v4737 = vsel %vm520, %v4546, 0
        %v4740 = vsel %vm520, %v4551, 0
        %v4743 = vsel %vm520, %v4556, 0
        %v4746 = vsel %vm520, %v4561, 0
        %v4749 = vsel %vm520, %v4566, 0
        %v4752 = vsel %vm520, %v4571, 0
        %v4755 = vsel %vm520, %v4576, 0
        %v4758 = vsel %vm520, %v4581, 0
        %v4761 = vsel %vm520, %v4586, 0
        %v4764 = vsel %vm520, %v4591, 0
        %v4767 = vsel %vm520, %v4596, 0
        %v4770 = vsel %vm520, %v4601, 0
        %v4773 = vsel %vm520, %v4606, 0
        %4775 = vmatpush.msra.mxu0 %v4622
        %4776 = vmatpush.msra.mxu0 %v4621
        %4777 = vmatpush.msra.mxu0 %v4620
        %4778 = vmatpush.msra.mxu0 %v4619
        %4779 = vmatpush.msra.mxu0 %v4618
        %4780 = vmatpush.msra.mxu0 %v4617
        %4781 = vmatpush.msra.mxu0 %v4616
        %4782 = vmatpush.msra.mxu0 %v4615
        %4783 = vmatpush.msra.mxu0 %v4614
        %4784 = vmatpush.msra.mxu0 %v4613
        %4785 = vmatpush.msra.mxu0 %v4612
        %4786 = vmatpush.msra.mxu0 %v4611
        %4787 = vmatpush.msra.mxu0 %v4610
        %4788 = vmatpush.msra.mxu0 %v4609
        %4789 = vmatpush.msra.mxu0 %v4608
        %4790 = vmatpush.msra.mxu0 %v4607
        %4791 = vmatmul.f32.gmra.mxu0 %v4447
        %v4792 = vpop.f32.mrf.mxu0
        %v4793 = vadd.f32 0.0, %v4792
        %4794 = vmatmul.f32.gmra.mxu0 %v4452
        %v4795 = vpop.f32.mrf.mxu0
        %v4796 = vadd.f32 0.0, %v4795
        %4797 = vmatmul.f32.gmra.mxu0 %v4457
        %v4798 = vpop.f32.mrf.mxu0
        %v4799 = vadd.f32 0.0, %v4798
        %4800 = vmatmul.f32.gmra.mxu0 %v4462
        %v4801 = vpop.f32.mrf.mxu0
        %v4802 = vadd.f32 0.0, %v4801
        %4803 = vmatmul.f32.gmra.mxu0 %v4467
        %v4804 = vpop.f32.mrf.mxu0
        %v4805 = vadd.f32 0.0, %v4804
        %4806 = vmatmul.f32.gmra.mxu0 %v4472
        %v4807 = vpop.f32.mrf.mxu0
        %v4808 = vadd.f32 0.0, %v4807
        %4809 = vmatmul.f32.gmra.mxu0 %v4477
        %v4810 = vpop.f32.mrf.mxu0
        %v4811 = vadd.f32 0.0, %v4810
        %4812 = vmatmul.f32.gmra.mxu0 %v4482
        %v4813 = vpop.f32.mrf.mxu0
        %v4814 = vadd.f32 0.0, %v4813
        %4815 = vmatmul.f32.gmra.mxu0 %v4487
        %v4816 = vpop.f32.mrf.mxu0
        %v4817 = vadd.f32 0.0, %v4816
        %4818 = vmatmul.f32.gmra.mxu0 %v4492
        %v4819 = vpop.f32.mrf.mxu0
        %v4820 = vadd.f32 0.0, %v4819
        %4821 = vmatmul.f32.gmra.mxu0 %v4497
        %v4822 = vpop.f32.mrf.mxu0
        %v4823 = vadd.f32 0.0, %v4822
        %4824 = vmatmul.f32.gmra.mxu0 %v4502
        %v4825 = vpop.f32.mrf.mxu0
        %v4826 = vadd.f32 0.0, %v4825
        %4827 = vmatmul.f32.gmra.mxu0 %v4507
        %v4828 = vpop.f32.mrf.mxu0
        %v4829 = vadd.f32 0.0, %v4828
        %4830 = vmatmul.f32.gmra.mxu0 %v4512
        %v4831 = vpop.f32.mrf.mxu0
        %v4832 = vadd.f32 0.0, %v4831
        %4833 = vmatmul.f32.gmra.mxu0 %v4517
        %v4834 = vpop.f32.mrf.mxu0
        %v4835 = vadd.f32 0.0, %v4834
        %4836 = vmatmul.f32.gmra.mxu0 %v4522
        %v4837 = vpop.f32.mrf.mxu0
        %v4838 = vadd.f32 0.0, %v4837
        %4839 = vmatmul.f32.gmra.mxu0 %v4527
        %v4840 = vpop.f32.mrf.mxu0
        %v4841 = vadd.f32 0.0, %v4840
        %4842 = vmatmul.f32.gmra.mxu0 %v4532
        %v4843 = vpop.f32.mrf.mxu0
        %v4844 = vadd.f32 0.0, %v4843
        %4845 = vmatmul.f32.gmra.mxu0 %v4537
        %v4846 = vpop.f32.mrf.mxu0
        %v4847 = vadd.f32 0.0, %v4846
        %4848 = vmatmul.f32.gmra.mxu0 %v4542
        %v4849 = vpop.f32.mrf.mxu0
        %v4850 = vadd.f32 0.0, %v4849
        %4851 = vmatmul.f32.gmra.mxu0 %v4547
        %v4852 = vpop.f32.mrf.mxu0
        %v4853 = vadd.f32 0.0, %v4852
        %4854 = vmatmul.f32.gmra.mxu0 %v4552
        %v4855 = vpop.f32.mrf.mxu0
        %v4856 = vadd.f32 0.0, %v4855
        %4857 = vmatmul.f32.gmra.mxu0 %v4557
        %v4858 = vpop.f32.mrf.mxu0
        %v4859 = vadd.f32 0.0, %v4858
        %4860 = vmatmul.f32.gmra.mxu0 %v4562
        %v4861 = vpop.f32.mrf.mxu0
        %v4862 = vadd.f32 0.0, %v4861
        %4863 = vmatmul.f32.gmra.mxu0 %v4567
        %v4864 = vpop.f32.mrf.mxu0
        %v4865 = vadd.f32 0.0, %v4864
        %4866 = vmatmul.f32.gmra.mxu0 %v4572
        %v4867 = vpop.f32.mrf.mxu0
        %v4868 = vadd.f32 0.0, %v4867
        %4869 = vmatmul.f32.gmra.mxu0 %v4577
        %v4870 = vpop.f32.mrf.mxu0
        %v4871 = vadd.f32 0.0, %v4870
        %4872 = vmatmul.f32.gmra.mxu0 %v4582
        %v4873 = vpop.f32.mrf.mxu0
        %v4874 = vadd.f32 0.0, %v4873
        %4875 = vmatmul.f32.gmra.mxu0 %v4587
        %v4876 = vpop.f32.mrf.mxu0
        %v4877 = vadd.f32 0.0, %v4876
        %4878 = vmatmul.f32.gmra.mxu0 %v4592
        %v4879 = vpop.f32.mrf.mxu0
        %v4880 = vadd.f32 0.0, %v4879
        %4881 = vmatmul.f32.gmra.mxu0 %v4597
        %v4882 = vpop.f32.mrf.mxu0
        %v4883 = vadd.f32 0.0, %v4882
        %4884 = vmatmul.f32.gmra.mxu0 %v4602
        %v4885 = vpop.f32.mrf.mxu0
        %v4886 = vadd.f32 0.0, %v4885
        %4887 = vdwg.mxu0
        %4888 = vmatpush.msra.mxu0 %v4638
        %4889 = vmatpush.msra.mxu0 %v4637
        %4890 = vmatpush.msra.mxu0 %v4636
        %4891 = vmatpush.msra.mxu0 %v4635
        %4892 = vmatpush.msra.mxu0 %v4634
        %4893 = vmatpush.msra.mxu0 %v4633
        %4894 = vmatpush.msra.mxu0 %v4632
        %4895 = vmatpush.msra.mxu0 %v4631
        %4896 = vmatpush.msra.mxu0 %v4630
        %4897 = vmatpush.msra.mxu0 %v4629
        %4898 = vmatpush.msra.mxu0 %v4628
        %4899 = vmatpush.msra.mxu0 %v4627
        %4900 = vmatpush.msra.mxu0 %v4626
        %4901 = vmatpush.msra.mxu0 %v4625
        %4902 = vmatpush.msra.mxu0 %v4624
        %4903 = vmatpush.msra.mxu0 %v4623
        %4904 = vmatmul.f32.gmra.mxu0 %v4448
        %v4905 = vpop.f32.mrf.mxu0
        %v4906 = vadd.f32 %v4793, %v4905
        %4907 = vmatmul.f32.gmra.mxu0 %v4453
        %v4908 = vpop.f32.mrf.mxu0
        %v4909 = vadd.f32 %v4796, %v4908
        %4910 = vmatmul.f32.gmra.mxu0 %v4458
        %v4911 = vpop.f32.mrf.mxu0
        %v4912 = vadd.f32 %v4799, %v4911
        %4913 = vmatmul.f32.gmra.mxu0 %v4463
        %v4914 = vpop.f32.mrf.mxu0
        %v4915 = vadd.f32 %v4802, %v4914
        %4916 = vmatmul.f32.gmra.mxu0 %v4468
        %v4917 = vpop.f32.mrf.mxu0
        %v4918 = vadd.f32 %v4805, %v4917
        %4919 = vmatmul.f32.gmra.mxu0 %v4473
        %v4920 = vpop.f32.mrf.mxu0
        %v4921 = vadd.f32 %v4808, %v4920
        %4922 = vmatmul.f32.gmra.mxu0 %v4478
        %v4923 = vpop.f32.mrf.mxu0
        %v4924 = vadd.f32 %v4811, %v4923
        %4925 = vmatmul.f32.gmra.mxu0 %v4483
        %v4926 = vpop.f32.mrf.mxu0
        %v4927 = vadd.f32 %v4814, %v4926
        %4928 = vmatmul.f32.gmra.mxu0 %v4488
        %v4929 = vpop.f32.mrf.mxu0
        %v4930 = vadd.f32 %v4817, %v4929
        %4931 = vmatmul.f32.gmra.mxu0 %v4493
        %v4932 = vpop.f32.mrf.mxu0
        %v4933 = vadd.f32 %v4820, %v4932
        %4934 = vmatmul.f32.gmra.mxu0 %v4498
        %v4935 = vpop.f32.mrf.mxu0
        %v4936 = vadd.f32 %v4823, %v4935
        %4937 = vmatmul.f32.gmra.mxu0 %v4503
        %v4938 = vpop.f32.mrf.mxu0
        %v4939 = vadd.f32 %v4826, %v4938
        %4940 = vmatmul.f32.gmra.mxu0 %v4508
        %v4941 = vpop.f32.mrf.mxu0
        %v4942 = vadd.f32 %v4829, %v4941
        %4943 = vmatmul.f32.gmra.mxu0 %v4513
        %v4944 = vpop.f32.mrf.mxu0
        %v4945 = vadd.f32 %v4832, %v4944
        %4946 = vmatmul.f32.gmra.mxu0 %v4518
        %v4947 = vpop.f32.mrf.mxu0
        %v4948 = vadd.f32 %v4835, %v4947
        %4949 = vmatmul.f32.gmra.mxu0 %v4523
        %v4950 = vpop.f32.mrf.mxu0
        %v4951 = vadd.f32 %v4838, %v4950
        %4952 = vmatmul.f32.gmra.mxu0 %v4528
        %v4953 = vpop.f32.mrf.mxu0
        %v4954 = vadd.f32 %v4841, %v4953
        %4955 = vmatmul.f32.gmra.mxu0 %v4533
        %v4956 = vpop.f32.mrf.mxu0
        %v4957 = vadd.f32 %v4844, %v4956
        %4958 = vmatmul.f32.gmra.mxu0 %v4538
        %v4959 = vpop.f32.mrf.mxu0
        %v4960 = vadd.f32 %v4847, %v4959
        %4961 = vmatmul.f32.gmra.mxu0 %v4543
        %v4962 = vpop.f32.mrf.mxu0
        %v4963 = vadd.f32 %v4850, %v4962
        %4964 = vmatmul.f32.gmra.mxu0 %v4548
        %v4965 = vpop.f32.mrf.mxu0
        %v4966 = vadd.f32 %v4853, %v4965
        %4967 = vmatmul.f32.gmra.mxu0 %v4553
        %v4968 = vpop.f32.mrf.mxu0
        %v4969 = vadd.f32 %v4856, %v4968
        %4970 = vmatmul.f32.gmra.mxu0 %v4558
        %v4971 = vpop.f32.mrf.mxu0
        %v4972 = vadd.f32 %v4859, %v4971
        %4973 = vmatmul.f32.gmra.mxu0 %v4563
        %v4974 = vpop.f32.mrf.mxu0
        %v4975 = vadd.f32 %v4862, %v4974
        %4976 = vmatmul.f32.gmra.mxu0 %v4568
        %v4977 = vpop.f32.mrf.mxu0
        %v4978 = vadd.f32 %v4865, %v4977
        %4979 = vmatmul.f32.gmra.mxu0 %v4573
        %v4980 = vpop.f32.mrf.mxu0
        %v4981 = vadd.f32 %v4868, %v4980
        %4982 = vmatmul.f32.gmra.mxu0 %v4578
        %v4983 = vpop.f32.mrf.mxu0
        %v4984 = vadd.f32 %v4871, %v4983
        %4985 = vmatmul.f32.gmra.mxu0 %v4583
        %v4986 = vpop.f32.mrf.mxu0
        %v4987 = vadd.f32 %v4874, %v4986
        %4988 = vmatmul.f32.gmra.mxu0 %v4588
        %v4989 = vpop.f32.mrf.mxu0
        %v4990 = vadd.f32 %v4877, %v4989
        %4991 = vmatmul.f32.gmra.mxu0 %v4593
        %v4992 = vpop.f32.mrf.mxu0
        %v4993 = vadd.f32 %v4880, %v4992
        %4994 = vmatmul.f32.gmra.mxu0 %v4598
        %v4995 = vpop.f32.mrf.mxu0
        %v4996 = vadd.f32 %v4883, %v4995
        %4997 = vmatmul.f32.gmra.mxu0 %v4603
        %v4998 = vpop.f32.mrf.mxu0
        %v4999 = vadd.f32 %v4886, %v4998
        %5000 = vdwg.mxu0
        %5001 = vmatpush.msra.mxu0 %v4654
        %5002 = vmatpush.msra.mxu0 %v4653
        %5003 = vmatpush.msra.mxu0 %v4652
        %5004 = vmatpush.msra.mxu0 %v4651
        %5005 = vmatpush.msra.mxu0 %v4650
        %5006 = vmatpush.msra.mxu0 %v4649
        %5007 = vmatpush.msra.mxu0 %v4648
        %5008 = vmatpush.msra.mxu0 %v4647
        %5009 = vmatpush.msra.mxu0 %v4646
        %5010 = vmatpush.msra.mxu0 %v4645
        %5011 = vmatpush.msra.mxu0 %v4644
        %5012 = vmatpush.msra.mxu0 %v4643
        %5013 = vmatpush.msra.mxu0 %v4642
        %5014 = vmatpush.msra.mxu0 %v4641
        %5015 = vmatpush.msra.mxu0 %v4640
        %5016 = vmatpush.msra.mxu0 %v4639
        %5017 = vmatmul.f32.gmra.mxu0 %v4449
        %v5018 = vpop.f32.mrf.mxu0
        %v5019 = vadd.f32 %v4906, %v5018
        %5020 = vmatmul.f32.gmra.mxu0 %v4454
        %v5021 = vpop.f32.mrf.mxu0
        %v5022 = vadd.f32 %v4909, %v5021
        %5023 = vmatmul.f32.gmra.mxu0 %v4459
        %v5024 = vpop.f32.mrf.mxu0
        %v5025 = vadd.f32 %v4912, %v5024
        %5026 = vmatmul.f32.gmra.mxu0 %v4464
        %v5027 = vpop.f32.mrf.mxu0
        %v5028 = vadd.f32 %v4915, %v5027
        %5029 = vmatmul.f32.gmra.mxu0 %v4469
        %v5030 = vpop.f32.mrf.mxu0
        %v5031 = vadd.f32 %v4918, %v5030
        %5032 = vmatmul.f32.gmra.mxu0 %v4474
        %v5033 = vpop.f32.mrf.mxu0
        %v5034 = vadd.f32 %v4921, %v5033
        %5035 = vmatmul.f32.gmra.mxu0 %v4479
        %v5036 = vpop.f32.mrf.mxu0
        %v5037 = vadd.f32 %v4924, %v5036
        %5038 = vmatmul.f32.gmra.mxu0 %v4484
        %v5039 = vpop.f32.mrf.mxu0
        %v5040 = vadd.f32 %v4927, %v5039
        %5041 = vmatmul.f32.gmra.mxu0 %v4489
        %v5042 = vpop.f32.mrf.mxu0
        %v5043 = vadd.f32 %v4930, %v5042
        %5044 = vmatmul.f32.gmra.mxu0 %v4494
        %v5045 = vpop.f32.mrf.mxu0
        %v5046 = vadd.f32 %v4933, %v5045
        %5047 = vmatmul.f32.gmra.mxu0 %v4499
        %v5048 = vpop.f32.mrf.mxu0
        %v5049 = vadd.f32 %v4936, %v5048
        %5050 = vmatmul.f32.gmra.mxu0 %v4504
        %v5051 = vpop.f32.mrf.mxu0
        %v5052 = vadd.f32 %v4939, %v5051
        %5053 = vmatmul.f32.gmra.mxu0 %v4509
        %v5054 = vpop.f32.mrf.mxu0
        %v5055 = vadd.f32 %v4942, %v5054
        %5056 = vmatmul.f32.gmra.mxu0 %v4514
        %v5057 = vpop.f32.mrf.mxu0
        %v5058 = vadd.f32 %v4945, %v5057
        %5059 = vmatmul.f32.gmra.mxu0 %v4519
        %v5060 = vpop.f32.mrf.mxu0
        %v5061 = vadd.f32 %v4948, %v5060
        %5062 = vmatmul.f32.gmra.mxu0 %v4524
        %v5063 = vpop.f32.mrf.mxu0
        %v5064 = vadd.f32 %v4951, %v5063
        %5065 = vmatmul.f32.gmra.mxu0 %v4529
        %v5066 = vpop.f32.mrf.mxu0
        %v5067 = vadd.f32 %v4954, %v5066
        %5068 = vmatmul.f32.gmra.mxu0 %v4534
        %v5069 = vpop.f32.mrf.mxu0
        %v5070 = vadd.f32 %v4957, %v5069
        %5071 = vmatmul.f32.gmra.mxu0 %v4539
        %v5072 = vpop.f32.mrf.mxu0
        %v5073 = vadd.f32 %v4960, %v5072
        %5074 = vmatmul.f32.gmra.mxu0 %v4544
        %v5075 = vpop.f32.mrf.mxu0
        %v5076 = vadd.f32 %v4963, %v5075
        %5077 = vmatmul.f32.gmra.mxu0 %v4549
        %v5078 = vpop.f32.mrf.mxu0
        %v5079 = vadd.f32 %v4966, %v5078
        %5080 = vmatmul.f32.gmra.mxu0 %v4554
        %v5081 = vpop.f32.mrf.mxu0
        %v5082 = vadd.f32 %v4969, %v5081
        %5083 = vmatmul.f32.gmra.mxu0 %v4559
        %v5084 = vpop.f32.mrf.mxu0
        %v5085 = vadd.f32 %v4972, %v5084
        %5086 = vmatmul.f32.gmra.mxu0 %v4564
        %v5087 = vpop.f32.mrf.mxu0
        %v5088 = vadd.f32 %v4975, %v5087
        %5089 = vmatmul.f32.gmra.mxu0 %v4569
        %v5090 = vpop.f32.mrf.mxu0
        %v5091 = vadd.f32 %v4978, %v5090
        %5092 = vmatmul.f32.gmra.mxu0 %v4574
        %v5093 = vpop.f32.mrf.mxu0
        %v5094 = vadd.f32 %v4981, %v5093
        %5095 = vmatmul.f32.gmra.mxu0 %v4579
        %v5096 = vpop.f32.mrf.mxu0
        %v5097 = vadd.f32 %v4984, %v5096
        %5098 = vmatmul.f32.gmra.mxu0 %v4584
        %v5099 = vpop.f32.mrf.mxu0
        %v5100 = vadd.f32 %v4987, %v5099
        %5101 = vmatmul.f32.gmra.mxu0 %v4589
        %v5102 = vpop.f32.mrf.mxu0
        %v5103 = vadd.f32 %v4990, %v5102
        %5104 = vmatmul.f32.gmra.mxu0 %v4594
        %v5105 = vpop.f32.mrf.mxu0
        %v5106 = vadd.f32 %v4993, %v5105
        %5107 = vmatmul.f32.gmra.mxu0 %v4599
        %v5108 = vpop.f32.mrf.mxu0
        %v5109 = vadd.f32 %v4996, %v5108
        %5110 = vmatmul.f32.gmra.mxu0 %v4604
        %v5111 = vpop.f32.mrf.mxu0
        %v5112 = vadd.f32 %v4999, %v5111
        %5113 = vdwg.mxu0
        %5114 = vmatpush.msra.mxu0 %v4670
        %5115 = vmatpush.msra.mxu0 %v4669
        %5116 = vmatpush.msra.mxu0 %v4668
        %5117 = vmatpush.msra.mxu0 %v4667
        %5118 = vmatpush.msra.mxu0 %v4666
        %5119 = vmatpush.msra.mxu0 %v4665
        %5120 = vmatpush.msra.mxu0 %v4664
        %5121 = vmatpush.msra.mxu0 %v4663
        %5122 = vmatpush.msra.mxu0 %v4662
        %5123 = vmatpush.msra.mxu0 %v4661
        %5124 = vmatpush.msra.mxu0 %v4660
        %5125 = vmatpush.msra.mxu0 %v4659
        %5126 = vmatpush.msra.mxu0 %v4658
        %5127 = vmatpush.msra.mxu0 %v4657
        %5128 = vmatpush.msra.mxu0 %v4656
        %5129 = vmatpush.msra.mxu0 %v4655
        %5130 = vmatmul.f32.gmra.mxu0 %v4450
        %v5131 = vpop.f32.mrf.mxu0
        %v5132 = vadd.f32 %v5019, %v5131
        %5133 = vmatmul.f32.gmra.mxu0 %v4455
        %v5134 = vpop.f32.mrf.mxu0
        %v5135 = vadd.f32 %v5022, %v5134
        %5136 = vmatmul.f32.gmra.mxu0 %v4460
        %v5137 = vpop.f32.mrf.mxu0
        %v5138 = vadd.f32 %v5025, %v5137
        %5139 = vmatmul.f32.gmra.mxu0 %v4465
        %v5140 = vpop.f32.mrf.mxu0
        %v5141 = vadd.f32 %v5028, %v5140
        %5142 = vmatmul.f32.gmra.mxu0 %v4470
        %v5143 = vpop.f32.mrf.mxu0
        %v5144 = vadd.f32 %v5031, %v5143
        %5145 = vmatmul.f32.gmra.mxu0 %v4475
        %v5146 = vpop.f32.mrf.mxu0
        %v5147 = vadd.f32 %v5034, %v5146
        %5148 = vmatmul.f32.gmra.mxu0 %v4480
        %v5149 = vpop.f32.mrf.mxu0
        %v5150 = vadd.f32 %v5037, %v5149
        %5151 = vmatmul.f32.gmra.mxu0 %v4485
        %v5152 = vpop.f32.mrf.mxu0
        %v5153 = vadd.f32 %v5040, %v5152
        %5154 = vmatmul.f32.gmra.mxu0 %v4490
        %v5155 = vpop.f32.mrf.mxu0
        %v5156 = vadd.f32 %v5043, %v5155
        %5157 = vmatmul.f32.gmra.mxu0 %v4495
        %v5158 = vpop.f32.mrf.mxu0
        %v5159 = vadd.f32 %v5046, %v5158
        %5160 = vmatmul.f32.gmra.mxu0 %v4500
        %v5161 = vpop.f32.mrf.mxu0
        %v5162 = vadd.f32 %v5049, %v5161
        %5163 = vmatmul.f32.gmra.mxu0 %v4505
        %v5164 = vpop.f32.mrf.mxu0
        %v5165 = vadd.f32 %v5052, %v5164
        %5166 = vmatmul.f32.gmra.mxu0 %v4510
        %v5167 = vpop.f32.mrf.mxu0
        %v5168 = vadd.f32 %v5055, %v5167
        %5169 = vmatmul.f32.gmra.mxu0 %v4515
        %v5170 = vpop.f32.mrf.mxu0
        %v5171 = vadd.f32 %v5058, %v5170
        %5172 = vmatmul.f32.gmra.mxu0 %v4520
        %v5173 = vpop.f32.mrf.mxu0
        %v5174 = vadd.f32 %v5061, %v5173
        %5175 = vmatmul.f32.gmra.mxu0 %v4525
        %v5176 = vpop.f32.mrf.mxu0
        %v5177 = vadd.f32 %v5064, %v5176
        %5178 = vmatmul.f32.gmra.mxu0 %v4530
        %v5179 = vpop.f32.mrf.mxu0
        %v5180 = vadd.f32 %v5067, %v5179
        %5181 = vmatmul.f32.gmra.mxu0 %v4535
        %v5182 = vpop.f32.mrf.mxu0
        %v5183 = vadd.f32 %v5070, %v5182
        %5184 = vmatmul.f32.gmra.mxu0 %v4540
        %v5185 = vpop.f32.mrf.mxu0
        %v5186 = vadd.f32 %v5073, %v5185
        %5187 = vmatmul.f32.gmra.mxu0 %v4545
        %v5188 = vpop.f32.mrf.mxu0
        %v5189 = vadd.f32 %v5076, %v5188
        %5190 = vmatmul.f32.gmra.mxu0 %v4550
        %v5191 = vpop.f32.mrf.mxu0
        %v5192 = vadd.f32 %v5079, %v5191
        %5193 = vmatmul.f32.gmra.mxu0 %v4555
        %v5194 = vpop.f32.mrf.mxu0
        %v5195 = vadd.f32 %v5082, %v5194
        %5196 = vmatmul.f32.gmra.mxu0 %v4560
        %v5197 = vpop.f32.mrf.mxu0
        %v5198 = vadd.f32 %v5085, %v5197
        %5199 = vmatmul.f32.gmra.mxu0 %v4565
        %v5200 = vpop.f32.mrf.mxu0
        %v5201 = vadd.f32 %v5088, %v5200
        %5202 = vmatmul.f32.gmra.mxu0 %v4570
        %v5203 = vpop.f32.mrf.mxu0
        %v5204 = vadd.f32 %v5091, %v5203
        %5205 = vmatmul.f32.gmra.mxu0 %v4575
        %v5206 = vpop.f32.mrf.mxu0
        %v5207 = vadd.f32 %v5094, %v5206
        %5208 = vmatmul.f32.gmra.mxu0 %v4580
        %v5209 = vpop.f32.mrf.mxu0
        %v5210 = vadd.f32 %v5097, %v5209
        %5211 = vmatmul.f32.gmra.mxu0 %v4585
        %v5212 = vpop.f32.mrf.mxu0
        %v5213 = vadd.f32 %v5100, %v5212
        %5214 = vmatmul.f32.gmra.mxu0 %v4590
        %v5215 = vpop.f32.mrf.mxu0
        %v5216 = vadd.f32 %v5103, %v5215
        %5217 = vmatmul.f32.gmra.mxu0 %v4595
        %v5218 = vpop.f32.mrf.mxu0
        %v5219 = vadd.f32 %v5106, %v5218
        %5220 = vmatmul.f32.gmra.mxu0 %v4600
        %v5221 = vpop.f32.mrf.mxu0
        %v5222 = vadd.f32 %v5109, %v5221
        %5223 = vmatmul.f32.gmra.mxu0 %v4605
        %v5224 = vpop.f32.mrf.mxu0
        %v5225 = vadd.f32 %v5112, %v5224
        %5226 = vdwg.mxu0
        %5227 = vmatpush.msra.mxu0 0.0
        %5228 = vmatpush.msra.mxu0 0.0
        %5229 = vmatpush.msra.mxu0 0.0
        %5230 = vmatpush.msra.mxu0 0.0
        %5231 = vmatpush.msra.mxu0 0.0
        %5232 = vmatpush.msra.mxu0 0.0
        %5233 = vmatpush.msra.mxu0 0.0
        %5234 = vmatpush.msra.mxu0 0.0
        %5235 = vmatpush.msra.mxu0 %v4678
        %5236 = vmatpush.msra.mxu0 %v4677
        %5237 = vmatpush.msra.mxu0 %v4676
        %5238 = vmatpush.msra.mxu0 %v4675
        %5239 = vmatpush.msra.mxu0 %v4674
        %5240 = vmatpush.msra.mxu0 %v4673
        %5241 = vmatpush.msra.mxu0 %v4672
        %5242 = vmatpush.msra.mxu0 %v4671
        %5243 = vmatmul.f32.gmra.mxu0 %v4680
        %v5244 = vpop.f32.mrf.mxu0
        %v5245 = vadd.f32 %v5132, %v5244
        %5246 = vmatmul.f32.gmra.mxu0 %v4683
        %v5247 = vpop.f32.mrf.mxu0
        %v5248 = vadd.f32 %v5135, %v5247
        %5249 = vmatmul.f32.gmra.mxu0 %v4686
        %v5250 = vpop.f32.mrf.mxu0
        %v5251 = vadd.f32 %v5138, %v5250
        %5252 = vmatmul.f32.gmra.mxu0 %v4689
        %v5253 = vpop.f32.mrf.mxu0
        %v5254 = vadd.f32 %v5141, %v5253
        %5255 = vmatmul.f32.gmra.mxu0 %v4692
        %v5256 = vpop.f32.mrf.mxu0
        %v5257 = vadd.f32 %v5144, %v5256
        %5258 = vmatmul.f32.gmra.mxu0 %v4695
        %v5259 = vpop.f32.mrf.mxu0
        %v5260 = vadd.f32 %v5147, %v5259
        %5261 = vmatmul.f32.gmra.mxu0 %v4698
        %v5262 = vpop.f32.mrf.mxu0
        %v5263 = vadd.f32 %v5150, %v5262
        %5264 = vmatmul.f32.gmra.mxu0 %v4701
        %v5265 = vpop.f32.mrf.mxu0
        %v5266 = vadd.f32 %v5153, %v5265
        %5267 = vmatmul.f32.gmra.mxu0 %v4704
        %v5268 = vpop.f32.mrf.mxu0
        %v5269 = vadd.f32 %v5156, %v5268
        %5270 = vmatmul.f32.gmra.mxu0 %v4707
        %v5271 = vpop.f32.mrf.mxu0
        %v5272 = vadd.f32 %v5159, %v5271
        %5273 = vmatmul.f32.gmra.mxu0 %v4710
        %v5274 = vpop.f32.mrf.mxu0
        %v5275 = vadd.f32 %v5162, %v5274
        %5276 = vmatmul.f32.gmra.mxu0 %v4713
        %v5277 = vpop.f32.mrf.mxu0
        %v5278 = vadd.f32 %v5165, %v5277
        %5279 = vmatmul.f32.gmra.mxu0 %v4716
        %v5280 = vpop.f32.mrf.mxu0
        %v5281 = vadd.f32 %v5168, %v5280
        %5282 = vmatmul.f32.gmra.mxu0 %v4719
        %v5283 = vpop.f32.mrf.mxu0
        %v5284 = vadd.f32 %v5171, %v5283
        %5285 = vmatmul.f32.gmra.mxu0 %v4722
        %v5286 = vpop.f32.mrf.mxu0
        %v5287 = vadd.f32 %v5174, %v5286
        %5288 = vmatmul.f32.gmra.mxu0 %v4725
        %v5289 = vpop.f32.mrf.mxu0
        %v5290 = vadd.f32 %v5177, %v5289
        %5291 = vmatmul.f32.gmra.mxu0 %v4728
        %v5292 = vpop.f32.mrf.mxu0
        %v5293 = vadd.f32 %v5180, %v5292
        %5294 = vmatmul.f32.gmra.mxu0 %v4731
        %v5295 = vpop.f32.mrf.mxu0
        %v5296 = vadd.f32 %v5183, %v5295
        %5297 = vmatmul.f32.gmra.mxu0 %v4734
        %v5298 = vpop.f32.mrf.mxu0
        %v5299 = vadd.f32 %v5186, %v5298
        %5300 = vmatmul.f32.gmra.mxu0 %v4737
        %v5301 = vpop.f32.mrf.mxu0
        %v5302 = vadd.f32 %v5189, %v5301
        %5303 = vmatmul.f32.gmra.mxu0 %v4740
        %v5304 = vpop.f32.mrf.mxu0
        %v5305 = vadd.f32 %v5192, %v5304
        %5306 = vmatmul.f32.gmra.mxu0 %v4743
        %v5307 = vpop.f32.mrf.mxu0
        %v5308 = vadd.f32 %v5195, %v5307
        %5309 = vmatmul.f32.gmra.mxu0 %v4746
        %v5310 = vpop.f32.mrf.mxu0
        %v5311 = vadd.f32 %v5198, %v5310
        %5312 = vmatmul.f32.gmra.mxu0 %v4749
        %v5313 = vpop.f32.mrf.mxu0
        %v5314 = vadd.f32 %v5201, %v5313
        %5315 = vmatmul.f32.gmra.mxu0 %v4752
        %v5316 = vpop.f32.mrf.mxu0
        %v5317 = vadd.f32 %v5204, %v5316
        %5318 = vmatmul.f32.gmra.mxu0 %v4755
        %v5319 = vpop.f32.mrf.mxu0
        %v5320 = vadd.f32 %v5207, %v5319
        %5321 = vmatmul.f32.gmra.mxu0 %v4758
        %v5322 = vpop.f32.mrf.mxu0
        %v5323 = vadd.f32 %v5210, %v5322
        %5324 = vmatmul.f32.gmra.mxu0 %v4761
        %v5325 = vpop.f32.mrf.mxu0
        %v5326 = vadd.f32 %v5213, %v5325
        %5327 = vmatmul.f32.gmra.mxu0 %v4764
        %v5328 = vpop.f32.mrf.mxu0
        %v5329 = vadd.f32 %v5216, %v5328
        %5330 = vmatmul.f32.gmra.mxu0 %v4767
        %v5331 = vpop.f32.mrf.mxu0
        %v5332 = vadd.f32 %v5219, %v5331
        %5333 = vmatmul.f32.gmra.mxu0 %v4770
        %v5334 = vpop.f32.mrf.mxu0
        %v5335 = vadd.f32 %v5222, %v5334
        %5336 = vmatmul.f32.gmra.mxu0 %v4773
        %v5337 = vpop.f32.mrf.mxu0
        %v5338 = vadd.f32 %v5225, %v5337
        %5339 = vdwg.mxu0
        %vm5340 = vcmask 261120
        %v5341 = vsel %vm5340, %v5245, 0.0
        %v5342 = vsel %vm5340, %v5248, 0.0
        %v5343 = vadd.f32 %v5341, %v5342
        %v5344 = vsel %vm5340, %v5251, 0.0
        %v5345 = vadd.f32 %v5343, %v5344
        %v5346 = vsel %vm5340, %v5254, 0.0
        %v5347 = vadd.f32 %v5345, %v5346
        %v5348 = vsel %vm5340, %v5257, 0.0
        %v5349 = vadd.f32 %v5347, %v5348
        %v5350 = vsel %vm5340, %v5260, 0.0
        %v5351 = vadd.f32 %v5349, %v5350
        %v5352 = vsel %vm5340, %v5263, 0.0
        %v5353 = vadd.f32 %v5351, %v5352
        %v5354 = vsel %vm5340, %v5266, 0.0
        %v5355 = vadd.f32 %v5353, %v5354
        %v5356 = vsel %vm5340, %v5269, 0.0
        %v5357 = vadd.f32 %v5355, %v5356
        %v5358 = vsel %vm5340, %v5272, 0.0
        %v5359 = vadd.f32 %v5357, %v5358
        %v5360 = vsel %vm5340, %v5275, 0.0
        %v5361 = vadd.f32 %v5359, %v5360
        %v5362 = vsel %vm5340, %v5278, 0.0
        %v5363 = vadd.f32 %v5361, %v5362
        %v5364 = vsel %vm5340, %v5281, 0.0
        %v5365 = vadd.f32 %v5363, %v5364
        %v5366 = vsel %vm5340, %v5284, 0.0
        %v5367 = vadd.f32 %v5365, %v5366
        %v5368 = vsel %vm5340, %v5287, 0.0
        %v5369 = vadd.f32 %v5367, %v5368
        %v5370 = vsel %vm5340, %v5290, 0.0
        %v5371 = vadd.f32 %v5369, %v5370
        %v5372 = vsel %vm5340, %v5293, 0.0
        %v5373 = vadd.f32 %v5371, %v5372
        %v5374 = vsel %vm5340, %v5296, 0.0
        %v5375 = vadd.f32 %v5373, %v5374
        %v5376 = vsel %vm5340, %v5299, 0.0
        %v5377 = vadd.f32 %v5375, %v5376
        %v5378 = vsel %vm5340, %v5302, 0.0
        %v5379 = vadd.f32 %v5377, %v5378
        %v5380 = vsel %vm5340, %v5305, 0.0
        %v5381 = vadd.f32 %v5379, %v5380
        %v5382 = vsel %vm5340, %v5308, 0.0
        %v5383 = vadd.f32 %v5381, %v5382
        %v5384 = vsel %vm5340, %v5311, 0.0
        %v5385 = vadd.f32 %v5383, %v5384
        %v5386 = vsel %vm5340, %v5314, 0.0
        %v5387 = vadd.f32 %v5385, %v5386
        %v5388 = vsel %vm5340, %v5317, 0.0
        %v5389 = vadd.f32 %v5387, %v5388
        %v5390 = vsel %vm5340, %v5320, 0.0
        %v5391 = vadd.f32 %v5389, %v5390
        %v5392 = vsel %vm5340, %v5323, 0.0
        %v5393 = vadd.f32 %v5391, %v5392
        %v5394 = vsel %vm5340, %v5326, 0.0
        %v5395 = vadd.f32 %v5393, %v5394
        %v5396 = vsel %vm5340, %v5329, 0.0
        %v5397 = vadd.f32 %v5395, %v5396
        %v5398 = vsel %vm5340, %v5332, 0.0
        %v5399 = vadd.f32 %v5397, %v5398
        %v5400 = vsel %vm5340, %v5335, 0.0
        %v5401 = vadd.f32 %v5399, %v5400
        %v5402 = vsel %vm5340, %v5338, 0.0
        %v5403 = vadd.f32 %v5401, %v5402
        %v5404 = vrot.slane %v5403, 4
        %v5405 = vadd.f32 %v5403, %v5404
        %v5406 = vrot.slane %v5405, 2
        %v5407 = vadd.f32 %v5405, %v5406
        %v5408 = vrot.slane %v5407, 1
        %v5409 = vadd.f32 %v5407, %v5408
        %v5410 = vmul.f32 %v5245, %v5245
        %v5411 = vmul.f32 %v5248, %v5248
        %v5412 = vmul.f32 %v5251, %v5251
        %v5413 = vmul.f32 %v5254, %v5254
        %v5414 = vmul.f32 %v5257, %v5257
        %v5415 = vmul.f32 %v5260, %v5260
        %v5416 = vmul.f32 %v5263, %v5263
        %v5417 = vmul.f32 %v5266, %v5266
        %v5418 = vmul.f32 %v5269, %v5269
        %v5419 = vmul.f32 %v5272, %v5272
        %v5420 = vmul.f32 %v5275, %v5275
        %v5421 = vmul.f32 %v5278, %v5278
        %v5422 = vmul.f32 %v5281, %v5281
        %v5423 = vmul.f32 %v5284, %v5284
        %v5424 = vmul.f32 %v5287, %v5287
        %v5425 = vmul.f32 %v5290, %v5290
        %v5426 = vmul.f32 %v5293, %v5293
        %v5427 = vmul.f32 %v5296, %v5296
        %v5428 = vmul.f32 %v5299, %v5299
        %v5429 = vmul.f32 %v5302, %v5302
        %v5430 = vmul.f32 %v5305, %v5305
        %v5431 = vmul.f32 %v5308, %v5308
        %v5432 = vmul.f32 %v5311, %v5311
        %v5433 = vmul.f32 %v5314, %v5314
        %v5434 = vmul.f32 %v5317, %v5317
        %v5435 = vmul.f32 %v5320, %v5320
        %v5436 = vmul.f32 %v5323, %v5323
        %v5437 = vmul.f32 %v5326, %v5326
        %v5438 = vmul.f32 %v5329, %v5329
        %v5439 = vmul.f32 %v5332, %v5332
        %v5440 = vmul.f32 %v5335, %v5335
        %v5441 = vmul.f32 %v5338, %v5338
        %v5442 = vsel %vm5340, %v5410, 0.0
        %v5443 = vsel %vm5340, %v5411, 0.0
        %v5444 = vadd.f32 %v5442, %v5443
        %v5445 = vsel %vm5340, %v5412, 0.0
        %v5446 = vadd.f32 %v5444, %v5445
        %v5447 = vsel %vm5340, %v5413, 0.0
        %v5448 = vadd.f32 %v5446, %v5447
        %v5449 = vsel %vm5340, %v5414, 0.0
        %v5450 = vadd.f32 %v5448, %v5449
        %v5451 = vsel %vm5340, %v5415, 0.0
        %v5452 = vadd.f32 %v5450, %v5451
        %v5453 = vsel %vm5340, %v5416, 0.0
        %v5454 = vadd.f32 %v5452, %v5453
        %v5455 = vsel %vm5340, %v5417, 0.0
        %v5456 = vadd.f32 %v5454, %v5455
        %v5457 = vsel %vm5340, %v5418, 0.0
        %v5458 = vadd.f32 %v5456, %v5457
        %v5459 = vsel %vm5340, %v5419, 0.0
        %v5460 = vadd.f32 %v5458, %v5459
        %v5461 = vsel %vm5340, %v5420, 0.0
        %v5462 = vadd.f32 %v5460, %v5461
        %v5463 = vsel %vm5340, %v5421, 0.0
        %v5464 = vadd.f32 %v5462, %v5463
        %v5465 = vsel %vm5340, %v5422, 0.0
        %v5466 = vadd.f32 %v5464, %v5465
        %v5467 = vsel %vm5340, %v5423, 0.0
        %v5468 = vadd.f32 %v5466, %v5467
        %v5469 = vsel %vm5340, %v5424, 0.0
        %v5470 = vadd.f32 %v5468, %v5469
        %v5471 = vsel %vm5340, %v5425, 0.0
        %v5472 = vadd.f32 %v5470, %v5471
        %v5473 = vsel %vm5340, %v5426, 0.0
        %v5474 = vadd.f32 %v5472, %v5473
        %v5475 = vsel %vm5340, %v5427, 0.0
        %v5476 = vadd.f32 %v5474, %v5475
        %v5477 = vsel %vm5340, %v5428, 0.0
        %v5478 = vadd.f32 %v5476, %v5477
        %v5479 = vsel %vm5340, %v5429, 0.0
        %v5480 = vadd.f32 %v5478, %v5479
        %v5481 = vsel %vm5340, %v5430, 0.0
        %v5482 = vadd.f32 %v5480, %v5481
        %v5483 = vsel %vm5340, %v5431, 0.0
        %v5484 = vadd.f32 %v5482, %v5483
        %v5485 = vsel %vm5340, %v5432, 0.0
        %v5486 = vadd.f32 %v5484, %v5485
        %v5487 = vsel %vm5340, %v5433, 0.0
        %v5488 = vadd.f32 %v5486, %v5487
        %v5489 = vsel %vm5340, %v5434, 0.0
        %v5490 = vadd.f32 %v5488, %v5489
        %v5491 = vsel %vm5340, %v5435, 0.0
        %v5492 = vadd.f32 %v5490, %v5491
        %v5493 = vsel %vm5340, %v5436, 0.0
        %v5494 = vadd.f32 %v5492, %v5493
        %v5495 = vsel %vm5340, %v5437, 0.0
        %v5496 = vadd.f32 %v5494, %v5495
        %v5497 = vsel %vm5340, %v5438, 0.0
        %v5498 = vadd.f32 %v5496, %v5497
        %v5499 = vsel %vm5340, %v5439, 0.0
        %v5500 = vadd.f32 %v5498, %v5499
        %v5501 = vsel %vm5340, %v5440, 0.0
        %v5502 = vadd.f32 %v5500, %v5501
        %v5503 = vsel %vm5340, %v5441, 0.0
        %v5504 = vadd.f32 %v5502, %v5503
        %v5505 = vrot.slane %v5504, 4
        %v5506 = vadd.f32 %v5504, %v5505
        %v5507 = vrot.slane %v5506, 2
        %v5508 = vadd.f32 %v5506, %v5507
        %v5509 = vrot.slane %v5508, 1
        %v5510 = vadd.f32 %v5508, %v5509
        %v5511 = vsel %vm767, %v5409, %v5510
        %v5512 = vld [vmem:[%s11] sm:$0xff]
        %v5513 = vld [vmem:[%s11 + $0x8] sm:$0xff]
        %v5514 = vld [vmem:[%s11 + $0x10] sm:$0xff]
        %v5515 = vld [vmem:[%s11 + $0x18] sm:$0xff]
        %v5517 = vsel %vm5340, %v5511, 0
        %5519 = vmatpush.msra.mxu0 0.0
        %5520 = vmatpush.msra.mxu0 0.0
        %5521 = vmatpush.msra.mxu0 0.0
        %5522 = vmatpush.msra.mxu0 0.0
        %5523 = vmatpush.msra.mxu0 0.0
        %5524 = vmatpush.msra.mxu0 0.0
        %5525 = vmatpush.msra.mxu0 0.0
        %5526 = vmatpush.msra.mxu0 0.0
        %5527 = vmatpush.msra.mxu0 0.0
        %5528 = vmatpush.msra.mxu0 0.0
        %5529 = vmatpush.msra.mxu0 0.0
        %5530 = vmatpush.msra.mxu0 0.0
        %5531 = vmatpush.msra.mxu0 %v5515
        %5532 = vmatpush.msra.mxu0 %v5514
        %5533 = vmatpush.msra.mxu0 %v5513
        %5534 = vmatpush.msra.mxu0 %v5512
        %5535 = vmatmul.f32.gmra.mxu0 %v5517
        %v5536 = vpop.f32.mrf.mxu0
        %v5537 = vadd.f32 0.0, %v5536
        %5538 = vdwg.mxu0
        %v5539 = vmul.f32 %v5537, %v5537
        %v5541 = vrot.slane %v5539, 7
        %v5543 = vsub.f32 %v5537, %v5541
        %v5544 = vadd.f32 %v5543, 1e-05
        %v5545 = vrsqrt.pop %v5544
        %v5546 = vmul.f32 %v5545, %v5544
        %v5547 = vmul.f32 %v5546, %v5545
        %v5548 = vmul.f32 0.5, %v5547
        %v5549 = vsub.f32 1.5, %v5548
        %v5550 = vmul.f32 %v5545, %v5549
        %vm5551 = vweird.f32 %v5544
        %vm5552 = vweird.f32 %v5545
        %vm5553 = vmor %vm5551, %vm5552
        %v5554 = vsel %vm5553, %v5545, %v5550
        %v5555 = vperm.slane %v5537, 0
        %v5556 = vsub.f32 %v5245, %v5555
        %v5557 = vsub.f32 %v5248, %v5555
        %v5558 = vsub.f32 %v5251, %v5555
        %v5559 = vsub.f32 %v5254, %v5555
        %v5560 = vsub.f32 %v5257, %v5555
        %v5561 = vsub.f32 %v5260, %v5555
        %v5562 = vsub.f32 %v5263, %v5555
        %v5563 = vsub.f32 %v5266, %v5555
        %v5564 = vsub.f32 %v5269, %v5555
        %v5565 = vsub.f32 %v5272, %v5555
        %v5566 = vsub.f32 %v5275, %v5555
        %v5567 = vsub.f32 %v5278, %v5555
        %v5568 = vsub.f32 %v5281, %v5555
        %v5569 = vsub.f32 %v5284, %v5555
        %v5570 = vsub.f32 %v5287, %v5555
        %v5571 = vsub.f32 %v5290, %v5555
        %v5572 = vsub.f32 %v5293, %v5555
        %v5573 = vsub.f32 %v5296, %v5555
        %v5574 = vsub.f32 %v5299, %v5555
        %v5575 = vsub.f32 %v5302, %v5555
        %v5576 = vsub.f32 %v5305, %v5555
        %v5577 = vsub.f32 %v5308, %v5555
        %v5578 = vsub.f32 %v5311, %v5555
        %v5579 = vsub.f32 %v5314, %v5555
        %v5580 = vsub.f32 %v5317, %v5555
        %v5581 = vsub.f32 %v5320, %v5555
        %v5582 = vsub.f32 %v5323, %v5555
        %v5583 = vsub.f32 %v5326, %v5555
        %v5584 = vsub.f32 %v5329, %v5555
        %v5585 = vsub.f32 %v5332, %v5555
        %v5586 = vsub.f32 %v5335, %v5555
        %v5587 = vsub.f32 %v5338, %v5555
        %v5588 = vld [vmem:[%s5] sm:$0x1]
        %v5590 = vperm.slane %v5588, 0
        %v5592 = vmul.f32 %v5554, %v5590
        %v5593 = vperm.slane %v5592, 1
        %v5594 = vmul.f32 %v5556, %v5593
        %v5595 = vmul.f32 %v5557, %v5593
        %v5596 = vmul.f32 %v5558, %v5593
        %v5597 = vmul.f32 %v5559, %v5593
        %v5598 = vmul.f32 %v5560, %v5593
        %v5599 = vmul.f32 %v5561, %v5593
        %v5600 = vmul.f32 %v5562, %v5593
        %v5601 = vmul.f32 %v5563, %v5593
        %v5602 = vmul.f32 %v5564, %v5593
        %v5603 = vmul.f32 %v5565, %v5593
        %v5604 = vmul.f32 %v5566, %v5593
        %v5605 = vmul.f32 %v5567, %v5593
        %v5606 = vmul.f32 %v5568, %v5593
        %v5607 = vmul.f32 %v5569, %v5593
        %v5608 = vmul.f32 %v5570, %v5593
        %v5609 = vmul.f32 %v5571, %v5593
        %v5610 = vmul.f32 %v5572, %v5593
        %v5611 = vmul.f32 %v5573, %v5593
        %v5612 = vmul.f32 %v5574, %v5593
        %v5613 = vmul.f32 %v5575, %v5593
        %v5614 = vmul.f32 %v5576, %v5593
        %v5615 = vmul.f32 %v5577, %v5593
        %v5616 = vmul.f32 %v5578, %v5593
        %v5617 = vmul.f32 %v5579, %v5593
        %v5618 = vmul.f32 %v5580, %v5593
        %v5619 = vmul.f32 %v5581, %v5593
        %v5620 = vmul.f32 %v5582, %v5593
        %v5621 = vmul.f32 %v5583, %v5593
        %v5622 = vmul.f32 %v5584, %v5593
        %v5623 = vmul.f32 %v5585, %v5593
        %v5624 = vmul.f32 %v5586, %v5593
        %v5625 = vmul.f32 %v5587, %v5593
        %v5626 = vld [vmem:[%s6] sm:$0x1]
        %v5628 = vperm.slane %v5626, 0
        %v5630 = vadd.f32 %v5594, %v5628
        %v5631 = vadd.f32 %v5595, %v5628
        %v5632 = vadd.f32 %v5596, %v5628
        %v5633 = vadd.f32 %v5597, %v5628
        %v5634 = vadd.f32 %v5598, %v5628
        %v5635 = vadd.f32 %v5599, %v5628
        %v5636 = vadd.f32 %v5600, %v5628
        %v5637 = vadd.f32 %v5601, %v5628
        %v5638 = vadd.f32 %v5602, %v5628
        %v5639 = vadd.f32 %v5603, %v5628
        %v5640 = vadd.f32 %v5604, %v5628
        %v5641 = vadd.f32 %v5605, %v5628
        %v5642 = vadd.f32 %v5606, %v5628
        %v5643 = vadd.f32 %v5607, %v5628
        %v5644 = vadd.f32 %v5608, %v5628
        %v5645 = vadd.f32 %v5609, %v5628
        %v5646 = vadd.f32 %v5610, %v5628
        %v5647 = vadd.f32 %v5611, %v5628
        %v5648 = vadd.f32 %v5612, %v5628
        %v5649 = vadd.f32 %v5613, %v5628
        %v5650 = vadd.f32 %v5614, %v5628
        %v5651 = vadd.f32 %v5615, %v5628
        %v5652 = vadd.f32 %v5616, %v5628
        %v5653 = vadd.f32 %v5617, %v5628
        %v5654 = vadd.f32 %v5618, %v5628
        %v5655 = vadd.f32 %v5619, %v5628
        %v5656 = vadd.f32 %v5620, %v5628
        %v5657 = vadd.f32 %v5621, %v5628
        %v5658 = vadd.f32 %v5622, %v5628
        %v5659 = vadd.f32 %v5623, %v5628
        %v5660 = vadd.f32 %v5624, %v5628
        %v5661 = vadd.f32 %v5625, %v5628
        %v5662 = vmax.f32 %v5630, 0.0
        %v5663 = vmax.f32 %v5631, 0.0
        %v5664 = vmax.f32 %v5632, 0.0
        %v5665 = vmax.f32 %v5633, 0.0
        %v5666 = vmax.f32 %v5634, 0.0
        %v5667 = vmax.f32 %v5635, 0.0
        %v5668 = vmax.f32 %v5636, 0.0
        %v5669 = vmax.f32 %v5637, 0.0
        %v5670 = vmax.f32 %v5638, 0.0
        %v5671 = vmax.f32 %v5639, 0.0
        %v5672 = vmax.f32 %v5640, 0.0
        %v5673 = vmax.f32 %v5641, 0.0
        %v5674 = vmax.f32 %v5642, 0.0
        %v5675 = vmax.f32 %v5643, 0.0
        %v5676 = vmax.f32 %v5644, 0.0
        %v5677 = vmax.f32 %v5645, 0.0
        %v5678 = vmax.f32 %v5646, 0.0
        %v5679 = vmax.f32 %v5647, 0.0
        %v5680 = vmax.f32 %v5648, 0.0
        %v5681 = vmax.f32 %v5649, 0.0
        %v5682 = vmax.f32 %v5650, 0.0
        %v5683 = vmax.f32 %v5651, 0.0
        %v5684 = vmax.f32 %v5652, 0.0
        %v5685 = vmax.f32 %v5653, 0.0
        %v5686 = vmax.f32 %v5654, 0.0
        %v5687 = vmax.f32 %v5655, 0.0
        %v5688 = vmax.f32 %v5656, 0.0
        %v5689 = vmax.f32 %v5657, 0.0
        %v5690 = vmax.f32 %v5658, 0.0
        %v5691 = vmax.f32 %v5659, 0.0
        %v5692 = vmax.f32 %v5660, 0.0
        %v5693 = vmax.f32 %v5661, 0.0
        %5694 = vst.msk [vmem:[%s955 + $0x1] sm:$0xff] %vm5340, %v5662
        %5695 = vst.msk [vmem:[%s955 + $0x9] sm:$0xff] %vm5340, %v5663
        %5696 = vst.msk [vmem:[%s955 + $0x19] sm:$0xff] %vm5340, %v5664
        %5697 = vst.msk [vmem:[%s955 + $0x21] sm:$0xff] %vm5340, %v5665
        %5698 = vst.msk [vmem:[%s955 + $0x31] sm:$0xff] %vm5340, %v5666
        %5699 = vst.msk [vmem:[%s955 + $0x39] sm:$0xff] %vm5340, %v5667
        %5700 = vst.msk [vmem:[%s955 + $0x49] sm:$0xff] %vm5340, %v5668
        %5701 = vst.msk [vmem:[%s955 + $0x51] sm:$0xff] %vm5340, %v5669
        %5702 = vst.msk [vmem:[%s955 + $0x61] sm:$0xff] %vm5340, %v5670
        %5703 = vst.msk [vmem:[%s955 + $0x69] sm:$0xff] %vm5340, %v5671
        %5704 = vst.msk [vmem:[%s955 + $0x79] sm:$0xff] %vm5340, %v5672
        %5705 = vst.msk [vmem:[%s955 + $0x81] sm:$0xff] %vm5340, %v5673
        %5706 = vst.msk [vmem:[%s955 + $0x91] sm:$0xff] %vm5340, %v5674
        %5707 = vst.msk [vmem:[%s955 + $0x99] sm:$0xff] %vm5340, %v5675
        %5708 = vst.msk [vmem:[%s955 + $0xa9] sm:$0xff] %vm5340, %v5676
        %5709 = vst.msk [vmem:[%s955 + $0xb1] sm:$0xff] %vm5340, %v5677
        %5710 = vst.msk [vmem:[%s955 + $0xc1] sm:$0xff] %vm5340, %v5678
        %5711 = vst.msk [vmem:[%s955 + $0xc9] sm:$0xff] %vm5340, %v5679
        %5712 = vst.msk [vmem:[%s955 + $0xd9] sm:$0xff] %vm5340, %v5680
        %5713 = vst.msk [vmem:[%s955 + $0xe1] sm:$0xff] %vm5340, %v5681
        %5714 = vst.msk [vmem:[%s955 + $0xf1] sm:$0xff] %vm5340, %v5682
        %5715 = vst.msk [vmem:[%s955 + $0xf9] sm:$0xff] %vm5340, %v5683
        %5716 = vst.msk [vmem:[%s955 + $0x109] sm:$0xff] %vm5340, %v5684
        %5717 = vst.msk [vmem:[%s955 + $0x111] sm:$0xff] %vm5340, %v5685
        %5718 = vst.msk [vmem:[%s955 + $0x121] sm:$0xff] %vm5340, %v5686
        %5719 = vst.msk [vmem:[%s955 + $0x129] sm:$0xff] %vm5340, %v5687
        %5720 = vst.msk [vmem:[%s955 + $0x139] sm:$0xff] %vm5340, %v5688
        %5721 = vst.msk [vmem:[%s955 + $0x141] sm:$0xff] %vm5340, %v5689
        %5722 = vst.msk [vmem:[%s955 + $0x151] sm:$0xff] %vm5340, %v5690
        %5723 = vst.msk [vmem:[%s955 + $0x159] sm:$0xff] %vm5340, %v5691
        %5724 = vst.msk [vmem:[%s955 + $0x169] sm:$0xff] %vm5340, %v5692
        %5725 = vst.msk [vmem:[%s955 + $0x171] sm:$0xff] %vm5340, %v5693
        %v5726 = vld [vmem:[#allocation2] sm:$0xff]
        %v5727 = vld [vmem:[#allocation2 + $0x8] sm:$0xff]
        %v5728 = vld [vmem:[#allocation2 + $0x18] sm:$0xff]
        %v5729 = vld [vmem:[#allocation2 + $0x20] sm:$0xff]
        %v5730 = vld [vmem:[#allocation2 + $0x30] sm:$0xff]
        %v5731 = vld [vmem:[#allocation2 + $0x38] sm:$0xff]
        %v5732 = vld [vmem:[#allocation2 + $0x48] sm:$0xff]
        %v5733 = vld [vmem:[#allocation2 + $0x50] sm:$0xff]
        %v5734 = vld [vmem:[#allocation2 + $0x60] sm:$0xff]
        %v5735 = vld [vmem:[#allocation2 + $0x68] sm:$0xff]
        %v5736 = vld [vmem:[#allocation2 + $0x78] sm:$0xff]
        %v5737 = vld [vmem:[#allocation2 + $0x80] sm:$0xff]
        %v5738 = vld [vmem:[#allocation2 + $0x90] sm:$0xff]
        %v5739 = vld [vmem:[#allocation2 + $0x98] sm:$0xff]
        %v5740 = vld [vmem:[#allocation2 + $0xa8] sm:$0xff]
        %v5741 = vld [vmem:[#allocation2 + $0xb0] sm:$0xff]
        %v5742 = vld [vmem:[#allocation2 + $0xc0] sm:$0xff]
        %v5743 = vld [vmem:[#allocation2 + $0xc8] sm:$0xff]
        %v5744 = vld [vmem:[#allocation2 + $0xd8] sm:$0xff]
        %v5745 = vld [vmem:[#allocation2 + $0xe0] sm:$0xff]
        %v5746 = vld [vmem:[#allocation2 + $0xf0] sm:$0xff]
        %v5747 = vld [vmem:[#allocation2 + $0xf8] sm:$0xff]
        %v5748 = vld [vmem:[#allocation2 + $0x108] sm:$0xff]
        %v5749 = vld [vmem:[#allocation2 + $0x110] sm:$0xff]
        %v5750 = vld [vmem:[#allocation2 + $0x120] sm:$0xff]
        %v5751 = vld [vmem:[#allocation2 + $0x128] sm:$0xff]
        %v5752 = vld [vmem:[#allocation2 + $0x138] sm:$0xff]
        %v5753 = vld [vmem:[#allocation2 + $0x140] sm:$0xff]
        %v5754 = vld [vmem:[#allocation2 + $0x150] sm:$0xff]
        %v5755 = vld [vmem:[#allocation2 + $0x158] sm:$0xff]
        %v5756 = vld [vmem:[#allocation2 + $0x168] sm:$0xff]
        %v5757 = vld [vmem:[#allocation2 + $0x170] sm:$0xff]
        %v5758 = vld [vmem:[#allocation2 + $0x1] sm:$0xff]
        %v5759 = vld [vmem:[#allocation2 + $0x9] sm:$0xff]
        %v5760 = vld [vmem:[#allocation2 + $0x19] sm:$0xff]
        %v5761 = vld [vmem:[#allocation2 + $0x21] sm:$0xff]
        %v5762 = vld [vmem:[#allocation2 + $0x31] sm:$0xff]
        %v5763 = vld [vmem:[#allocation2 + $0x39] sm:$0xff]
        %v5764 = vld [vmem:[#allocation2 + $0x49] sm:$0xff]
        %v5765 = vld [vmem:[#allocation2 + $0x51] sm:$0xff]
        %v5766 = vld [vmem:[#allocation2 + $0x61] sm:$0xff]
        %v5767 = vld [vmem:[#allocation2 + $0x69] sm:$0xff]
        %v5768 = vld [vmem:[#allocation2 + $0x79] sm:$0xff]
        %v5769 = vld [vmem:[#allocation2 + $0x81] sm:$0xff]
        %v5770 = vld [vmem:[#allocation2 + $0x91] sm:$0xff]
        %v5771 = vld [vmem:[#allocation2 + $0x99] sm:$0xff]
        %v5772 = vld [vmem:[#allocation2 + $0xa9] sm:$0xff]
        %v5773 = vld [vmem:[#allocation2 + $0xb1] sm:$0xff]
        %v5774 = vld [vmem:[#allocation2 + $0xc1] sm:$0xff]
        %v5775 = vld [vmem:[#allocation2 + $0xc9] sm:$0xff]
        %v5776 = vld [vmem:[#allocation2 + $0xd9] sm:$0xff]
        %v5777 = vld [vmem:[#allocation2 + $0xe1] sm:$0xff]
        %v5778 = vld [vmem:[#allocation2 + $0xf1] sm:$0xff]
        %v5779 = vld [vmem:[#allocation2 + $0xf9] sm:$0xff]
        %v5780 = vld [vmem:[#allocation2 + $0x109] sm:$0xff]
        %v5781 = vld [vmem:[#allocation2 + $0x111] sm:$0xff]
        %v5782 = vld [vmem:[#allocation2 + $0x121] sm:$0xff]
        %v5783 = vld [vmem:[#allocation2 + $0x129] sm:$0xff]
        %v5784 = vld [vmem:[#allocation2 + $0x139] sm:$0xff]
        %v5785 = vld [vmem:[#allocation2 + $0x141] sm:$0xff]
        %v5786 = vld [vmem:[#allocation2 + $0x151] sm:$0xff]
        %v5787 = vld [vmem:[#allocation2 + $0x159] sm:$0xff]
        %v5788 = vld [vmem:[#allocation2 + $0x169] sm:$0xff]
        %v5789 = vld [vmem:[#allocation2 + $0x171] sm:$0xff]
        %v5790 = vld [vmem:[#allocation2 + $0x2] sm:$0xff]
        %v5791 = vld [vmem:[#allocation2 + $0xa] sm:$0xff]
        %v5792 = vld [vmem:[#allocation2 + $0x1a] sm:$0xff]
        %v5793 = vld [vmem:[#allocation2 + $0x22] sm:$0xff]
        %v5794 = vld [vmem:[#allocation2 + $0x32] sm:$0xff]
        %v5795 = vld [vmem:[#allocation2 + $0x3a] sm:$0xff]
        %v5796 = vld [vmem:[#allocation2 + $0x4a] sm:$0xff]
        %v5797 = vld [vmem:[#allocation2 + $0x52] sm:$0xff]
        %v5798 = vld [vmem:[#allocation2 + $0x62] sm:$0xff]
        %v5799 = vld [vmem:[#allocation2 + $0x6a] sm:$0xff]
        %v5800 = vld [vmem:[#allocation2 + $0x7a] sm:$0xff]
        %v5801 = vld [vmem:[#allocation2 + $0x82] sm:$0xff]
        %v5802 = vld [vmem:[#allocation2 + $0x92] sm:$0xff]
        %v5803 = vld [vmem:[#allocation2 + $0x9a] sm:$0xff]
        %v5804 = vld [vmem:[#allocation2 + $0xaa] sm:$0xff]
        %v5805 = vld [vmem:[#allocation2 + $0xb2] sm:$0xff]
        %v5806 = vld [vmem:[#allocation2 + $0xc2] sm:$0xff]
        %v5807 = vld [vmem:[#allocation2 + $0xca] sm:$0xff]
        %v5808 = vld [vmem:[#allocation2 + $0xda] sm:$0xff]
        %v5809 = vld [vmem:[#allocation2 + $0xe2] sm:$0xff]
        %v5810 = vld [vmem:[#allocation2 + $0xf2] sm:$0xff]
        %v5811 = vld [vmem:[#allocation2 + $0xfa] sm:$0xff]
        %v5812 = vld [vmem:[#allocation2 + $0x10a] sm:$0xff]
        %v5813 = vld [vmem:[#allocation2 + $0x112] sm:$0xff]
        %v5814 = vld [vmem:[#allocation2 + $0x122] sm:$0xff]
        %v5815 = vld [vmem:[#allocation2 + $0x12a] sm:$0xff]
        %v5816 = vld [vmem:[#allocation2 + $0x13a] sm:$0xff]
        %v5817 = vld [vmem:[#allocation2 + $0x142] sm:$0xff]
        %v5818 = vld [vmem:[#allocation2 + $0x152] sm:$0xff]
        %v5819 = vld [vmem:[#allocation2 + $0x15a] sm:$0xff]
        %v5820 = vld [vmem:[#allocation2 + $0x16a] sm:$0xff]
        %v5821 = vld [vmem:[#allocation2 + $0x172] sm:$0xff]
        %v5822 = vld [vmem:[%s955] sm:$0xff]
        %v5823 = vld [vmem:[%s955 + $0x8] sm:$0xff]
        %v5824 = vld [vmem:[%s955 + $0x18] sm:$0xff]
        %v5825 = vld [vmem:[%s955 + $0x20] sm:$0xff]
        %v5826 = vld [vmem:[%s955 + $0x30] sm:$0xff]
        %v5827 = vld [vmem:[%s955 + $0x38] sm:$0xff]
        %v5828 = vld [vmem:[%s955 + $0x48] sm:$0xff]
        %v5829 = vld [vmem:[%s955 + $0x50] sm:$0xff]
        %v5830 = vld [vmem:[%s955 + $0x60] sm:$0xff]
        %v5831 = vld [vmem:[%s955 + $0x68] sm:$0xff]
        %v5832 = vld [vmem:[%s955 + $0x78] sm:$0xff]
        %v5833 = vld [vmem:[%s955 + $0x80] sm:$0xff]
        %v5834 = vld [vmem:[%s955 + $0x90] sm:$0xff]
        %v5835 = vld [vmem:[%s955 + $0x98] sm:$0xff]
        %v5836 = vld [vmem:[%s955 + $0xa8] sm:$0xff]
        %v5837 = vld [vmem:[%s955 + $0xb0] sm:$0xff]
        %v5838 = vld [vmem:[%s955 + $0xc0] sm:$0xff]
        %v5839 = vld [vmem:[%s955 + $0xc8] sm:$0xff]
        %v5840 = vld [vmem:[%s955 + $0xd8] sm:$0xff]
        %v5841 = vld [vmem:[%s955 + $0xe0] sm:$0xff]
        %v5842 = vld [vmem:[%s955 + $0xf0] sm:$0xff]
        %v5843 = vld [vmem:[%s955 + $0xf8] sm:$0xff]
        %v5844 = vld [vmem:[%s955 + $0x108] sm:$0xff]
        %v5845 = vld [vmem:[%s955 + $0x110] sm:$0xff]
        %v5846 = vld [vmem:[%s955 + $0x120] sm:$0xff]
        %v5847 = vld [vmem:[%s955 + $0x128] sm:$0xff]
        %v5848 = vld [vmem:[%s955 + $0x138] sm:$0xff]
        %v5849 = vld [vmem:[%s955 + $0x140] sm:$0xff]
        %v5850 = vld [vmem:[%s955 + $0x150] sm:$0xff]
        %v5851 = vld [vmem:[%s955 + $0x158] sm:$0xff]
        %v5852 = vld [vmem:[%s955 + $0x168] sm:$0xff]
        %v5853 = vld [vmem:[%s955 + $0x170] sm:$0xff]
        %5886 = vrot.lane.b32.xlu0 %v5758, 32
        %v5887 = vpop.permute.xlu0 %5886
        %5888 = vrot.lane.b32.xlu0 %v5759, 32
        %v5889 = vpop.permute.xlu0 %5888
        %5890 = vrot.lane.b32.xlu0 %v5760, 32
        %v5891 = vpop.permute.xlu0 %5890
        %5892 = vrot.lane.b32.xlu0 %v5761, 32
        %v5893 = vpop.permute.xlu0 %5892
        %5894 = vrot.lane.b32.xlu0 %v5762, 32
        %v5895 = vpop.permute.xlu0 %5894
        %5896 = vrot.lane.b32.xlu0 %v5763, 32
        %v5897 = vpop.permute.xlu0 %5896
        %5898 = vrot.lane.b32.xlu0 %v5764, 32
        %v5899 = vpop.permute.xlu0 %5898
        %5900 = vrot.lane.b32.xlu0 %v5765, 32
        %v5901 = vpop.permute.xlu0 %5900
        %5902 = vrot.lane.b32.xlu0 %v5766, 32
        %v5903 = vpop.permute.xlu0 %5902
        %5904 = vrot.lane.b32.xlu0 %v5767, 32
        %v5905 = vpop.permute.xlu0 %5904
        %5906 = vrot.lane.b32.xlu0 %v5768, 32
        %v5907 = vpop.permute.xlu0 %5906
        %5908 = vrot.lane.b32.xlu0 %v5769, 32
        %v5909 = vpop.permute.xlu0 %5908
        %5910 = vrot.lane.b32.xlu0 %v5770, 32
        %v5911 = vpop.permute.xlu0 %5910
        %5912 = vrot.lane.b32.xlu0 %v5771, 32
        %v5913 = vpop.permute.xlu0 %5912
        %5914 = vrot.lane.b32.xlu0 %v5772, 32
        %v5915 = vpop.permute.xlu0 %5914
        %5916 = vrot.lane.b32.xlu0 %v5773, 32
        %v5917 = vpop.permute.xlu0 %5916
        %5918 = vrot.lane.b32.xlu0 %v5774, 32
        %v5919 = vpop.permute.xlu0 %5918
        %5920 = vrot.lane.b32.xlu0 %v5775, 32
        %v5921 = vpop.permute.xlu0 %5920
        %5922 = vrot.lane.b32.xlu0 %v5776, 32
        %v5923 = vpop.permute.xlu0 %5922
        %5924 = vrot.lane.b32.xlu0 %v5777, 32
        %v5925 = vpop.permute.xlu0 %5924
        %5926 = vrot.lane.b32.xlu0 %v5778, 32
        %v5927 = vpop.permute.xlu0 %5926
        %5928 = vrot.lane.b32.xlu0 %v5779, 32
        %v5929 = vpop.permute.xlu0 %5928
        %5930 = vrot.lane.b32.xlu0 %v5780, 32
        %v5931 = vpop.permute.xlu0 %5930
        %5932 = vrot.lane.b32.xlu0 %v5781, 32
        %v5933 = vpop.permute.xlu0 %5932
        %5934 = vrot.lane.b32.xlu0 %v5782, 32
        %v5935 = vpop.permute.xlu0 %5934
        %5936 = vrot.lane.b32.xlu0 %v5783, 32
        %v5937 = vpop.permute.xlu0 %5936
        %5938 = vrot.lane.b32.xlu0 %v5784, 32
        %v5939 = vpop.permute.xlu0 %5938
        %5940 = vrot.lane.b32.xlu0 %v5785, 32
        %v5941 = vpop.permute.xlu0 %5940
        %5942 = vrot.lane.b32.xlu0 %v5786, 32
        %v5943 = vpop.permute.xlu0 %5942
        %5944 = vrot.lane.b32.xlu0 %v5787, 32
        %v5945 = vpop.permute.xlu0 %5944
        %5946 = vrot.lane.b32.xlu0 %v5788, 32
        %v5947 = vpop.permute.xlu0 %5946
        %5948 = vrot.lane.b32.xlu0 %v5789, 32
        %v5949 = vpop.permute.xlu0 %5948
        %6014 = vrot.lane.b32.xlu0 %v5790, 64
        %v6015 = vpop.permute.xlu0 %6014
        %6016 = vrot.lane.b32.xlu0 %v5791, 64
        %v6017 = vpop.permute.xlu0 %6016
        %6018 = vrot.lane.b32.xlu0 %v5792, 64
        %v6019 = vpop.permute.xlu0 %6018
        %6020 = vrot.lane.b32.xlu0 %v5793, 64
        %v6021 = vpop.permute.xlu0 %6020
        %6022 = vrot.lane.b32.xlu0 %v5794, 64
        %v6023 = vpop.permute.xlu0 %6022
        %6024 = vrot.lane.b32.xlu0 %v5795, 64
        %v6025 = vpop.permute.xlu0 %6024
        %6026 = vrot.lane.b32.xlu0 %v5796, 64
        %v6027 = vpop.permute.xlu0 %6026
        %6028 = vrot.lane.b32.xlu0 %v5797, 64
        %v6029 = vpop.permute.xlu0 %6028
        %6030 = vrot.lane.b32.xlu0 %v5798, 64
        %v6031 = vpop.permute.xlu0 %6030
        %6032 = vrot.lane.b32.xlu0 %v5799, 64
        %v6033 = vpop.permute.xlu0 %6032
        %6034 = vrot.lane.b32.xlu0 %v5800, 64
        %v6035 = vpop.permute.xlu0 %6034
        %6036 = vrot.lane.b32.xlu0 %v5801, 64
        %v6037 = vpop.permute.xlu0 %6036
        %6038 = vrot.lane.b32.xlu0 %v5802, 64
        %v6039 = vpop.permute.xlu0 %6038
        %6040 = vrot.lane.b32.xlu0 %v5803, 64
        %v6041 = vpop.permute.xlu0 %6040
        %6042 = vrot.lane.b32.xlu0 %v5804, 64
        %v6043 = vpop.permute.xlu0 %6042
        %6044 = vrot.lane.b32.xlu0 %v5805, 64
        %v6045 = vpop.permute.xlu0 %6044
        %6046 = vrot.lane.b32.xlu0 %v5806, 64
        %v6047 = vpop.permute.xlu0 %6046
        %6048 = vrot.lane.b32.xlu0 %v5807, 64
        %v6049 = vpop.permute.xlu0 %6048
        %6050 = vrot.lane.b32.xlu0 %v5808, 64
        %v6051 = vpop.permute.xlu0 %6050
        %6052 = vrot.lane.b32.xlu0 %v5809, 64
        %v6053 = vpop.permute.xlu0 %6052
        %6054 = vrot.lane.b32.xlu0 %v5810, 64
        %v6055 = vpop.permute.xlu0 %6054
        %6056 = vrot.lane.b32.xlu0 %v5811, 64
        %v6057 = vpop.permute.xlu0 %6056
        %6058 = vrot.lane.b32.xlu0 %v5812, 64
        %v6059 = vpop.permute.xlu0 %6058
        %6060 = vrot.lane.b32.xlu0 %v5813, 64
        %v6061 = vpop.permute.xlu0 %6060
        %6062 = vrot.lane.b32.xlu0 %v5814, 64
        %v6063 = vpop.permute.xlu0 %6062
        %6064 = vrot.lane.b32.xlu0 %v5815, 64
        %v6065 = vpop.permute.xlu0 %6064
        %6066 = vrot.lane.b32.xlu0 %v5816, 64
        %v6067 = vpop.permute.xlu0 %6066
        %6068 = vrot.lane.b32.xlu0 %v5817, 64
        %v6069 = vpop.permute.xlu0 %6068
        %6070 = vrot.lane.b32.xlu0 %v5818, 64
        %v6071 = vpop.permute.xlu0 %6070
        %6072 = vrot.lane.b32.xlu0 %v5819, 64
        %v6073 = vpop.permute.xlu0 %6072
        %6074 = vrot.lane.b32.xlu0 %v5820, 64
        %v6075 = vpop.permute.xlu0 %6074
        %6076 = vrot.lane.b32.xlu0 %v5821, 64
        %v6077 = vpop.permute.xlu0 %6076
        %6142 = vrot.lane.b32.xlu0 %v5822, 96
        %v6143 = vpop.permute.xlu0 %6142
        %6144 = vrot.lane.b32.xlu0 %v5823, 96
        %v6145 = vpop.permute.xlu0 %6144
        %6146 = vrot.lane.b32.xlu0 %v5824, 96
        %v6147 = vpop.permute.xlu0 %6146
        %6148 = vrot.lane.b32.xlu0 %v5825, 96
        %v6149 = vpop.permute.xlu0 %6148
        %6150 = vrot.lane.b32.xlu0 %v5826, 96
        %v6151 = vpop.permute.xlu0 %6150
        %6152 = vrot.lane.b32.xlu0 %v5827, 96
        %v6153 = vpop.permute.xlu0 %6152
        %6154 = vrot.lane.b32.xlu0 %v5828, 96
        %v6155 = vpop.permute.xlu0 %6154
        %6156 = vrot.lane.b32.xlu0 %v5829, 96
        %v6157 = vpop.permute.xlu0 %6156
        %6158 = vrot.lane.b32.xlu0 %v5830, 96
        %v6159 = vpop.permute.xlu0 %6158
        %6160 = vrot.lane.b32.xlu0 %v5831, 96
        %v6161 = vpop.permute.xlu0 %6160
        %6162 = vrot.lane.b32.xlu0 %v5832, 96
        %v6163 = vpop.permute.xlu0 %6162
        %6164 = vrot.lane.b32.xlu0 %v5833, 96
        %v6165 = vpop.permute.xlu0 %6164
        %6166 = vrot.lane.b32.xlu0 %v5834, 96
        %v6167 = vpop.permute.xlu0 %6166
        %6168 = vrot.lane.b32.xlu0 %v5835, 96
        %v6169 = vpop.permute.xlu0 %6168
        %6170 = vrot.lane.b32.xlu0 %v5836, 96
        %v6171 = vpop.permute.xlu0 %6170
        %6172 = vrot.lane.b32.xlu0 %v5837, 96
        %v6173 = vpop.permute.xlu0 %6172
        %6174 = vrot.lane.b32.xlu0 %v5838, 96
        %v6175 = vpop.permute.xlu0 %6174
        %6176 = vrot.lane.b32.xlu0 %v5839, 96
        %v6177 = vpop.permute.xlu0 %6176
        %6178 = vrot.lane.b32.xlu0 %v5840, 96
        %v6179 = vpop.permute.xlu0 %6178
        %6180 = vrot.lane.b32.xlu0 %v5841, 96
        %v6181 = vpop.permute.xlu0 %6180
        %6182 = vrot.lane.b32.xlu0 %v5842, 96
        %v6183 = vpop.permute.xlu0 %6182
        %6184 = vrot.lane.b32.xlu0 %v5843, 96
        %v6185 = vpop.permute.xlu0 %6184
        %6186 = vrot.lane.b32.xlu0 %v5844, 96
        %v6187 = vpop.permute.xlu0 %6186
        %6188 = vrot.lane.b32.xlu0 %v5845, 96
        %v6189 = vpop.permute.xlu0 %6188
        %6190 = vrot.lane.b32.xlu0 %v5846, 96
        %v6191 = vpop.permute.xlu0 %6190
        %6192 = vrot.lane.b32.xlu0 %v5847, 96
        %v6193 = vpop.permute.xlu0 %6192
        %6194 = vrot.lane.b32.xlu0 %v5848, 96
        %v6195 = vpop.permute.xlu0 %6194
        %6196 = vrot.lane.b32.xlu0 %v5849, 96
        %v6197 = vpop.permute.xlu0 %6196
        %6198 = vrot.lane.b32.xlu0 %v5850, 96
        %v6199 = vpop.permute.xlu0 %6198
        %6200 = vrot.lane.b32.xlu0 %v5851, 96
        %v6201 = vpop.permute.xlu0 %6200
        %6202 = vrot.lane.b32.xlu0 %v5852, 96
        %v6203 = vpop.permute.xlu0 %6202
        %6204 = vrot.lane.b32.xlu0 %v5853, 96
        %v6205 = vpop.permute.xlu0 %6204
        %v6238 = vsel %vm5340, %v5726, %v5887
        %v6239 = vsel %vm5340, %v5727, %v5889
        %v6240 = vsel %vm5340, %v5728, %v5891
        %v6241 = vsel %vm5340, %v5729, %v5893
        %v6242 = vsel %vm5340, %v5730, %v5895
        %v6243 = vsel %vm5340, %v5731, %v5897
        %v6244 = vsel %vm5340, %v5732, %v5899
        %v6245 = vsel %vm5340, %v5733, %v5901
        %v6246 = vsel %vm5340, %v5734, %v5903
        %v6247 = vsel %vm5340, %v5735, %v5905
        %v6248 = vsel %vm5340, %v5736, %v5907
        %v6249 = vsel %vm5340, %v5737, %v5909
        %v6250 = vsel %vm5340, %v5738, %v5911
        %v6251 = vsel %vm5340, %v5739, %v5913
        %v6252 = vsel %vm5340, %v5740, %v5915
        %v6253 = vsel %vm5340, %v5741, %v5917
        %v6254 = vsel %vm5340, %v5742, %v5919
        %v6255 = vsel %vm5340, %v5743, %v5921
        %v6256 = vsel %vm5340, %v5744, %v5923
        %v6257 = vsel %vm5340, %v5745, %v5925
        %v6258 = vsel %vm5340, %v5746, %v5927
        %v6259 = vsel %vm5340, %v5747, %v5929
        %v6260 = vsel %vm5340, %v5748, %v5931
        %v6261 = vsel %vm5340, %v5749, %v5933
        %v6262 = vsel %vm5340, %v5750, %v5935
        %v6263 = vsel %vm5340, %v5751, %v5937
        %v6264 = vsel %vm5340, %v5752, %v5939
        %v6265 = vsel %vm5340, %v5753, %v5941
        %v6266 = vsel %vm5340, %v5754, %v5943
        %v6267 = vsel %vm5340, %v5755, %v5945
        %v6268 = vsel %vm5340, %v5756, %v5947
        %v6269 = vsel %vm5340, %v5757, %v5949
        %v6270 = vsel %vm520, %v6238, %v6015
        %v6271 = vsel %vm520, %v6239, %v6017
        %v6272 = vsel %vm520, %v6240, %v6019
        %v6273 = vsel %vm520, %v6241, %v6021
        %v6274 = vsel %vm520, %v6242, %v6023
        %v6275 = vsel %vm520, %v6243, %v6025
        %v6276 = vsel %vm520, %v6244, %v6027
        %v6277 = vsel %vm520, %v6245, %v6029
        %v6278 = vsel %vm520, %v6246, %v6031
        %v6279 = vsel %vm520, %v6247, %v6033
        %v6280 = vsel %vm520, %v6248, %v6035
        %v6281 = vsel %vm520, %v6249, %v6037
        %v6282 = vsel %vm520, %v6250, %v6039
        %v6283 = vsel %vm520, %v6251, %v6041
        %v6284 = vsel %vm520, %v6252, %v6043
        %v6285 = vsel %vm520, %v6253, %v6045
        %v6286 = vsel %vm520, %v6254, %v6047
        %v6287 = vsel %vm520, %v6255, %v6049
        %v6288 = vsel %vm520, %v6256, %v6051
        %v6289 = vsel %vm520, %v6257, %v6053
        %v6290 = vsel %vm520, %v6258, %v6055
        %v6291 = vsel %vm520, %v6259, %v6057
        %v6292 = vsel %vm520, %v6260, %v6059
        %v6293 = vsel %vm520, %v6261, %v6061
        %v6294 = vsel %vm520, %v6262, %v6063
        %v6295 = vsel %vm520, %v6263, %v6065
        %v6296 = vsel %vm520, %v6264, %v6067
        %v6297 = vsel %vm520, %v6265, %v6069
        %v6298 = vsel %vm520, %v6266, %v6071
        %v6299 = vsel %vm520, %v6267, %v6073
        %v6300 = vsel %vm520, %v6268, %v6075
        %v6301 = vsel %vm520, %v6269, %v6077
        %vm6302 = vcmask 785408
        %v6303 = vsel %vm6302, %v6270, %v6143
        %v6304 = vsel %vm6302, %v6271, %v6145
        %v6305 = vsel %vm6302, %v6272, %v6147
        %v6306 = vsel %vm6302, %v6273, %v6149
        %v6307 = vsel %vm6302, %v6274, %v6151
        %v6308 = vsel %vm6302, %v6275, %v6153
        %v6309 = vsel %vm6302, %v6276, %v6155
        %v6310 = vsel %vm6302, %v6277, %v6157
        %v6311 = vsel %vm6302, %v6278, %v6159
        %v6312 = vsel %vm6302, %v6279, %v6161
        %v6313 = vsel %vm6302, %v6280, %v6163
        %v6314 = vsel %vm6302, %v6281, %v6165
        %v6315 = vsel %vm6302, %v6282, %v6167
        %v6316 = vsel %vm6302, %v6283, %v6169
        %v6317 = vsel %vm6302, %v6284, %v6171
        %v6318 = vsel %vm6302, %v6285, %v6173
        %v6319 = vsel %vm6302, %v6286, %v6175
        %v6320 = vsel %vm6302, %v6287, %v6177
        %v6321 = vsel %vm6302, %v6288, %v6179
        %v6322 = vsel %vm6302, %v6289, %v6181
        %v6323 = vsel %vm6302, %v6290, %v6183
        %v6324 = vsel %vm6302, %v6291, %v6185
        %v6325 = vsel %vm6302, %v6292, %v6187
        %v6326 = vsel %vm6302, %v6293, %v6189
        %v6327 = vsel %vm6302, %v6294, %v6191
        %v6328 = vsel %vm6302, %v6295, %v6193
        %v6329 = vsel %vm6302, %v6296, %v6195
        %v6330 = vsel %vm6302, %v6297, %v6197
        %v6331 = vsel %vm6302, %v6298, %v6199
        %v6332 = vsel %vm6302, %v6299, %v6201
        %v6333 = vsel %vm6302, %v6300, %v6203
        %v6334 = vsel %vm6302, %v6301, %v6205
        %6335 = vst [vmem:[#allocation3] sm:$0xff] %v6303
        %6336 = vst [vmem:[#allocation3 + $0x28] sm:$0xff] %v6304
        %6337 = vst [vmem:[#allocation3 + $0x50] sm:$0xff] %v6305
        %6338 = vst [vmem:[#allocation3 + $0x78] sm:$0xff] %v6306
        %6339 = vst [vmem:[#allocation3 + $0xa0] sm:$0xff] %v6307
        %6340 = vst [vmem:[#allocation3 + $0xc8] sm:$0xff] %v6308
        %6341 = vst [vmem:[#allocation3 + $0xf0] sm:$0xff] %v6309
        %6342 = vst [vmem:[#allocation3 + $0x118] sm:$0xff] %v6310
        %6343 = vst [vmem:[#allocation3 + $0x140] sm:$0xff] %v6311
        %6344 = vst [vmem:[#allocation3 + $0x168] sm:$0xff] %v6312
        %6345 = vst [vmem:[#allocation3 + $0x190] sm:$0xff] %v6313
        %6346 = vst [vmem:[#allocation3 + $0x1b8] sm:$0xff] %v6314
        %6347 = vst [vmem:[#allocation3 + $0x1e0] sm:$0xff] %v6315
        %6348 = vst [vmem:[#allocation3 + $0x208] sm:$0xff] %v6316
        %6349 = vst [vmem:[#allocation3 + $0x230] sm:$0xff] %v6317
        %6350 = vst [vmem:[#allocation3 + $0x258] sm:$0xff] %v6318
        %6351 = vst [vmem:[#allocation3 + $0x280] sm:$0xff] %v6319
        %6352 = vst [vmem:[#allocation3 + $0x2a8] sm:$0xff] %v6320
        %6353 = vst [vmem:[#allocation3 + $0x2d0] sm:$0xff] %v6321
        %6354 = vst [vmem:[#allocation3 + $0x2f8] sm:$0xff] %v6322
        %6355 = vst [vmem:[#allocation3 + $0x320] sm:$0xff] %v6323
        %6356 = vst [vmem:[#allocation3 + $0x348] sm:$0xff] %v6324
        %6357 = vst [vmem:[#allocation3 + $0x370] sm:$0xff] %v6325
        %6358 = vst [vmem:[#allocation3 + $0x398] sm:$0xff] %v6326
        %6359 = vst [vmem:[#allocation3 + $0x3c0] sm:$0xff] %v6327
        %6360 = vst [vmem:[#allocation3 + $0x3e8] sm:$0xff] %v6328
        %6361 = vst [vmem:[#allocation3 + $0x410] sm:$0xff] %v6329
        %6362 = vst [vmem:[#allocation3 + $0x438] sm:$0xff] %v6330
        %6363 = vst [vmem:[#allocation3 + $0x460] sm:$0xff] %v6331
        %6364 = vst [vmem:[#allocation3 + $0x488] sm:$0xff] %v6332
        %6365 = vst [vmem:[#allocation3 + $0x4b0] sm:$0xff] %v6333
        %6366 = vst [vmem:[#allocation3 + $0x4d8] sm:$0xff] %v6334
        %v6367 = vld [vmem:[%s955 + $0x1] sm:$0xff]
        %v6368 = vld [vmem:[%s955 + $0x9] sm:$0xff]
        %v6369 = vld [vmem:[%s955 + $0x19] sm:$0xff]
        %v6370 = vld [vmem:[%s955 + $0x21] sm:$0xff]
        %v6371 = vld [vmem:[%s955 + $0x31] sm:$0xff]
        %v6372 = vld [vmem:[%s955 + $0x39] sm:$0xff]
        %v6373 = vld [vmem:[%s955 + $0x49] sm:$0xff]
        %v6374 = vld [vmem:[%s955 + $0x51] sm:$0xff]
        %v6375 = vld [vmem:[%s955 + $0x61] sm:$0xff]
        %v6376 = vld [vmem:[%s955 + $0x69] sm:$0xff]
        %v6377 = vld [vmem:[%s955 + $0x79] sm:$0xff]
        %v6378 = vld [vmem:[%s955 + $0x81] sm:$0xff]
        %v6379 = vld [vmem:[%s955 + $0x91] sm:$0xff]
        %v6380 = vld [vmem:[%s955 + $0x99] sm:$0xff]
        %v6381 = vld [vmem:[%s955 + $0xa9] sm:$0xff]
        %v6382 = vld [vmem:[%s955 + $0xb1] sm:$0xff]
        %v6383 = vld [vmem:[%s955 + $0xc1] sm:$0xff]
        %v6384 = vld [vmem:[%s955 + $0xc9] sm:$0xff]
        %v6385 = vld [vmem:[%s955 + $0xd9] sm:$0xff]
        %v6386 = vld [vmem:[%s955 + $0xe1] sm:$0xff]
        %v6387 = vld [vmem:[%s955 + $0xf1] sm:$0xff]
        %v6388 = vld [vmem:[%s955 + $0xf9] sm:$0xff]
        %v6389 = vld [vmem:[%s955 + $0x109] sm:$0xff]
        %v6390 = vld [vmem:[%s955 + $0x111] sm:$0xff]
        %v6391 = vld [vmem:[%s955 + $0x121] sm:$0xff]
        %v6392 = vld [vmem:[%s955 + $0x129] sm:$0xff]
        %v6393 = vld [vmem:[%s955 + $0x139] sm:$0xff]
        %v6394 = vld [vmem:[%s955 + $0x141] sm:$0xff]
        %v6395 = vld [vmem:[%s955 + $0x151] sm:$0xff]
        %v6396 = vld [vmem:[%s955 + $0x159] sm:$0xff]
        %v6397 = vld [vmem:[%s955 + $0x169] sm:$0xff]
        %v6398 = vld [vmem:[%s955 + $0x171] sm:$0xff]
        %v6399 = vld [vmem:[%s955 + $0x2] sm:$0xff]
        %v6400 = vld [vmem:[%s955 + $0xa] sm:$0xff]
        %v6401 = vld [vmem:[%s955 + $0x1a] sm:$0xff]
        %v6402 = vld [vmem:[%s955 + $0x22] sm:$0xff]
        %v6403 = vld [vmem:[%s955 + $0x32] sm:$0xff]
        %v6404 = vld [vmem:[%s955 + $0x3a] sm:$0xff]
        %v6405 = vld [vmem:[%s955 + $0x4a] sm:$0xff]
        %v6406 = vld [vmem:[%s955 + $0x52] sm:$0xff]
        %v6407 = vld [vmem:[%s955 + $0x62] sm:$0xff]
        %v6408 = vld [vmem:[%s955 + $0x6a] sm:$0xff]
        %v6409 = vld [vmem:[%s955 + $0x7a] sm:$0xff]
        %v6410 = vld [vmem:[%s955 + $0x82] sm:$0xff]
        %v6411 = vld [vmem:[%s955 + $0x92] sm:$0xff]
        %v6412 = vld [vmem:[%s955 + $0x9a] sm:$0xff]
        %v6413 = vld [vmem:[%s955 + $0xaa] sm:$0xff]
        %v6414 = vld [vmem:[%s955 + $0xb2] sm:$0xff]
        %v6415 = vld [vmem:[%s955 + $0xc2] sm:$0xff]
        %v6416 = vld [vmem:[%s955 + $0xca] sm:$0xff]
        %v6417 = vld [vmem:[%s955 + $0xda] sm:$0xff]
        %v6418 = vld [vmem:[%s955 + $0xe2] sm:$0xff]
        %v6419 = vld [vmem:[%s955 + $0xf2] sm:$0xff]
        %v6420 = vld [vmem:[%s955 + $0xfa] sm:$0xff]
        %v6421 = vld [vmem:[%s955 + $0x10a] sm:$0xff]
        %v6422 = vld [vmem:[%s955 + $0x112] sm:$0xff]
        %v6423 = vld [vmem:[%s955 + $0x122] sm:$0xff]
        %v6424 = vld [vmem:[%s955 + $0x12a] sm:$0xff]
        %v6425 = vld [vmem:[%s955 + $0x13a] sm:$0xff]
        %v6426 = vld [vmem:[%s955 + $0x142] sm:$0xff]
        %v6427 = vld [vmem:[%s955 + $0x152] sm:$0xff]
        %v6428 = vld [vmem:[%s955 + $0x15a] sm:$0xff]
        %v6429 = vld [vmem:[%s955 + $0x16a] sm:$0xff]
        %v6430 = vld [vmem:[%s955 + $0x172] sm:$0xff]
        %v6431 = vld [vmem:[%s1756] sm:$0xff]
        %v6432 = vld [vmem:[%s1756 + $0x8] sm:$0xff]
        %v6433 = vld [vmem:[%s1756 + $0x18] sm:$0xff]
        %v6434 = vld [vmem:[%s1756 + $0x20] sm:$0xff]
        %v6435 = vld [vmem:[%s1756 + $0x30] sm:$0xff]
        %v6436 = vld [vmem:[%s1756 + $0x38] sm:$0xff]
        %v6437 = vld [vmem:[%s1756 + $0x48] sm:$0xff]
        %v6438 = vld [vmem:[%s1756 + $0x50] sm:$0xff]
        %v6439 = vld [vmem:[%s1756 + $0x60] sm:$0xff]
        %v6440 = vld [vmem:[%s1756 + $0x68] sm:$0xff]
        %v6441 = vld [vmem:[%s1756 + $0x78] sm:$0xff]
        %v6442 = vld [vmem:[%s1756 + $0x80] sm:$0xff]
        %v6443 = vld [vmem:[%s1756 + $0x90] sm:$0xff]
        %v6444 = vld [vmem:[%s1756 + $0x98] sm:$0xff]
        %v6445 = vld [vmem:[%s1756 + $0xa8] sm:$0xff]
        %v6446 = vld [vmem:[%s1756 + $0xb0] sm:$0xff]
        %v6447 = vld [vmem:[%s1756 + $0xc0] sm:$0xff]
        %v6448 = vld [vmem:[%s1756 + $0xc8] sm:$0xff]
        %v6449 = vld [vmem:[%s1756 + $0xd8] sm:$0xff]
        %v6450 = vld [vmem:[%s1756 + $0xe0] sm:$0xff]
        %v6451 = vld [vmem:[%s1756 + $0xf0] sm:$0xff]
        %v6452 = vld [vmem:[%s1756 + $0xf8] sm:$0xff]
        %v6453 = vld [vmem:[%s1756 + $0x108] sm:$0xff]
        %v6454 = vld [vmem:[%s1756 + $0x110] sm:$0xff]
        %v6455 = vld [vmem:[%s1756 + $0x120] sm:$0xff]
        %v6456 = vld [vmem:[%s1756 + $0x128] sm:$0xff]
        %v6457 = vld [vmem:[%s1756 + $0x138] sm:$0xff]
        %v6458 = vld [vmem:[%s1756 + $0x140] sm:$0xff]
        %v6459 = vld [vmem:[%s1756 + $0x150] sm:$0xff]
        %v6460 = vld [vmem:[%s1756 + $0x158] sm:$0xff]
        %v6461 = vld [vmem:[%s1756 + $0x168] sm:$0xff]
        %v6462 = vld [vmem:[%s1756 + $0x170] sm:$0xff]
        %v6463 = vld [vmem:[%s1756 + $0x1] sm:$0xff]
        %v6464 = vld [vmem:[%s1756 + $0x9] sm:$0xff]
        %v6465 = vld [vmem:[%s1756 + $0x19] sm:$0xff]
        %v6466 = vld [vmem:[%s1756 + $0x21] sm:$0xff]
        %v6467 = vld [vmem:[%s1756 + $0x31] sm:$0xff]
        %v6468 = vld [vmem:[%s1756 + $0x39] sm:$0xff]
        %v6469 = vld [vmem:[%s1756 + $0x49] sm:$0xff]
        %v6470 = vld [vmem:[%s1756 + $0x51] sm:$0xff]
        %v6471 = vld [vmem:[%s1756 + $0x61] sm:$0xff]
        %v6472 = vld [vmem:[%s1756 + $0x69] sm:$0xff]
        %v6473 = vld [vmem:[%s1756 + $0x79] sm:$0xff]
        %v6474 = vld [vmem:[%s1756 + $0x81] sm:$0xff]
        %v6475 = vld [vmem:[%s1756 + $0x91] sm:$0xff]
        %v6476 = vld [vmem:[%s1756 + $0x99] sm:$0xff]
        %v6477 = vld [vmem:[%s1756 + $0xa9] sm:$0xff]
        %v6478 = vld [vmem:[%s1756 + $0xb1] sm:$0xff]
        %v6479 = vld [vmem:[%s1756 + $0xc1] sm:$0xff]
        %v6480 = vld [vmem:[%s1756 + $0xc9] sm:$0xff]
        %v6481 = vld [vmem:[%s1756 + $0xd9] sm:$0xff]
        %v6482 = vld [vmem:[%s1756 + $0xe1] sm:$0xff]
        %v6483 = vld [vmem:[%s1756 + $0xf1] sm:$0xff]
        %v6484 = vld [vmem:[%s1756 + $0xf9] sm:$0xff]
        %v6485 = vld [vmem:[%s1756 + $0x109] sm:$0xff]
        %v6486 = vld [vmem:[%s1756 + $0x111] sm:$0xff]
        %v6487 = vld [vmem:[%s1756 + $0x121] sm:$0xff]
        %v6488 = vld [vmem:[%s1756 + $0x129] sm:$0xff]
        %v6489 = vld [vmem:[%s1756 + $0x139] sm:$0xff]
        %v6490 = vld [vmem:[%s1756 + $0x141] sm:$0xff]
        %v6491 = vld [vmem:[%s1756 + $0x151] sm:$0xff]
        %v6492 = vld [vmem:[%s1756 + $0x159] sm:$0xff]
        %v6493 = vld [vmem:[%s1756 + $0x169] sm:$0xff]
        %v6494 = vld [vmem:[%s1756 + $0x171] sm:$0xff]
        %6527 = vrot.lane.b32.xlu0 %v6399, 32
        %v6528 = vpop.permute.xlu0 %6527
        %6529 = vrot.lane.b32.xlu0 %v6400, 32
        %v6530 = vpop.permute.xlu0 %6529
        %6531 = vrot.lane.b32.xlu0 %v6401, 32
        %v6532 = vpop.permute.xlu0 %6531
        %6533 = vrot.lane.b32.xlu0 %v6402, 32
        %v6534 = vpop.permute.xlu0 %6533
        %6535 = vrot.lane.b32.xlu0 %v6403, 32
        %v6536 = vpop.permute.xlu0 %6535
        %6537 = vrot.lane.b32.xlu0 %v6404, 32
        %v6538 = vpop.permute.xlu0 %6537
        %6539 = vrot.lane.b32.xlu0 %v6405, 32
        %v6540 = vpop.permute.xlu0 %6539
        %6541 = vrot.lane.b32.xlu0 %v6406, 32
        %v6542 = vpop.permute.xlu0 %6541
        %6543 = vrot.lane.b32.xlu0 %v6407, 32
        %v6544 = vpop.permute.xlu0 %6543
        %6545 = vrot.lane.b32.xlu0 %v6408, 32
        %v6546 = vpop.permute.xlu0 %6545
        %6547 = vrot.lane.b32.xlu0 %v6409, 32
        %v6548 = vpop.permute.xlu0 %6547
        %6549 = vrot.lane.b32.xlu0 %v6410, 32
        %v6550 = vpop.permute.xlu0 %6549
        %6551 = vrot.lane.b32.xlu0 %v6411, 32
        %v6552 = vpop.permute.xlu0 %6551
        %6553 = vrot.lane.b32.xlu0 %v6412, 32
        %v6554 = vpop.permute.xlu0 %6553
        %6555 = vrot.lane.b32.xlu0 %v6413, 32
        %v6556 = vpop.permute.xlu0 %6555
        %6557 = vrot.lane.b32.xlu0 %v6414, 32
        %v6558 = vpop.permute.xlu0 %6557
        %6559 = vrot.lane.b32.xlu0 %v6415, 32
        %v6560 = vpop.permute.xlu0 %6559
        %6561 = vrot.lane.b32.xlu0 %v6416, 32
        %v6562 = vpop.permute.xlu0 %6561
        %6563 = vrot.lane.b32.xlu0 %v6417, 32
        %v6564 = vpop.permute.xlu0 %6563
        %6565 = vrot.lane.b32.xlu0 %v6418, 32
        %v6566 = vpop.permute.xlu0 %6565
        %6567 = vrot.lane.b32.xlu0 %v6419, 32
        %v6568 = vpop.permute.xlu0 %6567
        %6569 = vrot.lane.b32.xlu0 %v6420, 32
        %v6570 = vpop.permute.xlu0 %6569
        %6571 = vrot.lane.b32.xlu0 %v6421, 32
        %v6572 = vpop.permute.xlu0 %6571
        %6573 = vrot.lane.b32.xlu0 %v6422, 32
        %v6574 = vpop.permute.xlu0 %6573
        %6575 = vrot.lane.b32.xlu0 %v6423, 32
        %v6576 = vpop.permute.xlu0 %6575
        %6577 = vrot.lane.b32.xlu0 %v6424, 32
        %v6578 = vpop.permute.xlu0 %6577
        %6579 = vrot.lane.b32.xlu0 %v6425, 32
        %v6580 = vpop.permute.xlu0 %6579
        %6581 = vrot.lane.b32.xlu0 %v6426, 32
        %v6582 = vpop.permute.xlu0 %6581
        %6583 = vrot.lane.b32.xlu0 %v6427, 32
        %v6584 = vpop.permute.xlu0 %6583
        %6585 = vrot.lane.b32.xlu0 %v6428, 32
        %v6586 = vpop.permute.xlu0 %6585
        %6587 = vrot.lane.b32.xlu0 %v6429, 32
        %v6588 = vpop.permute.xlu0 %6587
        %6589 = vrot.lane.b32.xlu0 %v6430, 32
        %v6590 = vpop.permute.xlu0 %6589
        %6655 = vrot.lane.b32.xlu0 %v6431, 64
        %v6656 = vpop.permute.xlu0 %6655
        %6657 = vrot.lane.b32.xlu0 %v6432, 64
        %v6658 = vpop.permute.xlu0 %6657
        %6659 = vrot.lane.b32.xlu0 %v6433, 64
        %v6660 = vpop.permute.xlu0 %6659
        %6661 = vrot.lane.b32.xlu0 %v6434, 64
        %v6662 = vpop.permute.xlu0 %6661
        %6663 = vrot.lane.b32.xlu0 %v6435, 64
        %v6664 = vpop.permute.xlu0 %6663
        %6665 = vrot.lane.b32.xlu0 %v6436, 64
        %v6666 = vpop.permute.xlu0 %6665
        %6667 = vrot.lane.b32.xlu0 %v6437, 64
        %v6668 = vpop.permute.xlu0 %6667
        %6669 = vrot.lane.b32.xlu0 %v6438, 64
        %v6670 = vpop.permute.xlu0 %6669
        %6671 = vrot.lane.b32.xlu0 %v6439, 64
        %v6672 = vpop.permute.xlu0 %6671
        %6673 = vrot.lane.b32.xlu0 %v6440, 64
        %v6674 = vpop.permute.xlu0 %6673
        %6675 = vrot.lane.b32.xlu0 %v6441, 64
        %v6676 = vpop.permute.xlu0 %6675
        %6677 = vrot.lane.b32.xlu0 %v6442, 64
        %v6678 = vpop.permute.xlu0 %6677
        %6679 = vrot.lane.b32.xlu0 %v6443, 64
        %v6680 = vpop.permute.xlu0 %6679
        %6681 = vrot.lane.b32.xlu0 %v6444, 64
        %v6682 = vpop.permute.xlu0 %6681
        %6683 = vrot.lane.b32.xlu0 %v6445, 64
        %v6684 = vpop.permute.xlu0 %6683
        %6685 = vrot.lane.b32.xlu0 %v6446, 64
        %v6686 = vpop.permute.xlu0 %6685
        %6687 = vrot.lane.b32.xlu0 %v6447, 64
        %v6688 = vpop.permute.xlu0 %6687
        %6689 = vrot.lane.b32.xlu0 %v6448, 64
        %v6690 = vpop.permute.xlu0 %6689
        %6691 = vrot.lane.b32.xlu0 %v6449, 64
        %v6692 = vpop.permute.xlu0 %6691
        %6693 = vrot.lane.b32.xlu0 %v6450, 64
        %v6694 = vpop.permute.xlu0 %6693
        %6695 = vrot.lane.b32.xlu0 %v6451, 64
        %v6696 = vpop.permute.xlu0 %6695
        %6697 = vrot.lane.b32.xlu0 %v6452, 64
        %v6698 = vpop.permute.xlu0 %6697
        %6699 = vrot.lane.b32.xlu0 %v6453, 64
        %v6700 = vpop.permute.xlu0 %6699
        %6701 = vrot.lane.b32.xlu0 %v6454, 64
        %v6702 = vpop.permute.xlu0 %6701
        %6703 = vrot.lane.b32.xlu0 %v6455, 64
        %v6704 = vpop.permute.xlu0 %6703
        %6705 = vrot.lane.b32.xlu0 %v6456, 64
        %v6706 = vpop.permute.xlu0 %6705
        %6707 = vrot.lane.b32.xlu0 %v6457, 64
        %v6708 = vpop.permute.xlu0 %6707
        %6709 = vrot.lane.b32.xlu0 %v6458, 64
        %v6710 = vpop.permute.xlu0 %6709
        %6711 = vrot.lane.b32.xlu0 %v6459, 64
        %v6712 = vpop.permute.xlu0 %6711
        %6713 = vrot.lane.b32.xlu0 %v6460, 64
        %v6714 = vpop.permute.xlu0 %6713
        %6715 = vrot.lane.b32.xlu0 %v6461, 64
        %v6716 = vpop.permute.xlu0 %6715
        %6717 = vrot.lane.b32.xlu0 %v6462, 64
        %v6718 = vpop.permute.xlu0 %6717
        %6783 = vrot.lane.b32.xlu0 %v6463, 96
        %v6784 = vpop.permute.xlu0 %6783
        %6785 = vrot.lane.b32.xlu0 %v6464, 96
        %v6786 = vpop.permute.xlu0 %6785
        %6787 = vrot.lane.b32.xlu0 %v6465, 96
        %v6788 = vpop.permute.xlu0 %6787
        %6789 = vrot.lane.b32.xlu0 %v6466, 96
        %v6790 = vpop.permute.xlu0 %6789
        %6791 = vrot.lane.b32.xlu0 %v6467, 96
        %v6792 = vpop.permute.xlu0 %6791
        %6793 = vrot.lane.b32.xlu0 %v6468, 96
        %v6794 = vpop.permute.xlu0 %6793
        %6795 = vrot.lane.b32.xlu0 %v6469, 96
        %v6796 = vpop.permute.xlu0 %6795
        %6797 = vrot.lane.b32.xlu0 %v6470, 96
        %v6798 = vpop.permute.xlu0 %6797
        %6799 = vrot.lane.b32.xlu0 %v6471, 96
        %v6800 = vpop.permute.xlu0 %6799
        %6801 = vrot.lane.b32.xlu0 %v6472, 96
        %v6802 = vpop.permute.xlu0 %6801
        %6803 = vrot.lane.b32.xlu0 %v6473, 96
        %v6804 = vpop.permute.xlu0 %6803
        %6805 = vrot.lane.b32.xlu0 %v6474, 96
        %v6806 = vpop.permute.xlu0 %6805
        %6807 = vrot.lane.b32.xlu0 %v6475, 96
        %v6808 = vpop.permute.xlu0 %6807
        %6809 = vrot.lane.b32.xlu0 %v6476, 96
        %v6810 = vpop.permute.xlu0 %6809
        %6811 = vrot.lane.b32.xlu0 %v6477, 96
        %v6812 = vpop.permute.xlu0 %6811
        %6813 = vrot.lane.b32.xlu0 %v6478, 96
        %v6814 = vpop.permute.xlu0 %6813
        %6815 = vrot.lane.b32.xlu0 %v6479, 96
        %v6816 = vpop.permute.xlu0 %6815
        %6817 = vrot.lane.b32.xlu0 %v6480, 96
        %v6818 = vpop.permute.xlu0 %6817
        %6819 = vrot.lane.b32.xlu0 %v6481, 96
        %v6820 = vpop.permute.xlu0 %6819
        %6821 = vrot.lane.b32.xlu0 %v6482, 96
        %v6822 = vpop.permute.xlu0 %6821
        %6823 = vrot.lane.b32.xlu0 %v6483, 96
        %v6824 = vpop.permute.xlu0 %6823
        %6825 = vrot.lane.b32.xlu0 %v6484, 96
        %v6826 = vpop.permute.xlu0 %6825
        %6827 = vrot.lane.b32.xlu0 %v6485, 96
        %v6828 = vpop.permute.xlu0 %6827
        %6829 = vrot.lane.b32.xlu0 %v6486, 96
        %v6830 = vpop.permute.xlu0 %6829
        %6831 = vrot.lane.b32.xlu0 %v6487, 96
        %v6832 = vpop.permute.xlu0 %6831
        %6833 = vrot.lane.b32.xlu0 %v6488, 96
        %v6834 = vpop.permute.xlu0 %6833
        %6835 = vrot.lane.b32.xlu0 %v6489, 96
        %v6836 = vpop.permute.xlu0 %6835
        %6837 = vrot.lane.b32.xlu0 %v6490, 96
        %v6838 = vpop.permute.xlu0 %6837
        %6839 = vrot.lane.b32.xlu0 %v6491, 96
        %v6840 = vpop.permute.xlu0 %6839
        %6841 = vrot.lane.b32.xlu0 %v6492, 96
        %v6842 = vpop.permute.xlu0 %6841
        %6843 = vrot.lane.b32.xlu0 %v6493, 96
        %v6844 = vpop.permute.xlu0 %6843
        %6845 = vrot.lane.b32.xlu0 %v6494, 96
        %v6846 = vpop.permute.xlu0 %6845
        %v6879 = vsel %vm5340, %v6367, %v6528
        %v6880 = vsel %vm5340, %v6368, %v6530
        %v6881 = vsel %vm5340, %v6369, %v6532
        %v6882 = vsel %vm5340, %v6370, %v6534
        %v6883 = vsel %vm5340, %v6371, %v6536
        %v6884 = vsel %vm5340, %v6372, %v6538
        %v6885 = vsel %vm5340, %v6373, %v6540
        %v6886 = vsel %vm5340, %v6374, %v6542
        %v6887 = vsel %vm5340, %v6375, %v6544
        %v6888 = vsel %vm5340, %v6376, %v6546
        %v6889 = vsel %vm5340, %v6377, %v6548
        %v6890 = vsel %vm5340, %v6378, %v6550
        %v6891 = vsel %vm5340, %v6379, %v6552
        %v6892 = vsel %vm5340, %v6380, %v6554
        %v6893 = vsel %vm5340, %v6381, %v6556
        %v6894 = vsel %vm5340, %v6382, %v6558
        %v6895 = vsel %vm5340, %v6383, %v6560
        %v6896 = vsel %vm5340, %v6384, %v6562
        %v6897 = vsel %vm5340, %v6385, %v6564
        %v6898 = vsel %vm5340, %v6386, %v6566
        %v6899 = vsel %vm5340, %v6387, %v6568
        %v6900 = vsel %vm5340, %v6388, %v6570
        %v6901 = vsel %vm5340, %v6389, %v6572
        %v6902 = vsel %vm5340, %v6390, %v6574
        %v6903 = vsel %vm5340, %v6391, %v6576
        %v6904 = vsel %vm5340, %v6392, %v6578
        %v6905 = vsel %vm5340, %v6393, %v6580
        %v6906 = vsel %vm5340, %v6394, %v6582
        %v6907 = vsel %vm5340, %v6395, %v6584
        %v6908 = vsel %vm5340, %v6396, %v6586
        %v6909 = vsel %vm5340, %v6397, %v6588
        %v6910 = vsel %vm5340, %v6398, %v6590
        %v6911 = vsel %vm520, %v6879, %v6656
        %v6912 = vsel %vm520, %v6880, %v6658
        %v6913 = vsel %vm520, %v6881, %v6660
        %v6914 = vsel %vm520, %v6882, %v6662
        %v6915 = vsel %vm520, %v6883, %v6664
        %v6916 = vsel %vm520, %v6884, %v6666
        %v6917 = vsel %vm520, %v6885, %v6668
        %v6918 = vsel %vm520, %v6886, %v6670
        %v6919 = vsel %vm520, %v6887, %v6672
        %v6920 = vsel %vm520, %v6888, %v6674
        %v6921 = vsel %vm520, %v6889, %v6676
        %v6922 = vsel %vm520, %v6890, %v6678
        %v6923 = vsel %vm520, %v6891, %v6680
        %v6924 = vsel %vm520, %v6892, %v6682
        %v6925 = vsel %vm520, %v6893, %v6684
        %v6926 = vsel %vm520, %v6894, %v6686
        %v6927 = vsel %vm520, %v6895, %v6688
        %v6928 = vsel %vm520, %v6896, %v6690
        %v6929 = vsel %vm520, %v6897, %v6692
        %v6930 = vsel %vm520, %v6898, %v6694
        %v6931 = vsel %vm520, %v6899, %v6696
        %v6932 = vsel %vm520, %v6900, %v6698
        %v6933 = vsel %vm520, %v6901, %v6700
        %v6934 = vsel %vm520, %v6902, %v6702
        %v6935 = vsel %vm520, %v6903, %v6704
        %v6936 = vsel %vm520, %v6904, %v6706
        %v6937 = vsel %vm520, %v6905, %v6708
        %v6938 = vsel %vm520, %v6906, %v6710
        %v6939 = vsel %vm520, %v6907, %v6712
        %v6940 = vsel %vm520, %v6908, %v6714
        %v6941 = vsel %vm520, %v6909, %v6716
        %v6942 = vsel %vm520, %v6910, %v6718
        %v6943 = vsel %vm6302, %v6911, %v6784
        %v6944 = vsel %vm6302, %v6912, %v6786
        %v6945 = vsel %vm6302, %v6913, %v6788
        %v6946 = vsel %vm6302, %v6914, %v6790
        %v6947 = vsel %vm6302, %v6915, %v6792
        %v6948 = vsel %vm6302, %v6916, %v6794
        %v6949 = vsel %vm6302, %v6917, %v6796
        %v6950 = vsel %vm6302, %v6918, %v6798
        %v6951 = vsel %vm6302, %v6919, %v6800
        %v6952 = vsel %vm6302, %v6920, %v6802
        %v6953 = vsel %vm6302, %v6921, %v6804
        %v6954 = vsel %vm6302, %v6922, %v6806
        %v6955 = vsel %vm6302, %v6923, %v6808
        %v6956 = vsel %vm6302, %v6924, %v6810
        %v6957 = vsel %vm6302, %v6925, %v6812
        %v6958 = vsel %vm6302, %v6926, %v6814
        %v6959 = vsel %vm6302, %v6927, %v6816
        %v6960 = vsel %vm6302, %v6928, %v6818
        %v6961 = vsel %vm6302, %v6929, %v6820
        %v6962 = vsel %vm6302, %v6930, %v6822
        %v6963 = vsel %vm6302, %v6931, %v6824
        %v6964 = vsel %vm6302, %v6932, %v6826
        %v6965 = vsel %vm6302, %v6933, %v6828
        %v6966 = vsel %vm6302, %v6934, %v6830
        %v6967 = vsel %vm6302, %v6935, %v6832
        %v6968 = vsel %vm6302, %v6936, %v6834
        %v6969 = vsel %vm6302, %v6937, %v6836
        %v6970 = vsel %vm6302, %v6938, %v6838
        %v6971 = vsel %vm6302, %v6939, %v6840
        %v6972 = vsel %vm6302, %v6940, %v6842
        %v6973 = vsel %vm6302, %v6941, %v6844
        %v6974 = vsel %vm6302, %v6942, %v6846
        %6975 = vst [vmem:[#allocation3 + $0x8] sm:$0xff] %v6943
        %6976 = vst [vmem:[#allocation3 + $0x30] sm:$0xff] %v6944
        %6977 = vst [vmem:[#allocation3 + $0x58] sm:$0xff] %v6945
        %6978 = vst [vmem:[#allocation3 + $0x80] sm:$0xff] %v6946
        %6979 = vst [vmem:[#allocation3 + $0xa8] sm:$0xff] %v6947
        %6980 = vst [vmem:[#allocation3 + $0xd0] sm:$0xff] %v6948
        %6981 = vst [vmem:[#allocation3 + $0xf8] sm:$0xff] %v6949
        %6982 = vst [vmem:[#allocation3 + $0x120] sm:$0xff] %v6950
        %6983 = vst [vmem:[#allocation3 + $0x148] sm:$0xff] %v6951
        %6984 = vst [vmem:[#allocation3 + $0x170] sm:$0xff] %v6952
        %6985 = vst [vmem:[#allocation3 + $0x198] sm:$0xff] %v6953
        %6986 = vst [vmem:[#allocation3 + $0x1c0] sm:$0xff] %v6954
        %6987 = vst [vmem:[#allocation3 + $0x1e8] sm:$0xff] %v6955
        %6988 = vst [vmem:[#allocation3 + $0x210] sm:$0xff] %v6956
        %6989 = vst [vmem:[#allocation3 + $0x238] sm:$0xff] %v6957
        %6990 = vst [vmem:[#allocation3 + $0x260] sm:$0xff] %v6958
        %6991 = vst [vmem:[#allocation3 + $0x288] sm:$0xff] %v6959
        %6992 = vst [vmem:[#allocation3 + $0x2b0] sm:$0xff] %v6960
        %6993 = vst [vmem:[#allocation3 + $0x2d8] sm:$0xff] %v6961
        %6994 = vst [vmem:[#allocation3 + $0x300] sm:$0xff] %v6962
        %6995 = vst [vmem:[#allocation3 + $0x328] sm:$0xff] %v6963
        %6996 = vst [vmem:[#allocation3 + $0x350] sm:$0xff] %v6964
        %6997 = vst [vmem:[#allocation3 + $0x378] sm:$0xff] %v6965
        %6998 = vst [vmem:[#allocation3 + $0x3a0] sm:$0xff] %v6966
        %6999 = vst [vmem:[#allocation3 + $0x3c8] sm:$0xff] %v6967
        %7000 = vst [vmem:[#allocation3 + $0x3f0] sm:$0xff] %v6968
        %7001 = vst [vmem:[#allocation3 + $0x418] sm:$0xff] %v6969
        %7002 = vst [vmem:[#allocation3 + $0x440] sm:$0xff] %v6970
        %7003 = vst [vmem:[#allocation3 + $0x468] sm:$0xff] %v6971
        %7004 = vst [vmem:[#allocation3 + $0x490] sm:$0xff] %v6972
        %7005 = vst [vmem:[#allocation3 + $0x4b8] sm:$0xff] %v6973
        %7006 = vst [vmem:[#allocation3 + $0x4e0] sm:$0xff] %v6974
        %v7007 = vld [vmem:[%s1756 + $0x2] sm:$0xff]
        %v7008 = vld [vmem:[%s1756 + $0xa] sm:$0xff]
        %v7009 = vld [vmem:[%s1756 + $0x1a] sm:$0xff]
        %v7010 = vld [vmem:[%s1756 + $0x22] sm:$0xff]
        %v7011 = vld [vmem:[%s1756 + $0x32] sm:$0xff]
        %v7012 = vld [vmem:[%s1756 + $0x3a] sm:$0xff]
        %v7013 = vld [vmem:[%s1756 + $0x4a] sm:$0xff]
        %v7014 = vld [vmem:[%s1756 + $0x52] sm:$0xff]
        %v7015 = vld [vmem:[%s1756 + $0x62] sm:$0xff]
        %v7016 = vld [vmem:[%s1756 + $0x6a] sm:$0xff]
        %v7017 = vld [vmem:[%s1756 + $0x7a] sm:$0xff]
        %v7018 = vld [vmem:[%s1756 + $0x82] sm:$0xff]
        %v7019 = vld [vmem:[%s1756 + $0x92] sm:$0xff]
        %v7020 = vld [vmem:[%s1756 + $0x9a] sm:$0xff]
        %v7021 = vld [vmem:[%s1756 + $0xaa] sm:$0xff]
        %v7022 = vld [vmem:[%s1756 + $0xb2] sm:$0xff]
        %v7023 = vld [vmem:[%s1756 + $0xc2] sm:$0xff]
        %v7024 = vld [vmem:[%s1756 + $0xca] sm:$0xff]
        %v7025 = vld [vmem:[%s1756 + $0xda] sm:$0xff]
        %v7026 = vld [vmem:[%s1756 + $0xe2] sm:$0xff]
        %v7027 = vld [vmem:[%s1756 + $0xf2] sm:$0xff]
        %v7028 = vld [vmem:[%s1756 + $0xfa] sm:$0xff]
        %v7029 = vld [vmem:[%s1756 + $0x10a] sm:$0xff]
        %v7030 = vld [vmem:[%s1756 + $0x112] sm:$0xff]
        %v7031 = vld [vmem:[%s1756 + $0x122] sm:$0xff]
        %v7032 = vld [vmem:[%s1756 + $0x12a] sm:$0xff]
        %v7033 = vld [vmem:[%s1756 + $0x13a] sm:$0xff]
        %v7034 = vld [vmem:[%s1756 + $0x142] sm:$0xff]
        %v7035 = vld [vmem:[%s1756 + $0x152] sm:$0xff]
        %v7036 = vld [vmem:[%s1756 + $0x15a] sm:$0xff]
        %v7037 = vld [vmem:[%s1756 + $0x16a] sm:$0xff]
        %v7038 = vld [vmem:[%s1756 + $0x172] sm:$0xff]
        %7039 = vst.msk [vmem:[#allocation3 + $0x10] sm:$0xff] %vm5340, %v7007
        %7040 = vst.msk [vmem:[#allocation3 + $0x38] sm:$0xff] %vm5340, %v7008
        %7041 = vst.msk [vmem:[#allocation3 + $0x60] sm:$0xff] %vm5340, %v7009
        %7042 = vst.msk [vmem:[#allocation3 + $0x88] sm:$0xff] %vm5340, %v7010
        %7043 = vst.msk [vmem:[#allocation3 + $0xb0] sm:$0xff] %vm5340, %v7011
        %7044 = vst.msk [vmem:[#allocation3 + $0xd8] sm:$0xff] %vm5340, %v7012
        %7045 = vst.msk [vmem:[#allocation3 + $0x100] sm:$0xff] %vm5340, %v7013
        %7046 = vst.msk [vmem:[#allocation3 + $0x128] sm:$0xff] %vm5340, %v7014
        %7047 = vst.msk [vmem:[#allocation3 + $0x150] sm:$0xff] %vm5340, %v7015
        %7048 = vst.msk [vmem:[#allocation3 + $0x178] sm:$0xff] %vm5340, %v7016
        %7049 = vst.msk [vmem:[#allocation3 + $0x1a0] sm:$0xff] %vm5340, %v7017
        %7050 = vst.msk [vmem:[#allocation3 + $0x1c8] sm:$0xff] %vm5340, %v7018
        %7051 = vst.msk [vmem:[#allocation3 + $0x1f0] sm:$0xff] %vm5340, %v7019
        %7052 = vst.msk [vmem:[#allocation3 + $0x218] sm:$0xff] %vm5340, %v7020
        %7053 = vst.msk [vmem:[#allocation3 + $0x240] sm:$0xff] %vm5340, %v7021
        %7054 = vst.msk [vmem:[#allocation3 + $0x268] sm:$0xff] %vm5340, %v7022
        %7055 = vst.msk [vmem:[#allocation3 + $0x290] sm:$0xff] %vm5340, %v7023
        %7056 = vst.msk [vmem:[#allocation3 + $0x2b8] sm:$0xff] %vm5340, %v7024
        %7057 = vst.msk [vmem:[#allocation3 + $0x2e0] sm:$0xff] %vm5340, %v7025
        %7058 = vst.msk [vmem:[#allocation3 + $0x308] sm:$0xff] %vm5340, %v7026
        %7059 = vst.msk [vmem:[#allocation3 + $0x330] sm:$0xff] %vm5340, %v7027
        %7060 = vst.msk [vmem:[#allocation3 + $0x358] sm:$0xff] %vm5340, %v7028
        %7061 = vst.msk [vmem:[#allocation3 + $0x380] sm:$0xff] %vm5340, %v7029
        %7062 = vst.msk [vmem:[#allocation3 + $0x3a8] sm:$0xff] %vm5340, %v7030
        %7063 = vst.msk [vmem:[#allocation3 + $0x3d0] sm:$0xff] %vm5340, %v7031
        %7064 = vst.msk [vmem:[#allocation3 + $0x3f8] sm:$0xff] %vm5340, %v7032
        %7065 = vst.msk [vmem:[#allocation3 + $0x420] sm:$0xff] %vm5340, %v7033
        %7066 = vst.msk [vmem:[#allocation3 + $0x448] sm:$0xff] %vm5340, %v7034
        %7067 = vst.msk [vmem:[#allocation3 + $0x470] sm:$0xff] %vm5340, %v7035
        %7068 = vst.msk [vmem:[#allocation3 + $0x498] sm:$0xff] %vm5340, %v7036
        %7069 = vst.msk [vmem:[#allocation3 + $0x4c0] sm:$0xff] %vm5340, %v7037
        %7070 = vst.msk [vmem:[#allocation3 + $0x4e8] sm:$0xff] %vm5340, %v7038
        %v7071 = vld [vmem:[#allocation3] sm:$0xff]
        %v7072 = vld [vmem:[#allocation3 + $0x8] sm:$0xff]
        %v7073 = vld [vmem:[#allocation3 + $0x10] sm:$0xff]
        %v7074 = vld [vmem:[#allocation3 + $0x28] sm:$0xff]
        %v7075 = vld [vmem:[#allocation3 + $0x30] sm:$0xff]
        %v7076 = vld [vmem:[#allocation3 + $0x38] sm:$0xff]
        %v7077 = vld [vmem:[#allocation3 + $0x50] sm:$0xff]
        %v7078 = vld [vmem:[#allocation3 + $0x58] sm:$0xff]
        %v7079 = vld [vmem:[#allocation3 + $0x60] sm:$0xff]
        %v7080 = vld [vmem:[#allocation3 + $0x78] sm:$0xff]
        %v7081 = vld [vmem:[#allocation3 + $0x80] sm:$0xff]
        %v7082 = vld [vmem:[#allocation3 + $0x88] sm:$0xff]
        %v7083 = vld [vmem:[#allocation3 + $0xa0] sm:$0xff]
        %v7084 = vld [vmem:[#allocation3 + $0xa8] sm:$0xff]
        %v7085 = vld [vmem:[#allocation3 + $0xb0] sm:$0xff]
        %v7086 = vld [vmem:[#allocation3 + $0xc8] sm:$0xff]
        %v7087 = vld [vmem:[#allocation3 + $0xd0] sm:$0xff]
        %v7088 = vld [vmem:[#allocation3 + $0xd8] sm:$0xff]
        %v7089 = vld [vmem:[#allocation3 + $0xf0] sm:$0xff]
        %v7090 = vld [vmem:[#allocation3 + $0xf8] sm:$0xff]
        %v7091 = vld [vmem:[#allocation3 + $0x100] sm:$0xff]
        %v7092 = vld [vmem:[#allocation3 + $0x118] sm:$0xff]
        %v7093 = vld [vmem:[#allocation3 + $0x120] sm:$0xff]
        %v7094 = vld [vmem:[#allocation3 + $0x128] sm:$0xff]
        %v7095 = vld [vmem:[#allocation3 + $0x140] sm:$0xff]
        %v7096 = vld [vmem:[#allocation3 + $0x148] sm:$0xff]
        %v7097 = vld [vmem:[#allocation3 + $0x150] sm:$0xff]
        %v7098 = vld [vmem:[#allocation3 + $0x168] sm:$0xff]
        %v7099 = vld [vmem:[#allocation3 + $0x170] sm:$0xff]
        %v7100 = vld [vmem:[#allocation3 + $0x178] sm:$0xff]
        %v7101 = vld [vmem:[#allocation3 + $0x190] sm:$0xff]
        %v7102 = vld [vmem:[#allocation3 + $0x198] sm:$0xff]
        %v7103 = vld [vmem:[#allocation3 + $0x1a0] sm:$0xff]
        %v7104 = vld [vmem:[#allocation3 + $0x1b8] sm:$0xff]
        %v7105 = vld [vmem:[#allocation3 + $0x1c0] sm:$0xff]
        %v7106 = vld [vmem:[#allocation3 + $0x1c8] sm:$0xff]
        %v7107 = vld [vmem:[#allocation3 + $0x1e0] sm:$0xff]
        %v7108 = vld [vmem:[#allocation3 + $0x1e8] sm:$0xff]
        %v7109 = vld [vmem:[#allocation3 + $0x1f0] sm:$0xff]
        %v7110 = vld [vmem:[#allocation3 + $0x208] sm:$0xff]
        %v7111 = vld [vmem:[#allocation3 + $0x210] sm:$0xff]
        %v7112 = vld [vmem:[#allocation3 + $0x218] sm:$0xff]
        %v7113 = vld [vmem:[#allocation3 + $0x230] sm:$0xff]
        %v7114 = vld [vmem:[#allocation3 + $0x238] sm:$0xff]
        %v7115 = vld [vmem:[#allocation3 + $0x240] sm:$0xff]
        %v7116 = vld [vmem:[#allocation3 + $0x258] sm:$0xff]
        %v7117 = vld [vmem:[#allocation3 + $0x260] sm:$0xff]
        %v7118 = vld [vmem:[#allocation3 + $0x268] sm:$0xff]
        %v7119 = vld [vmem:[#allocation3 + $0x280] sm:$0xff]
        %v7120 = vld [vmem:[#allocation3 + $0x288] sm:$0xff]
        %v7121 = vld [vmem:[#allocation3 + $0x290] sm:$0xff]
        %v7122 = vld [vmem:[#allocation3 + $0x2a8] sm:$0xff]
        %v7123 = vld [vmem:[#allocation3 + $0x2b0] sm:$0xff]
        %v7124 = vld [vmem:[#allocation3 + $0x2b8] sm:$0xff]
        %v7125 = vld [vmem:[#allocation3 + $0x2d0] sm:$0xff]
        %v7126 = vld [vmem:[#allocation3 + $0x2d8] sm:$0xff]
        %v7127 = vld [vmem:[#allocation3 + $0x2e0] sm:$0xff]
        %v7128 = vld [vmem:[#allocation3 + $0x2f8] sm:$0xff]
        %v7129 = vld [vmem:[#allocation3 + $0x300] sm:$0xff]
        %v7130 = vld [vmem:[#allocation3 + $0x308] sm:$0xff]
        %v7131 = vld [vmem:[#allocation3 + $0x320] sm:$0xff]
        %v7132 = vld [vmem:[#allocation3 + $0x328] sm:$0xff]
        %v7133 = vld [vmem:[#allocation3 + $0x330] sm:$0xff]
        %v7134 = vld [vmem:[#allocation3 + $0x348] sm:$0xff]
        %v7135 = vld [vmem:[#allocation3 + $0x350] sm:$0xff]
        %v7136 = vld [vmem:[#allocation3 + $0x358] sm:$0xff]
        %v7137 = vld [vmem:[#allocation3 + $0x370] sm:$0xff]
        %v7138 = vld [vmem:[#allocation3 + $0x378] sm:$0xff]
        %v7139 = vld [vmem:[#allocation3 + $0x380] sm:$0xff]
        %v7140 = vld [vmem:[#allocation3 + $0x398] sm:$0xff]
        %v7141 = vld [vmem:[#allocation3 + $0x3a0] sm:$0xff]
        %v7142 = vld [vmem:[#allocation3 + $0x3a8] sm:$0xff]
        %v7143 = vld [vmem:[#allocation3 + $0x3c0] sm:$0xff]
        %v7144 = vld [vmem:[#allocation3 + $0x3c8] sm:$0xff]
        %v7145 = vld [vmem:[#allocation3 + $0x3d0] sm:$0xff]
        %v7146 = vld [vmem:[#allocation3 + $0x3e8] sm:$0xff]
        %v7147 = vld [vmem:[#allocation3 + $0x3f0] sm:$0xff]
        %v7148 = vld [vmem:[#allocation3 + $0x3f8] sm:$0xff]
        %v7149 = vld [vmem:[#allocation3 + $0x410] sm:$0xff]
        %v7150 = vld [vmem:[#allocation3 + $0x418] sm:$0xff]
        %v7151 = vld [vmem:[#allocation3 + $0x420] sm:$0xff]
        %v7152 = vld [vmem:[#allocation3 + $0x438] sm:$0xff]
        %v7153 = vld [vmem:[#allocation3 + $0x440] sm:$0xff]
        %v7154 = vld [vmem:[#allocation3 + $0x448] sm:$0xff]
        %v7155 = vld [vmem:[#allocation3 + $0x460] sm:$0xff]
        %v7156 = vld [vmem:[#allocation3 + $0x468] sm:$0xff]
        %v7157 = vld [vmem:[#allocation3 + $0x470] sm:$0xff]
        %v7158 = vld [vmem:[#allocation3 + $0x488] sm:$0xff]
        %v7159 = vld [vmem:[#allocation3 + $0x490] sm:$0xff]
        %v7160 = vld [vmem:[#allocation3 + $0x498] sm:$0xff]
        %v7161 = vld [vmem:[#allocation3 + $0x4b0] sm:$0xff]
        %v7162 = vld [vmem:[#allocation3 + $0x4b8] sm:$0xff]
        %v7163 = vld [vmem:[#allocation3 + $0x4c0] sm:$0xff]
        %v7164 = vld [vmem:[#allocation3 + $0x4d8] sm:$0xff]
        %v7165 = vld [vmem:[#allocation3 + $0x4e0] sm:$0xff]
        %v7166 = vld [vmem:[#allocation3 + $0x4e8] sm:$0xff]
        %v7167 = vld [vmem:[%s14] sm:$0xff]
        %v7168 = vld [vmem:[%s14 + $0x8] sm:$0xff]
        %v7169 = vld [vmem:[%s14 + $0x10] sm:$0xff]
        %v7170 = vld [vmem:[%s14 + $0x18] sm:$0xff]
        %v7171 = vld [vmem:[%s14 + $0x20] sm:$0xff]
        %v7172 = vld [vmem:[%s14 + $0x28] sm:$0xff]
        %v7173 = vld [vmem:[%s14 + $0x30] sm:$0xff]
        %v7174 = vld [vmem:[%s14 + $0x38] sm:$0xff]
        %v7175 = vld [vmem:[%s14 + $0x40] sm:$0xff]
        %v7176 = vld [vmem:[%s14 + $0x48] sm:$0xff]
        %v7177 = vld [vmem:[%s14 + $0x50] sm:$0xff]
        %v7178 = vld [vmem:[%s14 + $0x58] sm:$0xff]
        %v7179 = vld [vmem:[%s14 + $0x60] sm:$0xff]
        %v7180 = vld [vmem:[%s14 + $0x68] sm:$0xff]
        %v7181 = vld [vmem:[%s14 + $0x70] sm:$0xff]
        %v7182 = vld [vmem:[%s14 + $0x78] sm:$0xff]
        %v7183 = vld [vmem:[%s14 + $0x80] sm:$0xff]
        %v7184 = vld [vmem:[%s14 + $0x88] sm:$0xff]
        %v7185 = vld [vmem:[%s14 + $0x90] sm:$0xff]
        %v7186 = vld [vmem:[%s14 + $0x98] sm:$0xff]
        %v7187 = vld [vmem:[%s14 + $0xa0] sm:$0xff]
        %v7188 = vld [vmem:[%s14 + $0xa8] sm:$0xff]
        %v7189 = vld [vmem:[%s14 + $0xb0] sm:$0xff]
        %v7190 = vld [vmem:[%s14 + $0xb8] sm:$0xff]
        %v7191 = vld [vmem:[%s14 + $0xc0] sm:$0xff]
        %v7192 = vld [vmem:[%s14 + $0xc8] sm:$0xff]
        %v7193 = vld [vmem:[%s14 + $0xd0] sm:$0xff]
        %v7194 = vld [vmem:[%s14 + $0xd8] sm:$0xff]
        %v7195 = vld [vmem:[%s14 + $0xe0] sm:$0xff]
        %v7196 = vld [vmem:[%s14 + $0xe8] sm:$0xff]
        %v7197 = vld [vmem:[%s14 + $0xf0] sm:$0xff]
        %v7198 = vld [vmem:[%s14 + $0xf8] sm:$0xff]
        %v7199 = vld [vmem:[%s14 + $0x100] sm:$0xff]
        %v7200 = vld [vmem:[%s14 + $0x108] sm:$0xff]
        %v7201 = vld [vmem:[%s14 + $0x110] sm:$0xff]
        %v7202 = vld [vmem:[%s14 + $0x118] sm:$0xff]
        %v7204 = vsel %vm5340, %v7073, 0
        %v7207 = vsel %vm5340, %v7076, 0
        %v7210 = vsel %vm5340, %v7079, 0
        %v7213 = vsel %vm5340, %v7082, 0
        %v7216 = vsel %vm5340, %v7085, 0
        %v7219 = vsel %vm5340, %v7088, 0
        %v7222 = vsel %vm5340, %v7091, 0
        %v7225 = vsel %vm5340, %v7094, 0
        %v7228 = vsel %vm5340, %v7097, 0
        %v7231 = vsel %vm5340, %v7100, 0
        %v7234 = vsel %vm5340, %v7103, 0
        %v7237 = vsel %vm5340, %v7106, 0
        %v7240 = vsel %vm5340, %v7109, 0
        %v7243 = vsel %vm5340, %v7112, 0
        %v7246 = vsel %vm5340, %v7115, 0
        %v7249 = vsel %vm5340, %v7118, 0
        %v7252 = vsel %vm5340, %v7121, 0
        %v7255 = vsel %vm5340, %v7124, 0
        %v7258 = vsel %vm5340, %v7127, 0
        %v7261 = vsel %vm5340, %v7130, 0
        %v7264 = vsel %vm5340, %v7133, 0
        %v7267 = vsel %vm5340, %v7136, 0
        %v7270 = vsel %vm5340, %v7139, 0
        %v7273 = vsel %vm5340, %v7142, 0
        %v7276 = vsel %vm5340, %v7145, 0
        %v7279 = vsel %vm5340, %v7148, 0
        %v7282 = vsel %vm5340, %v7151, 0
        %v7285 = vsel %vm5340, %v7154, 0
        %v7288 = vsel %vm5340, %v7157, 0
        %v7291 = vsel %vm5340, %v7160, 0
        %v7294 = vsel %vm5340, %v7163, 0
        %v7297 = vsel %vm5340, %v7166, 0
        %7299 = vmatpush.msra.mxu0 %v7182
        %7300 = vmatpush.msra.mxu0 %v7181
        %7301 = vmatpush.msra.mxu0 %v7180
        %7302 = vmatpush.msra.mxu0 %v7179
        %7303 = vmatpush.msra.mxu0 %v7178
        %7304 = vmatpush.msra.mxu0 %v7177
        %7305 = vmatpush.msra.mxu0 %v7176
        %7306 = vmatpush.msra.mxu0 %v7175
        %7307 = vmatpush.msra.mxu0 %v7174
        %7308 = vmatpush.msra.mxu0 %v7173
        %7309 = vmatpush.msra.mxu0 %v7172
        %7310 = vmatpush.msra.mxu0 %v7171
        %7311 = vmatpush.msra.mxu0 %v7170
        %7312 = vmatpush.msra.mxu0 %v7169
        %7313 = vmatpush.msra.mxu0 %v7168
        %7314 = vmatpush.msra.mxu0 %v7167
        %7315 = vmatmul.f32.gmra.mxu0 %v7071
        %v7316 = vpop.f32.mrf.mxu0
        %v7317 = vadd.f32 0.0, %v7316
        %7318 = vmatmul.f32.gmra.mxu0 %v7074
        %v7319 = vpop.f32.mrf.mxu0
        %v7320 = vadd.f32 0.0, %v7319
        %7321 = vmatmul.f32.gmra.mxu0 %v7077
        %v7322 = vpop.f32.mrf.mxu0
        %v7323 = vadd.f32 0.0, %v7322
        %7324 = vmatmul.f32.gmra.mxu0 %v7080
        %v7325 = vpop.f32.mrf.mxu0
        %v7326 = vadd.f32 0.0, %v7325
        %7327 = vmatmul.f32.gmra.mxu0 %v7083
        %v7328 = vpop.f32.mrf.mxu0
        %v7329 = vadd.f32 0.0, %v7328
        %7330 = vmatmul.f32.gmra.mxu0 %v7086
        %v7331 = vpop.f32.mrf.mxu0
        %v7332 = vadd.f32 0.0, %v7331
        %7333 = vmatmul.f32.gmra.mxu0 %v7089
        %v7334 = vpop.f32.mrf.mxu0
        %v7335 = vadd.f32 0.0, %v7334
        %7336 = vmatmul.f32.gmra.mxu0 %v7092
        %v7337 = vpop.f32.mrf.mxu0
        %v7338 = vadd.f32 0.0, %v7337
        %7339 = vmatmul.f32.gmra.mxu0 %v7095
        %v7340 = vpop.f32.mrf.mxu0
        %v7341 = vadd.f32 0.0, %v7340
        %7342 = vmatmul.f32.gmra.mxu0 %v7098
        %v7343 = vpop.f32.mrf.mxu0
        %v7344 = vadd.f32 0.0, %v7343
        %7345 = vmatmul.f32.gmra.mxu0 %v7101
        %v7346 = vpop.f32.mrf.mxu0
        %v7347 = vadd.f32 0.0, %v7346
        %7348 = vmatmul.f32.gmra.mxu0 %v7104
        %v7349 = vpop.f32.mrf.mxu0
        %v7350 = vadd.f32 0.0, %v7349
        %7351 = vmatmul.f32.gmra.mxu0 %v7107
        %v7352 = vpop.f32.mrf.mxu0
        %v7353 = vadd.f32 0.0, %v7352
        %7354 = vmatmul.f32.gmra.mxu0 %v7110
        %v7355 = vpop.f32.mrf.mxu0
        %v7356 = vadd.f32 0.0, %v7355
        %7357 = vmatmul.f32.gmra.mxu0 %v7113
        %v7358 = vpop.f32.mrf.mxu0
        %v7359 = vadd.f32 0.0, %v7358
        %7360 = vmatmul.f32.gmra.mxu0 %v7116
        %v7361 = vpop.f32.mrf.mxu0
        %v7362 = vadd.f32 0.0, %v7361
        %7363 = vmatmul.f32.gmra.mxu0 %v7119
        %v7364 = vpop.f32.mrf.mxu0
        %v7365 = vadd.f32 0.0, %v7364
        %7366 = vmatmul.f32.gmra.mxu0 %v7122
        %v7367 = vpop.f32.mrf.mxu0
        %v7368 = vadd.f32 0.0, %v7367
        %7369 = vmatmul.f32.gmra.mxu0 %v7125
        %v7370 = vpop.f32.mrf.mxu0
        %v7371 = vadd.f32 0.0, %v7370
        %7372 = vmatmul.f32.gmra.mxu0 %v7128
        %v7373 = vpop.f32.mrf.mxu0
        %v7374 = vadd.f32 0.0, %v7373
        %7375 = vmatmul.f32.gmra.mxu0 %v7131
        %v7376 = vpop.f32.mrf.mxu0
        %v7377 = vadd.f32 0.0, %v7376
        %7378 = vmatmul.f32.gmra.mxu0 %v7134
        %v7379 = vpop.f32.mrf.mxu0
        %v7380 = vadd.f32 0.0, %v7379
        %7381 = vmatmul.f32.gmra.mxu0 %v7137
        %v7382 = vpop.f32.mrf.mxu0
        %v7383 = vadd.f32 0.0, %v7382
        %7384 = vmatmul.f32.gmra.mxu0 %v7140
        %v7385 = vpop.f32.mrf.mxu0
        %v7386 = vadd.f32 0.0, %v7385
        %7387 = vmatmul.f32.gmra.mxu0 %v7143
        %v7388 = vpop.f32.mrf.mxu0
        %v7389 = vadd.f32 0.0, %v7388
        %7390 = vmatmul.f32.gmra.mxu0 %v7146
        %v7391 = vpop.f32.mrf.mxu0
        %v7392 = vadd.f32 0.0, %v7391
        %7393 = vmatmul.f32.gmra.mxu0 %v7149
        %v7394 = vpop.f32.mrf.mxu0
        %v7395 = vadd.f32 0.0, %v7394
        %7396 = vmatmul.f32.gmra.mxu0 %v7152
        %v7397 = vpop.f32.mrf.mxu0
        %v7398 = vadd.f32 0.0, %v7397
        %7399 = vmatmul.f32.gmra.mxu0 %v7155
        %v7400 = vpop.f32.mrf.mxu0
        %v7401 = vadd.f32 0.0, %v7400
        %7402 = vmatmul.f32.gmra.mxu0 %v7158
        %v7403 = vpop.f32.mrf.mxu0
        %v7404 = vadd.f32 0.0, %v7403
        %7405 = vmatmul.f32.gmra.mxu0 %v7161
        %v7406 = vpop.f32.mrf.mxu0
        %v7407 = vadd.f32 0.0, %v7406
        %7408 = vmatmul.f32.gmra.mxu0 %v7164
        %v7409 = vpop.f32.mrf.mxu0
        %v7410 = vadd.f32 0.0, %v7409
        %7411 = vdwg.mxu0
        %7412 = vmatpush.msra.mxu0 %v7198
        %7413 = vmatpush.msra.mxu0 %v7197
        %7414 = vmatpush.msra.mxu0 %v7196
        %7415 = vmatpush.msra.mxu0 %v7195
        %7416 = vmatpush.msra.mxu0 %v7194
        %7417 = vmatpush.msra.mxu0 %v7193
        %7418 = vmatpush.msra.mxu0 %v7192
        %7419 = vmatpush.msra.mxu0 %v7191
        %7420 = vmatpush.msra.mxu0 %v7190
        %7421 = vmatpush.msra.mxu0 %v7189
        %7422 = vmatpush.msra.mxu0 %v7188
        %7423 = vmatpush.msra.mxu0 %v7187
        %7424 = vmatpush.msra.mxu0 %v7186
        %7425 = vmatpush.msra.mxu0 %v7185
        %7426 = vmatpush.msra.mxu0 %v7184
        %7427 = vmatpush.msra.mxu0 %v7183
        %7428 = vmatmul.f32.gmra.mxu0 %v7072
        %v7429 = vpop.f32.mrf.mxu0
        %v7430 = vadd.f32 %v7317, %v7429
        %7431 = vmatmul.f32.gmra.mxu0 %v7075
        %v7432 = vpop.f32.mrf.mxu0
        %v7433 = vadd.f32 %v7320, %v7432
        %7434 = vmatmul.f32.gmra.mxu0 %v7078
        %v7435 = vpop.f32.mrf.mxu0
        %v7436 = vadd.f32 %v7323, %v7435
        %7437 = vmatmul.f32.gmra.mxu0 %v7081
        %v7438 = vpop.f32.mrf.mxu0
        %v7439 = vadd.f32 %v7326, %v7438
        %7440 = vmatmul.f32.gmra.mxu0 %v7084
        %v7441 = vpop.f32.mrf.mxu0
        %v7442 = vadd.f32 %v7329, %v7441
        %7443 = vmatmul.f32.gmra.mxu0 %v7087
        %v7444 = vpop.f32.mrf.mxu0
        %v7445 = vadd.f32 %v7332, %v7444
        %7446 = vmatmul.f32.gmra.mxu0 %v7090
        %v7447 = vpop.f32.mrf.mxu0
        %v7448 = vadd.f32 %v7335, %v7447
        %7449 = vmatmul.f32.gmra.mxu0 %v7093
        %v7450 = vpop.f32.mrf.mxu0
        %v7451 = vadd.f32 %v7338, %v7450
        %7452 = vmatmul.f32.gmra.mxu0 %v7096
        %v7453 = vpop.f32.mrf.mxu0
        %v7454 = vadd.f32 %v7341, %v7453
        %7455 = vmatmul.f32.gmra.mxu0 %v7099
        %v7456 = vpop.f32.mrf.mxu0
        %v7457 = vadd.f32 %v7344, %v7456
        %7458 = vmatmul.f32.gmra.mxu0 %v7102
        %v7459 = vpop.f32.mrf.mxu0
        %v7460 = vadd.f32 %v7347, %v7459
        %7461 = vmatmul.f32.gmra.mxu0 %v7105
        %v7462 = vpop.f32.mrf.mxu0
        %v7463 = vadd.f32 %v7350, %v7462
        %7464 = vmatmul.f32.gmra.mxu0 %v7108
        %v7465 = vpop.f32.mrf.mxu0
        %v7466 = vadd.f32 %v7353, %v7465
        %7467 = vmatmul.f32.gmra.mxu0 %v7111
        %v7468 = vpop.f32.mrf.mxu0
        %v7469 = vadd.f32 %v7356, %v7468
        %7470 = vmatmul.f32.gmra.mxu0 %v7114
        %v7471 = vpop.f32.mrf.mxu0
        %v7472 = vadd.f32 %v7359, %v7471
        %7473 = vmatmul.f32.gmra.mxu0 %v7117
        %v7474 = vpop.f32.mrf.mxu0
        %v7475 = vadd.f32 %v7362, %v7474
        %7476 = vmatmul.f32.gmra.mxu0 %v7120
        %v7477 = vpop.f32.mrf.mxu0
        %v7478 = vadd.f32 %v7365, %v7477
        %7479 = vmatmul.f32.gmra.mxu0 %v7123
        %v7480 = vpop.f32.mrf.mxu0
        %v7481 = vadd.f32 %v7368, %v7480
        %7482 = vmatmul.f32.gmra.mxu0 %v7126
        %v7483 = vpop.f32.mrf.mxu0
        %v7484 = vadd.f32 %v7371, %v7483
        %7485 = vmatmul.f32.gmra.mxu0 %v7129
        %v7486 = vpop.f32.mrf.mxu0
        %v7487 = vadd.f32 %v7374, %v7486
        %7488 = vmatmul.f32.gmra.mxu0 %v7132
        %v7489 = vpop.f32.mrf.mxu0
        %v7490 = vadd.f32 %v7377, %v7489
        %7491 = vmatmul.f32.gmra.mxu0 %v7135
        %v7492 = vpop.f32.mrf.mxu0
        %v7493 = vadd.f32 %v7380, %v7492
        %7494 = vmatmul.f32.gmra.mxu0 %v7138
        %v7495 = vpop.f32.mrf.mxu0
        %v7496 = vadd.f32 %v7383, %v7495
        %7497 = vmatmul.f32.gmra.mxu0 %v7141
        %v7498 = vpop.f32.mrf.mxu0
        %v7499 = vadd.f32 %v7386, %v7498
        %7500 = vmatmul.f32.gmra.mxu0 %v7144
        %v7501 = vpop.f32.mrf.mxu0
        %v7502 = vadd.f32 %v7389, %v7501
        %7503 = vmatmul.f32.gmra.mxu0 %v7147
        %v7504 = vpop.f32.mrf.mxu0
        %v7505 = vadd.f32 %v7392, %v7504
        %7506 = vmatmul.f32.gmra.mxu0 %v7150
        %v7507 = vpop.f32.mrf.mxu0
        %v7508 = vadd.f32 %v7395, %v7507
        %7509 = vmatmul.f32.gmra.mxu0 %v7153
        %v7510 = vpop.f32.mrf.mxu0
        %v7511 = vadd.f32 %v7398, %v7510
        %7512 = vmatmul.f32.gmra.mxu0 %v7156
        %v7513 = vpop.f32.mrf.mxu0
        %v7514 = vadd.f32 %v7401, %v7513
        %7515 = vmatmul.f32.gmra.mxu0 %v7159
        %v7516 = vpop.f32.mrf.mxu0
        %v7517 = vadd.f32 %v7404, %v7516
        %7518 = vmatmul.f32.gmra.mxu0 %v7162
        %v7519 = vpop.f32.mrf.mxu0
        %v7520 = vadd.f32 %v7407, %v7519
        %7521 = vmatmul.f32.gmra.mxu0 %v7165
        %v7522 = vpop.f32.mrf.mxu0
        %v7523 = vadd.f32 %v7410, %v7522
        %7524 = vdwg.mxu0
        %7525 = vmatpush.msra.mxu0 0.0
        %7526 = vmatpush.msra.mxu0 0.0
        %7527 = vmatpush.msra.mxu0 0.0
        %7528 = vmatpush.msra.mxu0 0.0
        %7529 = vmatpush.msra.mxu0 0.0
        %7530 = vmatpush.msra.mxu0 0.0
        %7531 = vmatpush.msra.mxu0 0.0
        %7532 = vmatpush.msra.mxu0 0.0
        %7533 = vmatpush.msra.mxu0 0.0
        %7534 = vmatpush.msra.mxu0 0.0
        %7535 = vmatpush.msra.mxu0 0.0
        %7536 = vmatpush.msra.mxu0 0.0
        %7537 = vmatpush.msra.mxu0 %v7202
        %7538 = vmatpush.msra.mxu0 %v7201
        %7539 = vmatpush.msra.mxu0 %v7200
        %7540 = vmatpush.msra.mxu0 %v7199
        %7541 = vmatmul.f32.gmra.mxu0 %v7204
        %v7542 = vpop.f32.mrf.mxu0
        %v7543 = vadd.f32 %v7430, %v7542
        %7544 = vmatmul.f32.gmra.mxu0 %v7207
        %v7545 = vpop.f32.mrf.mxu0
        %v7546 = vadd.f32 %v7433, %v7545
        %7547 = vmatmul.f32.gmra.mxu0 %v7210
        %v7548 = vpop.f32.mrf.mxu0
        %v7549 = vadd.f32 %v7436, %v7548
        %7550 = vmatmul.f32.gmra.mxu0 %v7213
        %v7551 = vpop.f32.mrf.mxu0
        %v7552 = vadd.f32 %v7439, %v7551
        %7553 = vmatmul.f32.gmra.mxu0 %v7216
        %v7554 = vpop.f32.mrf.mxu0
        %v7555 = vadd.f32 %v7442, %v7554
        %7556 = vmatmul.f32.gmra.mxu0 %v7219
        %v7557 = vpop.f32.mrf.mxu0
        %v7558 = vadd.f32 %v7445, %v7557
        %7559 = vmatmul.f32.gmra.mxu0 %v7222
        %v7560 = vpop.f32.mrf.mxu0
        %v7561 = vadd.f32 %v7448, %v7560
        %7562 = vmatmul.f32.gmra.mxu0 %v7225
        %v7563 = vpop.f32.mrf.mxu0
        %v7564 = vadd.f32 %v7451, %v7563
        %7565 = vmatmul.f32.gmra.mxu0 %v7228
        %v7566 = vpop.f32.mrf.mxu0
        %v7567 = vadd.f32 %v7454, %v7566
        %7568 = vmatmul.f32.gmra.mxu0 %v7231
        %v7569 = vpop.f32.mrf.mxu0
        %v7570 = vadd.f32 %v7457, %v7569
        %7571 = vmatmul.f32.gmra.mxu0 %v7234
        %v7572 = vpop.f32.mrf.mxu0
        %v7573 = vadd.f32 %v7460, %v7572
        %7574 = vmatmul.f32.gmra.mxu0 %v7237
        %v7575 = vpop.f32.mrf.mxu0
        %v7576 = vadd.f32 %v7463, %v7575
        %7577 = vmatmul.f32.gmra.mxu0 %v7240
        %v7578 = vpop.f32.mrf.mxu0
        %v7579 = vadd.f32 %v7466, %v7578
        %7580 = vmatmul.f32.gmra.mxu0 %v7243
        %v7581 = vpop.f32.mrf.mxu0
        %v7582 = vadd.f32 %v7469, %v7581
        %7583 = vmatmul.f32.gmra.mxu0 %v7246
        %v7584 = vpop.f32.mrf.mxu0
        %v7585 = vadd.f32 %v7472, %v7584
        %7586 = vmatmul.f32.gmra.mxu0 %v7249
        %v7587 = vpop.f32.mrf.mxu0
        %v7588 = vadd.f32 %v7475, %v7587
        %7589 = vmatmul.f32.gmra.mxu0 %v7252
        %v7590 = vpop.f32.mrf.mxu0
        %v7591 = vadd.f32 %v7478, %v7590
        %7592 = vmatmul.f32.gmra.mxu0 %v7255
        %v7593 = vpop.f32.mrf.mxu0
        %v7594 = vadd.f32 %v7481, %v7593
        %7595 = vmatmul.f32.gmra.mxu0 %v7258
        %v7596 = vpop.f32.mrf.mxu0
        %v7597 = vadd.f32 %v7484, %v7596
        %7598 = vmatmul.f32.gmra.mxu0 %v7261
        %v7599 = vpop.f32.mrf.mxu0
        %v7600 = vadd.f32 %v7487, %v7599
        %7601 = vmatmul.f32.gmra.mxu0 %v7264
        %v7602 = vpop.f32.mrf.mxu0
        %v7603 = vadd.f32 %v7490, %v7602
        %7604 = vmatmul.f32.gmra.mxu0 %v7267
        %v7605 = vpop.f32.mrf.mxu0
        %v7606 = vadd.f32 %v7493, %v7605
        %7607 = vmatmul.f32.gmra.mxu0 %v7270
        %v7608 = vpop.f32.mrf.mxu0
        %v7609 = vadd.f32 %v7496, %v7608
        %7610 = vmatmul.f32.gmra.mxu0 %v7273
        %v7611 = vpop.f32.mrf.mxu0
        %v7612 = vadd.f32 %v7499, %v7611
        %7613 = vmatmul.f32.gmra.mxu0 %v7276
        %v7614 = vpop.f32.mrf.mxu0
        %v7615 = vadd.f32 %v7502, %v7614
        %7616 = vmatmul.f32.gmra.mxu0 %v7279
        %v7617 = vpop.f32.mrf.mxu0
        %v7618 = vadd.f32 %v7505, %v7617
        %7619 = vmatmul.f32.gmra.mxu0 %v7282
        %v7620 = vpop.f32.mrf.mxu0
        %v7621 = vadd.f32 %v7508, %v7620
        %7622 = vmatmul.f32.gmra.mxu0 %v7285
        %v7623 = vpop.f32.mrf.mxu0
        %v7624 = vadd.f32 %v7511, %v7623
        %7625 = vmatmul.f32.gmra.mxu0 %v7288
        %v7626 = vpop.f32.mrf.mxu0
        %v7627 = vadd.f32 %v7514, %v7626
        %7628 = vmatmul.f32.gmra.mxu0 %v7291
        %v7629 = vpop.f32.mrf.mxu0
        %v7630 = vadd.f32 %v7517, %v7629
        %7631 = vmatmul.f32.gmra.mxu0 %v7294
        %v7632 = vpop.f32.mrf.mxu0
        %v7633 = vadd.f32 %v7520, %v7632
        %7634 = vmatmul.f32.gmra.mxu0 %v7297
        %v7635 = vpop.f32.mrf.mxu0
        %v7636 = vadd.f32 %v7523, %v7635
        %7637 = vdwg.mxu0
        %7670 = vrot.lane.b32.xlu0 %v5245, 64
        %v7671 = vpop.permute.xlu0 %7670
        %7672 = vrot.lane.b32.xlu0 %v5248, 64
        %v7673 = vpop.permute.xlu0 %7672
        %7674 = vrot.lane.b32.xlu0 %v5251, 64
        %v7675 = vpop.permute.xlu0 %7674
        %7676 = vrot.lane.b32.xlu0 %v5254, 64
        %v7677 = vpop.permute.xlu0 %7676
        %7678 = vrot.lane.b32.xlu0 %v5257, 64
        %v7679 = vpop.permute.xlu0 %7678
        %7680 = vrot.lane.b32.xlu0 %v5260, 64
        %v7681 = vpop.permute.xlu0 %7680
        %7682 = vrot.lane.b32.xlu0 %v5263, 64
        %v7683 = vpop.permute.xlu0 %7682
        %7684 = vrot.lane.b32.xlu0 %v5266, 64
        %v7685 = vpop.permute.xlu0 %7684
        %7686 = vrot.lane.b32.xlu0 %v5269, 64
        %v7687 = vpop.permute.xlu0 %7686
        %7688 = vrot.lane.b32.xlu0 %v5272, 64
        %v7689 = vpop.permute.xlu0 %7688
        %7690 = vrot.lane.b32.xlu0 %v5275, 64
        %v7691 = vpop.permute.xlu0 %7690
        %7692 = vrot.lane.b32.xlu0 %v5278, 64
        %v7693 = vpop.permute.xlu0 %7692
        %7694 = vrot.lane.b32.xlu0 %v5281, 64
        %v7695 = vpop.permute.xlu0 %7694
        %7696 = vrot.lane.b32.xlu0 %v5284, 64
        %v7697 = vpop.permute.xlu0 %7696
        %7698 = vrot.lane.b32.xlu0 %v5287, 64
        %v7699 = vpop.permute.xlu0 %7698
        %7700 = vrot.lane.b32.xlu0 %v5290, 64
        %v7701 = vpop.permute.xlu0 %7700
        %7702 = vrot.lane.b32.xlu0 %v5293, 64
        %v7703 = vpop.permute.xlu0 %7702
        %7704 = vrot.lane.b32.xlu0 %v5296, 64
        %v7705 = vpop.permute.xlu0 %7704
        %7706 = vrot.lane.b32.xlu0 %v5299, 64
        %v7707 = vpop.permute.xlu0 %7706
        %7708 = vrot.lane.b32.xlu0 %v5302, 64
        %v7709 = vpop.permute.xlu0 %7708
        %7710 = vrot.lane.b32.xlu0 %v5305, 64
        %v7711 = vpop.permute.xlu0 %7710
        %7712 = vrot.lane.b32.xlu0 %v5308, 64
        %v7713 = vpop.permute.xlu0 %7712
        %7714 = vrot.lane.b32.xlu0 %v5311, 64
        %v7715 = vpop.permute.xlu0 %7714
        %7716 = vrot.lane.b32.xlu0 %v5314, 64
        %v7717 = vpop.permute.xlu0 %7716
        %7718 = vrot.lane.b32.xlu0 %v5317, 64
        %v7719 = vpop.permute.xlu0 %7718
        %7720 = vrot.lane.b32.xlu0 %v5320, 64
        %v7721 = vpop.permute.xlu0 %7720
        %7722 = vrot.lane.b32.xlu0 %v5323, 64
        %v7723 = vpop.permute.xlu0 %7722
        %7724 = vrot.lane.b32.xlu0 %v5326, 64
        %v7725 = vpop.permute.xlu0 %7724
        %7726 = vrot.lane.b32.xlu0 %v5329, 64
        %v7727 = vpop.permute.xlu0 %7726
        %7728 = vrot.lane.b32.xlu0 %v5332, 64
        %v7729 = vpop.permute.xlu0 %7728
        %7730 = vrot.lane.b32.xlu0 %v5335, 64
        %v7731 = vpop.permute.xlu0 %7730
        %7732 = vrot.lane.b32.xlu0 %v5338, 64
        %v7733 = vpop.permute.xlu0 %7732
        %7798 = vrot.lane.b32.xlu0 %v7543, 96
        %v7799 = vpop.permute.xlu0 %7798
        %7800 = vrot.lane.b32.xlu0 %v7546, 96
        %v7801 = vpop.permute.xlu0 %7800
        %7802 = vrot.lane.b32.xlu0 %v7549, 96
        %v7803 = vpop.permute.xlu0 %7802
        %7804 = vrot.lane.b32.xlu0 %v7552, 96
        %v7805 = vpop.permute.xlu0 %7804
        %7806 = vrot.lane.b32.xlu0 %v7555, 96
        %v7807 = vpop.permute.xlu0 %7806
        %7808 = vrot.lane.b32.xlu0 %v7558, 96
        %v7809 = vpop.permute.xlu0 %7808
        %7810 = vrot.lane.b32.xlu0 %v7561, 96
        %v7811 = vpop.permute.xlu0 %7810
        %7812 = vrot.lane.b32.xlu0 %v7564, 96
        %v7813 = vpop.permute.xlu0 %7812
        %7814 = vrot.lane.b32.xlu0 %v7567, 96
        %v7815 = vpop.permute.xlu0 %7814
        %7816 = vrot.lane.b32.xlu0 %v7570, 96
        %v7817 = vpop.permute.xlu0 %7816
        %7818 = vrot.lane.b32.xlu0 %v7573, 96
        %v7819 = vpop.permute.xlu0 %7818
        %7820 = vrot.lane.b32.xlu0 %v7576, 96
        %v7821 = vpop.permute.xlu0 %7820
        %7822 = vrot.lane.b32.xlu0 %v7579, 96
        %v7823 = vpop.permute.xlu0 %7822
        %7824 = vrot.lane.b32.xlu0 %v7582, 96
        %v7825 = vpop.permute.xlu0 %7824
        %7826 = vrot.lane.b32.xlu0 %v7585, 96
        %v7827 = vpop.permute.xlu0 %7826
        %7828 = vrot.lane.b32.xlu0 %v7588, 96
        %v7829 = vpop.permute.xlu0 %7828
        %7830 = vrot.lane.b32.xlu0 %v7591, 96
        %v7831 = vpop.permute.xlu0 %7830
        %7832 = vrot.lane.b32.xlu0 %v7594, 96
        %v7833 = vpop.permute.xlu0 %7832
        %7834 = vrot.lane.b32.xlu0 %v7597, 96
        %v7835 = vpop.permute.xlu0 %7834
        %7836 = vrot.lane.b32.xlu0 %v7600, 96
        %v7837 = vpop.permute.xlu0 %7836
        %7838 = vrot.lane.b32.xlu0 %v7603, 96
        %v7839 = vpop.permute.xlu0 %7838
        %7840 = vrot.lane.b32.xlu0 %v7606, 96
        %v7841 = vpop.permute.xlu0 %7840
        %7842 = vrot.lane.b32.xlu0 %v7609, 96
        %v7843 = vpop.permute.xlu0 %7842
        %7844 = vrot.lane.b32.xlu0 %v7612, 96
        %v7845 = vpop.permute.xlu0 %7844
        %7846 = vrot.lane.b32.xlu0 %v7615, 96
        %v7847 = vpop.permute.xlu0 %7846
        %7848 = vrot.lane.b32.xlu0 %v7618, 96
        %v7849 = vpop.permute.xlu0 %7848
        %7850 = vrot.lane.b32.xlu0 %v7621, 96
        %v7851 = vpop.permute.xlu0 %7850
        %7852 = vrot.lane.b32.xlu0 %v7624, 96
        %v7853 = vpop.permute.xlu0 %7852
        %7854 = vrot.lane.b32.xlu0 %v7627, 96
        %v7855 = vpop.permute.xlu0 %7854
        %7856 = vrot.lane.b32.xlu0 %v7630, 96
        %v7857 = vpop.permute.xlu0 %7856
        %7858 = vrot.lane.b32.xlu0 %v7633, 96
        %v7859 = vpop.permute.xlu0 %7858
        %7860 = vrot.lane.b32.xlu0 %v7636, 96
        %v7861 = vpop.permute.xlu0 %7860
        %v7894 = vsel %vm520, %v2875, %v7671
        %v7895 = vsel %vm520, %v2878, %v7673
        %v7896 = vsel %vm520, %v2881, %v7675
        %v7897 = vsel %vm520, %v2884, %v7677
        %v7898 = vsel %vm520, %v2887, %v7679
        %v7899 = vsel %vm520, %v2890, %v7681
        %v7900 = vsel %vm520, %v2893, %v7683
        %v7901 = vsel %vm520, %v2896, %v7685
        %v7902 = vsel %vm520, %v2899, %v7687
        %v7903 = vsel %vm520, %v2902, %v7689
        %v7904 = vsel %vm520, %v2905, %v7691
        %v7905 = vsel %vm520, %v2908, %v7693
        %v7906 = vsel %vm520, %v2911, %v7695
        %v7907 = vsel %vm520, %v2914, %v7697
        %v7908 = vsel %vm520, %v2917, %v7699
        %v7909 = vsel %vm520, %v2920, %v7701
        %v7910 = vsel %vm520, %v2923, %v7703
        %v7911 = vsel %vm520, %v2926, %v7705
        %v7912 = vsel %vm520, %v2929, %v7707
        %v7913 = vsel %vm520, %v2932, %v7709
        %v7914 = vsel %vm520, %v2935, %v7711
        %v7915 = vsel %vm520, %v2938, %v7713
        %v7916 = vsel %vm520, %v2941, %v7715
        %v7917 = vsel %vm520, %v2944, %v7717
        %v7918 = vsel %vm520, %v2947, %v7719
        %v7919 = vsel %vm520, %v2950, %v7721
        %v7920 = vsel %vm520, %v2953, %v7723
        %v7921 = vsel %vm520, %v2956, %v7725
        %v7922 = vsel %vm520, %v2959, %v7727
        %v7923 = vsel %vm520, %v2962, %v7729
        %v7924 = vsel %vm520, %v2965, %v7731
        %v7925 = vsel %vm520, %v2968, %v7733
        %v7926 = vsel %vm6302, %v7894, %v7799
        %v7927 = vsel %vm6302, %v7895, %v7801
        %v7928 = vsel %vm6302, %v7896, %v7803
        %v7929 = vsel %vm6302, %v7897, %v7805
        %v7930 = vsel %vm6302, %v7898, %v7807
        %v7931 = vsel %vm6302, %v7899, %v7809
        %v7932 = vsel %vm6302, %v7900, %v7811
        %v7933 = vsel %vm6302, %v7901, %v7813
        %v7934 = vsel %vm6302, %v7902, %v7815
        %v7935 = vsel %vm6302, %v7903, %v7817
        %v7936 = vsel %vm6302, %v7904, %v7819
        %v7937 = vsel %vm6302, %v7905, %v7821
        %v7938 = vsel %vm6302, %v7906, %v7823
        %v7939 = vsel %vm6302, %v7907, %v7825
        %v7940 = vsel %vm6302, %v7908, %v7827
        %v7941 = vsel %vm6302, %v7909, %v7829
        %v7942 = vsel %vm6302, %v7910, %v7831
        %v7943 = vsel %vm6302, %v7911, %v7833
        %v7944 = vsel %vm6302, %v7912, %v7835
        %v7945 = vsel %vm6302, %v7913, %v7837
        %v7946 = vsel %vm6302, %v7914, %v7839
        %v7947 = vsel %vm6302, %v7915, %v7841
        %v7948 = vsel %vm6302, %v7916, %v7843
        %v7949 = vsel %vm6302, %v7917, %v7845
        %v7950 = vsel %vm6302, %v7918, %v7847
        %v7951 = vsel %vm6302, %v7919, %v7849
        %v7952 = vsel %vm6302, %v7920, %v7851
        %v7953 = vsel %vm6302, %v7921, %v7853
        %v7954 = vsel %vm6302, %v7922, %v7855
        %v7955 = vsel %vm6302, %v7923, %v7857
        %v7956 = vsel %vm6302, %v7924, %v7859
        %v7957 = vsel %vm6302, %v7925, %v7861
        %v7958 = vld [vmem:[%s9] sm:$0xff]
        %v7959 = vld [vmem:[%s9 + $0x8] sm:$0xff]
        %v7960 = vld [vmem:[%s9 + $0x10] sm:$0xff]
        %v7961 = vld [vmem:[%s9 + $0x18] sm:$0xff]
        %v7962 = vld [vmem:[%s9 + $0x20] sm:$0xff]
        %v7963 = vld [vmem:[%s9 + $0x28] sm:$0xff]
        %v7964 = vld [vmem:[%s9 + $0x30] sm:$0xff]
        %v7965 = vld [vmem:[%s9 + $0x38] sm:$0xff]
        %7966 = vmatpush.msra.mxu0 0.0
        %7967 = vmatpush.msra.mxu0 0.0
        %7968 = vmatpush.msra.mxu0 0.0
        %7969 = vmatpush.msra.mxu0 0.0
        %7970 = vmatpush.msra.mxu0 0.0
        %7971 = vmatpush.msra.mxu0 0.0
        %7972 = vmatpush.msra.mxu0 0.0
        %7973 = vmatpush.msra.mxu0 0.0
        %7974 = vmatpush.msra.mxu0 %v7965
        %7975 = vmatpush.msra.mxu0 %v7964
        %7976 = vmatpush.msra.mxu0 %v7963
        %7977 = vmatpush.msra.mxu0 %v7962
        %7978 = vmatpush.msra.mxu0 %v7961
        %7979 = vmatpush.msra.mxu0 %v7960
        %7980 = vmatpush.msra.mxu0 %v7959
        %7981 = vmatpush.msra.mxu0 %v7958
        %7982 = vmatmul.f32.gmra.mxu0 %v778
        %v7983 = vpop.f32.mrf.mxu0
        %v7984 = vadd.f32 0.0, %v7983
        %7985 = vdwg.mxu0
        %v7986 = vmul.f32 %v7984, %v7984
        %v7988 = vrot.slane %v7986, 7
        %v7990 = vsub.f32 %v7984, %v7988
        %v7991 = vadd.f32 %v7990, 1e-05
        %v7992 = vrsqrt.pop %v7991
        %v7993 = vmul.f32 %v7992, %v7991
        %v7994 = vmul.f32 %v7993, %v7992
        %v7995 = vmul.f32 0.5, %v7994
        %v7996 = vsub.f32 1.5, %v7995
        %v7997 = vmul.f32 %v7992, %v7996
        %vm7998 = vweird.f32 %v7991
        %vm7999 = vweird.f32 %v7992
        %vm8000 = vmor %vm7998, %vm7999
        %v8001 = vsel %vm8000, %v7992, %v7997
        %v8002 = vperm.slane %v7984, 0
        %v8003 = vsub.f32 %v565, %v8002
        %v8004 = vsub.f32 %v566, %v8002
        %v8005 = vsub.f32 %v567, %v8002
        %v8006 = vsub.f32 %v568, %v8002
        %v8007 = vsub.f32 %v569, %v8002
        %v8008 = vsub.f32 %v570, %v8002
        %v8009 = vsub.f32 %v571, %v8002
        %v8010 = vsub.f32 %v572, %v8002
        %v8011 = vsub.f32 %v573, %v8002
        %v8012 = vsub.f32 %v574, %v8002
        %v8013 = vsub.f32 %v575, %v8002
        %v8014 = vsub.f32 %v576, %v8002
        %v8015 = vsub.f32 %v577, %v8002
        %v8016 = vsub.f32 %v578, %v8002
        %v8017 = vsub.f32 %v579, %v8002
        %v8018 = vsub.f32 %v580, %v8002
        %v8019 = vsub.f32 %v581, %v8002
        %v8020 = vsub.f32 %v582, %v8002
        %v8021 = vsub.f32 %v583, %v8002
        %v8022 = vsub.f32 %v584, %v8002
        %v8023 = vsub.f32 %v585, %v8002
        %v8024 = vsub.f32 %v586, %v8002
        %v8025 = vsub.f32 %v587, %v8002
        %v8026 = vsub.f32 %v588, %v8002
        %v8027 = vsub.f32 %v589, %v8002
        %v8028 = vsub.f32 %v590, %v8002
        %v8029 = vsub.f32 %v591, %v8002
        %v8030 = vsub.f32 %v592, %v8002
        %v8031 = vsub.f32 %v593, %v8002
        %v8032 = vsub.f32 %v594, %v8002
        %v8033 = vsub.f32 %v595, %v8002
        %v8034 = vsub.f32 %v596, %v8002
        %v8035 = vld [vmem:[%s7] sm:$0x1]
        %v8037 = vperm.slane %v8035, 0
        %v8039 = vmul.f32 %v8001, %v8037
        %v8040 = vperm.slane %v8039, 1
        %v8041 = vmul.f32 %v8003, %v8040
        %v8042 = vmul.f32 %v8004, %v8040
        %v8043 = vmul.f32 %v8005, %v8040
        %v8044 = vmul.f32 %v8006, %v8040
        %v8045 = vmul.f32 %v8007, %v8040
        %v8046 = vmul.f32 %v8008, %v8040
        %v8047 = vmul.f32 %v8009, %v8040
        %v8048 = vmul.f32 %v8010, %v8040
        %v8049 = vmul.f32 %v8011, %v8040
        %v8050 = vmul.f32 %v8012, %v8040
        %v8051 = vmul.f32 %v8013, %v8040
        %v8052 = vmul.f32 %v8014, %v8040
        %v8053 = vmul.f32 %v8015, %v8040
        %v8054 = vmul.f32 %v8016, %v8040
        %v8055 = vmul.f32 %v8017, %v8040
        %v8056 = vmul.f32 %v8018, %v8040
        %v8057 = vmul.f32 %v8019, %v8040
        %v8058 = vmul.f32 %v8020, %v8040
        %v8059 = vmul.f32 %v8021, %v8040
        %v8060 = vmul.f32 %v8022, %v8040
        %v8061 = vmul.f32 %v8023, %v8040
        %v8062 = vmul.f32 %v8024, %v8040
        %v8063 = vmul.f32 %v8025, %v8040
        %v8064 = vmul.f32 %v8026, %v8040
        %v8065 = vmul.f32 %v8027, %v8040
        %v8066 = vmul.f32 %v8028, %v8040
        %v8067 = vmul.f32 %v8029, %v8040
        %v8068 = vmul.f32 %v8030, %v8040
        %v8069 = vmul.f32 %v8031, %v8040
        %v8070 = vmul.f32 %v8032, %v8040
        %v8071 = vmul.f32 %v8033, %v8040
        %v8072 = vmul.f32 %v8034, %v8040
        %v8073 = vld [vmem:[%s8] sm:$0x1]
        %v8075 = vperm.slane %v8073, 0
        %v8077 = vadd.f32 %v8041, %v8075
        %v8078 = vadd.f32 %v8042, %v8075
        %v8079 = vadd.f32 %v8043, %v8075
        %v8080 = vadd.f32 %v8044, %v8075
        %v8081 = vadd.f32 %v8045, %v8075
        %v8082 = vadd.f32 %v8046, %v8075
        %v8083 = vadd.f32 %v8047, %v8075
        %v8084 = vadd.f32 %v8048, %v8075
        %v8085 = vadd.f32 %v8049, %v8075
        %v8086 = vadd.f32 %v8050, %v8075
        %v8087 = vadd.f32 %v8051, %v8075
        %v8088 = vadd.f32 %v8052, %v8075
        %v8089 = vadd.f32 %v8053, %v8075
        %v8090 = vadd.f32 %v8054, %v8075
        %v8091 = vadd.f32 %v8055, %v8075
        %v8092 = vadd.f32 %v8056, %v8075
        %v8093 = vadd.f32 %v8057, %v8075
        %v8094 = vadd.f32 %v8058, %v8075
        %v8095 = vadd.f32 %v8059, %v8075
        %v8096 = vadd.f32 %v8060, %v8075
        %v8097 = vadd.f32 %v8061, %v8075
        %v8098 = vadd.f32 %v8062, %v8075
        %v8099 = vadd.f32 %v8063, %v8075
        %v8100 = vadd.f32 %v8064, %v8075
        %v8101 = vadd.f32 %v8065, %v8075
        %v8102 = vadd.f32 %v8066, %v8075
        %v8103 = vadd.f32 %v8067, %v8075
        %v8104 = vadd.f32 %v8068, %v8075
        %v8105 = vadd.f32 %v8069, %v8075
        %v8106 = vadd.f32 %v8070, %v8075
        %v8107 = vadd.f32 %v8071, %v8075
        %v8108 = vadd.f32 %v8072, %v8075
        %v8109 = vmax.f32 %v8077, 0.0
        %v8110 = vmax.f32 %v8078, 0.0
        %v8111 = vmax.f32 %v8079, 0.0
        %v8112 = vmax.f32 %v8080, 0.0
        %v8113 = vmax.f32 %v8081, 0.0
        %v8114 = vmax.f32 %v8082, 0.0
        %v8115 = vmax.f32 %v8083, 0.0
        %v8116 = vmax.f32 %v8084, 0.0
        %v8117 = vmax.f32 %v8085, 0.0
        %v8118 = vmax.f32 %v8086, 0.0
        %v8119 = vmax.f32 %v8087, 0.0
        %v8120 = vmax.f32 %v8088, 0.0
        %v8121 = vmax.f32 %v8089, 0.0
        %v8122 = vmax.f32 %v8090, 0.0
        %v8123 = vmax.f32 %v8091, 0.0
        %v8124 = vmax.f32 %v8092, 0.0
        %v8125 = vmax.f32 %v8093, 0.0
        %v8126 = vmax.f32 %v8094, 0.0
        %v8127 = vmax.f32 %v8095, 0.0
        %v8128 = vmax.f32 %v8096, 0.0
        %v8129 = vmax.f32 %v8097, 0.0
        %v8130 = vmax.f32 %v8098, 0.0
        %v8131 = vmax.f32 %v8099, 0.0
        %v8132 = vmax.f32 %v8100, 0.0
        %v8133 = vmax.f32 %v8101, 0.0
        %v8134 = vmax.f32 %v8102, 0.0
        %v8135 = vmax.f32 %v8103, 0.0
        %v8136 = vmax.f32 %v8104, 0.0
        %v8137 = vmax.f32 %v8105, 0.0
        %v8138 = vmax.f32 %v8106, 0.0
        %v8139 = vmax.f32 %v8107, 0.0
        %v8140 = vmax.f32 %v8108, 0.0
        %v8141 = vld [vmem:[%s15] sm:$0xff]
        %v8142 = vld [vmem:[%s15 + $0x8] sm:$0xff]
        %v8143 = vld [vmem:[%s15 + $0x10] sm:$0xff]
        %v8144 = vld [vmem:[%s15 + $0x18] sm:$0xff]
        %v8145 = vld [vmem:[%s15 + $0x20] sm:$0xff]
        %v8146 = vld [vmem:[%s15 + $0x28] sm:$0xff]
        %v8147 = vld [vmem:[%s15 + $0x30] sm:$0xff]
        %v8148 = vld [vmem:[%s15 + $0x38] sm:$0xff]
        %v8150 = vsel %vm520, %v8109, 0
        %v8153 = vsel %vm520, %v8110, 0
        %v8156 = vsel %vm520, %v8111, 0
        %v8159 = vsel %vm520, %v8112, 0
        %v8162 = vsel %vm520, %v8113, 0
        %v8165 = vsel %vm520, %v8114, 0
        %v8168 = vsel %vm520, %v8115, 0
        %v8171 = vsel %vm520, %v8116, 0
        %v8174 = vsel %vm520, %v8117, 0
        %v8177 = vsel %vm520, %v8118, 0
        %v8180 = vsel %vm520, %v8119, 0
        %v8183 = vsel %vm520, %v8120, 0
        %v8186 = vsel %vm520, %v8121, 0
        %v8189 = vsel %vm520, %v8122, 0
        %v8192 = vsel %vm520, %v8123, 0
        %v8195 = vsel %vm520, %v8124, 0
        %v8198 = vsel %vm520, %v8125, 0
        %v8201 = vsel %vm520, %v8126, 0
        %v8204 = vsel %vm520, %v8127, 0
        %v8207 = vsel %vm520, %v8128, 0
        %v8210 = vsel %vm520, %v8129, 0
        %v8213 = vsel %vm520, %v8130, 0
        %v8216 = vsel %vm520, %v8131, 0
        %v8219 = vsel %vm520, %v8132, 0
        %v8222 = vsel %vm520, %v8133, 0
        %v8225 = vsel %vm520, %v8134, 0
        %v8228 = vsel %vm520, %v8135, 0
        %v8231 = vsel %vm520, %v8136, 0
        %v8234 = vsel %vm520, %v8137, 0
        %v8237 = vsel %vm520, %v8138, 0
        %v8240 = vsel %vm520, %v8139, 0
        %v8243 = vsel %vm520, %v8140, 0
        %8245 = vmatpush.msra.mxu0 0.0
        %8246 = vmatpush.msra.mxu0 0.0
        %8247 = vmatpush.msra.mxu0 0.0
        %8248 = vmatpush.msra.mxu0 0.0
        %8249 = vmatpush.msra.mxu0 0.0
        %8250 = vmatpush.msra.mxu0 0.0
        %8251 = vmatpush.msra.mxu0 0.0
        %8252 = vmatpush.msra.mxu0 0.0
        %8253 = vmatpush.msra.mxu0 %v8148
        %8254 = vmatpush.msra.mxu0 %v8147
        %8255 = vmatpush.msra.mxu0 %v8146
        %8256 = vmatpush.msra.mxu0 %v8145
        %8257 = vmatpush.msra.mxu0 %v8144
        %8258 = vmatpush.msra.mxu0 %v8143
        %8259 = vmatpush.msra.mxu0 %v8142
        %8260 = vmatpush.msra.mxu0 %v8141
        %8261 = vmatmul.f32.gmra.mxu0 %v8150
        %v8262 = vpop.f32.mrf.mxu0
        %v8263 = vadd.f32 0.0, %v8262
        %8264 = vmatmul.f32.gmra.mxu0 %v8153
        %v8265 = vpop.f32.mrf.mxu0
        %v8266 = vadd.f32 0.0, %v8265
        %8267 = vmatmul.f32.gmra.mxu0 %v8156
        %v8268 = vpop.f32.mrf.mxu0
        %v8269 = vadd.f32 0.0, %v8268
        %8270 = vmatmul.f32.gmra.mxu0 %v8159
        %v8271 = vpop.f32.mrf.mxu0
        %v8272 = vadd.f32 0.0, %v8271
        %8273 = vmatmul.f32.gmra.mxu0 %v8162
        %v8274 = vpop.f32.mrf.mxu0
        %v8275 = vadd.f32 0.0, %v8274
        %8276 = vmatmul.f32.gmra.mxu0 %v8165
        %v8277 = vpop.f32.mrf.mxu0
        %v8278 = vadd.f32 0.0, %v8277
        %8279 = vmatmul.f32.gmra.mxu0 %v8168
        %v8280 = vpop.f32.mrf.mxu0
        %v8281 = vadd.f32 0.0, %v8280
        %8282 = vmatmul.f32.gmra.mxu0 %v8171
        %v8283 = vpop.f32.mrf.mxu0
        %v8284 = vadd.f32 0.0, %v8283
        %8285 = vmatmul.f32.gmra.mxu0 %v8174
        %v8286 = vpop.f32.mrf.mxu0
        %v8287 = vadd.f32 0.0, %v8286
        %8288 = vmatmul.f32.gmra.mxu0 %v8177
        %v8289 = vpop.f32.mrf.mxu0
        %v8290 = vadd.f32 0.0, %v8289
        %8291 = vmatmul.f32.gmra.mxu0 %v8180
        %v8292 = vpop.f32.mrf.mxu0
        %v8293 = vadd.f32 0.0, %v8292
        %8294 = vmatmul.f32.gmra.mxu0 %v8183
        %v8295 = vpop.f32.mrf.mxu0
        %v8296 = vadd.f32 0.0, %v8295
        %8297 = vmatmul.f32.gmra.mxu0 %v8186
        %v8298 = vpop.f32.mrf.mxu0
        %v8299 = vadd.f32 0.0, %v8298
        %8300 = vmatmul.f32.gmra.mxu0 %v8189
        %v8301 = vpop.f32.mrf.mxu0
        %v8302 = vadd.f32 0.0, %v8301
        %8303 = vmatmul.f32.gmra.mxu0 %v8192
        %v8304 = vpop.f32.mrf.mxu0
        %v8305 = vadd.f32 0.0, %v8304
        %8306 = vmatmul.f32.gmra.mxu0 %v8195
        %v8307 = vpop.f32.mrf.mxu0
        %v8308 = vadd.f32 0.0, %v8307
        %8309 = vmatmul.f32.gmra.mxu0 %v8198
        %v8310 = vpop.f32.mrf.mxu0
        %v8311 = vadd.f32 0.0, %v8310
        %8312 = vmatmul.f32.gmra.mxu0 %v8201
        %v8313 = vpop.f32.mrf.mxu0
        %v8314 = vadd.f32 0.0, %v8313
        %8315 = vmatmul.f32.gmra.mxu0 %v8204
        %v8316 = vpop.f32.mrf.mxu0
        %v8317 = vadd.f32 0.0, %v8316
        %8318 = vmatmul.f32.gmra.mxu0 %v8207
        %v8319 = vpop.f32.mrf.mxu0
        %v8320 = vadd.f32 0.0, %v8319
        %8321 = vmatmul.f32.gmra.mxu0 %v8210
        %v8322 = vpop.f32.mrf.mxu0
        %v8323 = vadd.f32 0.0, %v8322
        %8324 = vmatmul.f32.gmra.mxu0 %v8213
        %v8325 = vpop.f32.mrf.mxu0
        %v8326 = vadd.f32 0.0, %v8325
        %8327 = vmatmul.f32.gmra.mxu0 %v8216
        %v8328 = vpop.f32.mrf.mxu0
        %v8329 = vadd.f32 0.0, %v8328
        %8330 = vmatmul.f32.gmra.mxu0 %v8219
        %v8331 = vpop.f32.mrf.mxu0
        %v8332 = vadd.f32 0.0, %v8331
        %8333 = vmatmul.f32.gmra.mxu0 %v8222
        %v8334 = vpop.f32.mrf.mxu0
        %v8335 = vadd.f32 0.0, %v8334
        %8336 = vmatmul.f32.gmra.mxu0 %v8225
        %v8337 = vpop.f32.mrf.mxu0
        %v8338 = vadd.f32 0.0, %v8337
        %8339 = vmatmul.f32.gmra.mxu0 %v8228
        %v8340 = vpop.f32.mrf.mxu0
        %v8341 = vadd.f32 0.0, %v8340
        %8342 = vmatmul.f32.gmra.mxu0 %v8231
        %v8343 = vpop.f32.mrf.mxu0
        %v8344 = vadd.f32 0.0, %v8343
        %8345 = vmatmul.f32.gmra.mxu0 %v8234
        %v8346 = vpop.f32.mrf.mxu0
        %v8347 = vadd.f32 0.0, %v8346
        %8348 = vmatmul.f32.gmra.mxu0 %v8237
        %v8349 = vpop.f32.mrf.mxu0
        %v8350 = vadd.f32 0.0, %v8349
        %8351 = vmatmul.f32.gmra.mxu0 %v8240
        %v8352 = vpop.f32.mrf.mxu0
        %v8353 = vadd.f32 0.0, %v8352
        %8354 = vmatmul.f32.gmra.mxu0 %v8243
        %v8355 = vpop.f32.mrf.mxu0
        %v8356 = vadd.f32 0.0, %v8355
        %8357 = vdwg.mxu0
        %v8358 = vadd.f32 %v7926, %v8263
        %v8359 = vadd.f32 %v7927, %v8266
        %v8360 = vadd.f32 %v7928, %v8269
        %v8361 = vadd.f32 %v7929, %v8272
        %v8362 = vadd.f32 %v7930, %v8275
        %v8363 = vadd.f32 %v7931, %v8278
        %v8364 = vadd.f32 %v7932, %v8281
        %v8365 = vadd.f32 %v7933, %v8284
        %v8366 = vadd.f32 %v7934, %v8287
        %v8367 = vadd.f32 %v7935, %v8290
        %v8368 = vadd.f32 %v7936, %v8293
        %v8369 = vadd.f32 %v7937, %v8296
        %v8370 = vadd.f32 %v7938, %v8299
        %v8371 = vadd.f32 %v7939, %v8302
        %v8372 = vadd.f32 %v7940, %v8305
        %v8373 = vadd.f32 %v7941, %v8308
        %v8374 = vadd.f32 %v7942, %v8311
        %v8375 = vadd.f32 %v7943, %v8314
        %v8376 = vadd.f32 %v7944, %v8317
        %v8377 = vadd.f32 %v7945, %v8320
        %v8378 = vadd.f32 %v7946, %v8323
        %v8379 = vadd.f32 %v7947, %v8326
        %v8380 = vadd.f32 %v7948, %v8329
        %v8381 = vadd.f32 %v7949, %v8332
        %v8382 = vadd.f32 %v7950, %v8335
        %v8383 = vadd.f32 %v7951, %v8338
        %v8384 = vadd.f32 %v7952, %v8341
        %v8385 = vadd.f32 %v7953, %v8344
        %v8386 = vadd.f32 %v7954, %v8347
        %v8387 = vadd.f32 %v7955, %v8350
        %v8388 = vadd.f32 %v7956, %v8353
        %v8389 = vadd.f32 %v7957, %v8356
        %8390 = vst [vmem:[%s514] sm:$0xff] %v8358
        %8391 = vst [vmem:[%s514 + $0x8] sm:$0xff] %v8359
        %8392 = vst [vmem:[%s514 + $0x10] sm:$0xff] %v8360
        %8393 = vst [vmem:[%s514 + $0x18] sm:$0xff] %v8361
        %8394 = vst [vmem:[%s514 + $0x20] sm:$0xff] %v8362
        %8395 = vst [vmem:[%s514 + $0x28] sm:$0xff] %v8363
        %8396 = vst [vmem:[%s514 + $0x30] sm:$0xff] %v8364
        %8397 = vst [vmem:[%s514 + $0x38] sm:$0xff] %v8365
        %8398 = vst [vmem:[%s514 + $0x40] sm:$0xff] %v8366
        %8399 = vst [vmem:[%s514 + $0x48] sm:$0xff] %v8367
        %8400 = vst [vmem:[%s514 + $0x50] sm:$0xff] %v8368
        %8401 = vst [vmem:[%s514 + $0x58] sm:$0xff] %v8369
        %8402 = vst [vmem:[%s514 + $0x60] sm:$0xff] %v8370
        %8403 = vst [vmem:[%s514 + $0x68] sm:$0xff] %v8371
        %8404 = vst [vmem:[%s514 + $0x70] sm:$0xff] %v8372
        %8405 = vst [vmem:[%s514 + $0x78] sm:$0xff] %v8373
        %8406 = vst [vmem:[%s514 + $0x80] sm:$0xff] %v8374
        %8407 = vst [vmem:[%s514 + $0x88] sm:$0xff] %v8375
        %8408 = vst [vmem:[%s514 + $0x90] sm:$0xff] %v8376
        %8409 = vst [vmem:[%s514 + $0x98] sm:$0xff] %v8377
        %8410 = vst [vmem:[%s514 + $0xa0] sm:$0xff] %v8378
        %8411 = vst [vmem:[%s514 + $0xa8] sm:$0xff] %v8379
        %8412 = vst [vmem:[%s514 + $0xb0] sm:$0xff] %v8380
        %8413 = vst [vmem:[%s514 + $0xb8] sm:$0xff] %v8381
        %8414 = vst [vmem:[%s514 + $0xc0] sm:$0xff] %v8382
        %8415 = vst [vmem:[%s514 + $0xc8] sm:$0xff] %v8383
        %8416 = vst [vmem:[%s514 + $0xd0] sm:$0xff] %v8384
        %8417 = vst [vmem:[%s514 + $0xd8] sm:$0xff] %v8385
        %8418 = vst [vmem:[%s514 + $0xe0] sm:$0xff] %v8386
        %8419 = vst [vmem:[%s514 + $0xe8] sm:$0xff] %v8387
        %8420 = vst [vmem:[%s514 + $0xf0] sm:$0xff] %v8388
        %8421 = vst [vmem:[%s514 + $0xf8] sm:$0xff] %v8389
        %s8422 = sand.u32 %s379, 1
        %s8423 = scalar_lea.sflag [#allocation5], %s8422
        %s8424 = sand.u32 %s379, 1
        %s8425 = smul.addr %s8424, 256
        %s8426 = scalar_lea.vmem [#allocation4], %s8425
        // Predicated region
        $region85: #{tpu_custom_call.1} parent=83 // pred_check
          %p8427 = pneg %p389
        $region86: #{tpu_custom_call.1} parent=83 // pred_check_branch
          %8429 = sbr.rel (%p8427) target = $region88
        $region87: #{tpu_custom_call.1} parent=83 // pred_region
          %8431 = vsyncadd %s8423, 0
          %s8432 = smul.addr %s30, 32
          %s8433 = smul.addr %s8432, 8
          %s8434 = scalar_lea.hbm %s16, %s8433
          %s8435 = sshll.u32 %s8426, 4
          %s8436 = int_to_ptr.vmem [resolvable:$true] %s8435
          %s8437 = sshll.u32 %s8434, 4
          %s8438 = int_to_ptr.hbm [resolvable:$true] %s8437
          %8443 = dma.vmem_to_hbm [thread:$0]  %s8436, 4096, %s8438, %s8423, 128, 128, 8
        $region88: #{tpu_custom_call.1} parent=83 // pred_fallthru
          _
      $region84: #{tpu_custom_call.1} parent=5 // pred_fallthru
        _
      %p8444 = scmp.le.s32.totalorder 2, %s25
      // Predicated region
      $region89: #{tpu_custom_call.1} parent=5 // pred_check
        %p8445 = pneg %p8444
      $region90: #{tpu_custom_call.1} parent=5 // pred_check_branch
        %8447 = sbr.rel (%p8445) target = $region92
      $region91: #{tpu_custom_call.1} parent=5 // pred_region
        %s8448 = ssub.s32 %s25, 2
        // Predicated region
        $region93: #{tpu_custom_call.1} parent=91 // pred_check
          %p8449 = pneg %p395
        $region94: #{tpu_custom_call.1} parent=91 // pred_check_branch
          %8451 = sbr.rel (%p8449) target = $region96
        $region95: #{tpu_custom_call.1} parent=91 // pred_region
          %s8452 = sand.u32 %s380, 1
          %s8453 = scalar_lea.sflag [#allocation5], %s8452
          %s8454 = sand.u32 %s380, 1
          %s8455 = smul.addr %s8454, 256
          %s8456 = scalar_lea.vmem [#allocation4], %s8455
          %8458 = dma.done %s8453, 4096
        $region96: #{tpu_custom_call.1} parent=91 // pred_fallthru
          _
      $region92: #{tpu_custom_call.1} parent=5 // pred_fallthru
        _
    $region6: #{tpu_custom_call.1} parent=1 // loop_footer
      %s29 = sadd.s32 1, %s25
    $region7: #{tpu_custom_call.1} parent=1 // loop_footer_branch
      %24 = sbr.rel target = $region3
    $region8: #{tpu_custom_call.1} parent=1 // loop_exit
      _
    %8459 = vsyncpa [#allocation5], 1
    %s8460 = scalar_lea.sflag [#allocation5], 1
    %8461 = vsyncpa %s8460, 1

</llo_original>
